<compile_context>
chip_gen: v6e
topology: v6e:2x2x1
jax: 0.10.0
libtpu: 0.0.40
codegen_flags: <defaults>
</compile_context>

<pallas_src>
import numpy as np

import jax
import jax.numpy as jnp
from jax.experimental import pallas as pl
from jax.experimental.pallas import tpu as pltpu

BN_EPS = 1e-5
ACT_DT = jnp.bfloat16   # inter-kernel activation dtype (HBM traffic)
W_DT = jnp.bfloat16     # conv weight / im2col patch dtype (MXU-native)

_VMEM = pltpu.MemorySpace.VMEM
_CPARAMS = pltpu.CompilerParams(vmem_limit_bytes=64 * 1024 * 1024)


# ------------------------- in-kernel building blocks -------------------------

def _bn_relu(acc):
    """BatchNorm (batch stats, biased var, gamma=1, beta=0) + ReLU in f32.

    One-pass statistics: var = E[x^2] - mean^2 (clamped at 0 against f32
    cancellation) -- halves the cross-sublane reduction traffic vs. the
    two-pass (x - mean)^2 formulation."""
    mean = jnp.mean(acc, axis=0, keepdims=True)
    meansq = jnp.mean(acc * acc, axis=0, keepdims=True)
    var = jnp.maximum(meansq - mean * mean, 0.0)
    y = (acc - mean) * jax.lax.rsqrt(var + BN_EPS)
    return jnp.maximum(y, 0.0)


def _conv3x3_bn_relu(x4, w_ref, pad_ref, patch_ref):
    """3x3 'same' conv (no bias) -> BN -> ReLU as ONE deep MXU matmul.

    x4:        (N,H,W,Cin) f32 value
    w_ref:     (9*Cin, Cout) bf16 weight ref
    pad_ref:   (N,H+2,W+2,>=Cin) f32 VMEM scratch; halo ring is already zero
               (initialized once per kernel call), only the interior is written.
    patch_ref: (N*H*W, >=9*Cin) bf16 VMEM scratch (im2col matrix, taps stored
               already cast to bf16).
    Returns (N*H*W, Cout) f32."""
    N, H, W, Cin = x4.shape
    M = N * H * W
    pad_ref[:, 1:1 + H, 1:1 + W, :Cin] = x4
    for kh in range(3):
        for kw in range(3):
            t = kh * 3 + kw
            tap = pad_ref[:, kh:kh + H, kw:kw + W, :Cin].reshape(M, Cin)
            patch_ref[:, t * Cin:(t + 1) * Cin] = tap.astype(W_DT)
    acc = jnp.dot(patch_ref[:, :9 * Cin], w_ref[...],
                  preferred_element_type=jnp.float32)
    return _bn_relu(acc)


def _maxpool3x3(x4, mp_ref):
    """nn.MaxPool2d(3, stride=1, padding=1).

    mp_ref halo ring is already -inf (initialized once per kernel call); only
    the interior is written per use.  Returns (N*H*W, C) f32."""
    N, H, W, C = x4.shape
    mp_ref[:, 1:1 + H, 1:1 + W, :C] = x4
    m = mp_ref[:, 0:H, 0:W, :C]
    for kh in range(3):
        for kw in range(3):
            if kh == 0 and kw == 0:
                continue
            m = jnp.maximum(m, mp_ref[:, kh:kh + H, kw:kw + W, :C])
    return m.reshape(N * H * W, C)


def _maxpool2x2_s2(x4, sel_even_ref, sel_odd_ref):
    """nn.MaxPool2d(2, stride=2), fully vectorized.

    H direction: leading-dim reshape + pairwise max.
    W direction: stride-2 compaction via two exact 0/1 selection matmuls
    (host-provided constants) on the MXU -- no per-column masked stores."""
    N, Hin, Win, C = x4.shape
    Ho, Wo = Hin // 2, Win // 2
    x5 = x4.reshape(N, Ho, 2, Win, C)
    y = jnp.maximum(x5[:, :, 0, :, :], x5[:, :, 1, :, :])     # (N,Ho,Win,C)
    y2 = y.reshape(N * Ho * Win, C)
    even = jnp.dot(sel_even_ref[...], y2, preferred_element_type=jnp.float32)
    odd = jnp.dot(sel_odd_ref[...], y2, preferred_element_type=jnp.float32)
    return jnp.maximum(even, odd).reshape(N, Ho, Wo, C)


def _pool_selection_matrices(N, Hin, Win):
    """Exact 0/1 row-selection matrices for the stride-2 W compaction."""
    Ho, Wo = Hin // 2, Win // 2
    rows, cols = N * Ho * Wo, N * Ho * Win
    r = np.arange(rows)
    wo = r % Wo
    ho = (r // Wo) % Ho
    n = r // (Wo * Ho)
    base = (n * Ho + ho) * Win + 2 * wo
    se = np.zeros((rows, cols), np.float32)
    so = np.zeros((rows, cols), np.float32)
    se[r, base] = 1.0
    so[r, base + 1] = 1.0
    return jnp.asarray(se), jnp.asarray(so)


# ------------------------------- Pallas calls --------------------------------

def _stem_kernel(x_ref, w_ref, o_ref, pad_ref, patch_ref):
    pad_ref[...] = jnp.zeros(pad_ref.shape, jnp.float32)   # zero halo, once
    x4 = x_ref[...].astype(jnp.float32)
    N, H, W, _ = x4.shape
    out = _conv3x3_bn_relu(x4, w_ref, pad_ref, patch_ref)  # (M, Cout)
    o_ref[...] = out.reshape(N, H, W, out.shape[-1]).astype(o_ref.dtype)


def stem_conv_bn_relu(x, w):
    N, H, W, Cin = x.shape
    Cout = w.shape[-1]
    return pl.pallas_call(
        _stem_kernel,
        out_shape=jax.ShapeDtypeStruct((N, H, W, Cout), ACT_DT),
        in_specs=[pl.BlockSpec(memory_space=_VMEM)] * 2,
        out_specs=pl.BlockSpec(memory_space=_VMEM),
        scratch_shapes=[pltpu.VMEM((N, H + 2, W + 2, Cin), jnp.float32),
                        pltpu.VMEM((N * H * W, 9 * Cin), W_DT)],
        compiler_params=_CPARAMS,
    )(x, w)


def _downsample_kernel(x_ref, se_ref, so_ref, o_ref):
    p = _maxpool2x2_s2(x_ref[...].astype(jnp.float32), se_ref, so_ref)
    o_ref[...] = p.astype(o_ref.dtype)


def downsample_maxpool2x2(x):
    """Standalone MaxPool2d(2,2) (only used if a pool is not followed by a cell)."""
    N, H, W, C = x.shape
    assert H % 2 == 0 and W % 2 == 0
    se, so = _pool_selection_matrices(N, H, W)
    return pl.pallas_call(
        _downsample_kernel,
        out_shape=jax.ShapeDtypeStruct((N, H // 2, W // 2, C), x.dtype),
        in_specs=[pl.BlockSpec(memory_space=_VMEM)] * 3,
        out_specs=pl.BlockSpec(memory_space=_VMEM),
        compiler_params=_CPARAMS,
    )(x, se, so)


def _gap_linear_kernel(x_ref, w_ref, b_ref, o_ref):
    N, H, W, C = x_ref.shape
    xf = x_ref[...].astype(jnp.float32).reshape(N, H * W, C)
    pooled = jnp.mean(xf, axis=1)                          # (N, C)
    o_ref[...] = jnp.dot(pooled, w_ref[...],
                         preferred_element_type=jnp.float32) + b_ref[...]


def gap_linear(x, w, b):
    """torch.mean(x, (2,3)) followed by the Linear classifier, fused."""
    N, H, W, C = x.shape
    nc = w.shape[-1]
    return pl.pallas_call(
        _gap_linear_kernel,
        out_shape=jax.ShapeDtypeStruct((N, nc), jnp.float32),
        in_specs=[pl.BlockSpec(memory_space=_VMEM)] * 3,
        out_specs=pl.BlockSpec(memory_space=_VMEM),
        compiler_params=_CPARAMS,
    )(x, w, b)


def _make_cell_kernel(matrix, vc, op_kinds, proj_segs, conv_w_ts,
                      pool_first, has_conv3, has_mp):
    """Builds the fused whole-cell kernel (optionally pooling its input first)."""
    nv = matrix.shape[0]
    cout = vc[nv - 1]
    has_proj = bool(proj_segs)
    n_conv = len(conv_w_ts)

    def kernel(*refs):
        idx = 0
        x_ref = refs[idx]; idx += 1
        sel_e = sel_o = None
        if pool_first:
            sel_e, sel_o = refs[idx], refs[idx + 1]; idx += 2
        projw_ref = None
        if has_proj:
            projw_ref = refs[idx]; idx += 1
        conv_w = {t: refs[idx + i] for i, t in enumerate(conv_w_ts)}
        idx += n_conv
        o_ref = refs[idx]; idx += 1
        scratch = refs[idx:]
        si = 0
        pad_ref = patch_ref = mp_ref = None
        if has_conv3:
            pad_ref, patch_ref = scratch[si], scratch[si + 1]; si += 2
        if has_mp:
            mp_ref = scratch[si]; si += 1

        # one-time halo initialisation (per kernel call, not per vertex op)
        if has_conv3:
            pad_ref[...] = jnp.zeros(pad_ref.shape, jnp.float32)
        if has_mp:
            mp_ref[...] = jnp.full(mp_ref.shape, -jnp.inf, jnp.float32)

        # cell input (optionally fused MaxPool2d(2,2) downsample)
        if pool_first:
            x4 = _maxpool2x2_s2(x_ref[...].astype(jnp.float32), sel_e, sel_o)
        else:
            x4 = x_ref[...].astype(jnp.float32)
        N, H, W, Cin = x4.shape
        M = N * H * W
        x_m = x4.reshape(M, Cin).astype(W_DT)

        # all 1x1 input projections of the cell fused into ONE wide matmul;
        # BN/ReLU applied per channel segment (identical to separate convs).
        proj = {}
        if has_proj:
            acc = jnp.dot(x_m, projw_ref[...],
                          preferred_element_type=jnp.float32)
            for (t, off, width) in proj_segs:
                proj[t] = _bn_relu(acc[:, off:off + width])

        # interior vertices (all values carried as (M, C) f32)
        tensors = {}
        out_pieces = []
        for t in range(1, nv - 1):
            ct = vc[t]
            fan = [tensors[s][:, :ct] for s in range(1, t) if matrix[s, t]]
            if matrix[0, t]:
                fan.append(proj[t])
            v_in = fan[0]
            for extra in fan[1:]:
                v_in = v_in + extra
            kind = op_kinds[t]
            if kind == 'conv3':
                v = _conv3x3_bn_relu(v_in.reshape(N, H, W, ct), conv_w[t],
                                     pad_ref, patch_ref)
            elif kind == 'conv1':
                v = _bn_relu(jnp.dot(v_in.astype(W_DT), conv_w[t][...],
                                     preferred_element_type=jnp.float32))
            else:
                v = _maxpool3x3(v_in.reshape(N, H, W, ct), mp_ref)
            tensors[t] = v
            if matrix[t, nv - 1]:
                out_pieces.append(v)

        # single contiguous (M, Cout) output + ONE store.  Pieces are placed
        # at their channel offsets via tiny exact 0/1 matmuls (avoids masked
        # stores at unaligned channel offsets and minor-dim concatenation).
        if not out_pieces:
            out = proj[nv - 1]
        else:
            if len(out_pieces) == 1:
                out = out_pieces[0]
            else:
                out = None
                off = 0
                for v in out_pieces:
                    c = v.shape[-1]
                    row = jax.lax.broadcasted_iota(jnp.int32, (c, cout), 0)
                    col = jax.lax.broadcasted_iota(jnp.int32, (c, cout), 1)
                    place = (col == row + off).astype(jnp.float32)
                    placed = jnp.dot(v, place,
                                     preferred_element_type=jnp.float32)
                    out = placed if out is None else out + placed
                    off += c
            if matrix[0, nv - 1]:
                out = out + proj[nv - 1]           # full-width add, once
        o_ref[...] = out.reshape(o_ref.shape).astype(o_ref.dtype)

    return kernel


def cell_forward(x, cell, pool_first=False):
    """One NASBench-101 cell (optionally fused with a preceding MaxPool2d(2,2))
    as a single pallas_call."""
    matrix, vc = cell['matrix'], cell['vc']
    nv = matrix.shape[0]
    N, Hin, Win, Cin = x.shape
    if pool_first:
        assert Hin % 2 == 0 and Win % 2 == 0
    H, W = (Hin // 2, Win // 2) if pool_first else (Hin, Win)
    Cout = vc[nv - 1]
    M = N * H * W

    # fused 1x1 projection weight: concat along Cout, record channel segments
    proj_segs, proj_blocks, off = [], [], 0
    for t in range(1, nv):
        if matrix[0, t]:
            proj_segs.append((t, off, vc[t]))
            proj_blocks.append(cell['input_op'][t])
            off += vc[t]
    proj_w = jnp.concatenate(proj_blocks, axis=1) if proj_blocks else None

    op_kinds, conv_w_ts, conv_w_arrays = {}, [], []
    for t in range(1, nv - 1):
        kind, k, wt = cell['vertex_op'][t]
        if kind == 'conv':
            op_kinds[t] = 'conv3' if k == 3 else 'conv1'
            conv_w_ts.append(t)
            conv_w_arrays.append(wt)
        else:
            op_kinds[t] = 'maxpool'

    conv3_cs = [vc[t] for t in range(1, nv - 1) if op_kinds[t] == 'conv3']
    mp_cs = [vc[t] for t in range(1, nv - 1) if op_kinds[t] == 'maxpool']
    has_conv3, has_mp = bool(conv3_cs), bool(mp_cs)

    inputs = [x]
    if pool_first:
        se, so = _pool_selection_matrices(N, Hin, Win)
        inputs += [se, so]
    if proj_w is not None:
        inputs.append(proj_w)
    inputs += conv_w_arrays

    scratch_shapes = []
    if has_conv3:
        cmax = max(conv3_cs)
        scratch_shapes.append(pltpu.VMEM((N, H + 2, W + 2, cmax), jnp.float32))
        scratch_shapes.append(pltpu.VMEM((M, 9 * cmax), W_DT))
    if has_mp:
        scratch_shapes.append(
            pltpu.VMEM((N, H + 2, W + 2, max(mp_cs)), jnp.float32))

    kernel = _make_cell_kernel(matrix, vc, op_kinds, proj_segs, conv_w_ts,
                               pool_first, has_conv3, has_mp)

    return pl.pallas_call(
        kernel,
        out_shape=jax.ShapeDtypeStruct((N, H, W, Cout), ACT_DT),
        in_specs=[pl.BlockSpec(memory_space=_VMEM)] * len(inputs),
        out_specs=pl.BlockSpec(memory_space=_VMEM),
        scratch_shapes=scratch_shapes,
        compiler_params=_CPARAMS,
    )(*inputs)


# ------------------------ NASBench-101 plumbing (glue) ------------------------

class ModelSpec:
    def __init__(self, matrix, ops):
        self.matrix = np.array(matrix, dtype=np.int64)
        self.ops = list(ops)


def compute_vertex_channels(in_channels, out_channels, matrix):
    """Faithful port of nasbench's ComputeVertexChannels."""
    num_vertices = np.shape(matrix)[0]
    vertex_channels = [0] * num_vertices
    vertex_channels[0] = in_channels
    vertex_channels[num_vertices - 1] = out_channels
    if num_vertices == 2:
        return vertex_channels
    in_degree = np.sum(matrix[1:], axis=0)
    interior_channels = out_channels // in_degree[num_vertices - 1]
    correction = out_channels % in_degree[num_vertices - 1]
    for v in range(1, num_vertices - 1):
        if matrix[v, num_vertices - 1]:
            vertex_channels[v] = interior_channels
            if correction:
                vertex_channels[v] += 1
                correction -= 1
    for v in range(num_vertices - 3, 0, -1):
        if not matrix[v, num_vertices - 1]:
            for dst in range(v + 1, num_vertices - 1):
                if matrix[v, dst]:
                    vertex_channels[v] = max(vertex_channels[v],
                                             vertex_channels[dst])
        assert vertex_channels[v] > 0
    final_fan_in = 0
    for v in range(1, num_vertices - 1):
        if matrix[v, num_vertices - 1]:
            final_fan_in += vertex_channels[v]
        for dst in range(v + 1, num_vertices - 1):
            if matrix[v, dst]:
                assert vertex_channels[v] >= vertex_channels[dst]
    assert final_fan_in == out_channels or num_vertices == 2
    return [int(c) for c in vertex_channels]


def init_conv(key, cin, cout, k):
    # nn.Conv2d init per _initialize_weights: normal(0, sqrt(2/(k*k*out))), no bias.
    # Stored pre-flattened for the im2col matmul: (k*k*cin, cout), bf16.
    std = float(np.sqrt(2.0 / (k * k * cout)))
    w = std * jax.random.normal(key, (k * k * cin, cout), dtype=jnp.float32)
    return w.astype(W_DT)


def init_cell(key, spec, in_channels, out_channels):
    matrix, ops = spec.matrix, spec.ops
    nv = matrix.shape[0]
    vc = compute_vertex_channels(in_channels, out_channels, matrix)
    keys = jax.random.split(key, 2 * nv)
    vertex_op = {}
    for t in range(1, nv - 1):
        if ops[t] == 'conv3x3-bn-relu':
            vertex_op[t] = ('conv', 3, init_conv(keys[t], vc[t], vc[t], 3))
        elif ops[t] == 'conv1x1-bn-relu':
            vertex_op[t] = ('conv', 1, init_conv(keys[t], vc[t], vc[t], 1))
        elif ops[t] == 'maxpool3x3':
            vertex_op[t] = ('maxpool', 3, None)
        else:
            raise ValueError(ops[t])
    input_op = {}
    for t in range(1, nv):
        if matrix[0, t]:
            input_op[t] = init_conv(keys[nv + t - 1], in_channels, vc[t], 1)
    return dict(matrix=matrix, vc=vc, vertex_op=vertex_op, input_op=input_op)


def build_network(key, spec, stem_out, num_stacks, num_mods, num_classes):
    keys = jax.random.split(key, 2 + num_stacks * num_mods)
    ki = 0
    net = {}
    in_c, out_c = 3, stem_out
    net['stem'] = init_conv(keys[ki], in_c, out_c, 3); ki += 1
    in_c = out_c
    layers = []
    for stack in range(num_stacks):
        if stack > 0:
            layers.append(('pool', None))
            out_c *= 2
        for _ in range(num_mods):
            layers.append(('cell', init_cell(keys[ki], spec, in_c, out_c)))
            ki += 1
            in_c = out_c
    net['layers'] = layers
    # Linear: weight ~ N(0, 0.01), bias = 0
    net['cls_w'] = 0.01 * jax.random.normal(keys[ki], (out_c, num_classes),
                                            jnp.float32)
    net['cls_b'] = jnp.zeros((1, num_classes), jnp.float32)
    return net


def nasbench101_forward(x_nchw, net, pre_GAP=False):
    x = jnp.transpose(x_nchw, (0, 2, 3, 1)).astype(jnp.float32)  # NCHW -> NHWC
    x = stem_conv_bn_relu(x, net['stem'])                        # stem ConvBnRelu
    pending_pool = False
    for kind, p in net['layers']:
        if kind == 'pool':
            pending_pool = True                   # fused into the next cell
        else:
            x = cell_forward(x, p, pool_first=pending_pool)
            pending_pool = False
    if pending_pool:                              # trailing pool (not in this arch)
        x = downsample_maxpool2x2(x)
    if pre_GAP:
        return jnp.transpose(x.astype(jnp.float32), (0, 3, 1, 2))  # back to NCHW
    return gap_linear(x, net['cls_w'], net['cls_b'])


# ----------------------------------- main -----------------------------------

if __name__ == "__main__":
    # Small NASBench-101 spec: input -> {conv3x3, conv1x1} -> maxpool3x3 -> output
    matrix = [[0, 1, 1, 0, 0],
              [0, 0, 0, 1, 0],
              [0, 0, 0, 1, 1],
              [0, 0, 0, 0, 1],
              [0, 0, 0, 0, 0]]
    ops = ['input', 'conv3x3-bn-relu', 'conv1x1-bn-relu', 'maxpool3x3', 'output']
    spec = ModelSpec(matrix, ops)

    stem_out, num_stacks, num_mods, num_classes = 16, 2, 1, 10

    key = jax.random.PRNGKey(0)
    k_param, k_x = jax.random.split(key)
    net = build_network(k_param, spec, stem_out, num_stacks, num_mods,
                        num_classes)

    x = jax.random.normal(k_x, (2, 3, 16, 16), dtype=jnp.float32)  # NCHW input
    logits = nasbench101_forward(x, net)
    logits = jax.block_until_ready(logits)

    assert logits.shape == (2, num_classes)
    assert bool(jnp.all(jnp.isfinite(logits)))
    print("KERNEL_OK")
</pallas_src>

<mosaic_0001>
module attributes {stable_mosaic.version = 11 : i64} {
  func.func @_stem_kernel(%arg0: memref<2x16x16x3xf32, #tpu.memory_space<vmem>>, %arg1: memref<27x16xbf16, #tpu.memory_space<vmem>>, %arg2: memref<2x16x16x16xbf16, #tpu.memory_space<vmem>>, %arg3: memref<2x18x18x3xf32, #tpu.memory_space<vmem>>, %arg4: memref<512x27xbf16, #tpu.memory_space<vmem>>) attributes {dimension_semantics = [], scalar_prefetch = 0 : i64, scratch_operands = 2 : i64, tpu.core_type = #tpu.core_type<tc>} {
    %cst = arith.constant 0.000000e+00 : f32
    %0 = vector.broadcast %cst : f32 to vector<2x18x18x3xf32>
    %c0 = arith.constant 0 : index
    %c0_0 = arith.constant 0 : index
    %c0_1 = arith.constant 0 : index
    %c0_2 = arith.constant 0 : index
    %1 = vector.load %arg3[%c0, %c0_0, %c0_1, %c0_2] : memref<2x18x18x3xf32, #tpu.memory_space<vmem>>, vector<2x18x18x3xf32>
    tpu.vector_store %arg3[%c0, %c0_0, %c0_1, %c0_2], %0 {strides = array<i32>} : memref<2x18x18x3xf32, #tpu.memory_space<vmem>>, vector<2x18x18x3xf32>,
    %c0_3 = arith.constant 0 : index
    %c0_4 = arith.constant 0 : index
    %c0_5 = arith.constant 0 : index
    %c0_6 = arith.constant 0 : index
    %2 = vector.load %arg0[%c0_3, %c0_4, %c0_5, %c0_6] : memref<2x16x16x3xf32, #tpu.memory_space<vmem>>, vector<2x16x16x3xf32>
    %c0_7 = arith.constant 0 : index
    %c1 = arith.constant 1 : index
    %c1_8 = arith.constant 1 : index
    %c0_9 = arith.constant 0 : index
    %3 = vector.load %arg3[%c0_7, %c1, %c1_8, %c0_9] : memref<2x18x18x3xf32, #tpu.memory_space<vmem>>, vector<2x16x16x3xf32>
    tpu.vector_store %arg3[%c0_7, %c1, %c1_8, %c0_9], %2 {strides = array<i32>} : memref<2x18x18x3xf32, #tpu.memory_space<vmem>>, vector<2x16x16x3xf32>,
    %c0_10 = arith.constant 0 : index
    %c0_11 = arith.constant 0 : index
    %c0_12 = arith.constant 0 : index
    %c0_13 = arith.constant 0 : index
    %4 = vector.load %arg3[%c0_10, %c0_11, %c0_12, %c0_13] : memref<2x18x18x3xf32, #tpu.memory_space<vmem>>, vector<2x16x16x3xf32>
    %5 = vector.shape_cast %4 : vector<2x16x16x3xf32> to vector<512x3xf32>
    %6 = arith.truncf %5 : vector<512x3xf32> to vector<512x3xbf16>
    %c0_14 = arith.constant 0 : index
    %c0_15 = arith.constant 0 : index
    %7 = vector.load %arg4[%c0_14, %c0_15] : memref<512x27xbf16, #tpu.memory_space<vmem>>, vector<512x3xbf16>
    tpu.vector_store %arg4[%c0_14, %c0_15], %6 {strides = array<i32>} : memref<512x27xbf16, #tpu.memory_space<vmem>>, vector<512x3xbf16>,
    %c0_16 = arith.constant 0 : index
    %c0_17 = arith.constant 0 : index
    %c1_18 = arith.constant 1 : index
    %c0_19 = arith.constant 0 : index
    %8 = vector.load %arg3[%c0_16, %c0_17, %c1_18, %c0_19] : memref<2x18x18x3xf32, #tpu.memory_space<vmem>>, vector<2x16x16x3xf32>
    %9 = vector.shape_cast %8 : vector<2x16x16x3xf32> to vector<512x3xf32>
    %10 = arith.truncf %9 : vector<512x3xf32> to vector<512x3xbf16>
    %c0_20 = arith.constant 0 : index
    %c3 = arith.constant 3 : index
    %11 = vector.load %arg4[%c0_20, %c3] : memref<512x27xbf16, #tpu.memory_space<vmem>>, vector<512x3xbf16>
    tpu.vector_store %arg4[%c0_20, %c3], %10 {strides = array<i32>} : memref<512x27xbf16, #tpu.memory_space<vmem>>, vector<512x3xbf16>,
    %c0_21 = arith.constant 0 : index
    %c0_22 = arith.constant 0 : index
    %c2 = arith.constant 2 : index
    %c0_23 = arith.constant 0 : index
    %12 = vector.load %arg3[%c0_21, %c0_22, %c2, %c0_23] : memref<2x18x18x3xf32, #tpu.memory_space<vmem>>, vector<2x16x16x3xf32>
    %13 = vector.shape_cast %12 : vector<2x16x16x3xf32> to vector<512x3xf32>
    %14 = arith.truncf %13 : vector<512x3xf32> to vector<512x3xbf16>
    %c0_24 = arith.constant 0 : index
    %c6 = arith.constant 6 : index
    %15 = vector.load %arg4[%c0_24, %c6] : memref<512x27xbf16, #tpu.memory_space<vmem>>, vector<512x3xbf16>
    tpu.vector_store %arg4[%c0_24, %c6], %14 {strides = array<i32>} : memref<512x27xbf16, #tpu.memory_space<vmem>>, vector<512x3xbf16>,
    %c0_25 = arith.constant 0 : index
    %c1_26 = arith.constant 1 : index
    %c0_27 = arith.constant 0 : index
    %c0_28 = arith.constant 0 : index
    %16 = vector.load %arg3[%c0_25, %c1_26, %c0_27, %c0_28] : memref<2x18x18x3xf32, #tpu.memory_space<vmem>>, vector<2x16x16x3xf32>
    %17 = vector.shape_cast %16 : vector<2x16x16x3xf32> to vector<512x3xf32>
    %18 = arith.truncf %17 : vector<512x3xf32> to vector<512x3xbf16>
    %c0_29 = arith.constant 0 : index
    %c9 = arith.constant 9 : index
    %19 = vector.load %arg4[%c0_29, %c9] : memref<512x27xbf16, #tpu.memory_space<vmem>>, vector<512x3xbf16>
    tpu.vector_store %arg4[%c0_29, %c9], %18 {strides = array<i32>} : memref<512x27xbf16, #tpu.memory_space<vmem>>, vector<512x3xbf16>,
    %c0_30 = arith.constant 0 : index
    %c1_31 = arith.constant 1 : index
    %c1_32 = arith.constant 1 : index
    %c0_33 = arith.constant 0 : index
    %20 = vector.load %arg3[%c0_30, %c1_31, %c1_32, %c0_33] : memref<2x18x18x3xf32, #tpu.memory_space<vmem>>, vector<2x16x16x3xf32>
    %21 = vector.shape_cast %20 : vector<2x16x16x3xf32> to vector<512x3xf32>
    %22 = arith.truncf %21 : vector<512x3xf32> to vector<512x3xbf16>
    %c0_34 = arith.constant 0 : index
    %c12 = arith.constant 12 : index
    %23 = vector.load %arg4[%c0_34, %c12] : memref<512x27xbf16, #tpu.memory_space<vmem>>, vector<512x3xbf16>
    tpu.vector_store %arg4[%c0_34, %c12], %22 {strides = array<i32>} : memref<512x27xbf16, #tpu.memory_space<vmem>>, vector<512x3xbf16>,
    %c0_35 = arith.constant 0 : index
    %c1_36 = arith.constant 1 : index
    %c2_37 = arith.constant 2 : index
    %c0_38 = arith.constant 0 : index
    %24 = vector.load %arg3[%c0_35, %c1_36, %c2_37, %c0_38] : memref<2x18x18x3xf32, #tpu.memory_space<vmem>>, vector<2x16x16x3xf32>
    %25 = vector.shape_cast %24 : vector<2x16x16x3xf32> to vector<512x3xf32>
    %26 = arith.truncf %25 : vector<512x3xf32> to vector<512x3xbf16>
    %c0_39 = arith.constant 0 : index
    %c15 = arith.constant 15 : index
    %27 = vector.load %arg4[%c0_39, %c15] : memref<512x27xbf16, #tpu.memory_space<vmem>>, vector<512x3xbf16>
    tpu.vector_store %arg4[%c0_39, %c15], %26 {strides = array<i32>} : memref<512x27xbf16, #tpu.memory_space<vmem>>, vector<512x3xbf16>,
    %c0_40 = arith.constant 0 : index
    %c2_41 = arith.constant 2 : index
    %c0_42 = arith.constant 0 : index
    %c0_43 = arith.constant 0 : index
    %28 = vector.load %arg3[%c0_40, %c2_41, %c0_42, %c0_43] : memref<2x18x18x3xf32, #tpu.memory_space<vmem>>, vector<2x16x16x3xf32>
    %29 = vector.shape_cast %28 : vector<2x16x16x3xf32> to vector<512x3xf32>
    %30 = arith.truncf %29 : vector<512x3xf32> to vector<512x3xbf16>
    %c0_44 = arith.constant 0 : index
    %c18 = arith.constant 18 : index
    %31 = vector.load %arg4[%c0_44, %c18] : memref<512x27xbf16, #tpu.memory_space<vmem>>, vector<512x3xbf16>
    tpu.vector_store %arg4[%c0_44, %c18], %30 {strides = array<i32>} : memref<512x27xbf16, #tpu.memory_space<vmem>>, vector<512x3xbf16>,
    %c0_45 = arith.constant 0 : index
    %c2_46 = arith.constant 2 : index
    %c1_47 = arith.constant 1 : index
    %c0_48 = arith.constant 0 : index
    %32 = vector.load %arg3[%c0_45, %c2_46, %c1_47, %c0_48] : memref<2x18x18x3xf32, #tpu.memory_space<vmem>>, vector<2x16x16x3xf32>
    %33 = vector.shape_cast %32 : vector<2x16x16x3xf32> to vector<512x3xf32>
    %34 = arith.truncf %33 : vector<512x3xf32> to vector<512x3xbf16>
    %c0_49 = arith.constant 0 : index
    %c21 = arith.constant 21 : index
    %35 = vector.load %arg4[%c0_49, %c21] : memref<512x27xbf16, #tpu.memory_space<vmem>>, vector<512x3xbf16>
    tpu.vector_store %arg4[%c0_49, %c21], %34 {strides = array<i32>} : memref<512x27xbf16, #tpu.memory_space<vmem>>, vector<512x3xbf16>,
    %c0_50 = arith.constant 0 : index
    %c2_51 = arith.constant 2 : index
    %c2_52 = arith.constant 2 : index
    %c0_53 = arith.constant 0 : index
    %36 = vector.load %arg3[%c0_50, %c2_51, %c2_52, %c0_53] : memref<2x18x18x3xf32, #tpu.memory_space<vmem>>, vector<2x16x16x3xf32>
    %37 = vector.shape_cast %36 : vector<2x16x16x3xf32> to vector<512x3xf32>
    %38 = arith.truncf %37 : vector<512x3xf32> to vector<512x3xbf16>
    %c0_54 = arith.constant 0 : index
    %c24 = arith.constant 24 : index
    %39 = vector.load %arg4[%c0_54, %c24] : memref<512x27xbf16, #tpu.memory_space<vmem>>, vector<512x3xbf16>
    tpu.vector_store %arg4[%c0_54, %c24], %38 {strides = array<i32>} : memref<512x27xbf16, #tpu.memory_space<vmem>>, vector<512x3xbf16>,
    %c0_55 = arith.constant 0 : index
    %c0_56 = arith.constant 0 : index
    %40 = vector.load %arg4[%c0_55, %c0_56] : memref<512x27xbf16, #tpu.memory_space<vmem>>, vector<512x27xbf16>
    %c0_57 = arith.constant 0 : index
    %c0_58 = arith.constant 0 : index
    %41 = vector.load %arg1[%c0_57, %c0_58] : memref<27x16xbf16, #tpu.memory_space<vmem>>, vector<27x16xbf16>
    %cst_59 = arith.constant dense<0.000000e+00> : vector<512x16xf32>
    %42 = tpu.matmul %40, %41, %cst_59 {dimension_numbers = #tpu.dot_dimension_numbers<[1], [0], [0], [1], [0, 0, 1, 1], [], []>} : vector<512x27xbf16>, vector<27x16xbf16>, vector<512x16xf32> -> vector<512x16xf32>
    %cst_60 = arith.constant dense<0.000000e+00> : vector<16xf32>
    %43 = vector.multi_reduction <add>, %42, %cst_60 [0] : vector<512x16xf32> to vector<16xf32>
    %44 = vector.shape_cast %43 : vector<16xf32> to vector<1x16xf32>
    %cst_61 = arith.constant 5.120000e+02 : f32
    %45 = vector.broadcast %cst_61 : f32 to vector<1x16xf32>
    %46 = arith.divf %44, %45 : vector<1x16xf32>
    %47 = arith.mulf %42, %42 : vector<512x16xf32>
    %cst_62 = arith.constant dense<0.000000e+00> : vector<16xf32>
    %48 = vector.multi_reduction <add>, %47, %cst_62 [0] : vector<512x16xf32> to vector<16xf32>
    %49 = vector.shape_cast %48 : vector<16xf32> to vector<1x16xf32>
    %cst_63 = arith.constant 5.120000e+02 : f32
    %50 = vector.broadcast %cst_63 : f32 to vector<1x16xf32>
    %51 = arith.divf %49, %50 : vector<1x16xf32>
    %52 = arith.mulf %46, %46 : vector<1x16xf32>
    %53 = arith.subf %51, %52 : vector<1x16xf32>
    %cst_64 = arith.constant 0.000000e+00 : f32
    %54 = vector.broadcast %cst_64 : f32 to vector<1x16xf32>
    %55 = arith.maximumf %53, %54 : vector<1x16xf32>
    %56 = vector.broadcast %46 : vector<1x16xf32> to vector<512x16xf32>
    %57 = arith.subf %42, %56 : vector<512x16xf32>
    %cst_65 = arith.constant 9.99999974E-6 : f32
    %58 = vector.broadcast %cst_65 : f32 to vector<1x16xf32>
    %59 = arith.addf %55, %58 : vector<1x16xf32>
    %60 = math.rsqrt %59 : vector<1x16xf32>
    %61 = vector.broadcast %60 : vector<1x16xf32> to vector<512x16xf32>
    %62 = arith.mulf %57, %61 : vector<512x16xf32>
    %cst_66 = arith.constant 0.000000e+00 : f32
    %63 = vector.broadcast %cst_66 : f32 to vector<512x16xf32>
    %64 = arith.maximumf %62, %63 : vector<512x16xf32>
    %65 = vector.shape_cast %64 : vector<512x16xf32> to vector<2x16x16x16xf32>
    %66 = arith.truncf %65 : vector<2x16x16x16xf32> to vector<2x16x16x16xbf16>
    %c0_67 = arith.constant 0 : index
    %c0_68 = arith.constant 0 : index
    %c0_69 = arith.constant 0 : index
    %c0_70 = arith.constant 0 : index
    %67 = vector.load %arg2[%c0_67, %c0_68, %c0_69, %c0_70] : memref<2x16x16x16xbf16, #tpu.memory_space<vmem>>, vector<2x16x16x16xbf16>
    tpu.vector_store %arg2[%c0_67, %c0_68, %c0_69, %c0_70], %66 {strides = array<i32>} : memref<2x16x16x16xbf16, #tpu.memory_space<vmem>>, vector<2x16x16x16xbf16>,
    return
  }
}

</mosaic_0001>

<llo_original>
// kernel: tpu_custom_call.1
$region0: #{tpu_custom_call.1}
  #allocation0 [shape = 'u32[]', space=smem, size = 0x4, offset = 0x4, fixed_abs, tag = 'smem constant byte address 0x4 - core index']
  #allocation1 [shape = 'u32[144,128]{1,0:T(1,128)}', space=vmem, size = 0x12000, scoped, tag = 'internal scratch']
  #allocation2 [shape = 'f32[2,18,18,3]{3,2,1,0:T(8,128)}', space=vmem, size = 0x6c000, scoped, tag = 'scratch operand']
  #allocation3 [shape = 'bf16[512,27]{1,0:T(8,128)(2,1)}', space=vmem, size = 0x20000, scoped, tag = 'scratch operand']
  %s0 = inlined_call_operand.vmem [shape: f32[2,16,16,3], index: 0, kind: input, shape index: {}]
  %s1 = inlined_call_operand.vmem [shape: bf16[27,16], index: 1, kind: input, shape index: {}]
  %s2 = inlined_call_operand.hbm [shape: bf16[2,16,16,16], index: 2, kind: output, shape index: {}]
  %s3 = sld [smem:[#allocation0]]
  $region18: #{tpu_custom_call.1} parent=0
    _
  %s5 = ssub.s32 1, %s3
  %s6 = scalar_select 0, %s5, %s3
  $region1: #{tpu_custom_call.1} parent=0
    #allocation4 [shape = 'u8[131072]{0}', space=vmem, size = 0x20000, scoped, tag = 'output window, operand 0, single buffered']
    #allocation5 [shape = 's32[1]{0}', space=sflag, size = 0x4, scoped, tag = 'scoped memory for tpu_custom_call.1']
    %7 = vsyncpa [#allocation5], 0
    // Predicated region
    $region2: #{tpu_custom_call.1} parent=1 // pred_check
      _
    $region3: #{tpu_custom_call.1} parent=1 // pred_check_branch
      %9 = sbr.rel (0) target = $region5
    $region4: #{tpu_custom_call.1} parent=1 // pred_region
      _
    $region5: #{tpu_custom_call.1} parent=1 // pred_fallthru
      _
    // Predicated region
    $region6: #{tpu_custom_call.1} parent=1 // pred_check
      _
    $region7: #{tpu_custom_call.1} parent=1 // pred_check_branch
      %11 = sbr.rel (0) target = $region9
    $region8: #{tpu_custom_call.1} parent=1 // pred_region
      _
    $region9: #{tpu_custom_call.1} parent=1 // pred_fallthru
      _
    %vm13 = vcmask 23552
    %14 = vst.msk [vmem:[#allocation2] sm:$0xff] %vm13, 0.0
    %15 = vst.msk [vmem:[#allocation2 + $0x8] sm:$0xff] %vm13, 0.0
    %vm16 = vcmask 17408
    %17 = vst.msk [vmem:[#allocation2 + $0x10] sm:$0x3] %vm16, 0.0
    %18 = vst.msk [vmem:[#allocation2 + $0x18] sm:$0xff] %vm13, 0.0
    %19 = vst.msk [vmem:[#allocation2 + $0x20] sm:$0xff] %vm13, 0.0
    %20 = vst.msk [vmem:[#allocation2 + $0x28] sm:$0x3] %vm16, 0.0
    %21 = vst.msk [vmem:[#allocation2 + $0x30] sm:$0xff] %vm13, 0.0
    %22 = vst.msk [vmem:[#allocation2 + $0x38] sm:$0xff] %vm13, 0.0
    %23 = vst.msk [vmem:[#allocation2 + $0x40] sm:$0x3] %vm16, 0.0
    %24 = vst.msk [vmem:[#allocation2 + $0x48] sm:$0xff] %vm13, 0.0
    %25 = vst.msk [vmem:[#allocation2 + $0x50] sm:$0xff] %vm13, 0.0
    %26 = vst.msk [vmem:[#allocation2 + $0x58] sm:$0x3] %vm16, 0.0
    %27 = vst.msk [vmem:[#allocation2 + $0x60] sm:$0xff] %vm13, 0.0
    %28 = vst.msk [vmem:[#allocation2 + $0x68] sm:$0xff] %vm13, 0.0
    %29 = vst.msk [vmem:[#allocation2 + $0x70] sm:$0x3] %vm16, 0.0
    %30 = vst.msk [vmem:[#allocation2 + $0x78] sm:$0xff] %vm13, 0.0
    %31 = vst.msk [vmem:[#allocation2 + $0x80] sm:$0xff] %vm13, 0.0
    %32 = vst.msk [vmem:[#allocation2 + $0x88] sm:$0x3] %vm16, 0.0
    %33 = vst.msk [vmem:[#allocation2 + $0x90] sm:$0xff] %vm13, 0.0
    %34 = vst.msk [vmem:[#allocation2 + $0x98] sm:$0xff] %vm13, 0.0
    %35 = vst.msk [vmem:[#allocation2 + $0xa0] sm:$0x3] %vm16, 0.0
    %36 = vst.msk [vmem:[#allocation2 + $0xa8] sm:$0xff] %vm13, 0.0
    %37 = vst.msk [vmem:[#allocation2 + $0xb0] sm:$0xff] %vm13, 0.0
    %38 = vst.msk [vmem:[#allocation2 + $0xb8] sm:$0x3] %vm16, 0.0
    %39 = vst.msk [vmem:[#allocation2 + $0xc0] sm:$0xff] %vm13, 0.0
    %40 = vst.msk [vmem:[#allocation2 + $0xc8] sm:$0xff] %vm13, 0.0
    %41 = vst.msk [vmem:[#allocation2 + $0xd0] sm:$0x3] %vm16, 0.0
    %42 = vst.msk [vmem:[#allocation2 + $0xd8] sm:$0xff] %vm13, 0.0
    %43 = vst.msk [vmem:[#allocation2 + $0xe0] sm:$0xff] %vm13, 0.0
    %44 = vst.msk [vmem:[#allocation2 + $0xe8] sm:$0x3] %vm16, 0.0
    %45 = vst.msk [vmem:[#allocation2 + $0xf0] sm:$0xff] %vm13, 0.0
    %46 = vst.msk [vmem:[#allocation2 + $0xf8] sm:$0xff] %vm13, 0.0
    %47 = vst.msk [vmem:[#allocation2 + $0x100] sm:$0x3] %vm16, 0.0
    %48 = vst.msk [vmem:[#allocation2 + $0x108] sm:$0xff] %vm13, 0.0
    %49 = vst.msk [vmem:[#allocation2 + $0x110] sm:$0xff] %vm13, 0.0
    %50 = vst.msk [vmem:[#allocation2 + $0x118] sm:$0x3] %vm16, 0.0
    %51 = vst.msk [vmem:[#allocation2 + $0x120] sm:$0xff] %vm13, 0.0
    %52 = vst.msk [vmem:[#allocation2 + $0x128] sm:$0xff] %vm13, 0.0
    %53 = vst.msk [vmem:[#allocation2 + $0x130] sm:$0x3] %vm16, 0.0
    %54 = vst.msk [vmem:[#allocation2 + $0x138] sm:$0xff] %vm13, 0.0
    %55 = vst.msk [vmem:[#allocation2 + $0x140] sm:$0xff] %vm13, 0.0
    %56 = vst.msk [vmem:[#allocation2 + $0x148] sm:$0x3] %vm16, 0.0
    %57 = vst.msk [vmem:[#allocation2 + $0x150] sm:$0xff] %vm13, 0.0
    %58 = vst.msk [vmem:[#allocation2 + $0x158] sm:$0xff] %vm13, 0.0
    %59 = vst.msk [vmem:[#allocation2 + $0x160] sm:$0x3] %vm16, 0.0
    %60 = vst.msk [vmem:[#allocation2 + $0x168] sm:$0xff] %vm13, 0.0
    %61 = vst.msk [vmem:[#allocation2 + $0x170] sm:$0xff] %vm13, 0.0
    %62 = vst.msk [vmem:[#allocation2 + $0x178] sm:$0x3] %vm16, 0.0
    %63 = vst.msk [vmem:[#allocation2 + $0x180] sm:$0xff] %vm13, 0.0
    %64 = vst.msk [vmem:[#allocation2 + $0x188] sm:$0xff] %vm13, 0.0
    %65 = vst.msk [vmem:[#allocation2 + $0x190] sm:$0x3] %vm16, 0.0
    %66 = vst.msk [vmem:[#allocation2 + $0x198] sm:$0xff] %vm13, 0.0
    %67 = vst.msk [vmem:[#allocation2 + $0x1a0] sm:$0xff] %vm13, 0.0
    %68 = vst.msk [vmem:[#allocation2 + $0x1a8] sm:$0x3] %vm16, 0.0
    %69 = vst.msk [vmem:[#allocation2 + $0x1b0] sm:$0xff] %vm13, 0.0
    %70 = vst.msk [vmem:[#allocation2 + $0x1b8] sm:$0xff] %vm13, 0.0
    %71 = vst.msk [vmem:[#allocation2 + $0x1c0] sm:$0x3] %vm16, 0.0
    %72 = vst.msk [vmem:[#allocation2 + $0x1c8] sm:$0xff] %vm13, 0.0
    %73 = vst.msk [vmem:[#allocation2 + $0x1d0] sm:$0xff] %vm13, 0.0
    %74 = vst.msk [vmem:[#allocation2 + $0x1d8] sm:$0x3] %vm16, 0.0
    %75 = vst.msk [vmem:[#allocation2 + $0x1e0] sm:$0xff] %vm13, 0.0
    %76 = vst.msk [vmem:[#allocation2 + $0x1e8] sm:$0xff] %vm13, 0.0
    %77 = vst.msk [vmem:[#allocation2 + $0x1f0] sm:$0x3] %vm16, 0.0
    %78 = vst.msk [vmem:[#allocation2 + $0x1f8] sm:$0xff] %vm13, 0.0
    %79 = vst.msk [vmem:[#allocation2 + $0x200] sm:$0xff] %vm13, 0.0
    %80 = vst.msk [vmem:[#allocation2 + $0x208] sm:$0x3] %vm16, 0.0
    %81 = vst.msk [vmem:[#allocation2 + $0x210] sm:$0xff] %vm13, 0.0
    %82 = vst.msk [vmem:[#allocation2 + $0x218] sm:$0xff] %vm13, 0.0
    %83 = vst.msk [vmem:[#allocation2 + $0x220] sm:$0x3] %vm16, 0.0
    %84 = vst.msk [vmem:[#allocation2 + $0x228] sm:$0xff] %vm13, 0.0
    %85 = vst.msk [vmem:[#allocation2 + $0x230] sm:$0xff] %vm13, 0.0
    %86 = vst.msk [vmem:[#allocation2 + $0x238] sm:$0x3] %vm16, 0.0
    %87 = vst.msk [vmem:[#allocation2 + $0x240] sm:$0xff] %vm13, 0.0
    %88 = vst.msk [vmem:[#allocation2 + $0x248] sm:$0xff] %vm13, 0.0
    %89 = vst.msk [vmem:[#allocation2 + $0x250] sm:$0x3] %vm16, 0.0
    %90 = vst.msk [vmem:[#allocation2 + $0x258] sm:$0xff] %vm13, 0.0
    %91 = vst.msk [vmem:[#allocation2 + $0x260] sm:$0xff] %vm13, 0.0
    %92 = vst.msk [vmem:[#allocation2 + $0x268] sm:$0x3] %vm16, 0.0
    %93 = vst.msk [vmem:[#allocation2 + $0x270] sm:$0xff] %vm13, 0.0
    %94 = vst.msk [vmem:[#allocation2 + $0x278] sm:$0xff] %vm13, 0.0
    %95 = vst.msk [vmem:[#allocation2 + $0x280] sm:$0x3] %vm16, 0.0
    %96 = vst.msk [vmem:[#allocation2 + $0x288] sm:$0xff] %vm13, 0.0
    %97 = vst.msk [vmem:[#allocation2 + $0x290] sm:$0xff] %vm13, 0.0
    %98 = vst.msk [vmem:[#allocation2 + $0x298] sm:$0x3] %vm16, 0.0
    %99 = vst.msk [vmem:[#allocation2 + $0x2a0] sm:$0xff] %vm13, 0.0
    %100 = vst.msk [vmem:[#allocation2 + $0x2a8] sm:$0xff] %vm13, 0.0
    %101 = vst.msk [vmem:[#allocation2 + $0x2b0] sm:$0x3] %vm16, 0.0
    %102 = vst.msk [vmem:[#allocation2 + $0x2b8] sm:$0xff] %vm13, 0.0
    %103 = vst.msk [vmem:[#allocation2 + $0x2c0] sm:$0xff] %vm13, 0.0
    %104 = vst.msk [vmem:[#allocation2 + $0x2c8] sm:$0x3] %vm16, 0.0
    %105 = vst.msk [vmem:[#allocation2 + $0x2d0] sm:$0xff] %vm13, 0.0
    %106 = vst.msk [vmem:[#allocation2 + $0x2d8] sm:$0xff] %vm13, 0.0
    %107 = vst.msk [vmem:[#allocation2 + $0x2e0] sm:$0x3] %vm16, 0.0
    %108 = vst.msk [vmem:[#allocation2 + $0x2e8] sm:$0xff] %vm13, 0.0
    %109 = vst.msk [vmem:[#allocation2 + $0x2f0] sm:$0xff] %vm13, 0.0
    %110 = vst.msk [vmem:[#allocation2 + $0x2f8] sm:$0x3] %vm16, 0.0
    %111 = vst.msk [vmem:[#allocation2 + $0x300] sm:$0xff] %vm13, 0.0
    %112 = vst.msk [vmem:[#allocation2 + $0x308] sm:$0xff] %vm13, 0.0
    %113 = vst.msk [vmem:[#allocation2 + $0x310] sm:$0x3] %vm16, 0.0
    %114 = vst.msk [vmem:[#allocation2 + $0x318] sm:$0xff] %vm13, 0.0
    %115 = vst.msk [vmem:[#allocation2 + $0x320] sm:$0xff] %vm13, 0.0
    %116 = vst.msk [vmem:[#allocation2 + $0x328] sm:$0x3] %vm16, 0.0
    %117 = vst.msk [vmem:[#allocation2 + $0x330] sm:$0xff] %vm13, 0.0
    %118 = vst.msk [vmem:[#allocation2 + $0x338] sm:$0xff] %vm13, 0.0
    %119 = vst.msk [vmem:[#allocation2 + $0x340] sm:$0x3] %vm16, 0.0
    %120 = vst.msk [vmem:[#allocation2 + $0x348] sm:$0xff] %vm13, 0.0
    %121 = vst.msk [vmem:[#allocation2 + $0x350] sm:$0xff] %vm13, 0.0
    %122 = vst.msk [vmem:[#allocation2 + $0x358] sm:$0x3] %vm16, 0.0
    %v123 = vld [vmem:[%s0] sm:$0xff]
    %v124 = vld [vmem:[%s0 + $0x8] sm:$0xff]
    %v125 = vld [vmem:[%s0 + $0x10] sm:$0xff]
    %v126 = vld [vmem:[%s0 + $0x18] sm:$0xff]
    %v127 = vld [vmem:[%s0 + $0x20] sm:$0xff]
    %v128 = vld [vmem:[%s0 + $0x28] sm:$0xff]
    %v129 = vld [vmem:[%s0 + $0x30] sm:$0xff]
    %v130 = vld [vmem:[%s0 + $0x38] sm:$0xff]
    %v131 = vld [vmem:[%s0 + $0x40] sm:$0xff]
    %v132 = vld [vmem:[%s0 + $0x48] sm:$0xff]
    %v133 = vld [vmem:[%s0 + $0x50] sm:$0xff]
    %v134 = vld [vmem:[%s0 + $0x58] sm:$0xff]
    %v135 = vld [vmem:[%s0 + $0x60] sm:$0xff]
    %v136 = vld [vmem:[%s0 + $0x68] sm:$0xff]
    %v137 = vld [vmem:[%s0 + $0x70] sm:$0xff]
    %v138 = vld [vmem:[%s0 + $0x78] sm:$0xff]
    %v139 = vld [vmem:[%s0 + $0x80] sm:$0xff]
    %v140 = vld [vmem:[%s0 + $0x88] sm:$0xff]
    %v141 = vld [vmem:[%s0 + $0x90] sm:$0xff]
    %v142 = vld [vmem:[%s0 + $0x98] sm:$0xff]
    %v143 = vld [vmem:[%s0 + $0xa0] sm:$0xff]
    %v144 = vld [vmem:[%s0 + $0xa8] sm:$0xff]
    %v145 = vld [vmem:[%s0 + $0xb0] sm:$0xff]
    %v146 = vld [vmem:[%s0 + $0xb8] sm:$0xff]
    %v147 = vld [vmem:[%s0 + $0xc0] sm:$0xff]
    %v148 = vld [vmem:[%s0 + $0xc8] sm:$0xff]
    %v149 = vld [vmem:[%s0 + $0xd0] sm:$0xff]
    %v150 = vld [vmem:[%s0 + $0xd8] sm:$0xff]
    %v151 = vld [vmem:[%s0 + $0xe0] sm:$0xff]
    %v152 = vld [vmem:[%s0 + $0xe8] sm:$0xff]
    %v153 = vld [vmem:[%s0 + $0xf0] sm:$0xff]
    %v154 = vld [vmem:[%s0 + $0xf8] sm:$0xff]
    %v155 = vld [vmem:[%s0 + $0x100] sm:$0xff]
    %v156 = vld [vmem:[%s0 + $0x108] sm:$0xff]
    %v157 = vld [vmem:[%s0 + $0x110] sm:$0xff]
    %v158 = vld [vmem:[%s0 + $0x118] sm:$0xff]
    %v159 = vld [vmem:[%s0 + $0x120] sm:$0xff]
    %v160 = vld [vmem:[%s0 + $0x128] sm:$0xff]
    %v161 = vld [vmem:[%s0 + $0x130] sm:$0xff]
    %v162 = vld [vmem:[%s0 + $0x138] sm:$0xff]
    %v163 = vld [vmem:[%s0 + $0x140] sm:$0xff]
    %v164 = vld [vmem:[%s0 + $0x148] sm:$0xff]
    %v165 = vld [vmem:[%s0 + $0x150] sm:$0xff]
    %v166 = vld [vmem:[%s0 + $0x158] sm:$0xff]
    %v167 = vld [vmem:[%s0 + $0x160] sm:$0xff]
    %v168 = vld [vmem:[%s0 + $0x168] sm:$0xff]
    %v169 = vld [vmem:[%s0 + $0x170] sm:$0xff]
    %v170 = vld [vmem:[%s0 + $0x178] sm:$0xff]
    %v171 = vld [vmem:[%s0 + $0x180] sm:$0xff]
    %v172 = vld [vmem:[%s0 + $0x188] sm:$0xff]
    %v173 = vld [vmem:[%s0 + $0x190] sm:$0xff]
    %v174 = vld [vmem:[%s0 + $0x198] sm:$0xff]
    %v175 = vld [vmem:[%s0 + $0x1a0] sm:$0xff]
    %v176 = vld [vmem:[%s0 + $0x1a8] sm:$0xff]
    %v177 = vld [vmem:[%s0 + $0x1b0] sm:$0xff]
    %v178 = vld [vmem:[%s0 + $0x1b8] sm:$0xff]
    %v179 = vld [vmem:[%s0 + $0x1c0] sm:$0xff]
    %v180 = vld [vmem:[%s0 + $0x1c8] sm:$0xff]
    %v181 = vld [vmem:[%s0 + $0x1d0] sm:$0xff]
    %v182 = vld [vmem:[%s0 + $0x1d8] sm:$0xff]
    %v183 = vld [vmem:[%s0 + $0x1e0] sm:$0xff]
    %v184 = vld [vmem:[%s0 + $0x1e8] sm:$0xff]
    %v185 = vld [vmem:[%s0 + $0x1f0] sm:$0xff]
    %v186 = vld [vmem:[%s0 + $0x1f8] sm:$0xff]
    %s187 = scalar_lea.vmem [#allocation2], 24
    %188 = vst.msk [vmem:[%s187 + $0x1] sm:$0xff] %vm13, %v123
    %189 = vst.msk [vmem:[%s187 + $0x9] sm:$0xff] %vm13, %v124
    %190 = vst.msk [vmem:[%s187 + $0x19] sm:$0xff] %vm13, %v125
    %191 = vst.msk [vmem:[%s187 + $0x21] sm:$0xff] %vm13, %v126
    %192 = vst.msk [vmem:[%s187 + $0x31] sm:$0xff] %vm13, %v127
    %193 = vst.msk [vmem:[%s187 + $0x39] sm:$0xff] %vm13, %v128
    %194 = vst.msk [vmem:[%s187 + $0x49] sm:$0xff] %vm13, %v129
    %195 = vst.msk [vmem:[%s187 + $0x51] sm:$0xff] %vm13, %v130
    %196 = vst.msk [vmem:[%s187 + $0x61] sm:$0xff] %vm13, %v131
    %197 = vst.msk [vmem:[%s187 + $0x69] sm:$0xff] %vm13, %v132
    %198 = vst.msk [vmem:[%s187 + $0x79] sm:$0xff] %vm13, %v133
    %199 = vst.msk [vmem:[%s187 + $0x81] sm:$0xff] %vm13, %v134
    %200 = vst.msk [vmem:[%s187 + $0x91] sm:$0xff] %vm13, %v135
    %201 = vst.msk [vmem:[%s187 + $0x99] sm:$0xff] %vm13, %v136
    %202 = vst.msk [vmem:[%s187 + $0xa9] sm:$0xff] %vm13, %v137
    %203 = vst.msk [vmem:[%s187 + $0xb1] sm:$0xff] %vm13, %v138
    %204 = vst.msk [vmem:[%s187 + $0xc1] sm:$0xff] %vm13, %v139
    %205 = vst.msk [vmem:[%s187 + $0xc9] sm:$0xff] %vm13, %v140
    %206 = vst.msk [vmem:[%s187 + $0xd9] sm:$0xff] %vm13, %v141
    %207 = vst.msk [vmem:[%s187 + $0xe1] sm:$0xff] %vm13, %v142
    %208 = vst.msk [vmem:[%s187 + $0xf1] sm:$0xff] %vm13, %v143
    %209 = vst.msk [vmem:[%s187 + $0xf9] sm:$0xff] %vm13, %v144
    %210 = vst.msk [vmem:[%s187 + $0x109] sm:$0xff] %vm13, %v145
    %211 = vst.msk [vmem:[%s187 + $0x111] sm:$0xff] %vm13, %v146
    %212 = vst.msk [vmem:[%s187 + $0x121] sm:$0xff] %vm13, %v147
    %213 = vst.msk [vmem:[%s187 + $0x129] sm:$0xff] %vm13, %v148
    %214 = vst.msk [vmem:[%s187 + $0x139] sm:$0xff] %vm13, %v149
    %215 = vst.msk [vmem:[%s187 + $0x141] sm:$0xff] %vm13, %v150
    %216 = vst.msk [vmem:[%s187 + $0x151] sm:$0xff] %vm13, %v151
    %217 = vst.msk [vmem:[%s187 + $0x159] sm:$0xff] %vm13, %v152
    %218 = vst.msk [vmem:[%s187 + $0x169] sm:$0xff] %vm13, %v153
    %219 = vst.msk [vmem:[%s187 + $0x171] sm:$0xff] %vm13, %v154
    %220 = vst.msk [vmem:[%s187 + $0x1b1] sm:$0xff] %vm13, %v155
    %221 = vst.msk [vmem:[%s187 + $0x1b9] sm:$0xff] %vm13, %v156
    %222 = vst.msk [vmem:[%s187 + $0x1c9] sm:$0xff] %vm13, %v157
    %223 = vst.msk [vmem:[%s187 + $0x1d1] sm:$0xff] %vm13, %v158
    %224 = vst.msk [vmem:[%s187 + $0x1e1] sm:$0xff] %vm13, %v159
    %225 = vst.msk [vmem:[%s187 + $0x1e9] sm:$0xff] %vm13, %v160
    %226 = vst.msk [vmem:[%s187 + $0x1f9] sm:$0xff] %vm13, %v161
    %227 = vst.msk [vmem:[%s187 + $0x201] sm:$0xff] %vm13, %v162
    %228 = vst.msk [vmem:[%s187 + $0x211] sm:$0xff] %vm13, %v163
    %229 = vst.msk [vmem:[%s187 + $0x219] sm:$0xff] %vm13, %v164
    %230 = vst.msk [vmem:[%s187 + $0x229] sm:$0xff] %vm13, %v165
    %231 = vst.msk [vmem:[%s187 + $0x231] sm:$0xff] %vm13, %v166
    %232 = vst.msk [vmem:[%s187 + $0x241] sm:$0xff] %vm13, %v167
    %233 = vst.msk [vmem:[%s187 + $0x249] sm:$0xff] %vm13, %v168
    %234 = vst.msk [vmem:[%s187 + $0x259] sm:$0xff] %vm13, %v169
    %235 = vst.msk [vmem:[%s187 + $0x261] sm:$0xff] %vm13, %v170
    %236 = vst.msk [vmem:[%s187 + $0x271] sm:$0xff] %vm13, %v171
    %237 = vst.msk [vmem:[%s187 + $0x279] sm:$0xff] %vm13, %v172
    %238 = vst.msk [vmem:[%s187 + $0x289] sm:$0xff] %vm13, %v173
    %239 = vst.msk [vmem:[%s187 + $0x291] sm:$0xff] %vm13, %v174
    %240 = vst.msk [vmem:[%s187 + $0x2a1] sm:$0xff] %vm13, %v175
    %241 = vst.msk [vmem:[%s187 + $0x2a9] sm:$0xff] %vm13, %v176
    %242 = vst.msk [vmem:[%s187 + $0x2b9] sm:$0xff] %vm13, %v177
    %243 = vst.msk [vmem:[%s187 + $0x2c1] sm:$0xff] %vm13, %v178
    %244 = vst.msk [vmem:[%s187 + $0x2d1] sm:$0xff] %vm13, %v179
    %245 = vst.msk [vmem:[%s187 + $0x2d9] sm:$0xff] %vm13, %v180
    %246 = vst.msk [vmem:[%s187 + $0x2e9] sm:$0xff] %vm13, %v181
    %247 = vst.msk [vmem:[%s187 + $0x2f1] sm:$0xff] %vm13, %v182
    %248 = vst.msk [vmem:[%s187 + $0x301] sm:$0xff] %vm13, %v183
    %249 = vst.msk [vmem:[%s187 + $0x309] sm:$0xff] %vm13, %v184
    %250 = vst.msk [vmem:[%s187 + $0x319] sm:$0xff] %vm13, %v185
    %251 = vst.msk [vmem:[%s187 + $0x321] sm:$0xff] %vm13, %v186
    %v252 = vld [vmem:[#allocation2] sm:$0xff]
    %v253 = vld [vmem:[#allocation2 + $0x8] sm:$0xff]
    %v254 = vld [vmem:[#allocation2 + $0x18] sm:$0xff]
    %v255 = vld [vmem:[#allocation2 + $0x20] sm:$0xff]
    %v256 = vld [vmem:[#allocation2 + $0x30] sm:$0xff]
    %v257 = vld [vmem:[#allocation2 + $0x38] sm:$0xff]
    %v258 = vld [vmem:[#allocation2 + $0x48] sm:$0xff]
    %v259 = vld [vmem:[#allocation2 + $0x50] sm:$0xff]
    %v260 = vld [vmem:[#allocation2 + $0x60] sm:$0xff]
    %v261 = vld [vmem:[#allocation2 + $0x68] sm:$0xff]
    %v262 = vld [vmem:[#allocation2 + $0x78] sm:$0xff]
    %v263 = vld [vmem:[#allocation2 + $0x80] sm:$0xff]
    %v264 = vld [vmem:[#allocation2 + $0x90] sm:$0xff]
    %v265 = vld [vmem:[#allocation2 + $0x98] sm:$0xff]
    %v266 = vld [vmem:[#allocation2 + $0xa8] sm:$0xff]
    %v267 = vld [vmem:[#allocation2 + $0xb0] sm:$0xff]
    %v268 = vld [vmem:[#allocation2 + $0xc0] sm:$0xff]
    %v269 = vld [vmem:[#allocation2 + $0xc8] sm:$0xff]
    %v270 = vld [vmem:[#allocation2 + $0xd8] sm:$0xff]
    %v271 = vld [vmem:[#allocation2 + $0xe0] sm:$0xff]
    %v272 = vld [vmem:[#allocation2 + $0xf0] sm:$0xff]
    %v273 = vld [vmem:[#allocation2 + $0xf8] sm:$0xff]
    %v274 = vld [vmem:[#allocation2 + $0x108] sm:$0xff]
    %v275 = vld [vmem:[#allocation2 + $0x110] sm:$0xff]
    %v276 = vld [vmem:[#allocation2 + $0x120] sm:$0xff]
    %v277 = vld [vmem:[#allocation2 + $0x128] sm:$0xff]
    %v278 = vld [vmem:[#allocation2 + $0x138] sm:$0xff]
    %v279 = vld [vmem:[#allocation2 + $0x140] sm:$0xff]
    %v280 = vld [vmem:[#allocation2 + $0x150] sm:$0xff]
    %v281 = vld [vmem:[#allocation2 + $0x158] sm:$0xff]
    %v282 = vld [vmem:[#allocation2 + $0x168] sm:$0xff]
    %v283 = vld [vmem:[#allocation2 + $0x170] sm:$0xff]
    %v284 = vld [vmem:[#allocation2 + $0x1b0] sm:$0xff]
    %v285 = vld [vmem:[#allocation2 + $0x1b8] sm:$0xff]
    %v286 = vld [vmem:[#allocation2 + $0x1c8] sm:$0xff]
    %v287 = vld [vmem:[#allocation2 + $0x1d0] sm:$0xff]
    %v288 = vld [vmem:[#allocation2 + $0x1e0] sm:$0xff]
    %v289 = vld [vmem:[#allocation2 + $0x1e8] sm:$0xff]
    %v290 = vld [vmem:[#allocation2 + $0x1f8] sm:$0xff]
    %v291 = vld [vmem:[#allocation2 + $0x200] sm:$0xff]
    %v292 = vld [vmem:[#allocation2 + $0x210] sm:$0xff]
    %v293 = vld [vmem:[#allocation2 + $0x218] sm:$0xff]
    %v294 = vld [vmem:[#allocation2 + $0x228] sm:$0xff]
    %v295 = vld [vmem:[#allocation2 + $0x230] sm:$0xff]
    %v296 = vld [vmem:[#allocation2 + $0x240] sm:$0xff]
    %v297 = vld [vmem:[#allocation2 + $0x248] sm:$0xff]
    %v298 = vld [vmem:[#allocation2 + $0x258] sm:$0xff]
    %v299 = vld [vmem:[#allocation2 + $0x260] sm:$0xff]
    %v300 = vld [vmem:[#allocation2 + $0x270] sm:$0xff]
    %v301 = vld [vmem:[#allocation2 + $0x278] sm:$0xff]
    %v302 = vld [vmem:[#allocation2 + $0x288] sm:$0xff]
    %v303 = vld [vmem:[#allocation2 + $0x290] sm:$0xff]
    %v304 = vld [vmem:[#allocation2 + $0x2a0] sm:$0xff]
    %v305 = vld [vmem:[#allocation2 + $0x2a8] sm:$0xff]
    %v306 = vld [vmem:[#allocation2 + $0x2b8] sm:$0xff]
    %v307 = vld [vmem:[#allocation2 + $0x2c0] sm:$0xff]
    %v308 = vld [vmem:[#allocation2 + $0x2d0] sm:$0xff]
    %v309 = vld [vmem:[#allocation2 + $0x2d8] sm:$0xff]
    %v310 = vld [vmem:[#allocation2 + $0x2e8] sm:$0xff]
    %v311 = vld [vmem:[#allocation2 + $0x2f0] sm:$0xff]
    %v312 = vld [vmem:[#allocation2 + $0x300] sm:$0xff]
    %v313 = vld [vmem:[#allocation2 + $0x308] sm:$0xff]
    %v314 = vld [vmem:[#allocation2 + $0x318] sm:$0xff]
    %v315 = vld [vmem:[#allocation2 + $0x320] sm:$0xff]
    %v316 = vpack.c.bf16 %v253, %v252
    %v317 = vpack.c.bf16 %v255, %v254
    %v318 = vpack.c.bf16 %v257, %v256
    %v319 = vpack.c.bf16 %v259, %v258
    %v320 = vpack.c.bf16 %v261, %v260
    %v321 = vpack.c.bf16 %v263, %v262
    %v322 = vpack.c.bf16 %v265, %v264
    %v323 = vpack.c.bf16 %v267, %v266
    %v324 = vpack.c.bf16 %v269, %v268
    %v325 = vpack.c.bf16 %v271, %v270
    %v326 = vpack.c.bf16 %v273, %v272
    %v327 = vpack.c.bf16 %v275, %v274
    %v328 = vpack.c.bf16 %v277, %v276
    %v329 = vpack.c.bf16 %v279, %v278
    %v330 = vpack.c.bf16 %v281, %v280
    %v331 = vpack.c.bf16 %v283, %v282
    %v332 = vpack.c.bf16 %v285, %v284
    %v333 = vpack.c.bf16 %v287, %v286
    %v334 = vpack.c.bf16 %v289, %v288
    %v335 = vpack.c.bf16 %v291, %v290
    %v336 = vpack.c.bf16 %v293, %v292
    %v337 = vpack.c.bf16 %v295, %v294
    %v338 = vpack.c.bf16 %v297, %v296
    %v339 = vpack.c.bf16 %v299, %v298
    %v340 = vpack.c.bf16 %v301, %v300
    %v341 = vpack.c.bf16 %v303, %v302
    %v342 = vpack.c.bf16 %v305, %v304
    %v343 = vpack.c.bf16 %v307, %v306
    %v344 = vpack.c.bf16 %v309, %v308
    %v345 = vpack.c.bf16 %v311, %v310
    %v346 = vpack.c.bf16 %v313, %v312
    %v347 = vpack.c.bf16 %v315, %v314
    %v380 = vunpack.c.l.b16 %v316
    %v381 = vunpack.c.h.b16 %v316
    %v382 = vunpack.c.l.b16 %v317
    %v383 = vunpack.c.h.b16 %v317
    %v384 = vunpack.c.l.b16 %v318
    %v385 = vunpack.c.h.b16 %v318
    %v386 = vunpack.c.l.b16 %v319
    %v387 = vunpack.c.h.b16 %v319
    %v388 = vunpack.c.l.b16 %v320
    %v389 = vunpack.c.h.b16 %v320
    %v390 = vunpack.c.l.b16 %v321
    %v391 = vunpack.c.h.b16 %v321
    %v392 = vunpack.c.l.b16 %v322
    %v393 = vunpack.c.h.b16 %v322
    %v394 = vunpack.c.l.b16 %v323
    %v395 = vunpack.c.h.b16 %v323
    %v396 = vunpack.c.l.b16 %v324
    %v397 = vunpack.c.h.b16 %v324
    %v398 = vunpack.c.l.b16 %v325
    %v399 = vunpack.c.h.b16 %v325
    %v400 = vunpack.c.l.b16 %v326
    %v401 = vunpack.c.h.b16 %v326
    %v402 = vunpack.c.l.b16 %v327
    %v403 = vunpack.c.h.b16 %v327
    %v404 = vunpack.c.l.b16 %v328
    %v405 = vunpack.c.h.b16 %v328
    %v406 = vunpack.c.l.b16 %v329
    %v407 = vunpack.c.h.b16 %v329
    %v408 = vunpack.c.l.b16 %v330
    %v409 = vunpack.c.h.b16 %v330
    %v410 = vunpack.c.l.b16 %v331
    %v411 = vunpack.c.h.b16 %v331
    %v412 = vunpack.c.l.b16 %v332
    %v413 = vunpack.c.h.b16 %v332
    %v414 = vunpack.c.l.b16 %v333
    %v415 = vunpack.c.h.b16 %v333
    %v416 = vunpack.c.l.b16 %v334
    %v417 = vunpack.c.h.b16 %v334
    %v418 = vunpack.c.l.b16 %v335
    %v419 = vunpack.c.h.b16 %v335
    %v420 = vunpack.c.l.b16 %v336
    %v421 = vunpack.c.h.b16 %v336
    %v422 = vunpack.c.l.b16 %v337
    %v423 = vunpack.c.h.b16 %v337
    %v424 = vunpack.c.l.b16 %v338
    %v425 = vunpack.c.h.b16 %v338
    %v426 = vunpack.c.l.b16 %v339
    %v427 = vunpack.c.h.b16 %v339
    %v428 = vunpack.c.l.b16 %v340
    %v429 = vunpack.c.h.b16 %v340
    %v430 = vunpack.c.l.b16 %v341
    %v431 = vunpack.c.h.b16 %v341
    %v432 = vunpack.c.l.b16 %v342
    %v433 = vunpack.c.h.b16 %v342
    %v434 = vunpack.c.l.b16 %v343
    %v435 = vunpack.c.h.b16 %v343
    %v436 = vunpack.c.l.b16 %v344
    %v437 = vunpack.c.h.b16 %v344
    %v438 = vunpack.c.l.b16 %v345
    %v439 = vunpack.c.h.b16 %v345
    %v440 = vunpack.c.l.b16 %v346
    %v441 = vunpack.c.h.b16 %v346
    %v442 = vunpack.c.l.b16 %v347
    %v443 = vunpack.c.h.b16 %v347
    %v444 = vpack.c.b16 %v380, %v380
    %v445 = vpack.c.b16 %v381, %v381
    %v446 = vpack.c.b16 %v382, %v382
    %v447 = vpack.c.b16 %v383, %v383
    %v448 = vpack.c.b16 %v384, %v384
    %v449 = vpack.c.b16 %v385, %v385
    %v450 = vpack.c.b16 %v386, %v386
    %v451 = vpack.c.b16 %v387, %v387
    %v452 = vpack.c.b16 %v388, %v388
    %v453 = vpack.c.b16 %v389, %v389
    %v454 = vpack.c.b16 %v390, %v390
    %v455 = vpack.c.b16 %v391, %v391
    %v456 = vpack.c.b16 %v392, %v392
    %v457 = vpack.c.b16 %v393, %v393
    %v458 = vpack.c.b16 %v394, %v394
    %v459 = vpack.c.b16 %v395, %v395
    %v460 = vpack.c.b16 %v396, %v396
    %v461 = vpack.c.b16 %v397, %v397
    %v462 = vpack.c.b16 %v398, %v398
    %v463 = vpack.c.b16 %v399, %v399
    %v464 = vpack.c.b16 %v400, %v400
    %v465 = vpack.c.b16 %v401, %v401
    %v466 = vpack.c.b16 %v402, %v402
    %v467 = vpack.c.b16 %v403, %v403
    %v468 = vpack.c.b16 %v404, %v404
    %v469 = vpack.c.b16 %v405, %v405
    %v470 = vpack.c.b16 %v406, %v406
    %v471 = vpack.c.b16 %v407, %v407
    %v472 = vpack.c.b16 %v408, %v408
    %v473 = vpack.c.b16 %v409, %v409
    %v474 = vpack.c.b16 %v410, %v410
    %v475 = vpack.c.b16 %v411, %v411
    %v476 = vpack.c.b16 %v412, %v412
    %v477 = vpack.c.b16 %v413, %v413
    %v478 = vpack.c.b16 %v414, %v414
    %v479 = vpack.c.b16 %v415, %v415
    %v480 = vpack.c.b16 %v416, %v416
    %v481 = vpack.c.b16 %v417, %v417
    %v482 = vpack.c.b16 %v418, %v418
    %v483 = vpack.c.b16 %v419, %v419
    %v484 = vpack.c.b16 %v420, %v420
    %v485 = vpack.c.b16 %v421, %v421
    %v486 = vpack.c.b16 %v422, %v422
    %v487 = vpack.c.b16 %v423, %v423
    %v488 = vpack.c.b16 %v424, %v424
    %v489 = vpack.c.b16 %v425, %v425
    %v490 = vpack.c.b16 %v426, %v426
    %v491 = vpack.c.b16 %v427, %v427
    %v492 = vpack.c.b16 %v428, %v428
    %v493 = vpack.c.b16 %v429, %v429
    %v494 = vpack.c.b16 %v430, %v430
    %v495 = vpack.c.b16 %v431, %v431
    %v496 = vpack.c.b16 %v432, %v432
    %v497 = vpack.c.b16 %v433, %v433
    %v498 = vpack.c.b16 %v434, %v434
    %v499 = vpack.c.b16 %v435, %v435
    %v500 = vpack.c.b16 %v436, %v436
    %v501 = vpack.c.b16 %v437, %v437
    %v502 = vpack.c.b16 %v438, %v438
    %v503 = vpack.c.b16 %v439, %v439
    %v504 = vpack.c.b16 %v440, %v440
    %v505 = vpack.c.b16 %v441, %v441
    %v506 = vpack.c.b16 %v442, %v442
    %v507 = vpack.c.b16 %v443, %v443
    %vm572 = vcmask 19456
    %573 = vst.msk [vmem:[#allocation3] sm:$0xf] %vm572, %v444
    %574 = vst.msk [vmem:[#allocation3 + $0x4] sm:$0xf] %vm572, %v445
    %575 = vst.msk [vmem:[#allocation3 + $0x8] sm:$0xf] %vm572, %v446
    %576 = vst.msk [vmem:[#allocation3 + $0xc] sm:$0xf] %vm572, %v447
    %577 = vst.msk [vmem:[#allocation3 + $0x10] sm:$0xf] %vm572, %v448
    %578 = vst.msk [vmem:[#allocation3 + $0x14] sm:$0xf] %vm572, %v449
    %579 = vst.msk [vmem:[#allocation3 + $0x18] sm:$0xf] %vm572, %v450
    %580 = vst.msk [vmem:[#allocation3 + $0x1c] sm:$0xf] %vm572, %v451
    %581 = vst.msk [vmem:[#allocation3 + $0x20] sm:$0xf] %vm572, %v452
    %582 = vst.msk [vmem:[#allocation3 + $0x24] sm:$0xf] %vm572, %v453
    %583 = vst.msk [vmem:[#allocation3 + $0x28] sm:$0xf] %vm572, %v454
    %584 = vst.msk [vmem:[#allocation3 + $0x2c] sm:$0xf] %vm572, %v455
    %585 = vst.msk [vmem:[#allocation3 + $0x30] sm:$0xf] %vm572, %v456
    %586 = vst.msk [vmem:[#allocation3 + $0x34] sm:$0xf] %vm572, %v457
    %587 = vst.msk [vmem:[#allocation3 + $0x38] sm:$0xf] %vm572, %v458
    %588 = vst.msk [vmem:[#allocation3 + $0x3c] sm:$0xf] %vm572, %v459
    %589 = vst.msk [vmem:[#allocation3 + $0x40] sm:$0xf] %vm572, %v460
    %590 = vst.msk [vmem:[#allocation3 + $0x44] sm:$0xf] %vm572, %v461
    %591 = vst.msk [vmem:[#allocation3 + $0x48] sm:$0xf] %vm572, %v462
    %592 = vst.msk [vmem:[#allocation3 + $0x4c] sm:$0xf] %vm572, %v463
    %593 = vst.msk [vmem:[#allocation3 + $0x50] sm:$0xf] %vm572, %v464
    %594 = vst.msk [vmem:[#allocation3 + $0x54] sm:$0xf] %vm572, %v465
    %595 = vst.msk [vmem:[#allocation3 + $0x58] sm:$0xf] %vm572, %v466
    %596 = vst.msk [vmem:[#allocation3 + $0x5c] sm:$0xf] %vm572, %v467
    %597 = vst.msk [vmem:[#allocation3 + $0x60] sm:$0xf] %vm572, %v468
    %598 = vst.msk [vmem:[#allocation3 + $0x64] sm:$0xf] %vm572, %v469
    %599 = vst.msk [vmem:[#allocation3 + $0x68] sm:$0xf] %vm572, %v470
    %600 = vst.msk [vmem:[#allocation3 + $0x6c] sm:$0xf] %vm572, %v471
    %601 = vst.msk [vmem:[#allocation3 + $0x70] sm:$0xf] %vm572, %v472
    %602 = vst.msk [vmem:[#allocation3 + $0x74] sm:$0xf] %vm572, %v473
    %603 = vst.msk [vmem:[#allocation3 + $0x78] sm:$0xf] %vm572, %v474
    %604 = vst.msk [vmem:[#allocation3 + $0x7c] sm:$0xf] %vm572, %v475
    %605 = vst.msk [vmem:[#allocation3 + $0x80] sm:$0xf] %vm572, %v476
    %606 = vst.msk [vmem:[#allocation3 + $0x84] sm:$0xf] %vm572, %v477
    %607 = vst.msk [vmem:[#allocation3 + $0x88] sm:$0xf] %vm572, %v478
    %608 = vst.msk [vmem:[#allocation3 + $0x8c] sm:$0xf] %vm572, %v479
    %609 = vst.msk [vmem:[#allocation3 + $0x90] sm:$0xf] %vm572, %v480
    %610 = vst.msk [vmem:[#allocation3 + $0x94] sm:$0xf] %vm572, %v481
    %611 = vst.msk [vmem:[#allocation3 + $0x98] sm:$0xf] %vm572, %v482
    %612 = vst.msk [vmem:[#allocation3 + $0x9c] sm:$0xf] %vm572, %v483
    %613 = vst.msk [vmem:[#allocation3 + $0xa0] sm:$0xf] %vm572, %v484
    %614 = vst.msk [vmem:[#allocation3 + $0xa4] sm:$0xf] %vm572, %v485
    %615 = vst.msk [vmem:[#allocation3 + $0xa8] sm:$0xf] %vm572, %v486
    %616 = vst.msk [vmem:[#allocation3 + $0xac] sm:$0xf] %vm572, %v487
    %617 = vst.msk [vmem:[#allocation3 + $0xb0] sm:$0xf] %vm572, %v488
    %618 = vst.msk [vmem:[#allocation3 + $0xb4] sm:$0xf] %vm572, %v489
    %619 = vst.msk [vmem:[#allocation3 + $0xb8] sm:$0xf] %vm572, %v490
    %620 = vst.msk [vmem:[#allocation3 + $0xbc] sm:$0xf] %vm572, %v491
    %621 = vst.msk [vmem:[#allocation3 + $0xc0] sm:$0xf] %vm572, %v492
    %622 = vst.msk [vmem:[#allocation3 + $0xc4] sm:$0xf] %vm572, %v493
    %623 = vst.msk [vmem:[#allocation3 + $0xc8] sm:$0xf] %vm572, %v494
    %624 = vst.msk [vmem:[#allocation3 + $0xcc] sm:$0xf] %vm572, %v495
    %625 = vst.msk [vmem:[#allocation3 + $0xd0] sm:$0xf] %vm572, %v496
    %626 = vst.msk [vmem:[#allocation3 + $0xd4] sm:$0xf] %vm572, %v497
    %627 = vst.msk [vmem:[#allocation3 + $0xd8] sm:$0xf] %vm572, %v498
    %628 = vst.msk [vmem:[#allocation3 + $0xdc] sm:$0xf] %vm572, %v499
    %629 = vst.msk [vmem:[#allocation3 + $0xe0] sm:$0xf] %vm572, %v500
    %630 = vst.msk [vmem:[#allocation3 + $0xe4] sm:$0xf] %vm572, %v501
    %631 = vst.msk [vmem:[#allocation3 + $0xe8] sm:$0xf] %vm572, %v502
    %632 = vst.msk [vmem:[#allocation3 + $0xec] sm:$0xf] %vm572, %v503
    %633 = vst.msk [vmem:[#allocation3 + $0xf0] sm:$0xf] %vm572, %v504
    %634 = vst.msk [vmem:[#allocation3 + $0xf4] sm:$0xf] %vm572, %v505
    %635 = vst.msk [vmem:[#allocation3 + $0xf8] sm:$0xf] %vm572, %v506
    %636 = vst.msk [vmem:[#allocation3 + $0xfc] sm:$0xf] %vm572, %v507
    %v637 = vld [vmem:[#allocation2 + $0x1] sm:$0xff]
    %v638 = vld [vmem:[#allocation2 + $0x9] sm:$0xff]
    %v639 = vld [vmem:[#allocation2 + $0x19] sm:$0xff]
    %v640 = vld [vmem:[#allocation2 + $0x21] sm:$0xff]
    %v641 = vld [vmem:[#allocation2 + $0x31] sm:$0xff]
    %v642 = vld [vmem:[#allocation2 + $0x39] sm:$0xff]
    %v643 = vld [vmem:[#allocation2 + $0x49] sm:$0xff]
    %v644 = vld [vmem:[#allocation2 + $0x51] sm:$0xff]
    %v645 = vld [vmem:[#allocation2 + $0x61] sm:$0xff]
    %v646 = vld [vmem:[#allocation2 + $0x69] sm:$0xff]
    %v647 = vld [vmem:[#allocation2 + $0x79] sm:$0xff]
    %v648 = vld [vmem:[#allocation2 + $0x81] sm:$0xff]
    %v649 = vld [vmem:[#allocation2 + $0x91] sm:$0xff]
    %v650 = vld [vmem:[#allocation2 + $0x99] sm:$0xff]
    %v651 = vld [vmem:[#allocation2 + $0xa9] sm:$0xff]
    %v652 = vld [vmem:[#allocation2 + $0xb1] sm:$0xff]
    %v653 = vld [vmem:[#allocation2 + $0xc1] sm:$0xff]
    %v654 = vld [vmem:[#allocation2 + $0xc9] sm:$0xff]
    %v655 = vld [vmem:[#allocation2 + $0xd9] sm:$0xff]
    %v656 = vld [vmem:[#allocation2 + $0xe1] sm:$0xff]
    %v657 = vld [vmem:[#allocation2 + $0xf1] sm:$0xff]
    %v658 = vld [vmem:[#allocation2 + $0xf9] sm:$0xff]
    %v659 = vld [vmem:[#allocation2 + $0x109] sm:$0xff]
    %v660 = vld [vmem:[#allocation2 + $0x111] sm:$0xff]
    %v661 = vld [vmem:[#allocation2 + $0x121] sm:$0xff]
    %v662 = vld [vmem:[#allocation2 + $0x129] sm:$0xff]
    %v663 = vld [vmem:[#allocation2 + $0x139] sm:$0xff]
    %v664 = vld [vmem:[#allocation2 + $0x141] sm:$0xff]
    %v665 = vld [vmem:[#allocation2 + $0x151] sm:$0xff]
    %v666 = vld [vmem:[#allocation2 + $0x159] sm:$0xff]
    %v667 = vld [vmem:[#allocation2 + $0x169] sm:$0xff]
    %v668 = vld [vmem:[#allocation2 + $0x171] sm:$0xff]
    %v669 = vld [vmem:[#allocation2 + $0x1b1] sm:$0xff]
    %v670 = vld [vmem:[#allocation2 + $0x1b9] sm:$0xff]
    %v671 = vld [vmem:[#allocation2 + $0x1c9] sm:$0xff]
    %v672 = vld [vmem:[#allocation2 + $0x1d1] sm:$0xff]
    %v673 = vld [vmem:[#allocation2 + $0x1e1] sm:$0xff]
    %v674 = vld [vmem:[#allocation2 + $0x1e9] sm:$0xff]
    %v675 = vld [vmem:[#allocation2 + $0x1f9] sm:$0xff]
    %v676 = vld [vmem:[#allocation2 + $0x201] sm:$0xff]
    %v677 = vld [vmem:[#allocation2 + $0x211] sm:$0xff]
    %v678 = vld [vmem:[#allocation2 + $0x219] sm:$0xff]
    %v679 = vld [vmem:[#allocation2 + $0x229] sm:$0xff]
    %v680 = vld [vmem:[#allocation2 + $0x231] sm:$0xff]
    %v681 = vld [vmem:[#allocation2 + $0x241] sm:$0xff]
    %v682 = vld [vmem:[#allocation2 + $0x249] sm:$0xff]
    %v683 = vld [vmem:[#allocation2 + $0x259] sm:$0xff]
    %v684 = vld [vmem:[#allocation2 + $0x261] sm:$0xff]
    %v685 = vld [vmem:[#allocation2 + $0x271] sm:$0xff]
    %v686 = vld [vmem:[#allocation2 + $0x279] sm:$0xff]
    %v687 = vld [vmem:[#allocation2 + $0x289] sm:$0xff]
    %v688 = vld [vmem:[#allocation2 + $0x291] sm:$0xff]
    %v689 = vld [vmem:[#allocation2 + $0x2a1] sm:$0xff]
    %v690 = vld [vmem:[#allocation2 + $0x2a9] sm:$0xff]
    %v691 = vld [vmem:[#allocation2 + $0x2b9] sm:$0xff]
    %v692 = vld [vmem:[#allocation2 + $0x2c1] sm:$0xff]
    %v693 = vld [vmem:[#allocation2 + $0x2d1] sm:$0xff]
    %v694 = vld [vmem:[#allocation2 + $0x2d9] sm:$0xff]
    %v695 = vld [vmem:[#allocation2 + $0x2e9] sm:$0xff]
    %v696 = vld [vmem:[#allocation2 + $0x2f1] sm:$0xff]
    %v697 = vld [vmem:[#allocation2 + $0x301] sm:$0xff]
    %v698 = vld [vmem:[#allocation2 + $0x309] sm:$0xff]
    %v699 = vld [vmem:[#allocation2 + $0x319] sm:$0xff]
    %v700 = vld [vmem:[#allocation2 + $0x321] sm:$0xff]
    %v701 = vpack.c.bf16 %v638, %v637
    %v702 = vpack.c.bf16 %v640, %v639
    %v703 = vpack.c.bf16 %v642, %v641
    %v704 = vpack.c.bf16 %v644, %v643
    %v705 = vpack.c.bf16 %v646, %v645
    %v706 = vpack.c.bf16 %v648, %v647
    %v707 = vpack.c.bf16 %v650, %v649
    %v708 = vpack.c.bf16 %v652, %v651
    %v709 = vpack.c.bf16 %v654, %v653
    %v710 = vpack.c.bf16 %v656, %v655
    %v711 = vpack.c.bf16 %v658, %v657
    %v712 = vpack.c.bf16 %v660, %v659
    %v713 = vpack.c.bf16 %v662, %v661
    %v714 = vpack.c.bf16 %v664, %v663
    %v715 = vpack.c.bf16 %v666, %v665
    %v716 = vpack.c.bf16 %v668, %v667
    %v717 = vpack.c.bf16 %v670, %v669
    %v718 = vpack.c.bf16 %v672, %v671
    %v719 = vpack.c.bf16 %v674, %v673
    %v720 = vpack.c.bf16 %v676, %v675
    %v721 = vpack.c.bf16 %v678, %v677
    %v722 = vpack.c.bf16 %v680, %v679
    %v723 = vpack.c.bf16 %v682, %v681
    %v724 = vpack.c.bf16 %v684, %v683
    %v725 = vpack.c.bf16 %v686, %v685
    %v726 = vpack.c.bf16 %v688, %v687
    %v727 = vpack.c.bf16 %v690, %v689
    %v728 = vpack.c.bf16 %v692, %v691
    %v729 = vpack.c.bf16 %v694, %v693
    %v730 = vpack.c.bf16 %v696, %v695
    %v731 = vpack.c.bf16 %v698, %v697
    %v732 = vpack.c.bf16 %v700, %v699
    %v765 = vunpack.c.l.b16 %v701
    %v766 = vunpack.c.h.b16 %v701
    %v767 = vunpack.c.l.b16 %v702
    %v768 = vunpack.c.h.b16 %v702
    %v769 = vunpack.c.l.b16 %v703
    %v770 = vunpack.c.h.b16 %v703
    %v771 = vunpack.c.l.b16 %v704
    %v772 = vunpack.c.h.b16 %v704
    %v773 = vunpack.c.l.b16 %v705
    %v774 = vunpack.c.h.b16 %v705
    %v775 = vunpack.c.l.b16 %v706
    %v776 = vunpack.c.h.b16 %v706
    %v777 = vunpack.c.l.b16 %v707
    %v778 = vunpack.c.h.b16 %v707
    %v779 = vunpack.c.l.b16 %v708
    %v780 = vunpack.c.h.b16 %v708
    %v781 = vunpack.c.l.b16 %v709
    %v782 = vunpack.c.h.b16 %v709
    %v783 = vunpack.c.l.b16 %v710
    %v784 = vunpack.c.h.b16 %v710
    %v785 = vunpack.c.l.b16 %v711
    %v786 = vunpack.c.h.b16 %v711
    %v787 = vunpack.c.l.b16 %v712
    %v788 = vunpack.c.h.b16 %v712
    %v789 = vunpack.c.l.b16 %v713
    %v790 = vunpack.c.h.b16 %v713
    %v791 = vunpack.c.l.b16 %v714
    %v792 = vunpack.c.h.b16 %v714
    %v793 = vunpack.c.l.b16 %v715
    %v794 = vunpack.c.h.b16 %v715
    %v795 = vunpack.c.l.b16 %v716
    %v796 = vunpack.c.h.b16 %v716
    %v797 = vunpack.c.l.b16 %v717
    %v798 = vunpack.c.h.b16 %v717
    %v799 = vunpack.c.l.b16 %v718
    %v800 = vunpack.c.h.b16 %v718
    %v801 = vunpack.c.l.b16 %v719
    %v802 = vunpack.c.h.b16 %v719
    %v803 = vunpack.c.l.b16 %v720
    %v804 = vunpack.c.h.b16 %v720
    %v805 = vunpack.c.l.b16 %v721
    %v806 = vunpack.c.h.b16 %v721
    %v807 = vunpack.c.l.b16 %v722
    %v808 = vunpack.c.h.b16 %v722
    %v809 = vunpack.c.l.b16 %v723
    %v810 = vunpack.c.h.b16 %v723
    %v811 = vunpack.c.l.b16 %v724
    %v812 = vunpack.c.h.b16 %v724
    %v813 = vunpack.c.l.b16 %v725
    %v814 = vunpack.c.h.b16 %v725
    %v815 = vunpack.c.l.b16 %v726
    %v816 = vunpack.c.h.b16 %v726
    %v817 = vunpack.c.l.b16 %v727
    %v818 = vunpack.c.h.b16 %v727
    %v819 = vunpack.c.l.b16 %v728
    %v820 = vunpack.c.h.b16 %v728
    %v821 = vunpack.c.l.b16 %v729
    %v822 = vunpack.c.h.b16 %v729
    %v823 = vunpack.c.l.b16 %v730
    %v824 = vunpack.c.h.b16 %v730
    %v825 = vunpack.c.l.b16 %v731
    %v826 = vunpack.c.h.b16 %v731
    %v827 = vunpack.c.l.b16 %v732
    %v828 = vunpack.c.h.b16 %v732
    %v829 = vpack.c.b16 %v765, %v765
    %v830 = vpack.c.b16 %v766, %v766
    %v831 = vpack.c.b16 %v767, %v767
    %v832 = vpack.c.b16 %v768, %v768
    %v833 = vpack.c.b16 %v769, %v769
    %v834 = vpack.c.b16 %v770, %v770
    %v835 = vpack.c.b16 %v771, %v771
    %v836 = vpack.c.b16 %v772, %v772
    %v837 = vpack.c.b16 %v773, %v773
    %v838 = vpack.c.b16 %v774, %v774
    %v839 = vpack.c.b16 %v775, %v775
    %v840 = vpack.c.b16 %v776, %v776
    %v841 = vpack.c.b16 %v777, %v777
    %v842 = vpack.c.b16 %v778, %v778
    %v843 = vpack.c.b16 %v779, %v779
    %v844 = vpack.c.b16 %v780, %v780
    %v845 = vpack.c.b16 %v781, %v781
    %v846 = vpack.c.b16 %v782, %v782
    %v847 = vpack.c.b16 %v783, %v783
    %v848 = vpack.c.b16 %v784, %v784
    %v849 = vpack.c.b16 %v785, %v785
    %v850 = vpack.c.b16 %v786, %v786
    %v851 = vpack.c.b16 %v787, %v787
    %v852 = vpack.c.b16 %v788, %v788
    %v853 = vpack.c.b16 %v789, %v789
    %v854 = vpack.c.b16 %v790, %v790
    %v855 = vpack.c.b16 %v791, %v791
    %v856 = vpack.c.b16 %v792, %v792
    %v857 = vpack.c.b16 %v793, %v793
    %v858 = vpack.c.b16 %v794, %v794
    %v859 = vpack.c.b16 %v795, %v795
    %v860 = vpack.c.b16 %v796, %v796
    %v861 = vpack.c.b16 %v797, %v797
    %v862 = vpack.c.b16 %v798, %v798
    %v863 = vpack.c.b16 %v799, %v799
    %v864 = vpack.c.b16 %v800, %v800
    %v865 = vpack.c.b16 %v801, %v801
    %v866 = vpack.c.b16 %v802, %v802
    %v867 = vpack.c.b16 %v803, %v803
    %v868 = vpack.c.b16 %v804, %v804
    %v869 = vpack.c.b16 %v805, %v805
    %v870 = vpack.c.b16 %v806, %v806
    %v871 = vpack.c.b16 %v807, %v807
    %v872 = vpack.c.b16 %v808, %v808
    %v873 = vpack.c.b16 %v809, %v809
    %v874 = vpack.c.b16 %v810, %v810
    %v875 = vpack.c.b16 %v811, %v811
    %v876 = vpack.c.b16 %v812, %v812
    %v877 = vpack.c.b16 %v813, %v813
    %v878 = vpack.c.b16 %v814, %v814
    %v879 = vpack.c.b16 %v815, %v815
    %v880 = vpack.c.b16 %v816, %v816
    %v881 = vpack.c.b16 %v817, %v817
    %v882 = vpack.c.b16 %v818, %v818
    %v883 = vpack.c.b16 %v819, %v819
    %v884 = vpack.c.b16 %v820, %v820
    %v885 = vpack.c.b16 %v821, %v821
    %v886 = vpack.c.b16 %v822, %v822
    %v887 = vpack.c.b16 %v823, %v823
    %v888 = vpack.c.b16 %v824, %v824
    %v889 = vpack.c.b16 %v825, %v825
    %v890 = vpack.c.b16 %v826, %v826
    %v891 = vpack.c.b16 %v827, %v827
    %v892 = vpack.c.b16 %v828, %v828
    %893 = vrot.lane.b32.xlu0 %v829, 3
    %v894 = vpop.permute.xlu0 %893
    %895 = vrot.lane.b32.xlu0 %v830, 3
    %v896 = vpop.permute.xlu0 %895
    %897 = vrot.lane.b32.xlu0 %v831, 3
    %v898 = vpop.permute.xlu0 %897
    %899 = vrot.lane.b32.xlu0 %v832, 3
    %v900 = vpop.permute.xlu0 %899
    %901 = vrot.lane.b32.xlu0 %v833, 3
    %v902 = vpop.permute.xlu0 %901
    %903 = vrot.lane.b32.xlu0 %v834, 3
    %v904 = vpop.permute.xlu0 %903
    %905 = vrot.lane.b32.xlu0 %v835, 3
    %v906 = vpop.permute.xlu0 %905
    %907 = vrot.lane.b32.xlu0 %v836, 3
    %v908 = vpop.permute.xlu0 %907
    %909 = vrot.lane.b32.xlu0 %v837, 3
    %v910 = vpop.permute.xlu0 %909
    %911 = vrot.lane.b32.xlu0 %v838, 3
    %v912 = vpop.permute.xlu0 %911
    %913 = vrot.lane.b32.xlu0 %v839, 3
    %v914 = vpop.permute.xlu0 %913
    %915 = vrot.lane.b32.xlu0 %v840, 3
    %v916 = vpop.permute.xlu0 %915
    %917 = vrot.lane.b32.xlu0 %v841, 3
    %v918 = vpop.permute.xlu0 %917
    %919 = vrot.lane.b32.xlu0 %v842, 3
    %v920 = vpop.permute.xlu0 %919
    %921 = vrot.lane.b32.xlu0 %v843, 3
    %v922 = vpop.permute.xlu0 %921
    %923 = vrot.lane.b32.xlu0 %v844, 3
    %v924 = vpop.permute.xlu0 %923
    %925 = vrot.lane.b32.xlu0 %v845, 3
    %v926 = vpop.permute.xlu0 %925
    %927 = vrot.lane.b32.xlu0 %v846, 3
    %v928 = vpop.permute.xlu0 %927
    %929 = vrot.lane.b32.xlu0 %v847, 3
    %v930 = vpop.permute.xlu0 %929
    %931 = vrot.lane.b32.xlu0 %v848, 3
    %v932 = vpop.permute.xlu0 %931
    %933 = vrot.lane.b32.xlu0 %v849, 3
    %v934 = vpop.permute.xlu0 %933
    %935 = vrot.lane.b32.xlu0 %v850, 3
    %v936 = vpop.permute.xlu0 %935
    %937 = vrot.lane.b32.xlu0 %v851, 3
    %v938 = vpop.permute.xlu0 %937
    %939 = vrot.lane.b32.xlu0 %v852, 3
    %v940 = vpop.permute.xlu0 %939
    %941 = vrot.lane.b32.xlu0 %v853, 3
    %v942 = vpop.permute.xlu0 %941
    %943 = vrot.lane.b32.xlu0 %v854, 3
    %v944 = vpop.permute.xlu0 %943
    %945 = vrot.lane.b32.xlu0 %v855, 3
    %v946 = vpop.permute.xlu0 %945
    %947 = vrot.lane.b32.xlu0 %v856, 3
    %v948 = vpop.permute.xlu0 %947
    %949 = vrot.lane.b32.xlu0 %v857, 3
    %v950 = vpop.permute.xlu0 %949
    %951 = vrot.lane.b32.xlu0 %v858, 3
    %v952 = vpop.permute.xlu0 %951
    %953 = vrot.lane.b32.xlu0 %v859, 3
    %v954 = vpop.permute.xlu0 %953
    %955 = vrot.lane.b32.xlu0 %v860, 3
    %v956 = vpop.permute.xlu0 %955
    %957 = vrot.lane.b32.xlu0 %v861, 3
    %v958 = vpop.permute.xlu0 %957
    %959 = vrot.lane.b32.xlu0 %v862, 3
    %v960 = vpop.permute.xlu0 %959
    %961 = vrot.lane.b32.xlu0 %v863, 3
    %v962 = vpop.permute.xlu0 %961
    %963 = vrot.lane.b32.xlu0 %v864, 3
    %v964 = vpop.permute.xlu0 %963
    %965 = vrot.lane.b32.xlu0 %v865, 3
    %v966 = vpop.permute.xlu0 %965
    %967 = vrot.lane.b32.xlu0 %v866, 3
    %v968 = vpop.permute.xlu0 %967
    %969 = vrot.lane.b32.xlu0 %v867, 3
    %v970 = vpop.permute.xlu0 %969
    %971 = vrot.lane.b32.xlu0 %v868, 3
    %v972 = vpop.permute.xlu0 %971
    %973 = vrot.lane.b32.xlu0 %v869, 3
    %v974 = vpop.permute.xlu0 %973
    %975 = vrot.lane.b32.xlu0 %v870, 3
    %v976 = vpop.permute.xlu0 %975
    %977 = vrot.lane.b32.xlu0 %v871, 3
    %v978 = vpop.permute.xlu0 %977
    %979 = vrot.lane.b32.xlu0 %v872, 3
    %v980 = vpop.permute.xlu0 %979
    %981 = vrot.lane.b32.xlu0 %v873, 3
    %v982 = vpop.permute.xlu0 %981
    %983 = vrot.lane.b32.xlu0 %v874, 3
    %v984 = vpop.permute.xlu0 %983
    %985 = vrot.lane.b32.xlu0 %v875, 3
    %v986 = vpop.permute.xlu0 %985
    %987 = vrot.lane.b32.xlu0 %v876, 3
    %v988 = vpop.permute.xlu0 %987
    %989 = vrot.lane.b32.xlu0 %v877, 3
    %v990 = vpop.permute.xlu0 %989
    %991 = vrot.lane.b32.xlu0 %v878, 3
    %v992 = vpop.permute.xlu0 %991
    %993 = vrot.lane.b32.xlu0 %v879, 3
    %v994 = vpop.permute.xlu0 %993
    %995 = vrot.lane.b32.xlu0 %v880, 3
    %v996 = vpop.permute.xlu0 %995
    %997 = vrot.lane.b32.xlu0 %v881, 3
    %v998 = vpop.permute.xlu0 %997
    %999 = vrot.lane.b32.xlu0 %v882, 3
    %v1000 = vpop.permute.xlu0 %999
    %1001 = vrot.lane.b32.xlu0 %v883, 3
    %v1002 = vpop.permute.xlu0 %1001
    %1003 = vrot.lane.b32.xlu0 %v884, 3
    %v1004 = vpop.permute.xlu0 %1003
    %1005 = vrot.lane.b32.xlu0 %v885, 3
    %v1006 = vpop.permute.xlu0 %1005
    %1007 = vrot.lane.b32.xlu0 %v886, 3
    %v1008 = vpop.permute.xlu0 %1007
    %1009 = vrot.lane.b32.xlu0 %v887, 3
    %v1010 = vpop.permute.xlu0 %1009
    %1011 = vrot.lane.b32.xlu0 %v888, 3
    %v1012 = vpop.permute.xlu0 %1011
    %1013 = vrot.lane.b32.xlu0 %v889, 3
    %v1014 = vpop.permute.xlu0 %1013
    %1015 = vrot.lane.b32.xlu0 %v890, 3
    %v1016 = vpop.permute.xlu0 %1015
    %1017 = vrot.lane.b32.xlu0 %v891, 3
    %v1018 = vpop.permute.xlu0 %1017
    %1019 = vrot.lane.b32.xlu0 %v892, 3
    %v1020 = vpop.permute.xlu0 %1019
    %vm1085 = vcmask 44056
    %1086 = vst.msk [vmem:[#allocation3] sm:$0xf] %vm1085, %v894
    %1087 = vst.msk [vmem:[#allocation3 + $0x4] sm:$0xf] %vm1085, %v896
    %1088 = vst.msk [vmem:[#allocation3 + $0x8] sm:$0xf] %vm1085, %v898
    %1089 = vst.msk [vmem:[#allocation3 + $0xc] sm:$0xf] %vm1085, %v900
    %1090 = vst.msk [vmem:[#allocation3 + $0x10] sm:$0xf] %vm1085, %v902
    %1091 = vst.msk [vmem:[#allocation3 + $0x14] sm:$0xf] %vm1085, %v904
    %1092 = vst.msk [vmem:[#allocation3 + $0x18] sm:$0xf] %vm1085, %v906
    %1093 = vst.msk [vmem:[#allocation3 + $0x1c] sm:$0xf] %vm1085, %v908
    %1094 = vst.msk [vmem:[#allocation3 + $0x20] sm:$0xf] %vm1085, %v910
    %1095 = vst.msk [vmem:[#allocation3 + $0x24] sm:$0xf] %vm1085, %v912
    %1096 = vst.msk [vmem:[#allocation3 + $0x28] sm:$0xf] %vm1085, %v914
    %1097 = vst.msk [vmem:[#allocation3 + $0x2c] sm:$0xf] %vm1085, %v916
    %1098 = vst.msk [vmem:[#allocation3 + $0x30] sm:$0xf] %vm1085, %v918
    %1099 = vst.msk [vmem:[#allocation3 + $0x34] sm:$0xf] %vm1085, %v920
    %1100 = vst.msk [vmem:[#allocation3 + $0x38] sm:$0xf] %vm1085, %v922
    %1101 = vst.msk [vmem:[#allocation3 + $0x3c] sm:$0xf] %vm1085, %v924
    %1102 = vst.msk [vmem:[#allocation3 + $0x40] sm:$0xf] %vm1085, %v926
    %1103 = vst.msk [vmem:[#allocation3 + $0x44] sm:$0xf] %vm1085, %v928
    %1104 = vst.msk [vmem:[#allocation3 + $0x48] sm:$0xf] %vm1085, %v930
    %1105 = vst.msk [vmem:[#allocation3 + $0x4c] sm:$0xf] %vm1085, %v932
    %1106 = vst.msk [vmem:[#allocation3 + $0x50] sm:$0xf] %vm1085, %v934
    %1107 = vst.msk [vmem:[#allocation3 + $0x54] sm:$0xf] %vm1085, %v936
    %1108 = vst.msk [vmem:[#allocation3 + $0x58] sm:$0xf] %vm1085, %v938
    %1109 = vst.msk [vmem:[#allocation3 + $0x5c] sm:$0xf] %vm1085, %v940
    %1110 = vst.msk [vmem:[#allocation3 + $0x60] sm:$0xf] %vm1085, %v942
    %1111 = vst.msk [vmem:[#allocation3 + $0x64] sm:$0xf] %vm1085, %v944
    %1112 = vst.msk [vmem:[#allocation3 + $0x68] sm:$0xf] %vm1085, %v946
    %1113 = vst.msk [vmem:[#allocation3 + $0x6c] sm:$0xf] %vm1085, %v948
    %1114 = vst.msk [vmem:[#allocation3 + $0x70] sm:$0xf] %vm1085, %v950
    %1115 = vst.msk [vmem:[#allocation3 + $0x74] sm:$0xf] %vm1085, %v952
    %1116 = vst.msk [vmem:[#allocation3 + $0x78] sm:$0xf] %vm1085, %v954
    %1117 = vst.msk [vmem:[#allocation3 + $0x7c] sm:$0xf] %vm1085, %v956
    %1118 = vst.msk [vmem:[#allocation3 + $0x80] sm:$0xf] %vm1085, %v958
    %1119 = vst.msk [vmem:[#allocation3 + $0x84] sm:$0xf] %vm1085, %v960
    %1120 = vst.msk [vmem:[#allocation3 + $0x88] sm:$0xf] %vm1085, %v962
    %1121 = vst.msk [vmem:[#allocation3 + $0x8c] sm:$0xf] %vm1085, %v964
    %1122 = vst.msk [vmem:[#allocation3 + $0x90] sm:$0xf] %vm1085, %v966
    %1123 = vst.msk [vmem:[#allocation3 + $0x94] sm:$0xf] %vm1085, %v968
    %1124 = vst.msk [vmem:[#allocation3 + $0x98] sm:$0xf] %vm1085, %v970
    %1125 = vst.msk [vmem:[#allocation3 + $0x9c] sm:$0xf] %vm1085, %v972
    %1126 = vst.msk [vmem:[#allocation3 + $0xa0] sm:$0xf] %vm1085, %v974
    %1127 = vst.msk [vmem:[#allocation3 + $0xa4] sm:$0xf] %vm1085, %v976
    %1128 = vst.msk [vmem:[#allocation3 + $0xa8] sm:$0xf] %vm1085, %v978
    %1129 = vst.msk [vmem:[#allocation3 + $0xac] sm:$0xf] %vm1085, %v980
    %1130 = vst.msk [vmem:[#allocation3 + $0xb0] sm:$0xf] %vm1085, %v982
    %1131 = vst.msk [vmem:[#allocation3 + $0xb4] sm:$0xf] %vm1085, %v984
    %1132 = vst.msk [vmem:[#allocation3 + $0xb8] sm:$0xf] %vm1085, %v986
    %1133 = vst.msk [vmem:[#allocation3 + $0xbc] sm:$0xf] %vm1085, %v988
    %1134 = vst.msk [vmem:[#allocation3 + $0xc0] sm:$0xf] %vm1085, %v990
    %1135 = vst.msk [vmem:[#allocation3 + $0xc4] sm:$0xf] %vm1085, %v992
    %1136 = vst.msk [vmem:[#allocation3 + $0xc8] sm:$0xf] %vm1085, %v994
    %1137 = vst.msk [vmem:[#allocation3 + $0xcc] sm:$0xf] %vm1085, %v996
    %1138 = vst.msk [vmem:[#allocation3 + $0xd0] sm:$0xf] %vm1085, %v998
    %1139 = vst.msk [vmem:[#allocation3 + $0xd4] sm:$0xf] %vm1085, %v1000
    %1140 = vst.msk [vmem:[#allocation3 + $0xd8] sm:$0xf] %vm1085, %v1002
    %1141 = vst.msk [vmem:[#allocation3 + $0xdc] sm:$0xf] %vm1085, %v1004
    %1142 = vst.msk [vmem:[#allocation3 + $0xe0] sm:$0xf] %vm1085, %v1006
    %1143 = vst.msk [vmem:[#allocation3 + $0xe4] sm:$0xf] %vm1085, %v1008
    %1144 = vst.msk [vmem:[#allocation3 + $0xe8] sm:$0xf] %vm1085, %v1010
    %1145 = vst.msk [vmem:[#allocation3 + $0xec] sm:$0xf] %vm1085, %v1012
    %1146 = vst.msk [vmem:[#allocation3 + $0xf0] sm:$0xf] %vm1085, %v1014
    %1147 = vst.msk [vmem:[#allocation3 + $0xf4] sm:$0xf] %vm1085, %v1016
    %1148 = vst.msk [vmem:[#allocation3 + $0xf8] sm:$0xf] %vm1085, %v1018
    %1149 = vst.msk [vmem:[#allocation3 + $0xfc] sm:$0xf] %vm1085, %v1020
    %v1150 = vld [vmem:[#allocation2 + $0x2] sm:$0xff]
    %v1151 = vld [vmem:[#allocation2 + $0xa] sm:$0xff]
    %v1152 = vld [vmem:[#allocation2 + $0x1a] sm:$0xff]
    %v1153 = vld [vmem:[#allocation2 + $0x22] sm:$0xff]
    %v1154 = vld [vmem:[#allocation2 + $0x32] sm:$0xff]
    %v1155 = vld [vmem:[#allocation2 + $0x3a] sm:$0xff]
    %v1156 = vld [vmem:[#allocation2 + $0x4a] sm:$0xff]
    %v1157 = vld [vmem:[#allocation2 + $0x52] sm:$0xff]
    %v1158 = vld [vmem:[#allocation2 + $0x62] sm:$0xff]
    %v1159 = vld [vmem:[#allocation2 + $0x6a] sm:$0xff]
    %v1160 = vld [vmem:[#allocation2 + $0x7a] sm:$0xff]
    %v1161 = vld [vmem:[#allocation2 + $0x82] sm:$0xff]
    %v1162 = vld [vmem:[#allocation2 + $0x92] sm:$0xff]
    %v1163 = vld [vmem:[#allocation2 + $0x9a] sm:$0xff]
    %v1164 = vld [vmem:[#allocation2 + $0xaa] sm:$0xff]
    %v1165 = vld [vmem:[#allocation2 + $0xb2] sm:$0xff]
    %v1166 = vld [vmem:[#allocation2 + $0xc2] sm:$0xff]
    %v1167 = vld [vmem:[#allocation2 + $0xca] sm:$0xff]
    %v1168 = vld [vmem:[#allocation2 + $0xda] sm:$0xff]
    %v1169 = vld [vmem:[#allocation2 + $0xe2] sm:$0xff]
    %v1170 = vld [vmem:[#allocation2 + $0xf2] sm:$0xff]
    %v1171 = vld [vmem:[#allocation2 + $0xfa] sm:$0xff]
    %v1172 = vld [vmem:[#allocation2 + $0x10a] sm:$0xff]
    %v1173 = vld [vmem:[#allocation2 + $0x112] sm:$0xff]
    %v1174 = vld [vmem:[#allocation2 + $0x122] sm:$0xff]
    %v1175 = vld [vmem:[#allocation2 + $0x12a] sm:$0xff]
    %v1176 = vld [vmem:[#allocation2 + $0x13a] sm:$0xff]
    %v1177 = vld [vmem:[#allocation2 + $0x142] sm:$0xff]
    %v1178 = vld [vmem:[#allocation2 + $0x152] sm:$0xff]
    %v1179 = vld [vmem:[#allocation2 + $0x15a] sm:$0xff]
    %v1180 = vld [vmem:[#allocation2 + $0x16a] sm:$0xff]
    %v1181 = vld [vmem:[#allocation2 + $0x172] sm:$0xff]
    %v1182 = vld [vmem:[#allocation2 + $0x1b2] sm:$0xff]
    %v1183 = vld [vmem:[#allocation2 + $0x1ba] sm:$0xff]
    %v1184 = vld [vmem:[#allocation2 + $0x1ca] sm:$0xff]
    %v1185 = vld [vmem:[#allocation2 + $0x1d2] sm:$0xff]
    %v1186 = vld [vmem:[#allocation2 + $0x1e2] sm:$0xff]
    %v1187 = vld [vmem:[#allocation2 + $0x1ea] sm:$0xff]
    %v1188 = vld [vmem:[#allocation2 + $0x1fa] sm:$0xff]
    %v1189 = vld [vmem:[#allocation2 + $0x202] sm:$0xff]
    %v1190 = vld [vmem:[#allocation2 + $0x212] sm:$0xff]
    %v1191 = vld [vmem:[#allocation2 + $0x21a] sm:$0xff]
    %v1192 = vld [vmem:[#allocation2 + $0x22a] sm:$0xff]
    %v1193 = vld [vmem:[#allocation2 + $0x232] sm:$0xff]
    %v1194 = vld [vmem:[#allocation2 + $0x242] sm:$0xff]
    %v1195 = vld [vmem:[#allocation2 + $0x24a] sm:$0xff]
    %v1196 = vld [vmem:[#allocation2 + $0x25a] sm:$0xff]
    %v1197 = vld [vmem:[#allocation2 + $0x262] sm:$0xff]
    %v1198 = vld [vmem:[#allocation2 + $0x272] sm:$0xff]
    %v1199 = vld [vmem:[#allocation2 + $0x27a] sm:$0xff]
    %v1200 = vld [vmem:[#allocation2 + $0x28a] sm:$0xff]
    %v1201 = vld [vmem:[#allocation2 + $0x292] sm:$0xff]
    %v1202 = vld [vmem:[#allocation2 + $0x2a2] sm:$0xff]
    %v1203 = vld [vmem:[#allocation2 + $0x2aa] sm:$0xff]
    %v1204 = vld [vmem:[#allocation2 + $0x2ba] sm:$0xff]
    %v1205 = vld [vmem:[#allocation2 + $0x2c2] sm:$0xff]
    %v1206 = vld [vmem:[#allocation2 + $0x2d2] sm:$0xff]
    %v1207 = vld [vmem:[#allocation2 + $0x2da] sm:$0xff]
    %v1208 = vld [vmem:[#allocation2 + $0x2ea] sm:$0xff]
    %v1209 = vld [vmem:[#allocation2 + $0x2f2] sm:$0xff]
    %v1210 = vld [vmem:[#allocation2 + $0x302] sm:$0xff]
    %v1211 = vld [vmem:[#allocation2 + $0x30a] sm:$0xff]
    %v1212 = vld [vmem:[#allocation2 + $0x31a] sm:$0xff]
    %v1213 = vld [vmem:[#allocation2 + $0x322] sm:$0xff]
    %v1214 = vpack.c.bf16 %v1151, %v1150
    %v1215 = vpack.c.bf16 %v1153, %v1152
    %v1216 = vpack.c.bf16 %v1155, %v1154
    %v1217 = vpack.c.bf16 %v1157, %v1156
    %v1218 = vpack.c.bf16 %v1159, %v1158
    %v1219 = vpack.c.bf16 %v1161, %v1160
    %v1220 = vpack.c.bf16 %v1163, %v1162
    %v1221 = vpack.c.bf16 %v1165, %v1164
    %v1222 = vpack.c.bf16 %v1167, %v1166
    %v1223 = vpack.c.bf16 %v1169, %v1168
    %v1224 = vpack.c.bf16 %v1171, %v1170
    %v1225 = vpack.c.bf16 %v1173, %v1172
    %v1226 = vpack.c.bf16 %v1175, %v1174
    %v1227 = vpack.c.bf16 %v1177, %v1176
    %v1228 = vpack.c.bf16 %v1179, %v1178
    %v1229 = vpack.c.bf16 %v1181, %v1180
    %v1230 = vpack.c.bf16 %v1183, %v1182
    %v1231 = vpack.c.bf16 %v1185, %v1184
    %v1232 = vpack.c.bf16 %v1187, %v1186
    %v1233 = vpack.c.bf16 %v1189, %v1188
    %v1234 = vpack.c.bf16 %v1191, %v1190
    %v1235 = vpack.c.bf16 %v1193, %v1192
    %v1236 = vpack.c.bf16 %v1195, %v1194
    %v1237 = vpack.c.bf16 %v1197, %v1196
    %v1238 = vpack.c.bf16 %v1199, %v1198
    %v1239 = vpack.c.bf16 %v1201, %v1200
    %v1240 = vpack.c.bf16 %v1203, %v1202
    %v1241 = vpack.c.bf16 %v1205, %v1204
    %v1242 = vpack.c.bf16 %v1207, %v1206
    %v1243 = vpack.c.bf16 %v1209, %v1208
    %v1244 = vpack.c.bf16 %v1211, %v1210
    %v1245 = vpack.c.bf16 %v1213, %v1212
    %v1278 = vunpack.c.l.b16 %v1214
    %v1279 = vunpack.c.h.b16 %v1214
    %v1280 = vunpack.c.l.b16 %v1215
    %v1281 = vunpack.c.h.b16 %v1215
    %v1282 = vunpack.c.l.b16 %v1216
    %v1283 = vunpack.c.h.b16 %v1216
    %v1284 = vunpack.c.l.b16 %v1217
    %v1285 = vunpack.c.h.b16 %v1217
    %v1286 = vunpack.c.l.b16 %v1218
    %v1287 = vunpack.c.h.b16 %v1218
    %v1288 = vunpack.c.l.b16 %v1219
    %v1289 = vunpack.c.h.b16 %v1219
    %v1290 = vunpack.c.l.b16 %v1220
    %v1291 = vunpack.c.h.b16 %v1220
    %v1292 = vunpack.c.l.b16 %v1221
    %v1293 = vunpack.c.h.b16 %v1221
    %v1294 = vunpack.c.l.b16 %v1222
    %v1295 = vunpack.c.h.b16 %v1222
    %v1296 = vunpack.c.l.b16 %v1223
    %v1297 = vunpack.c.h.b16 %v1223
    %v1298 = vunpack.c.l.b16 %v1224
    %v1299 = vunpack.c.h.b16 %v1224
    %v1300 = vunpack.c.l.b16 %v1225
    %v1301 = vunpack.c.h.b16 %v1225
    %v1302 = vunpack.c.l.b16 %v1226
    %v1303 = vunpack.c.h.b16 %v1226
    %v1304 = vunpack.c.l.b16 %v1227
    %v1305 = vunpack.c.h.b16 %v1227
    %v1306 = vunpack.c.l.b16 %v1228
    %v1307 = vunpack.c.h.b16 %v1228
    %v1308 = vunpack.c.l.b16 %v1229
    %v1309 = vunpack.c.h.b16 %v1229
    %v1310 = vunpack.c.l.b16 %v1230
    %v1311 = vunpack.c.h.b16 %v1230
    %v1312 = vunpack.c.l.b16 %v1231
    %v1313 = vunpack.c.h.b16 %v1231
    %v1314 = vunpack.c.l.b16 %v1232
    %v1315 = vunpack.c.h.b16 %v1232
    %v1316 = vunpack.c.l.b16 %v1233
    %v1317 = vunpack.c.h.b16 %v1233
    %v1318 = vunpack.c.l.b16 %v1234
    %v1319 = vunpack.c.h.b16 %v1234
    %v1320 = vunpack.c.l.b16 %v1235
    %v1321 = vunpack.c.h.b16 %v1235
    %v1322 = vunpack.c.l.b16 %v1236
    %v1323 = vunpack.c.h.b16 %v1236
    %v1324 = vunpack.c.l.b16 %v1237
    %v1325 = vunpack.c.h.b16 %v1237
    %v1326 = vunpack.c.l.b16 %v1238
    %v1327 = vunpack.c.h.b16 %v1238
    %v1328 = vunpack.c.l.b16 %v1239
    %v1329 = vunpack.c.h.b16 %v1239
    %v1330 = vunpack.c.l.b16 %v1240
    %v1331 = vunpack.c.h.b16 %v1240
    %v1332 = vunpack.c.l.b16 %v1241
    %v1333 = vunpack.c.h.b16 %v1241
    %v1334 = vunpack.c.l.b16 %v1242
    %v1335 = vunpack.c.h.b16 %v1242
    %v1336 = vunpack.c.l.b16 %v1243
    %v1337 = vunpack.c.h.b16 %v1243
    %v1338 = vunpack.c.l.b16 %v1244
    %v1339 = vunpack.c.h.b16 %v1244
    %v1340 = vunpack.c.l.b16 %v1245
    %v1341 = vunpack.c.h.b16 %v1245
    %v1342 = vpack.c.b16 %v1278, %v1278
    %v1343 = vpack.c.b16 %v1279, %v1279
    %v1344 = vpack.c.b16 %v1280, %v1280
    %v1345 = vpack.c.b16 %v1281, %v1281
    %v1346 = vpack.c.b16 %v1282, %v1282
    %v1347 = vpack.c.b16 %v1283, %v1283
    %v1348 = vpack.c.b16 %v1284, %v1284
    %v1349 = vpack.c.b16 %v1285, %v1285
    %v1350 = vpack.c.b16 %v1286, %v1286
    %v1351 = vpack.c.b16 %v1287, %v1287
    %v1352 = vpack.c.b16 %v1288, %v1288
    %v1353 = vpack.c.b16 %v1289, %v1289
    %v1354 = vpack.c.b16 %v1290, %v1290
    %v1355 = vpack.c.b16 %v1291, %v1291
    %v1356 = vpack.c.b16 %v1292, %v1292
    %v1357 = vpack.c.b16 %v1293, %v1293
    %v1358 = vpack.c.b16 %v1294, %v1294
    %v1359 = vpack.c.b16 %v1295, %v1295
    %v1360 = vpack.c.b16 %v1296, %v1296
    %v1361 = vpack.c.b16 %v1297, %v1297
    %v1362 = vpack.c.b16 %v1298, %v1298
    %v1363 = vpack.c.b16 %v1299, %v1299
    %v1364 = vpack.c.b16 %v1300, %v1300
    %v1365 = vpack.c.b16 %v1301, %v1301
    %v1366 = vpack.c.b16 %v1302, %v1302
    %v1367 = vpack.c.b16 %v1303, %v1303
    %v1368 = vpack.c.b16 %v1304, %v1304
    %v1369 = vpack.c.b16 %v1305, %v1305
    %v1370 = vpack.c.b16 %v1306, %v1306
    %v1371 = vpack.c.b16 %v1307, %v1307
    %v1372 = vpack.c.b16 %v1308, %v1308
    %v1373 = vpack.c.b16 %v1309, %v1309
    %v1374 = vpack.c.b16 %v1310, %v1310
    %v1375 = vpack.c.b16 %v1311, %v1311
    %v1376 = vpack.c.b16 %v1312, %v1312
    %v1377 = vpack.c.b16 %v1313, %v1313
    %v1378 = vpack.c.b16 %v1314, %v1314
    %v1379 = vpack.c.b16 %v1315, %v1315
    %v1380 = vpack.c.b16 %v1316, %v1316
    %v1381 = vpack.c.b16 %v1317, %v1317
    %v1382 = vpack.c.b16 %v1318, %v1318
    %v1383 = vpack.c.b16 %v1319, %v1319
    %v1384 = vpack.c.b16 %v1320, %v1320
    %v1385 = vpack.c.b16 %v1321, %v1321
    %v1386 = vpack.c.b16 %v1322, %v1322
    %v1387 = vpack.c.b16 %v1323, %v1323
    %v1388 = vpack.c.b16 %v1324, %v1324
    %v1389 = vpack.c.b16 %v1325, %v1325
    %v1390 = vpack.c.b16 %v1326, %v1326
    %v1391 = vpack.c.b16 %v1327, %v1327
    %v1392 = vpack.c.b16 %v1328, %v1328
    %v1393 = vpack.c.b16 %v1329, %v1329
    %v1394 = vpack.c.b16 %v1330, %v1330
    %v1395 = vpack.c.b16 %v1331, %v1331
    %v1396 = vpack.c.b16 %v1332, %v1332
    %v1397 = vpack.c.b16 %v1333, %v1333
    %v1398 = vpack.c.b16 %v1334, %v1334
    %v1399 = vpack.c.b16 %v1335, %v1335
    %v1400 = vpack.c.b16 %v1336, %v1336
    %v1401 = vpack.c.b16 %v1337, %v1337
    %v1402 = vpack.c.b16 %v1338, %v1338
    %v1403 = vpack.c.b16 %v1339, %v1339
    %v1404 = vpack.c.b16 %v1340, %v1340
    %v1405 = vpack.c.b16 %v1341, %v1341
    %1406 = vrot.lane.b32.xlu0 %v1342, 6
    %v1407 = vpop.permute.xlu0 %1406
    %1408 = vrot.lane.b32.xlu0 %v1343, 6
    %v1409 = vpop.permute.xlu0 %1408
    %1410 = vrot.lane.b32.xlu0 %v1344, 6
    %v1411 = vpop.permute.xlu0 %1410
    %1412 = vrot.lane.b32.xlu0 %v1345, 6
    %v1413 = vpop.permute.xlu0 %1412
    %1414 = vrot.lane.b32.xlu0 %v1346, 6
    %v1415 = vpop.permute.xlu0 %1414
    %1416 = vrot.lane.b32.xlu0 %v1347, 6
    %v1417 = vpop.permute.xlu0 %1416
    %1418 = vrot.lane.b32.xlu0 %v1348, 6
    %v1419 = vpop.permute.xlu0 %1418
    %1420 = vrot.lane.b32.xlu0 %v1349, 6
    %v1421 = vpop.permute.xlu0 %1420
    %1422 = vrot.lane.b32.xlu0 %v1350, 6
    %v1423 = vpop.permute.xlu0 %1422
    %1424 = vrot.lane.b32.xlu0 %v1351, 6
    %v1425 = vpop.permute.xlu0 %1424
    %1426 = vrot.lane.b32.xlu0 %v1352, 6
    %v1427 = vpop.permute.xlu0 %1426
    %1428 = vrot.lane.b32.xlu0 %v1353, 6
    %v1429 = vpop.permute.xlu0 %1428
    %1430 = vrot.lane.b32.xlu0 %v1354, 6
    %v1431 = vpop.permute.xlu0 %1430
    %1432 = vrot.lane.b32.xlu0 %v1355, 6
    %v1433 = vpop.permute.xlu0 %1432
    %1434 = vrot.lane.b32.xlu0 %v1356, 6
    %v1435 = vpop.permute.xlu0 %1434
    %1436 = vrot.lane.b32.xlu0 %v1357, 6
    %v1437 = vpop.permute.xlu0 %1436
    %1438 = vrot.lane.b32.xlu0 %v1358, 6
    %v1439 = vpop.permute.xlu0 %1438
    %1440 = vrot.lane.b32.xlu0 %v1359, 6
    %v1441 = vpop.permute.xlu0 %1440
    %1442 = vrot.lane.b32.xlu0 %v1360, 6
    %v1443 = vpop.permute.xlu0 %1442
    %1444 = vrot.lane.b32.xlu0 %v1361, 6
    %v1445 = vpop.permute.xlu0 %1444
    %1446 = vrot.lane.b32.xlu0 %v1362, 6
    %v1447 = vpop.permute.xlu0 %1446
    %1448 = vrot.lane.b32.xlu0 %v1363, 6
    %v1449 = vpop.permute.xlu0 %1448
    %1450 = vrot.lane.b32.xlu0 %v1364, 6
    %v1451 = vpop.permute.xlu0 %1450
    %1452 = vrot.lane.b32.xlu0 %v1365, 6
    %v1453 = vpop.permute.xlu0 %1452
    %1454 = vrot.lane.b32.xlu0 %v1366, 6
    %v1455 = vpop.permute.xlu0 %1454
    %1456 = vrot.lane.b32.xlu0 %v1367, 6
    %v1457 = vpop.permute.xlu0 %1456
    %1458 = vrot.lane.b32.xlu0 %v1368, 6
    %v1459 = vpop.permute.xlu0 %1458
    %1460 = vrot.lane.b32.xlu0 %v1369, 6
    %v1461 = vpop.permute.xlu0 %1460
    %1462 = vrot.lane.b32.xlu0 %v1370, 6
    %v1463 = vpop.permute.xlu0 %1462
    %1464 = vrot.lane.b32.xlu0 %v1371, 6
    %v1465 = vpop.permute.xlu0 %1464
    %1466 = vrot.lane.b32.xlu0 %v1372, 6
    %v1467 = vpop.permute.xlu0 %1466
    %1468 = vrot.lane.b32.xlu0 %v1373, 6
    %v1469 = vpop.permute.xlu0 %1468
    %1470 = vrot.lane.b32.xlu0 %v1374, 6
    %v1471 = vpop.permute.xlu0 %1470
    %1472 = vrot.lane.b32.xlu0 %v1375, 6
    %v1473 = vpop.permute.xlu0 %1472
    %1474 = vrot.lane.b32.xlu0 %v1376, 6
    %v1475 = vpop.permute.xlu0 %1474
    %1476 = vrot.lane.b32.xlu0 %v1377, 6
    %v1477 = vpop.permute.xlu0 %1476
    %1478 = vrot.lane.b32.xlu0 %v1378, 6
    %v1479 = vpop.permute.xlu0 %1478
    %1480 = vrot.lane.b32.xlu0 %v1379, 6
    %v1481 = vpop.permute.xlu0 %1480
    %1482 = vrot.lane.b32.xlu0 %v1380, 6
    %v1483 = vpop.permute.xlu0 %1482
    %1484 = vrot.lane.b32.xlu0 %v1381, 6
    %v1485 = vpop.permute.xlu0 %1484
    %1486 = vrot.lane.b32.xlu0 %v1382, 6
    %v1487 = vpop.permute.xlu0 %1486
    %1488 = vrot.lane.b32.xlu0 %v1383, 6
    %v1489 = vpop.permute.xlu0 %1488
    %1490 = vrot.lane.b32.xlu0 %v1384, 6
    %v1491 = vpop.permute.xlu0 %1490
    %1492 = vrot.lane.b32.xlu0 %v1385, 6
    %v1493 = vpop.permute.xlu0 %1492
    %1494 = vrot.lane.b32.xlu0 %v1386, 6
    %v1495 = vpop.permute.xlu0 %1494
    %1496 = vrot.lane.b32.xlu0 %v1387, 6
    %v1497 = vpop.permute.xlu0 %1496
    %1498 = vrot.lane.b32.xlu0 %v1388, 6
    %v1499 = vpop.permute.xlu0 %1498
    %1500 = vrot.lane.b32.xlu0 %v1389, 6
    %v1501 = vpop.permute.xlu0 %1500
    %1502 = vrot.lane.b32.xlu0 %v1390, 6
    %v1503 = vpop.permute.xlu0 %1502
    %1504 = vrot.lane.b32.xlu0 %v1391, 6
    %v1505 = vpop.permute.xlu0 %1504
    %1506 = vrot.lane.b32.xlu0 %v1392, 6
    %v1507 = vpop.permute.xlu0 %1506
    %1508 = vrot.lane.b32.xlu0 %v1393, 6
    %v1509 = vpop.permute.xlu0 %1508
    %1510 = vrot.lane.b32.xlu0 %v1394, 6
    %v1511 = vpop.permute.xlu0 %1510
    %1512 = vrot.lane.b32.xlu0 %v1395, 6
    %v1513 = vpop.permute.xlu0 %1512
    %1514 = vrot.lane.b32.xlu0 %v1396, 6
    %v1515 = vpop.permute.xlu0 %1514
    %1516 = vrot.lane.b32.xlu0 %v1397, 6
    %v1517 = vpop.permute.xlu0 %1516
    %1518 = vrot.lane.b32.xlu0 %v1398, 6
    %v1519 = vpop.permute.xlu0 %1518
    %1520 = vrot.lane.b32.xlu0 %v1399, 6
    %v1521 = vpop.permute.xlu0 %1520
    %1522 = vrot.lane.b32.xlu0 %v1400, 6
    %v1523 = vpop.permute.xlu0 %1522
    %1524 = vrot.lane.b32.xlu0 %v1401, 6
    %v1525 = vpop.permute.xlu0 %1524
    %1526 = vrot.lane.b32.xlu0 %v1402, 6
    %v1527 = vpop.permute.xlu0 %1526
    %1528 = vrot.lane.b32.xlu0 %v1403, 6
    %v1529 = vpop.permute.xlu0 %1528
    %1530 = vrot.lane.b32.xlu0 %v1404, 6
    %v1531 = vpop.permute.xlu0 %1530
    %1532 = vrot.lane.b32.xlu0 %v1405, 6
    %v1533 = vpop.permute.xlu0 %1532
    %vm1598 = vcmask 68656
    %1599 = vst.msk [vmem:[#allocation3] sm:$0xf] %vm1598, %v1407
    %1600 = vst.msk [vmem:[#allocation3 + $0x4] sm:$0xf] %vm1598, %v1409
    %1601 = vst.msk [vmem:[#allocation3 + $0x8] sm:$0xf] %vm1598, %v1411
    %1602 = vst.msk [vmem:[#allocation3 + $0xc] sm:$0xf] %vm1598, %v1413
    %1603 = vst.msk [vmem:[#allocation3 + $0x10] sm:$0xf] %vm1598, %v1415
    %1604 = vst.msk [vmem:[#allocation3 + $0x14] sm:$0xf] %vm1598, %v1417
    %1605 = vst.msk [vmem:[#allocation3 + $0x18] sm:$0xf] %vm1598, %v1419
    %1606 = vst.msk [vmem:[#allocation3 + $0x1c] sm:$0xf] %vm1598, %v1421
    %1607 = vst.msk [vmem:[#allocation3 + $0x20] sm:$0xf] %vm1598, %v1423
    %1608 = vst.msk [vmem:[#allocation3 + $0x24] sm:$0xf] %vm1598, %v1425
    %1609 = vst.msk [vmem:[#allocation3 + $0x28] sm:$0xf] %vm1598, %v1427
    %1610 = vst.msk [vmem:[#allocation3 + $0x2c] sm:$0xf] %vm1598, %v1429
    %1611 = vst.msk [vmem:[#allocation3 + $0x30] sm:$0xf] %vm1598, %v1431
    %1612 = vst.msk [vmem:[#allocation3 + $0x34] sm:$0xf] %vm1598, %v1433
    %1613 = vst.msk [vmem:[#allocation3 + $0x38] sm:$0xf] %vm1598, %v1435
    %1614 = vst.msk [vmem:[#allocation3 + $0x3c] sm:$0xf] %vm1598, %v1437
    %1615 = vst.msk [vmem:[#allocation3 + $0x40] sm:$0xf] %vm1598, %v1439
    %1616 = vst.msk [vmem:[#allocation3 + $0x44] sm:$0xf] %vm1598, %v1441
    %1617 = vst.msk [vmem:[#allocation3 + $0x48] sm:$0xf] %vm1598, %v1443
    %1618 = vst.msk [vmem:[#allocation3 + $0x4c] sm:$0xf] %vm1598, %v1445
    %1619 = vst.msk [vmem:[#allocation3 + $0x50] sm:$0xf] %vm1598, %v1447
    %1620 = vst.msk [vmem:[#allocation3 + $0x54] sm:$0xf] %vm1598, %v1449
    %1621 = vst.msk [vmem:[#allocation3 + $0x58] sm:$0xf] %vm1598, %v1451
    %1622 = vst.msk [vmem:[#allocation3 + $0x5c] sm:$0xf] %vm1598, %v1453
    %1623 = vst.msk [vmem:[#allocation3 + $0x60] sm:$0xf] %vm1598, %v1455
    %1624 = vst.msk [vmem:[#allocation3 + $0x64] sm:$0xf] %vm1598, %v1457
    %1625 = vst.msk [vmem:[#allocation3 + $0x68] sm:$0xf] %vm1598, %v1459
    %1626 = vst.msk [vmem:[#allocation3 + $0x6c] sm:$0xf] %vm1598, %v1461
    %1627 = vst.msk [vmem:[#allocation3 + $0x70] sm:$0xf] %vm1598, %v1463
    %1628 = vst.msk [vmem:[#allocation3 + $0x74] sm:$0xf] %vm1598, %v1465
    %1629 = vst.msk [vmem:[#allocation3 + $0x78] sm:$0xf] %vm1598, %v1467
    %1630 = vst.msk [vmem:[#allocation3 + $0x7c] sm:$0xf] %vm1598, %v1469
    %1631 = vst.msk [vmem:[#allocation3 + $0x80] sm:$0xf] %vm1598, %v1471
    %1632 = vst.msk [vmem:[#allocation3 + $0x84] sm:$0xf] %vm1598, %v1473
    %1633 = vst.msk [vmem:[#allocation3 + $0x88] sm:$0xf] %vm1598, %v1475
    %1634 = vst.msk [vmem:[#allocation3 + $0x8c] sm:$0xf] %vm1598, %v1477
    %1635 = vst.msk [vmem:[#allocation3 + $0x90] sm:$0xf] %vm1598, %v1479
    %1636 = vst.msk [vmem:[#allocation3 + $0x94] sm:$0xf] %vm1598, %v1481
    %1637 = vst.msk [vmem:[#allocation3 + $0x98] sm:$0xf] %vm1598, %v1483
    %1638 = vst.msk [vmem:[#allocation3 + $0x9c] sm:$0xf] %vm1598, %v1485
    %1639 = vst.msk [vmem:[#allocation3 + $0xa0] sm:$0xf] %vm1598, %v1487
    %1640 = vst.msk [vmem:[#allocation3 + $0xa4] sm:$0xf] %vm1598, %v1489
    %1641 = vst.msk [vmem:[#allocation3 + $0xa8] sm:$0xf] %vm1598, %v1491
    %1642 = vst.msk [vmem:[#allocation3 + $0xac] sm:$0xf] %vm1598, %v1493
    %1643 = vst.msk [vmem:[#allocation3 + $0xb0] sm:$0xf] %vm1598, %v1495
    %1644 = vst.msk [vmem:[#allocation3 + $0xb4] sm:$0xf] %vm1598, %v1497
    %1645 = vst.msk [vmem:[#allocation3 + $0xb8] sm:$0xf] %vm1598, %v1499
    %1646 = vst.msk [vmem:[#allocation3 + $0xbc] sm:$0xf] %vm1598, %v1501
    %1647 = vst.msk [vmem:[#allocation3 + $0xc0] sm:$0xf] %vm1598, %v1503
    %1648 = vst.msk [vmem:[#allocation3 + $0xc4] sm:$0xf] %vm1598, %v1505
    %1649 = vst.msk [vmem:[#allocation3 + $0xc8] sm:$0xf] %vm1598, %v1507
    %1650 = vst.msk [vmem:[#allocation3 + $0xcc] sm:$0xf] %vm1598, %v1509
    %1651 = vst.msk [vmem:[#allocation3 + $0xd0] sm:$0xf] %vm1598, %v1511
    %1652 = vst.msk [vmem:[#allocation3 + $0xd4] sm:$0xf] %vm1598, %v1513
    %1653 = vst.msk [vmem:[#allocation3 + $0xd8] sm:$0xf] %vm1598, %v1515
    %1654 = vst.msk [vmem:[#allocation3 + $0xdc] sm:$0xf] %vm1598, %v1517
    %1655 = vst.msk [vmem:[#allocation3 + $0xe0] sm:$0xf] %vm1598, %v1519
    %1656 = vst.msk [vmem:[#allocation3 + $0xe4] sm:$0xf] %vm1598, %v1521
    %1657 = vst.msk [vmem:[#allocation3 + $0xe8] sm:$0xf] %vm1598, %v1523
    %1658 = vst.msk [vmem:[#allocation3 + $0xec] sm:$0xf] %vm1598, %v1525
    %1659 = vst.msk [vmem:[#allocation3 + $0xf0] sm:$0xf] %vm1598, %v1527
    %1660 = vst.msk [vmem:[#allocation3 + $0xf4] sm:$0xf] %vm1598, %v1529
    %1661 = vst.msk [vmem:[#allocation3 + $0xf8] sm:$0xf] %vm1598, %v1531
    %1662 = vst.msk [vmem:[#allocation3 + $0xfc] sm:$0xf] %vm1598, %v1533
    %v1663 = vld [vmem:[%s187] sm:$0xff]
    %v1664 = vld [vmem:[%s187 + $0x8] sm:$0xff]
    %v1665 = vld [vmem:[%s187 + $0x18] sm:$0xff]
    %v1666 = vld [vmem:[%s187 + $0x20] sm:$0xff]
    %v1667 = vld [vmem:[%s187 + $0x30] sm:$0xff]
    %v1668 = vld [vmem:[%s187 + $0x38] sm:$0xff]
    %v1669 = vld [vmem:[%s187 + $0x48] sm:$0xff]
    %v1670 = vld [vmem:[%s187 + $0x50] sm:$0xff]
    %v1671 = vld [vmem:[%s187 + $0x60] sm:$0xff]
    %v1672 = vld [vmem:[%s187 + $0x68] sm:$0xff]
    %v1673 = vld [vmem:[%s187 + $0x78] sm:$0xff]
    %v1674 = vld [vmem:[%s187 + $0x80] sm:$0xff]
    %v1675 = vld [vmem:[%s187 + $0x90] sm:$0xff]
    %v1676 = vld [vmem:[%s187 + $0x98] sm:$0xff]
    %v1677 = vld [vmem:[%s187 + $0xa8] sm:$0xff]
    %v1678 = vld [vmem:[%s187 + $0xb0] sm:$0xff]
    %v1679 = vld [vmem:[%s187 + $0xc0] sm:$0xff]
    %v1680 = vld [vmem:[%s187 + $0xc8] sm:$0xff]
    %v1681 = vld [vmem:[%s187 + $0xd8] sm:$0xff]
    %v1682 = vld [vmem:[%s187 + $0xe0] sm:$0xff]
    %v1683 = vld [vmem:[%s187 + $0xf0] sm:$0xff]
    %v1684 = vld [vmem:[%s187 + $0xf8] sm:$0xff]
    %v1685 = vld [vmem:[%s187 + $0x108] sm:$0xff]
    %v1686 = vld [vmem:[%s187 + $0x110] sm:$0xff]
    %v1687 = vld [vmem:[%s187 + $0x120] sm:$0xff]
    %v1688 = vld [vmem:[%s187 + $0x128] sm:$0xff]
    %v1689 = vld [vmem:[%s187 + $0x138] sm:$0xff]
    %v1690 = vld [vmem:[%s187 + $0x140] sm:$0xff]
    %v1691 = vld [vmem:[%s187 + $0x150] sm:$0xff]
    %v1692 = vld [vmem:[%s187 + $0x158] sm:$0xff]
    %v1693 = vld [vmem:[%s187 + $0x168] sm:$0xff]
    %v1694 = vld [vmem:[%s187 + $0x170] sm:$0xff]
    %v1695 = vld [vmem:[%s187 + $0x1b0] sm:$0xff]
    %v1696 = vld [vmem:[%s187 + $0x1b8] sm:$0xff]
    %v1697 = vld [vmem:[%s187 + $0x1c8] sm:$0xff]
    %v1698 = vld [vmem:[%s187 + $0x1d0] sm:$0xff]
    %v1699 = vld [vmem:[%s187 + $0x1e0] sm:$0xff]
    %v1700 = vld [vmem:[%s187 + $0x1e8] sm:$0xff]
    %v1701 = vld [vmem:[%s187 + $0x1f8] sm:$0xff]
    %v1702 = vld [vmem:[%s187 + $0x200] sm:$0xff]
    %v1703 = vld [vmem:[%s187 + $0x210] sm:$0xff]
    %v1704 = vld [vmem:[%s187 + $0x218] sm:$0xff]
    %v1705 = vld [vmem:[%s187 + $0x228] sm:$0xff]
    %v1706 = vld [vmem:[%s187 + $0x230] sm:$0xff]
    %v1707 = vld [vmem:[%s187 + $0x240] sm:$0xff]
    %v1708 = vld [vmem:[%s187 + $0x248] sm:$0xff]
    %v1709 = vld [vmem:[%s187 + $0x258] sm:$0xff]
    %v1710 = vld [vmem:[%s187 + $0x260] sm:$0xff]
    %v1711 = vld [vmem:[%s187 + $0x270] sm:$0xff]
    %v1712 = vld [vmem:[%s187 + $0x278] sm:$0xff]
    %v1713 = vld [vmem:[%s187 + $0x288] sm:$0xff]
    %v1714 = vld [vmem:[%s187 + $0x290] sm:$0xff]
    %v1715 = vld [vmem:[%s187 + $0x2a0] sm:$0xff]
    %v1716 = vld [vmem:[%s187 + $0x2a8] sm:$0xff]
    %v1717 = vld [vmem:[%s187 + $0x2b8] sm:$0xff]
    %v1718 = vld [vmem:[%s187 + $0x2c0] sm:$0xff]
    %v1719 = vld [vmem:[%s187 + $0x2d0] sm:$0xff]
    %v1720 = vld [vmem:[%s187 + $0x2d8] sm:$0xff]
    %v1721 = vld [vmem:[%s187 + $0x2e8] sm:$0xff]
    %v1722 = vld [vmem:[%s187 + $0x2f0] sm:$0xff]
    %v1723 = vld [vmem:[%s187 + $0x300] sm:$0xff]
    %v1724 = vld [vmem:[%s187 + $0x308] sm:$0xff]
    %v1725 = vld [vmem:[%s187 + $0x318] sm:$0xff]
    %v1726 = vld [vmem:[%s187 + $0x320] sm:$0xff]
    %v1727 = vpack.c.bf16 %v1664, %v1663
    %v1728 = vpack.c.bf16 %v1666, %v1665
    %v1729 = vpack.c.bf16 %v1668, %v1667
    %v1730 = vpack.c.bf16 %v1670, %v1669
    %v1731 = vpack.c.bf16 %v1672, %v1671
    %v1732 = vpack.c.bf16 %v1674, %v1673
    %v1733 = vpack.c.bf16 %v1676, %v1675
    %v1734 = vpack.c.bf16 %v1678, %v1677
    %v1735 = vpack.c.bf16 %v1680, %v1679
    %v1736 = vpack.c.bf16 %v1682, %v1681
    %v1737 = vpack.c.bf16 %v1684, %v1683
    %v1738 = vpack.c.bf16 %v1686, %v1685
    %v1739 = vpack.c.bf16 %v1688, %v1687
    %v1740 = vpack.c.bf16 %v1690, %v1689
    %v1741 = vpack.c.bf16 %v1692, %v1691
    %v1742 = vpack.c.bf16 %v1694, %v1693
    %v1743 = vpack.c.bf16 %v1696, %v1695
    %v1744 = vpack.c.bf16 %v1698, %v1697
    %v1745 = vpack.c.bf16 %v1700, %v1699
    %v1746 = vpack.c.bf16 %v1702, %v1701
    %v1747 = vpack.c.bf16 %v1704, %v1703
    %v1748 = vpack.c.bf16 %v1706, %v1705
    %v1749 = vpack.c.bf16 %v1708, %v1707
    %v1750 = vpack.c.bf16 %v1710, %v1709
    %v1751 = vpack.c.bf16 %v1712, %v1711
    %v1752 = vpack.c.bf16 %v1714, %v1713
    %v1753 = vpack.c.bf16 %v1716, %v1715
    %v1754 = vpack.c.bf16 %v1718, %v1717
    %v1755 = vpack.c.bf16 %v1720, %v1719
    %v1756 = vpack.c.bf16 %v1722, %v1721
    %v1757 = vpack.c.bf16 %v1724, %v1723
    %v1758 = vpack.c.bf16 %v1726, %v1725
    %v1791 = vunpack.c.l.b16 %v1727
    %v1792 = vunpack.c.h.b16 %v1727
    %v1793 = vunpack.c.l.b16 %v1728
    %v1794 = vunpack.c.h.b16 %v1728
    %v1795 = vunpack.c.l.b16 %v1729
    %v1796 = vunpack.c.h.b16 %v1729
    %v1797 = vunpack.c.l.b16 %v1730
    %v1798 = vunpack.c.h.b16 %v1730
    %v1799 = vunpack.c.l.b16 %v1731
    %v1800 = vunpack.c.h.b16 %v1731
    %v1801 = vunpack.c.l.b16 %v1732
    %v1802 = vunpack.c.h.b16 %v1732
    %v1803 = vunpack.c.l.b16 %v1733
    %v1804 = vunpack.c.h.b16 %v1733
    %v1805 = vunpack.c.l.b16 %v1734
    %v1806 = vunpack.c.h.b16 %v1734
    %v1807 = vunpack.c.l.b16 %v1735
    %v1808 = vunpack.c.h.b16 %v1735
    %v1809 = vunpack.c.l.b16 %v1736
    %v1810 = vunpack.c.h.b16 %v1736
    %v1811 = vunpack.c.l.b16 %v1737
    %v1812 = vunpack.c.h.b16 %v1737
    %v1813 = vunpack.c.l.b16 %v1738
    %v1814 = vunpack.c.h.b16 %v1738
    %v1815 = vunpack.c.l.b16 %v1739
    %v1816 = vunpack.c.h.b16 %v1739
    %v1817 = vunpack.c.l.b16 %v1740
    %v1818 = vunpack.c.h.b16 %v1740
    %v1819 = vunpack.c.l.b16 %v1741
    %v1820 = vunpack.c.h.b16 %v1741
    %v1821 = vunpack.c.l.b16 %v1742
    %v1822 = vunpack.c.h.b16 %v1742
    %v1823 = vunpack.c.l.b16 %v1743
    %v1824 = vunpack.c.h.b16 %v1743
    %v1825 = vunpack.c.l.b16 %v1744
    %v1826 = vunpack.c.h.b16 %v1744
    %v1827 = vunpack.c.l.b16 %v1745
    %v1828 = vunpack.c.h.b16 %v1745
    %v1829 = vunpack.c.l.b16 %v1746
    %v1830 = vunpack.c.h.b16 %v1746
    %v1831 = vunpack.c.l.b16 %v1747
    %v1832 = vunpack.c.h.b16 %v1747
    %v1833 = vunpack.c.l.b16 %v1748
    %v1834 = vunpack.c.h.b16 %v1748
    %v1835 = vunpack.c.l.b16 %v1749
    %v1836 = vunpack.c.h.b16 %v1749
    %v1837 = vunpack.c.l.b16 %v1750
    %v1838 = vunpack.c.h.b16 %v1750
    %v1839 = vunpack.c.l.b16 %v1751
    %v1840 = vunpack.c.h.b16 %v1751
    %v1841 = vunpack.c.l.b16 %v1752
    %v1842 = vunpack.c.h.b16 %v1752
    %v1843 = vunpack.c.l.b16 %v1753
    %v1844 = vunpack.c.h.b16 %v1753
    %v1845 = vunpack.c.l.b16 %v1754
    %v1846 = vunpack.c.h.b16 %v1754
    %v1847 = vunpack.c.l.b16 %v1755
    %v1848 = vunpack.c.h.b16 %v1755
    %v1849 = vunpack.c.l.b16 %v1756
    %v1850 = vunpack.c.h.b16 %v1756
    %v1851 = vunpack.c.l.b16 %v1757
    %v1852 = vunpack.c.h.b16 %v1757
    %v1853 = vunpack.c.l.b16 %v1758
    %v1854 = vunpack.c.h.b16 %v1758
    %v1855 = vpack.c.b16 %v1791, %v1791
    %v1856 = vpack.c.b16 %v1792, %v1792
    %v1857 = vpack.c.b16 %v1793, %v1793
    %v1858 = vpack.c.b16 %v1794, %v1794
    %v1859 = vpack.c.b16 %v1795, %v1795
    %v1860 = vpack.c.b16 %v1796, %v1796
    %v1861 = vpack.c.b16 %v1797, %v1797
    %v1862 = vpack.c.b16 %v1798, %v1798
    %v1863 = vpack.c.b16 %v1799, %v1799
    %v1864 = vpack.c.b16 %v1800, %v1800
    %v1865 = vpack.c.b16 %v1801, %v1801
    %v1866 = vpack.c.b16 %v1802, %v1802
    %v1867 = vpack.c.b16 %v1803, %v1803
    %v1868 = vpack.c.b16 %v1804, %v1804
    %v1869 = vpack.c.b16 %v1805, %v1805
    %v1870 = vpack.c.b16 %v1806, %v1806
    %v1871 = vpack.c.b16 %v1807, %v1807
    %v1872 = vpack.c.b16 %v1808, %v1808
    %v1873 = vpack.c.b16 %v1809, %v1809
    %v1874 = vpack.c.b16 %v1810, %v1810
    %v1875 = vpack.c.b16 %v1811, %v1811
    %v1876 = vpack.c.b16 %v1812, %v1812
    %v1877 = vpack.c.b16 %v1813, %v1813
    %v1878 = vpack.c.b16 %v1814, %v1814
    %v1879 = vpack.c.b16 %v1815, %v1815
    %v1880 = vpack.c.b16 %v1816, %v1816
    %v1881 = vpack.c.b16 %v1817, %v1817
    %v1882 = vpack.c.b16 %v1818, %v1818
    %v1883 = vpack.c.b16 %v1819, %v1819
    %v1884 = vpack.c.b16 %v1820, %v1820
    %v1885 = vpack.c.b16 %v1821, %v1821
    %v1886 = vpack.c.b16 %v1822, %v1822
    %v1887 = vpack.c.b16 %v1823, %v1823
    %v1888 = vpack.c.b16 %v1824, %v1824
    %v1889 = vpack.c.b16 %v1825, %v1825
    %v1890 = vpack.c.b16 %v1826, %v1826
    %v1891 = vpack.c.b16 %v1827, %v1827
    %v1892 = vpack.c.b16 %v1828, %v1828
    %v1893 = vpack.c.b16 %v1829, %v1829
    %v1894 = vpack.c.b16 %v1830, %v1830
    %v1895 = vpack.c.b16 %v1831, %v1831
    %v1896 = vpack.c.b16 %v1832, %v1832
    %v1897 = vpack.c.b16 %v1833, %v1833
    %v1898 = vpack.c.b16 %v1834, %v1834
    %v1899 = vpack.c.b16 %v1835, %v1835
    %v1900 = vpack.c.b16 %v1836, %v1836
    %v1901 = vpack.c.b16 %v1837, %v1837
    %v1902 = vpack.c.b16 %v1838, %v1838
    %v1903 = vpack.c.b16 %v1839, %v1839
    %v1904 = vpack.c.b16 %v1840, %v1840
    %v1905 = vpack.c.b16 %v1841, %v1841
    %v1906 = vpack.c.b16 %v1842, %v1842
    %v1907 = vpack.c.b16 %v1843, %v1843
    %v1908 = vpack.c.b16 %v1844, %v1844
    %v1909 = vpack.c.b16 %v1845, %v1845
    %v1910 = vpack.c.b16 %v1846, %v1846
    %v1911 = vpack.c.b16 %v1847, %v1847
    %v1912 = vpack.c.b16 %v1848, %v1848
    %v1913 = vpack.c.b16 %v1849, %v1849
    %v1914 = vpack.c.b16 %v1850, %v1850
    %v1915 = vpack.c.b16 %v1851, %v1851
    %v1916 = vpack.c.b16 %v1852, %v1852
    %v1917 = vpack.c.b16 %v1853, %v1853
    %v1918 = vpack.c.b16 %v1854, %v1854
    %1919 = vrot.lane.b32.xlu0 %v1855, 9
    %v1920 = vpop.permute.xlu0 %1919
    %1921 = vrot.lane.b32.xlu0 %v1856, 9
    %v1922 = vpop.permute.xlu0 %1921
    %1923 = vrot.lane.b32.xlu0 %v1857, 9
    %v1924 = vpop.permute.xlu0 %1923
    %1925 = vrot.lane.b32.xlu0 %v1858, 9
    %v1926 = vpop.permute.xlu0 %1925
    %1927 = vrot.lane.b32.xlu0 %v1859, 9
    %v1928 = vpop.permute.xlu0 %1927
    %1929 = vrot.lane.b32.xlu0 %v1860, 9
    %v1930 = vpop.permute.xlu0 %1929
    %1931 = vrot.lane.b32.xlu0 %v1861, 9
    %v1932 = vpop.permute.xlu0 %1931
    %1933 = vrot.lane.b32.xlu0 %v1862, 9
    %v1934 = vpop.permute.xlu0 %1933
    %1935 = vrot.lane.b32.xlu0 %v1863, 9
    %v1936 = vpop.permute.xlu0 %1935
    %1937 = vrot.lane.b32.xlu0 %v1864, 9
    %v1938 = vpop.permute.xlu0 %1937
    %1939 = vrot.lane.b32.xlu0 %v1865, 9
    %v1940 = vpop.permute.xlu0 %1939
    %1941 = vrot.lane.b32.xlu0 %v1866, 9
    %v1942 = vpop.permute.xlu0 %1941
    %1943 = vrot.lane.b32.xlu0 %v1867, 9
    %v1944 = vpop.permute.xlu0 %1943
    %1945 = vrot.lane.b32.xlu0 %v1868, 9
    %v1946 = vpop.permute.xlu0 %1945
    %1947 = vrot.lane.b32.xlu0 %v1869, 9
    %v1948 = vpop.permute.xlu0 %1947
    %1949 = vrot.lane.b32.xlu0 %v1870, 9
    %v1950 = vpop.permute.xlu0 %1949
    %1951 = vrot.lane.b32.xlu0 %v1871, 9
    %v1952 = vpop.permute.xlu0 %1951
    %1953 = vrot.lane.b32.xlu0 %v1872, 9
    %v1954 = vpop.permute.xlu0 %1953
    %1955 = vrot.lane.b32.xlu0 %v1873, 9
    %v1956 = vpop.permute.xlu0 %1955
    %1957 = vrot.lane.b32.xlu0 %v1874, 9
    %v1958 = vpop.permute.xlu0 %1957
    %1959 = vrot.lane.b32.xlu0 %v1875, 9
    %v1960 = vpop.permute.xlu0 %1959
    %1961 = vrot.lane.b32.xlu0 %v1876, 9
    %v1962 = vpop.permute.xlu0 %1961
    %1963 = vrot.lane.b32.xlu0 %v1877, 9
    %v1964 = vpop.permute.xlu0 %1963
    %1965 = vrot.lane.b32.xlu0 %v1878, 9
    %v1966 = vpop.permute.xlu0 %1965
    %1967 = vrot.lane.b32.xlu0 %v1879, 9
    %v1968 = vpop.permute.xlu0 %1967
    %1969 = vrot.lane.b32.xlu0 %v1880, 9
    %v1970 = vpop.permute.xlu0 %1969
    %1971 = vrot.lane.b32.xlu0 %v1881, 9
    %v1972 = vpop.permute.xlu0 %1971
    %1973 = vrot.lane.b32.xlu0 %v1882, 9
    %v1974 = vpop.permute.xlu0 %1973
    %1975 = vrot.lane.b32.xlu0 %v1883, 9
    %v1976 = vpop.permute.xlu0 %1975
    %1977 = vrot.lane.b32.xlu0 %v1884, 9
    %v1978 = vpop.permute.xlu0 %1977
    %1979 = vrot.lane.b32.xlu0 %v1885, 9
    %v1980 = vpop.permute.xlu0 %1979
    %1981 = vrot.lane.b32.xlu0 %v1886, 9
    %v1982 = vpop.permute.xlu0 %1981
    %1983 = vrot.lane.b32.xlu0 %v1887, 9
    %v1984 = vpop.permute.xlu0 %1983
    %1985 = vrot.lane.b32.xlu0 %v1888, 9
    %v1986 = vpop.permute.xlu0 %1985
    %1987 = vrot.lane.b32.xlu0 %v1889, 9
    %v1988 = vpop.permute.xlu0 %1987
    %1989 = vrot.lane.b32.xlu0 %v1890, 9
    %v1990 = vpop.permute.xlu0 %1989
    %1991 = vrot.lane.b32.xlu0 %v1891, 9
    %v1992 = vpop.permute.xlu0 %1991
    %1993 = vrot.lane.b32.xlu0 %v1892, 9
    %v1994 = vpop.permute.xlu0 %1993
    %1995 = vrot.lane.b32.xlu0 %v1893, 9
    %v1996 = vpop.permute.xlu0 %1995
    %1997 = vrot.lane.b32.xlu0 %v1894, 9
    %v1998 = vpop.permute.xlu0 %1997
    %1999 = vrot.lane.b32.xlu0 %v1895, 9
    %v2000 = vpop.permute.xlu0 %1999
    %2001 = vrot.lane.b32.xlu0 %v1896, 9
    %v2002 = vpop.permute.xlu0 %2001
    %2003 = vrot.lane.b32.xlu0 %v1897, 9
    %v2004 = vpop.permute.xlu0 %2003
    %2005 = vrot.lane.b32.xlu0 %v1898, 9
    %v2006 = vpop.permute.xlu0 %2005
    %2007 = vrot.lane.b32.xlu0 %v1899, 9
    %v2008 = vpop.permute.xlu0 %2007
    %2009 = vrot.lane.b32.xlu0 %v1900, 9
    %v2010 = vpop.permute.xlu0 %2009
    %2011 = vrot.lane.b32.xlu0 %v1901, 9
    %v2012 = vpop.permute.xlu0 %2011
    %2013 = vrot.lane.b32.xlu0 %v1902, 9
    %v2014 = vpop.permute.xlu0 %2013
    %2015 = vrot.lane.b32.xlu0 %v1903, 9
    %v2016 = vpop.permute.xlu0 %2015
    %2017 = vrot.lane.b32.xlu0 %v1904, 9
    %v2018 = vpop.permute.xlu0 %2017
    %2019 = vrot.lane.b32.xlu0 %v1905, 9
    %v2020 = vpop.permute.xlu0 %2019
    %2021 = vrot.lane.b32.xlu0 %v1906, 9
    %v2022 = vpop.permute.xlu0 %2021
    %2023 = vrot.lane.b32.xlu0 %v1907, 9
    %v2024 = vpop.permute.xlu0 %2023
    %2025 = vrot.lane.b32.xlu0 %v1908, 9
    %v2026 = vpop.permute.xlu0 %2025
    %2027 = vrot.lane.b32.xlu0 %v1909, 9
    %v2028 = vpop.permute.xlu0 %2027
    %2029 = vrot.lane.b32.xlu0 %v1910, 9
    %v2030 = vpop.permute.xlu0 %2029
    %2031 = vrot.lane.b32.xlu0 %v1911, 9
    %v2032 = vpop.permute.xlu0 %2031
    %2033 = vrot.lane.b32.xlu0 %v1912, 9
    %v2034 = vpop.permute.xlu0 %2033
    %2035 = vrot.lane.b32.xlu0 %v1913, 9
    %v2036 = vpop.permute.xlu0 %2035
    %2037 = vrot.lane.b32.xlu0 %v1914, 9
    %v2038 = vpop.permute.xlu0 %2037
    %2039 = vrot.lane.b32.xlu0 %v1915, 9
    %v2040 = vpop.permute.xlu0 %2039
    %2041 = vrot.lane.b32.xlu0 %v1916, 9
    %v2042 = vpop.permute.xlu0 %2041
    %2043 = vrot.lane.b32.xlu0 %v1917, 9
    %v2044 = vpop.permute.xlu0 %2043
    %2045 = vrot.lane.b32.xlu0 %v1918, 9
    %v2046 = vpop.permute.xlu0 %2045
    %vm2111 = vcmask 93256
    %2112 = vst.msk [vmem:[#allocation3] sm:$0xf] %vm2111, %v1920
    %2113 = vst.msk [vmem:[#allocation3 + $0x4] sm:$0xf] %vm2111, %v1922
    %2114 = vst.msk [vmem:[#allocation3 + $0x8] sm:$0xf] %vm2111, %v1924
    %2115 = vst.msk [vmem:[#allocation3 + $0xc] sm:$0xf] %vm2111, %v1926
    %2116 = vst.msk [vmem:[#allocation3 + $0x10] sm:$0xf] %vm2111, %v1928
    %2117 = vst.msk [vmem:[#allocation3 + $0x14] sm:$0xf] %vm2111, %v1930
    %2118 = vst.msk [vmem:[#allocation3 + $0x18] sm:$0xf] %vm2111, %v1932
    %2119 = vst.msk [vmem:[#allocation3 + $0x1c] sm:$0xf] %vm2111, %v1934
    %2120 = vst.msk [vmem:[#allocation3 + $0x20] sm:$0xf] %vm2111, %v1936
    %2121 = vst.msk [vmem:[#allocation3 + $0x24] sm:$0xf] %vm2111, %v1938
    %2122 = vst.msk [vmem:[#allocation3 + $0x28] sm:$0xf] %vm2111, %v1940
    %2123 = vst.msk [vmem:[#allocation3 + $0x2c] sm:$0xf] %vm2111, %v1942
    %2124 = vst.msk [vmem:[#allocation3 + $0x30] sm:$0xf] %vm2111, %v1944
    %2125 = vst.msk [vmem:[#allocation3 + $0x34] sm:$0xf] %vm2111, %v1946
    %2126 = vst.msk [vmem:[#allocation3 + $0x38] sm:$0xf] %vm2111, %v1948
    %2127 = vst.msk [vmem:[#allocation3 + $0x3c] sm:$0xf] %vm2111, %v1950
    %2128 = vst.msk [vmem:[#allocation3 + $0x40] sm:$0xf] %vm2111, %v1952
    %2129 = vst.msk [vmem:[#allocation3 + $0x44] sm:$0xf] %vm2111, %v1954
    %2130 = vst.msk [vmem:[#allocation3 + $0x48] sm:$0xf] %vm2111, %v1956
    %2131 = vst.msk [vmem:[#allocation3 + $0x4c] sm:$0xf] %vm2111, %v1958
    %2132 = vst.msk [vmem:[#allocation3 + $0x50] sm:$0xf] %vm2111, %v1960
    %2133 = vst.msk [vmem:[#allocation3 + $0x54] sm:$0xf] %vm2111, %v1962
    %2134 = vst.msk [vmem:[#allocation3 + $0x58] sm:$0xf] %vm2111, %v1964
    %2135 = vst.msk [vmem:[#allocation3 + $0x5c] sm:$0xf] %vm2111, %v1966
    %2136 = vst.msk [vmem:[#allocation3 + $0x60] sm:$0xf] %vm2111, %v1968
    %2137 = vst.msk [vmem:[#allocation3 + $0x64] sm:$0xf] %vm2111, %v1970
    %2138 = vst.msk [vmem:[#allocation3 + $0x68] sm:$0xf] %vm2111, %v1972
    %2139 = vst.msk [vmem:[#allocation3 + $0x6c] sm:$0xf] %vm2111, %v1974
    %2140 = vst.msk [vmem:[#allocation3 + $0x70] sm:$0xf] %vm2111, %v1976
    %2141 = vst.msk [vmem:[#allocation3 + $0x74] sm:$0xf] %vm2111, %v1978
    %2142 = vst.msk [vmem:[#allocation3 + $0x78] sm:$0xf] %vm2111, %v1980
    %2143 = vst.msk [vmem:[#allocation3 + $0x7c] sm:$0xf] %vm2111, %v1982
    %2144 = vst.msk [vmem:[#allocation3 + $0x80] sm:$0xf] %vm2111, %v1984
    %2145 = vst.msk [vmem:[#allocation3 + $0x84] sm:$0xf] %vm2111, %v1986
    %2146 = vst.msk [vmem:[#allocation3 + $0x88] sm:$0xf] %vm2111, %v1988
    %2147 = vst.msk [vmem:[#allocation3 + $0x8c] sm:$0xf] %vm2111, %v1990
    %2148 = vst.msk [vmem:[#allocation3 + $0x90] sm:$0xf] %vm2111, %v1992
    %2149 = vst.msk [vmem:[#allocation3 + $0x94] sm:$0xf] %vm2111, %v1994
    %2150 = vst.msk [vmem:[#allocation3 + $0x98] sm:$0xf] %vm2111, %v1996
    %2151 = vst.msk [vmem:[#allocation3 + $0x9c] sm:$0xf] %vm2111, %v1998
    %2152 = vst.msk [vmem:[#allocation3 + $0xa0] sm:$0xf] %vm2111, %v2000
    %2153 = vst.msk [vmem:[#allocation3 + $0xa4] sm:$0xf] %vm2111, %v2002
    %2154 = vst.msk [vmem:[#allocation3 + $0xa8] sm:$0xf] %vm2111, %v2004
    %2155 = vst.msk [vmem:[#allocation3 + $0xac] sm:$0xf] %vm2111, %v2006
    %2156 = vst.msk [vmem:[#allocation3 + $0xb0] sm:$0xf] %vm2111, %v2008
    %2157 = vst.msk [vmem:[#allocation3 + $0xb4] sm:$0xf] %vm2111, %v2010
    %2158 = vst.msk [vmem:[#allocation3 + $0xb8] sm:$0xf] %vm2111, %v2012
    %2159 = vst.msk [vmem:[#allocation3 + $0xbc] sm:$0xf] %vm2111, %v2014
    %2160 = vst.msk [vmem:[#allocation3 + $0xc0] sm:$0xf] %vm2111, %v2016
    %2161 = vst.msk [vmem:[#allocation3 + $0xc4] sm:$0xf] %vm2111, %v2018
    %2162 = vst.msk [vmem:[#allocation3 + $0xc8] sm:$0xf] %vm2111, %v2020
    %2163 = vst.msk [vmem:[#allocation3 + $0xcc] sm:$0xf] %vm2111, %v2022
    %2164 = vst.msk [vmem:[#allocation3 + $0xd0] sm:$0xf] %vm2111, %v2024
    %2165 = vst.msk [vmem:[#allocation3 + $0xd4] sm:$0xf] %vm2111, %v2026
    %2166 = vst.msk [vmem:[#allocation3 + $0xd8] sm:$0xf] %vm2111, %v2028
    %2167 = vst.msk [vmem:[#allocation3 + $0xdc] sm:$0xf] %vm2111, %v2030
    %2168 = vst.msk [vmem:[#allocation3 + $0xe0] sm:$0xf] %vm2111, %v2032
    %2169 = vst.msk [vmem:[#allocation3 + $0xe4] sm:$0xf] %vm2111, %v2034
    %2170 = vst.msk [vmem:[#allocation3 + $0xe8] sm:$0xf] %vm2111, %v2036
    %2171 = vst.msk [vmem:[#allocation3 + $0xec] sm:$0xf] %vm2111, %v2038
    %2172 = vst.msk [vmem:[#allocation3 + $0xf0] sm:$0xf] %vm2111, %v2040
    %2173 = vst.msk [vmem:[#allocation3 + $0xf4] sm:$0xf] %vm2111, %v2042
    %2174 = vst.msk [vmem:[#allocation3 + $0xf8] sm:$0xf] %vm2111, %v2044
    %2175 = vst.msk [vmem:[#allocation3 + $0xfc] sm:$0xf] %vm2111, %v2046
    %v2176 = vld [vmem:[%s187 + $0x1] sm:$0xff]
    %v2177 = vld [vmem:[%s187 + $0x9] sm:$0xff]
    %v2178 = vld [vmem:[%s187 + $0x19] sm:$0xff]
    %v2179 = vld [vmem:[%s187 + $0x21] sm:$0xff]
    %v2180 = vld [vmem:[%s187 + $0x31] sm:$0xff]
    %v2181 = vld [vmem:[%s187 + $0x39] sm:$0xff]
    %v2182 = vld [vmem:[%s187 + $0x49] sm:$0xff]
    %v2183 = vld [vmem:[%s187 + $0x51] sm:$0xff]
    %v2184 = vld [vmem:[%s187 + $0x61] sm:$0xff]
    %v2185 = vld [vmem:[%s187 + $0x69] sm:$0xff]
    %v2186 = vld [vmem:[%s187 + $0x79] sm:$0xff]
    %v2187 = vld [vmem:[%s187 + $0x81] sm:$0xff]
    %v2188 = vld [vmem:[%s187 + $0x91] sm:$0xff]
    %v2189 = vld [vmem:[%s187 + $0x99] sm:$0xff]
    %v2190 = vld [vmem:[%s187 + $0xa9] sm:$0xff]
    %v2191 = vld [vmem:[%s187 + $0xb1] sm:$0xff]
    %v2192 = vld [vmem:[%s187 + $0xc1] sm:$0xff]
    %v2193 = vld [vmem:[%s187 + $0xc9] sm:$0xff]
    %v2194 = vld [vmem:[%s187 + $0xd9] sm:$0xff]
    %v2195 = vld [vmem:[%s187 + $0xe1] sm:$0xff]
    %v2196 = vld [vmem:[%s187 + $0xf1] sm:$0xff]
    %v2197 = vld [vmem:[%s187 + $0xf9] sm:$0xff]
    %v2198 = vld [vmem:[%s187 + $0x109] sm:$0xff]
    %v2199 = vld [vmem:[%s187 + $0x111] sm:$0xff]
    %v2200 = vld [vmem:[%s187 + $0x121] sm:$0xff]
    %v2201 = vld [vmem:[%s187 + $0x129] sm:$0xff]
    %v2202 = vld [vmem:[%s187 + $0x139] sm:$0xff]
    %v2203 = vld [vmem:[%s187 + $0x141] sm:$0xff]
    %v2204 = vld [vmem:[%s187 + $0x151] sm:$0xff]
    %v2205 = vld [vmem:[%s187 + $0x159] sm:$0xff]
    %v2206 = vld [vmem:[%s187 + $0x169] sm:$0xff]
    %v2207 = vld [vmem:[%s187 + $0x171] sm:$0xff]
    %v2208 = vld [vmem:[%s187 + $0x1b1] sm:$0xff]
    %v2209 = vld [vmem:[%s187 + $0x1b9] sm:$0xff]
    %v2210 = vld [vmem:[%s187 + $0x1c9] sm:$0xff]
    %v2211 = vld [vmem:[%s187 + $0x1d1] sm:$0xff]
    %v2212 = vld [vmem:[%s187 + $0x1e1] sm:$0xff]
    %v2213 = vld [vmem:[%s187 + $0x1e9] sm:$0xff]
    %v2214 = vld [vmem:[%s187 + $0x1f9] sm:$0xff]
    %v2215 = vld [vmem:[%s187 + $0x201] sm:$0xff]
    %v2216 = vld [vmem:[%s187 + $0x211] sm:$0xff]
    %v2217 = vld [vmem:[%s187 + $0x219] sm:$0xff]
    %v2218 = vld [vmem:[%s187 + $0x229] sm:$0xff]
    %v2219 = vld [vmem:[%s187 + $0x231] sm:$0xff]
    %v2220 = vld [vmem:[%s187 + $0x241] sm:$0xff]
    %v2221 = vld [vmem:[%s187 + $0x249] sm:$0xff]
    %v2222 = vld [vmem:[%s187 + $0x259] sm:$0xff]
    %v2223 = vld [vmem:[%s187 + $0x261] sm:$0xff]
    %v2224 = vld [vmem:[%s187 + $0x271] sm:$0xff]
    %v2225 = vld [vmem:[%s187 + $0x279] sm:$0xff]
    %v2226 = vld [vmem:[%s187 + $0x289] sm:$0xff]
    %v2227 = vld [vmem:[%s187 + $0x291] sm:$0xff]
    %v2228 = vld [vmem:[%s187 + $0x2a1] sm:$0xff]
    %v2229 = vld [vmem:[%s187 + $0x2a9] sm:$0xff]
    %v2230 = vld [vmem:[%s187 + $0x2b9] sm:$0xff]
    %v2231 = vld [vmem:[%s187 + $0x2c1] sm:$0xff]
    %v2232 = vld [vmem:[%s187 + $0x2d1] sm:$0xff]
    %v2233 = vld [vmem:[%s187 + $0x2d9] sm:$0xff]
    %v2234 = vld [vmem:[%s187 + $0x2e9] sm:$0xff]
    %v2235 = vld [vmem:[%s187 + $0x2f1] sm:$0xff]
    %v2236 = vld [vmem:[%s187 + $0x301] sm:$0xff]
    %v2237 = vld [vmem:[%s187 + $0x309] sm:$0xff]
    %v2238 = vld [vmem:[%s187 + $0x319] sm:$0xff]
    %v2239 = vld [vmem:[%s187 + $0x321] sm:$0xff]
    %v2240 = vpack.c.bf16 %v2177, %v2176
    %v2241 = vpack.c.bf16 %v2179, %v2178
    %v2242 = vpack.c.bf16 %v2181, %v2180
    %v2243 = vpack.c.bf16 %v2183, %v2182
    %v2244 = vpack.c.bf16 %v2185, %v2184
    %v2245 = vpack.c.bf16 %v2187, %v2186
    %v2246 = vpack.c.bf16 %v2189, %v2188
    %v2247 = vpack.c.bf16 %v2191, %v2190
    %v2248 = vpack.c.bf16 %v2193, %v2192
    %v2249 = vpack.c.bf16 %v2195, %v2194
    %v2250 = vpack.c.bf16 %v2197, %v2196
    %v2251 = vpack.c.bf16 %v2199, %v2198
    %v2252 = vpack.c.bf16 %v2201, %v2200
    %v2253 = vpack.c.bf16 %v2203, %v2202
    %v2254 = vpack.c.bf16 %v2205, %v2204
    %v2255 = vpack.c.bf16 %v2207, %v2206
    %v2256 = vpack.c.bf16 %v2209, %v2208
    %v2257 = vpack.c.bf16 %v2211, %v2210
    %v2258 = vpack.c.bf16 %v2213, %v2212
    %v2259 = vpack.c.bf16 %v2215, %v2214
    %v2260 = vpack.c.bf16 %v2217, %v2216
    %v2261 = vpack.c.bf16 %v2219, %v2218
    %v2262 = vpack.c.bf16 %v2221, %v2220
    %v2263 = vpack.c.bf16 %v2223, %v2222
    %v2264 = vpack.c.bf16 %v2225, %v2224
    %v2265 = vpack.c.bf16 %v2227, %v2226
    %v2266 = vpack.c.bf16 %v2229, %v2228
    %v2267 = vpack.c.bf16 %v2231, %v2230
    %v2268 = vpack.c.bf16 %v2233, %v2232
    %v2269 = vpack.c.bf16 %v2235, %v2234
    %v2270 = vpack.c.bf16 %v2237, %v2236
    %v2271 = vpack.c.bf16 %v2239, %v2238
    %v2304 = vunpack.c.l.b16 %v2240
    %v2305 = vunpack.c.h.b16 %v2240
    %v2306 = vunpack.c.l.b16 %v2241
    %v2307 = vunpack.c.h.b16 %v2241
    %v2308 = vunpack.c.l.b16 %v2242
    %v2309 = vunpack.c.h.b16 %v2242
    %v2310 = vunpack.c.l.b16 %v2243
    %v2311 = vunpack.c.h.b16 %v2243
    %v2312 = vunpack.c.l.b16 %v2244
    %v2313 = vunpack.c.h.b16 %v2244
    %v2314 = vunpack.c.l.b16 %v2245
    %v2315 = vunpack.c.h.b16 %v2245
    %v2316 = vunpack.c.l.b16 %v2246
    %v2317 = vunpack.c.h.b16 %v2246
    %v2318 = vunpack.c.l.b16 %v2247
    %v2319 = vunpack.c.h.b16 %v2247
    %v2320 = vunpack.c.l.b16 %v2248
    %v2321 = vunpack.c.h.b16 %v2248
    %v2322 = vunpack.c.l.b16 %v2249
    %v2323 = vunpack.c.h.b16 %v2249
    %v2324 = vunpack.c.l.b16 %v2250
    %v2325 = vunpack.c.h.b16 %v2250
    %v2326 = vunpack.c.l.b16 %v2251
    %v2327 = vunpack.c.h.b16 %v2251
    %v2328 = vunpack.c.l.b16 %v2252
    %v2329 = vunpack.c.h.b16 %v2252
    %v2330 = vunpack.c.l.b16 %v2253
    %v2331 = vunpack.c.h.b16 %v2253
    %v2332 = vunpack.c.l.b16 %v2254
    %v2333 = vunpack.c.h.b16 %v2254
    %v2334 = vunpack.c.l.b16 %v2255
    %v2335 = vunpack.c.h.b16 %v2255
    %v2336 = vunpack.c.l.b16 %v2256
    %v2337 = vunpack.c.h.b16 %v2256
    %v2338 = vunpack.c.l.b16 %v2257
    %v2339 = vunpack.c.h.b16 %v2257
    %v2340 = vunpack.c.l.b16 %v2258
    %v2341 = vunpack.c.h.b16 %v2258
    %v2342 = vunpack.c.l.b16 %v2259
    %v2343 = vunpack.c.h.b16 %v2259
    %v2344 = vunpack.c.l.b16 %v2260
    %v2345 = vunpack.c.h.b16 %v2260
    %v2346 = vunpack.c.l.b16 %v2261
    %v2347 = vunpack.c.h.b16 %v2261
    %v2348 = vunpack.c.l.b16 %v2262
    %v2349 = vunpack.c.h.b16 %v2262
    %v2350 = vunpack.c.l.b16 %v2263
    %v2351 = vunpack.c.h.b16 %v2263
    %v2352 = vunpack.c.l.b16 %v2264
    %v2353 = vunpack.c.h.b16 %v2264
    %v2354 = vunpack.c.l.b16 %v2265
    %v2355 = vunpack.c.h.b16 %v2265
    %v2356 = vunpack.c.l.b16 %v2266
    %v2357 = vunpack.c.h.b16 %v2266
    %v2358 = vunpack.c.l.b16 %v2267
    %v2359 = vunpack.c.h.b16 %v2267
    %v2360 = vunpack.c.l.b16 %v2268
    %v2361 = vunpack.c.h.b16 %v2268
    %v2362 = vunpack.c.l.b16 %v2269
    %v2363 = vunpack.c.h.b16 %v2269
    %v2364 = vunpack.c.l.b16 %v2270
    %v2365 = vunpack.c.h.b16 %v2270
    %v2366 = vunpack.c.l.b16 %v2271
    %v2367 = vunpack.c.h.b16 %v2271
    %v2368 = vpack.c.b16 %v2304, %v2304
    %v2369 = vpack.c.b16 %v2305, %v2305
    %v2370 = vpack.c.b16 %v2306, %v2306
    %v2371 = vpack.c.b16 %v2307, %v2307
    %v2372 = vpack.c.b16 %v2308, %v2308
    %v2373 = vpack.c.b16 %v2309, %v2309
    %v2374 = vpack.c.b16 %v2310, %v2310
    %v2375 = vpack.c.b16 %v2311, %v2311
    %v2376 = vpack.c.b16 %v2312, %v2312
    %v2377 = vpack.c.b16 %v2313, %v2313
    %v2378 = vpack.c.b16 %v2314, %v2314
    %v2379 = vpack.c.b16 %v2315, %v2315
    %v2380 = vpack.c.b16 %v2316, %v2316
    %v2381 = vpack.c.b16 %v2317, %v2317
    %v2382 = vpack.c.b16 %v2318, %v2318
    %v2383 = vpack.c.b16 %v2319, %v2319
    %v2384 = vpack.c.b16 %v2320, %v2320
    %v2385 = vpack.c.b16 %v2321, %v2321
    %v2386 = vpack.c.b16 %v2322, %v2322
    %v2387 = vpack.c.b16 %v2323, %v2323
    %v2388 = vpack.c.b16 %v2324, %v2324
    %v2389 = vpack.c.b16 %v2325, %v2325
    %v2390 = vpack.c.b16 %v2326, %v2326
    %v2391 = vpack.c.b16 %v2327, %v2327
    %v2392 = vpack.c.b16 %v2328, %v2328
    %v2393 = vpack.c.b16 %v2329, %v2329
    %v2394 = vpack.c.b16 %v2330, %v2330
    %v2395 = vpack.c.b16 %v2331, %v2331
    %v2396 = vpack.c.b16 %v2332, %v2332
    %v2397 = vpack.c.b16 %v2333, %v2333
    %v2398 = vpack.c.b16 %v2334, %v2334
    %v2399 = vpack.c.b16 %v2335, %v2335
    %v2400 = vpack.c.b16 %v2336, %v2336
    %v2401 = vpack.c.b16 %v2337, %v2337
    %v2402 = vpack.c.b16 %v2338, %v2338
    %v2403 = vpack.c.b16 %v2339, %v2339
    %v2404 = vpack.c.b16 %v2340, %v2340
    %v2405 = vpack.c.b16 %v2341, %v2341
    %v2406 = vpack.c.b16 %v2342, %v2342
    %v2407 = vpack.c.b16 %v2343, %v2343
    %v2408 = vpack.c.b16 %v2344, %v2344
    %v2409 = vpack.c.b16 %v2345, %v2345
    %v2410 = vpack.c.b16 %v2346, %v2346
    %v2411 = vpack.c.b16 %v2347, %v2347
    %v2412 = vpack.c.b16 %v2348, %v2348
    %v2413 = vpack.c.b16 %v2349, %v2349
    %v2414 = vpack.c.b16 %v2350, %v2350
    %v2415 = vpack.c.b16 %v2351, %v2351
    %v2416 = vpack.c.b16 %v2352, %v2352
    %v2417 = vpack.c.b16 %v2353, %v2353
    %v2418 = vpack.c.b16 %v2354, %v2354
    %v2419 = vpack.c.b16 %v2355, %v2355
    %v2420 = vpack.c.b16 %v2356, %v2356
    %v2421 = vpack.c.b16 %v2357, %v2357
    %v2422 = vpack.c.b16 %v2358, %v2358
    %v2423 = vpack.c.b16 %v2359, %v2359
    %v2424 = vpack.c.b16 %v2360, %v2360
    %v2425 = vpack.c.b16 %v2361, %v2361
    %v2426 = vpack.c.b16 %v2362, %v2362
    %v2427 = vpack.c.b16 %v2363, %v2363
    %v2428 = vpack.c.b16 %v2364, %v2364
    %v2429 = vpack.c.b16 %v2365, %v2365
    %v2430 = vpack.c.b16 %v2366, %v2366
    %v2431 = vpack.c.b16 %v2367, %v2367
    %2432 = vrot.lane.b32.xlu0 %v2368, 12
    %v2433 = vpop.permute.xlu0 %2432
    %2434 = vrot.lane.b32.xlu0 %v2369, 12
    %v2435 = vpop.permute.xlu0 %2434
    %2436 = vrot.lane.b32.xlu0 %v2370, 12
    %v2437 = vpop.permute.xlu0 %2436
    %2438 = vrot.lane.b32.xlu0 %v2371, 12
    %v2439 = vpop.permute.xlu0 %2438
    %2440 = vrot.lane.b32.xlu0 %v2372, 12
    %v2441 = vpop.permute.xlu0 %2440
    %2442 = vrot.lane.b32.xlu0 %v2373, 12
    %v2443 = vpop.permute.xlu0 %2442
    %2444 = vrot.lane.b32.xlu0 %v2374, 12
    %v2445 = vpop.permute.xlu0 %2444
    %2446 = vrot.lane.b32.xlu0 %v2375, 12
    %v2447 = vpop.permute.xlu0 %2446
    %2448 = vrot.lane.b32.xlu0 %v2376, 12
    %v2449 = vpop.permute.xlu0 %2448
    %2450 = vrot.lane.b32.xlu0 %v2377, 12
    %v2451 = vpop.permute.xlu0 %2450
    %2452 = vrot.lane.b32.xlu0 %v2378, 12
    %v2453 = vpop.permute.xlu0 %2452
    %2454 = vrot.lane.b32.xlu0 %v2379, 12
    %v2455 = vpop.permute.xlu0 %2454
    %2456 = vrot.lane.b32.xlu0 %v2380, 12
    %v2457 = vpop.permute.xlu0 %2456
    %2458 = vrot.lane.b32.xlu0 %v2381, 12
    %v2459 = vpop.permute.xlu0 %2458
    %2460 = vrot.lane.b32.xlu0 %v2382, 12
    %v2461 = vpop.permute.xlu0 %2460
    %2462 = vrot.lane.b32.xlu0 %v2383, 12
    %v2463 = vpop.permute.xlu0 %2462
    %2464 = vrot.lane.b32.xlu0 %v2384, 12
    %v2465 = vpop.permute.xlu0 %2464
    %2466 = vrot.lane.b32.xlu0 %v2385, 12
    %v2467 = vpop.permute.xlu0 %2466
    %2468 = vrot.lane.b32.xlu0 %v2386, 12
    %v2469 = vpop.permute.xlu0 %2468
    %2470 = vrot.lane.b32.xlu0 %v2387, 12
    %v2471 = vpop.permute.xlu0 %2470
    %2472 = vrot.lane.b32.xlu0 %v2388, 12
    %v2473 = vpop.permute.xlu0 %2472
    %2474 = vrot.lane.b32.xlu0 %v2389, 12
    %v2475 = vpop.permute.xlu0 %2474
    %2476 = vrot.lane.b32.xlu0 %v2390, 12
    %v2477 = vpop.permute.xlu0 %2476
    %2478 = vrot.lane.b32.xlu0 %v2391, 12
    %v2479 = vpop.permute.xlu0 %2478
    %2480 = vrot.lane.b32.xlu0 %v2392, 12
    %v2481 = vpop.permute.xlu0 %2480
    %2482 = vrot.lane.b32.xlu0 %v2393, 12
    %v2483 = vpop.permute.xlu0 %2482
    %2484 = vrot.lane.b32.xlu0 %v2394, 12
    %v2485 = vpop.permute.xlu0 %2484
    %2486 = vrot.lane.b32.xlu0 %v2395, 12
    %v2487 = vpop.permute.xlu0 %2486
    %2488 = vrot.lane.b32.xlu0 %v2396, 12
    %v2489 = vpop.permute.xlu0 %2488
    %2490 = vrot.lane.b32.xlu0 %v2397, 12
    %v2491 = vpop.permute.xlu0 %2490
    %2492 = vrot.lane.b32.xlu0 %v2398, 12
    %v2493 = vpop.permute.xlu0 %2492
    %2494 = vrot.lane.b32.xlu0 %v2399, 12
    %v2495 = vpop.permute.xlu0 %2494
    %2496 = vrot.lane.b32.xlu0 %v2400, 12
    %v2497 = vpop.permute.xlu0 %2496
    %2498 = vrot.lane.b32.xlu0 %v2401, 12
    %v2499 = vpop.permute.xlu0 %2498
    %2500 = vrot.lane.b32.xlu0 %v2402, 12
    %v2501 = vpop.permute.xlu0 %2500
    %2502 = vrot.lane.b32.xlu0 %v2403, 12
    %v2503 = vpop.permute.xlu0 %2502
    %2504 = vrot.lane.b32.xlu0 %v2404, 12
    %v2505 = vpop.permute.xlu0 %2504
    %2506 = vrot.lane.b32.xlu0 %v2405, 12
    %v2507 = vpop.permute.xlu0 %2506
    %2508 = vrot.lane.b32.xlu0 %v2406, 12
    %v2509 = vpop.permute.xlu0 %2508
    %2510 = vrot.lane.b32.xlu0 %v2407, 12
    %v2511 = vpop.permute.xlu0 %2510
    %2512 = vrot.lane.b32.xlu0 %v2408, 12
    %v2513 = vpop.permute.xlu0 %2512
    %2514 = vrot.lane.b32.xlu0 %v2409, 12
    %v2515 = vpop.permute.xlu0 %2514
    %2516 = vrot.lane.b32.xlu0 %v2410, 12
    %v2517 = vpop.permute.xlu0 %2516
    %2518 = vrot.lane.b32.xlu0 %v2411, 12
    %v2519 = vpop.permute.xlu0 %2518
    %2520 = vrot.lane.b32.xlu0 %v2412, 12
    %v2521 = vpop.permute.xlu0 %2520
    %2522 = vrot.lane.b32.xlu0 %v2413, 12
    %v2523 = vpop.permute.xlu0 %2522
    %2524 = vrot.lane.b32.xlu0 %v2414, 12
    %v2525 = vpop.permute.xlu0 %2524
    %2526 = vrot.lane.b32.xlu0 %v2415, 12
    %v2527 = vpop.permute.xlu0 %2526
    %2528 = vrot.lane.b32.xlu0 %v2416, 12
    %v2529 = vpop.permute.xlu0 %2528
    %2530 = vrot.lane.b32.xlu0 %v2417, 12
    %v2531 = vpop.permute.xlu0 %2530
    %2532 = vrot.lane.b32.xlu0 %v2418, 12
    %v2533 = vpop.permute.xlu0 %2532
    %2534 = vrot.lane.b32.xlu0 %v2419, 12
    %v2535 = vpop.permute.xlu0 %2534
    %2536 = vrot.lane.b32.xlu0 %v2420, 12
    %v2537 = vpop.permute.xlu0 %2536
    %2538 = vrot.lane.b32.xlu0 %v2421, 12
    %v2539 = vpop.permute.xlu0 %2538
    %2540 = vrot.lane.b32.xlu0 %v2422, 12
    %v2541 = vpop.permute.xlu0 %2540
    %2542 = vrot.lane.b32.xlu0 %v2423, 12
    %v2543 = vpop.permute.xlu0 %2542
    %2544 = vrot.lane.b32.xlu0 %v2424, 12
    %v2545 = vpop.permute.xlu0 %2544
    %2546 = vrot.lane.b32.xlu0 %v2425, 12
    %v2547 = vpop.permute.xlu0 %2546
    %2548 = vrot.lane.b32.xlu0 %v2426, 12
    %v2549 = vpop.permute.xlu0 %2548
    %2550 = vrot.lane.b32.xlu0 %v2427, 12
    %v2551 = vpop.permute.xlu0 %2550
    %2552 = vrot.lane.b32.xlu0 %v2428, 12
    %v2553 = vpop.permute.xlu0 %2552
    %2554 = vrot.lane.b32.xlu0 %v2429, 12
    %v2555 = vpop.permute.xlu0 %2554
    %2556 = vrot.lane.b32.xlu0 %v2430, 12
    %v2557 = vpop.permute.xlu0 %2556
    %2558 = vrot.lane.b32.xlu0 %v2431, 12
    %v2559 = vpop.permute.xlu0 %2558
    %vm2624 = vcmask 117856
    %2625 = vst.msk [vmem:[#allocation3] sm:$0xf] %vm2624, %v2433
    %2626 = vst.msk [vmem:[#allocation3 + $0x4] sm:$0xf] %vm2624, %v2435
    %2627 = vst.msk [vmem:[#allocation3 + $0x8] sm:$0xf] %vm2624, %v2437
    %2628 = vst.msk [vmem:[#allocation3 + $0xc] sm:$0xf] %vm2624, %v2439
    %2629 = vst.msk [vmem:[#allocation3 + $0x10] sm:$0xf] %vm2624, %v2441
    %2630 = vst.msk [vmem:[#allocation3 + $0x14] sm:$0xf] %vm2624, %v2443
    %2631 = vst.msk [vmem:[#allocation3 + $0x18] sm:$0xf] %vm2624, %v2445
    %2632 = vst.msk [vmem:[#allocation3 + $0x1c] sm:$0xf] %vm2624, %v2447
    %2633 = vst.msk [vmem:[#allocation3 + $0x20] sm:$0xf] %vm2624, %v2449
    %2634 = vst.msk [vmem:[#allocation3 + $0x24] sm:$0xf] %vm2624, %v2451
    %2635 = vst.msk [vmem:[#allocation3 + $0x28] sm:$0xf] %vm2624, %v2453
    %2636 = vst.msk [vmem:[#allocation3 + $0x2c] sm:$0xf] %vm2624, %v2455
    %2637 = vst.msk [vmem:[#allocation3 + $0x30] sm:$0xf] %vm2624, %v2457
    %2638 = vst.msk [vmem:[#allocation3 + $0x34] sm:$0xf] %vm2624, %v2459
    %2639 = vst.msk [vmem:[#allocation3 + $0x38] sm:$0xf] %vm2624, %v2461
    %2640 = vst.msk [vmem:[#allocation3 + $0x3c] sm:$0xf] %vm2624, %v2463
    %2641 = vst.msk [vmem:[#allocation3 + $0x40] sm:$0xf] %vm2624, %v2465
    %2642 = vst.msk [vmem:[#allocation3 + $0x44] sm:$0xf] %vm2624, %v2467
    %2643 = vst.msk [vmem:[#allocation3 + $0x48] sm:$0xf] %vm2624, %v2469
    %2644 = vst.msk [vmem:[#allocation3 + $0x4c] sm:$0xf] %vm2624, %v2471
    %2645 = vst.msk [vmem:[#allocation3 + $0x50] sm:$0xf] %vm2624, %v2473
    %2646 = vst.msk [vmem:[#allocation3 + $0x54] sm:$0xf] %vm2624, %v2475
    %2647 = vst.msk [vmem:[#allocation3 + $0x58] sm:$0xf] %vm2624, %v2477
    %2648 = vst.msk [vmem:[#allocation3 + $0x5c] sm:$0xf] %vm2624, %v2479
    %2649 = vst.msk [vmem:[#allocation3 + $0x60] sm:$0xf] %vm2624, %v2481
    %2650 = vst.msk [vmem:[#allocation3 + $0x64] sm:$0xf] %vm2624, %v2483
    %2651 = vst.msk [vmem:[#allocation3 + $0x68] sm:$0xf] %vm2624, %v2485
    %2652 = vst.msk [vmem:[#allocation3 + $0x6c] sm:$0xf] %vm2624, %v2487
    %2653 = vst.msk [vmem:[#allocation3 + $0x70] sm:$0xf] %vm2624, %v2489
    %2654 = vst.msk [vmem:[#allocation3 + $0x74] sm:$0xf] %vm2624, %v2491
    %2655 = vst.msk [vmem:[#allocation3 + $0x78] sm:$0xf] %vm2624, %v2493
    %2656 = vst.msk [vmem:[#allocation3 + $0x7c] sm:$0xf] %vm2624, %v2495
    %2657 = vst.msk [vmem:[#allocation3 + $0x80] sm:$0xf] %vm2624, %v2497
    %2658 = vst.msk [vmem:[#allocation3 + $0x84] sm:$0xf] %vm2624, %v2499
    %2659 = vst.msk [vmem:[#allocation3 + $0x88] sm:$0xf] %vm2624, %v2501
    %2660 = vst.msk [vmem:[#allocation3 + $0x8c] sm:$0xf] %vm2624, %v2503
    %2661 = vst.msk [vmem:[#allocation3 + $0x90] sm:$0xf] %vm2624, %v2505
    %2662 = vst.msk [vmem:[#allocation3 + $0x94] sm:$0xf] %vm2624, %v2507
    %2663 = vst.msk [vmem:[#allocation3 + $0x98] sm:$0xf] %vm2624, %v2509
    %2664 = vst.msk [vmem:[#allocation3 + $0x9c] sm:$0xf] %vm2624, %v2511
    %2665 = vst.msk [vmem:[#allocation3 + $0xa0] sm:$0xf] %vm2624, %v2513
    %2666 = vst.msk [vmem:[#allocation3 + $0xa4] sm:$0xf] %vm2624, %v2515
    %2667 = vst.msk [vmem:[#allocation3 + $0xa8] sm:$0xf] %vm2624, %v2517
    %2668 = vst.msk [vmem:[#allocation3 + $0xac] sm:$0xf] %vm2624, %v2519
    %2669 = vst.msk [vmem:[#allocation3 + $0xb0] sm:$0xf] %vm2624, %v2521
    %2670 = vst.msk [vmem:[#allocation3 + $0xb4] sm:$0xf] %vm2624, %v2523
    %2671 = vst.msk [vmem:[#allocation3 + $0xb8] sm:$0xf] %vm2624, %v2525
    %2672 = vst.msk [vmem:[#allocation3 + $0xbc] sm:$0xf] %vm2624, %v2527
    %2673 = vst.msk [vmem:[#allocation3 + $0xc0] sm:$0xf] %vm2624, %v2529
    %2674 = vst.msk [vmem:[#allocation3 + $0xc4] sm:$0xf] %vm2624, %v2531
    %2675 = vst.msk [vmem:[#allocation3 + $0xc8] sm:$0xf] %vm2624, %v2533
    %2676 = vst.msk [vmem:[#allocation3 + $0xcc] sm:$0xf] %vm2624, %v2535
    %2677 = vst.msk [vmem:[#allocation3 + $0xd0] sm:$0xf] %vm2624, %v2537
    %2678 = vst.msk [vmem:[#allocation3 + $0xd4] sm:$0xf] %vm2624, %v2539
    %2679 = vst.msk [vmem:[#allocation3 + $0xd8] sm:$0xf] %vm2624, %v2541
    %2680 = vst.msk [vmem:[#allocation3 + $0xdc] sm:$0xf] %vm2624, %v2543
    %2681 = vst.msk [vmem:[#allocation3 + $0xe0] sm:$0xf] %vm2624, %v2545
    %2682 = vst.msk [vmem:[#allocation3 + $0xe4] sm:$0xf] %vm2624, %v2547
    %2683 = vst.msk [vmem:[#allocation3 + $0xe8] sm:$0xf] %vm2624, %v2549
    %2684 = vst.msk [vmem:[#allocation3 + $0xec] sm:$0xf] %vm2624, %v2551
    %2685 = vst.msk [vmem:[#allocation3 + $0xf0] sm:$0xf] %vm2624, %v2553
    %2686 = vst.msk [vmem:[#allocation3 + $0xf4] sm:$0xf] %vm2624, %v2555
    %2687 = vst.msk [vmem:[#allocation3 + $0xf8] sm:$0xf] %vm2624, %v2557
    %2688 = vst.msk [vmem:[#allocation3 + $0xfc] sm:$0xf] %vm2624, %v2559
    %v2689 = vld [vmem:[%s187 + $0x2] sm:$0xff]
    %v2690 = vld [vmem:[%s187 + $0xa] sm:$0xff]
    %v2691 = vld [vmem:[%s187 + $0x1a] sm:$0xff]
    %v2692 = vld [vmem:[%s187 + $0x22] sm:$0xff]
    %v2693 = vld [vmem:[%s187 + $0x32] sm:$0xff]
    %v2694 = vld [vmem:[%s187 + $0x3a] sm:$0xff]
    %v2695 = vld [vmem:[%s187 + $0x4a] sm:$0xff]
    %v2696 = vld [vmem:[%s187 + $0x52] sm:$0xff]
    %v2697 = vld [vmem:[%s187 + $0x62] sm:$0xff]
    %v2698 = vld [vmem:[%s187 + $0x6a] sm:$0xff]
    %v2699 = vld [vmem:[%s187 + $0x7a] sm:$0xff]
    %v2700 = vld [vmem:[%s187 + $0x82] sm:$0xff]
    %v2701 = vld [vmem:[%s187 + $0x92] sm:$0xff]
    %v2702 = vld [vmem:[%s187 + $0x9a] sm:$0xff]
    %v2703 = vld [vmem:[%s187 + $0xaa] sm:$0xff]
    %v2704 = vld [vmem:[%s187 + $0xb2] sm:$0xff]
    %v2705 = vld [vmem:[%s187 + $0xc2] sm:$0xff]
    %v2706 = vld [vmem:[%s187 + $0xca] sm:$0xff]
    %v2707 = vld [vmem:[%s187 + $0xda] sm:$0xff]
    %v2708 = vld [vmem:[%s187 + $0xe2] sm:$0xff]
    %v2709 = vld [vmem:[%s187 + $0xf2] sm:$0xff]
    %v2710 = vld [vmem:[%s187 + $0xfa] sm:$0xff]
    %v2711 = vld [vmem:[%s187 + $0x10a] sm:$0xff]
    %v2712 = vld [vmem:[%s187 + $0x112] sm:$0xff]
    %v2713 = vld [vmem:[%s187 + $0x122] sm:$0xff]
    %v2714 = vld [vmem:[%s187 + $0x12a] sm:$0xff]
    %v2715 = vld [vmem:[%s187 + $0x13a] sm:$0xff]
    %v2716 = vld [vmem:[%s187 + $0x142] sm:$0xff]
    %v2717 = vld [vmem:[%s187 + $0x152] sm:$0xff]
    %v2718 = vld [vmem:[%s187 + $0x15a] sm:$0xff]
    %v2719 = vld [vmem:[%s187 + $0x16a] sm:$0xff]
    %v2720 = vld [vmem:[%s187 + $0x172] sm:$0xff]
    %v2721 = vld [vmem:[%s187 + $0x1b2] sm:$0xff]
    %v2722 = vld [vmem:[%s187 + $0x1ba] sm:$0xff]
    %v2723 = vld [vmem:[%s187 + $0x1ca] sm:$0xff]
    %v2724 = vld [vmem:[%s187 + $0x1d2] sm:$0xff]
    %v2725 = vld [vmem:[%s187 + $0x1e2] sm:$0xff]
    %v2726 = vld [vmem:[%s187 + $0x1ea] sm:$0xff]
    %v2727 = vld [vmem:[%s187 + $0x1fa] sm:$0xff]
    %v2728 = vld [vmem:[%s187 + $0x202] sm:$0xff]
    %v2729 = vld [vmem:[%s187 + $0x212] sm:$0xff]
    %v2730 = vld [vmem:[%s187 + $0x21a] sm:$0xff]
    %v2731 = vld [vmem:[%s187 + $0x22a] sm:$0xff]
    %v2732 = vld [vmem:[%s187 + $0x232] sm:$0xff]
    %v2733 = vld [vmem:[%s187 + $0x242] sm:$0xff]
    %v2734 = vld [vmem:[%s187 + $0x24a] sm:$0xff]
    %v2735 = vld [vmem:[%s187 + $0x25a] sm:$0xff]
    %v2736 = vld [vmem:[%s187 + $0x262] sm:$0xff]
    %v2737 = vld [vmem:[%s187 + $0x272] sm:$0xff]
    %v2738 = vld [vmem:[%s187 + $0x27a] sm:$0xff]
    %v2739 = vld [vmem:[%s187 + $0x28a] sm:$0xff]
    %v2740 = vld [vmem:[%s187 + $0x292] sm:$0xff]
    %v2741 = vld [vmem:[%s187 + $0x2a2] sm:$0xff]
    %v2742 = vld [vmem:[%s187 + $0x2aa] sm:$0xff]
    %v2743 = vld [vmem:[%s187 + $0x2ba] sm:$0xff]
    %v2744 = vld [vmem:[%s187 + $0x2c2] sm:$0xff]
    %v2745 = vld [vmem:[%s187 + $0x2d2] sm:$0xff]
    %v2746 = vld [vmem:[%s187 + $0x2da] sm:$0xff]
    %v2747 = vld [vmem:[%s187 + $0x2ea] sm:$0xff]
    %v2748 = vld [vmem:[%s187 + $0x2f2] sm:$0xff]
    %v2749 = vld [vmem:[%s187 + $0x302] sm:$0xff]
    %v2750 = vld [vmem:[%s187 + $0x30a] sm:$0xff]
    %v2751 = vld [vmem:[%s187 + $0x31a] sm:$0xff]
    %v2752 = vld [vmem:[%s187 + $0x322] sm:$0xff]
    %v2753 = vpack.c.bf16 %v2690, %v2689
    %v2754 = vpack.c.bf16 %v2692, %v2691
    %v2755 = vpack.c.bf16 %v2694, %v2693
    %v2756 = vpack.c.bf16 %v2696, %v2695
    %v2757 = vpack.c.bf16 %v2698, %v2697
    %v2758 = vpack.c.bf16 %v2700, %v2699
    %v2759 = vpack.c.bf16 %v2702, %v2701
    %v2760 = vpack.c.bf16 %v2704, %v2703
    %v2761 = vpack.c.bf16 %v2706, %v2705
    %v2762 = vpack.c.bf16 %v2708, %v2707
    %v2763 = vpack.c.bf16 %v2710, %v2709
    %v2764 = vpack.c.bf16 %v2712, %v2711
    %v2765 = vpack.c.bf16 %v2714, %v2713
    %v2766 = vpack.c.bf16 %v2716, %v2715
    %v2767 = vpack.c.bf16 %v2718, %v2717
    %v2768 = vpack.c.bf16 %v2720, %v2719
    %v2769 = vpack.c.bf16 %v2722, %v2721
    %v2770 = vpack.c.bf16 %v2724, %v2723
    %v2771 = vpack.c.bf16 %v2726, %v2725
    %v2772 = vpack.c.bf16 %v2728, %v2727
    %v2773 = vpack.c.bf16 %v2730, %v2729
    %v2774 = vpack.c.bf16 %v2732, %v2731
    %v2775 = vpack.c.bf16 %v2734, %v2733
    %v2776 = vpack.c.bf16 %v2736, %v2735
    %v2777 = vpack.c.bf16 %v2738, %v2737
    %v2778 = vpack.c.bf16 %v2740, %v2739
    %v2779 = vpack.c.bf16 %v2742, %v2741
    %v2780 = vpack.c.bf16 %v2744, %v2743
    %v2781 = vpack.c.bf16 %v2746, %v2745
    %v2782 = vpack.c.bf16 %v2748, %v2747
    %v2783 = vpack.c.bf16 %v2750, %v2749
    %v2784 = vpack.c.bf16 %v2752, %v2751
    %v2817 = vunpack.c.l.b16 %v2753
    %v2818 = vunpack.c.h.b16 %v2753
    %v2819 = vunpack.c.l.b16 %v2754
    %v2820 = vunpack.c.h.b16 %v2754
    %v2821 = vunpack.c.l.b16 %v2755
    %v2822 = vunpack.c.h.b16 %v2755
    %v2823 = vunpack.c.l.b16 %v2756
    %v2824 = vunpack.c.h.b16 %v2756
    %v2825 = vunpack.c.l.b16 %v2757
    %v2826 = vunpack.c.h.b16 %v2757
    %v2827 = vunpack.c.l.b16 %v2758
    %v2828 = vunpack.c.h.b16 %v2758
    %v2829 = vunpack.c.l.b16 %v2759
    %v2830 = vunpack.c.h.b16 %v2759
    %v2831 = vunpack.c.l.b16 %v2760
    %v2832 = vunpack.c.h.b16 %v2760
    %v2833 = vunpack.c.l.b16 %v2761
    %v2834 = vunpack.c.h.b16 %v2761
    %v2835 = vunpack.c.l.b16 %v2762
    %v2836 = vunpack.c.h.b16 %v2762
    %v2837 = vunpack.c.l.b16 %v2763
    %v2838 = vunpack.c.h.b16 %v2763
    %v2839 = vunpack.c.l.b16 %v2764
    %v2840 = vunpack.c.h.b16 %v2764
    %v2841 = vunpack.c.l.b16 %v2765
    %v2842 = vunpack.c.h.b16 %v2765
    %v2843 = vunpack.c.l.b16 %v2766
    %v2844 = vunpack.c.h.b16 %v2766
    %v2845 = vunpack.c.l.b16 %v2767
    %v2846 = vunpack.c.h.b16 %v2767
    %v2847 = vunpack.c.l.b16 %v2768
    %v2848 = vunpack.c.h.b16 %v2768
    %v2849 = vunpack.c.l.b16 %v2769
    %v2850 = vunpack.c.h.b16 %v2769
    %v2851 = vunpack.c.l.b16 %v2770
    %v2852 = vunpack.c.h.b16 %v2770
    %v2853 = vunpack.c.l.b16 %v2771
    %v2854 = vunpack.c.h.b16 %v2771
    %v2855 = vunpack.c.l.b16 %v2772
    %v2856 = vunpack.c.h.b16 %v2772
    %v2857 = vunpack.c.l.b16 %v2773
    %v2858 = vunpack.c.h.b16 %v2773
    %v2859 = vunpack.c.l.b16 %v2774
    %v2860 = vunpack.c.h.b16 %v2774
    %v2861 = vunpack.c.l.b16 %v2775
    %v2862 = vunpack.c.h.b16 %v2775
    %v2863 = vunpack.c.l.b16 %v2776
    %v2864 = vunpack.c.h.b16 %v2776
    %v2865 = vunpack.c.l.b16 %v2777
    %v2866 = vunpack.c.h.b16 %v2777
    %v2867 = vunpack.c.l.b16 %v2778
    %v2868 = vunpack.c.h.b16 %v2778
    %v2869 = vunpack.c.l.b16 %v2779
    %v2870 = vunpack.c.h.b16 %v2779
    %v2871 = vunpack.c.l.b16 %v2780
    %v2872 = vunpack.c.h.b16 %v2780
    %v2873 = vunpack.c.l.b16 %v2781
    %v2874 = vunpack.c.h.b16 %v2781
    %v2875 = vunpack.c.l.b16 %v2782
    %v2876 = vunpack.c.h.b16 %v2782
    %v2877 = vunpack.c.l.b16 %v2783
    %v2878 = vunpack.c.h.b16 %v2783
    %v2879 = vunpack.c.l.b16 %v2784
    %v2880 = vunpack.c.h.b16 %v2784
    %v2881 = vpack.c.b16 %v2817, %v2817
    %v2882 = vpack.c.b16 %v2818, %v2818
    %v2883 = vpack.c.b16 %v2819, %v2819
    %v2884 = vpack.c.b16 %v2820, %v2820
    %v2885 = vpack.c.b16 %v2821, %v2821
    %v2886 = vpack.c.b16 %v2822, %v2822
    %v2887 = vpack.c.b16 %v2823, %v2823
    %v2888 = vpack.c.b16 %v2824, %v2824
    %v2889 = vpack.c.b16 %v2825, %v2825
    %v2890 = vpack.c.b16 %v2826, %v2826
    %v2891 = vpack.c.b16 %v2827, %v2827
    %v2892 = vpack.c.b16 %v2828, %v2828
    %v2893 = vpack.c.b16 %v2829, %v2829
    %v2894 = vpack.c.b16 %v2830, %v2830
    %v2895 = vpack.c.b16 %v2831, %v2831
    %v2896 = vpack.c.b16 %v2832, %v2832
    %v2897 = vpack.c.b16 %v2833, %v2833
    %v2898 = vpack.c.b16 %v2834, %v2834
    %v2899 = vpack.c.b16 %v2835, %v2835
    %v2900 = vpack.c.b16 %v2836, %v2836
    %v2901 = vpack.c.b16 %v2837, %v2837
    %v2902 = vpack.c.b16 %v2838, %v2838
    %v2903 = vpack.c.b16 %v2839, %v2839
    %v2904 = vpack.c.b16 %v2840, %v2840
    %v2905 = vpack.c.b16 %v2841, %v2841
    %v2906 = vpack.c.b16 %v2842, %v2842
    %v2907 = vpack.c.b16 %v2843, %v2843
    %v2908 = vpack.c.b16 %v2844, %v2844
    %v2909 = vpack.c.b16 %v2845, %v2845
    %v2910 = vpack.c.b16 %v2846, %v2846
    %v2911 = vpack.c.b16 %v2847, %v2847
    %v2912 = vpack.c.b16 %v2848, %v2848
    %v2913 = vpack.c.b16 %v2849, %v2849
    %v2914 = vpack.c.b16 %v2850, %v2850
    %v2915 = vpack.c.b16 %v2851, %v2851
    %v2916 = vpack.c.b16 %v2852, %v2852
    %v2917 = vpack.c.b16 %v2853, %v2853
    %v2918 = vpack.c.b16 %v2854, %v2854
    %v2919 = vpack.c.b16 %v2855, %v2855
    %v2920 = vpack.c.b16 %v2856, %v2856
    %v2921 = vpack.c.b16 %v2857, %v2857
    %v2922 = vpack.c.b16 %v2858, %v2858
    %v2923 = vpack.c.b16 %v2859, %v2859
    %v2924 = vpack.c.b16 %v2860, %v2860
    %v2925 = vpack.c.b16 %v2861, %v2861
    %v2926 = vpack.c.b16 %v2862, %v2862
    %v2927 = vpack.c.b16 %v2863, %v2863
    %v2928 = vpack.c.b16 %v2864, %v2864
    %v2929 = vpack.c.b16 %v2865, %v2865
    %v2930 = vpack.c.b16 %v2866, %v2866
    %v2931 = vpack.c.b16 %v2867, %v2867
    %v2932 = vpack.c.b16 %v2868, %v2868
    %v2933 = vpack.c.b16 %v2869, %v2869
    %v2934 = vpack.c.b16 %v2870, %v2870
    %v2935 = vpack.c.b16 %v2871, %v2871
    %v2936 = vpack.c.b16 %v2872, %v2872
    %v2937 = vpack.c.b16 %v2873, %v2873
    %v2938 = vpack.c.b16 %v2874, %v2874
    %v2939 = vpack.c.b16 %v2875, %v2875
    %v2940 = vpack.c.b16 %v2876, %v2876
    %v2941 = vpack.c.b16 %v2877, %v2877
    %v2942 = vpack.c.b16 %v2878, %v2878
    %v2943 = vpack.c.b16 %v2879, %v2879
    %v2944 = vpack.c.b16 %v2880, %v2880
    %2945 = vrot.lane.b32.xlu0 %v2881, 15
    %v2946 = vpop.permute.xlu0 %2945
    %2947 = vrot.lane.b32.xlu0 %v2882, 15
    %v2948 = vpop.permute.xlu0 %2947
    %2949 = vrot.lane.b32.xlu0 %v2883, 15
    %v2950 = vpop.permute.xlu0 %2949
    %2951 = vrot.lane.b32.xlu0 %v2884, 15
    %v2952 = vpop.permute.xlu0 %2951
    %2953 = vrot.lane.b32.xlu0 %v2885, 15
    %v2954 = vpop.permute.xlu0 %2953
    %2955 = vrot.lane.b32.xlu0 %v2886, 15
    %v2956 = vpop.permute.xlu0 %2955
    %2957 = vrot.lane.b32.xlu0 %v2887, 15
    %v2958 = vpop.permute.xlu0 %2957
    %2959 = vrot.lane.b32.xlu0 %v2888, 15
    %v2960 = vpop.permute.xlu0 %2959
    %2961 = vrot.lane.b32.xlu0 %v2889, 15
    %v2962 = vpop.permute.xlu0 %2961
    %2963 = vrot.lane.b32.xlu0 %v2890, 15
    %v2964 = vpop.permute.xlu0 %2963
    %2965 = vrot.lane.b32.xlu0 %v2891, 15
    %v2966 = vpop.permute.xlu0 %2965
    %2967 = vrot.lane.b32.xlu0 %v2892, 15
    %v2968 = vpop.permute.xlu0 %2967
    %2969 = vrot.lane.b32.xlu0 %v2893, 15
    %v2970 = vpop.permute.xlu0 %2969
    %2971 = vrot.lane.b32.xlu0 %v2894, 15
    %v2972 = vpop.permute.xlu0 %2971
    %2973 = vrot.lane.b32.xlu0 %v2895, 15
    %v2974 = vpop.permute.xlu0 %2973
    %2975 = vrot.lane.b32.xlu0 %v2896, 15
    %v2976 = vpop.permute.xlu0 %2975
    %2977 = vrot.lane.b32.xlu0 %v2897, 15
    %v2978 = vpop.permute.xlu0 %2977
    %2979 = vrot.lane.b32.xlu0 %v2898, 15
    %v2980 = vpop.permute.xlu0 %2979
    %2981 = vrot.lane.b32.xlu0 %v2899, 15
    %v2982 = vpop.permute.xlu0 %2981
    %2983 = vrot.lane.b32.xlu0 %v2900, 15
    %v2984 = vpop.permute.xlu0 %2983
    %2985 = vrot.lane.b32.xlu0 %v2901, 15
    %v2986 = vpop.permute.xlu0 %2985
    %2987 = vrot.lane.b32.xlu0 %v2902, 15
    %v2988 = vpop.permute.xlu0 %2987
    %2989 = vrot.lane.b32.xlu0 %v2903, 15
    %v2990 = vpop.permute.xlu0 %2989
    %2991 = vrot.lane.b32.xlu0 %v2904, 15
    %v2992 = vpop.permute.xlu0 %2991
    %2993 = vrot.lane.b32.xlu0 %v2905, 15
    %v2994 = vpop.permute.xlu0 %2993
    %2995 = vrot.lane.b32.xlu0 %v2906, 15
    %v2996 = vpop.permute.xlu0 %2995
    %2997 = vrot.lane.b32.xlu0 %v2907, 15
    %v2998 = vpop.permute.xlu0 %2997
    %2999 = vrot.lane.b32.xlu0 %v2908, 15
    %v3000 = vpop.permute.xlu0 %2999
    %3001 = vrot.lane.b32.xlu0 %v2909, 15
    %v3002 = vpop.permute.xlu0 %3001
    %3003 = vrot.lane.b32.xlu0 %v2910, 15
    %v3004 = vpop.permute.xlu0 %3003
    %3005 = vrot.lane.b32.xlu0 %v2911, 15
    %v3006 = vpop.permute.xlu0 %3005
    %3007 = vrot.lane.b32.xlu0 %v2912, 15
    %v3008 = vpop.permute.xlu0 %3007
    %3009 = vrot.lane.b32.xlu0 %v2913, 15
    %v3010 = vpop.permute.xlu0 %3009
    %3011 = vrot.lane.b32.xlu0 %v2914, 15
    %v3012 = vpop.permute.xlu0 %3011
    %3013 = vrot.lane.b32.xlu0 %v2915, 15
    %v3014 = vpop.permute.xlu0 %3013
    %3015 = vrot.lane.b32.xlu0 %v2916, 15
    %v3016 = vpop.permute.xlu0 %3015
    %3017 = vrot.lane.b32.xlu0 %v2917, 15
    %v3018 = vpop.permute.xlu0 %3017
    %3019 = vrot.lane.b32.xlu0 %v2918, 15
    %v3020 = vpop.permute.xlu0 %3019
    %3021 = vrot.lane.b32.xlu0 %v2919, 15
    %v3022 = vpop.permute.xlu0 %3021
    %3023 = vrot.lane.b32.xlu0 %v2920, 15
    %v3024 = vpop.permute.xlu0 %3023
    %3025 = vrot.lane.b32.xlu0 %v2921, 15
    %v3026 = vpop.permute.xlu0 %3025
    %3027 = vrot.lane.b32.xlu0 %v2922, 15
    %v3028 = vpop.permute.xlu0 %3027
    %3029 = vrot.lane.b32.xlu0 %v2923, 15
    %v3030 = vpop.permute.xlu0 %3029
    %3031 = vrot.lane.b32.xlu0 %v2924, 15
    %v3032 = vpop.permute.xlu0 %3031
    %3033 = vrot.lane.b32.xlu0 %v2925, 15
    %v3034 = vpop.permute.xlu0 %3033
    %3035 = vrot.lane.b32.xlu0 %v2926, 15
    %v3036 = vpop.permute.xlu0 %3035
    %3037 = vrot.lane.b32.xlu0 %v2927, 15
    %v3038 = vpop.permute.xlu0 %3037
    %3039 = vrot.lane.b32.xlu0 %v2928, 15
    %v3040 = vpop.permute.xlu0 %3039
    %3041 = vrot.lane.b32.xlu0 %v2929, 15
    %v3042 = vpop.permute.xlu0 %3041
    %3043 = vrot.lane.b32.xlu0 %v2930, 15
    %v3044 = vpop.permute.xlu0 %3043
    %3045 = vrot.lane.b32.xlu0 %v2931, 15
    %v3046 = vpop.permute.xlu0 %3045
    %3047 = vrot.lane.b32.xlu0 %v2932, 15
    %v3048 = vpop.permute.xlu0 %3047
    %3049 = vrot.lane.b32.xlu0 %v2933, 15
    %v3050 = vpop.permute.xlu0 %3049
    %3051 = vrot.lane.b32.xlu0 %v2934, 15
    %v3052 = vpop.permute.xlu0 %3051
    %3053 = vrot.lane.b32.xlu0 %v2935, 15
    %v3054 = vpop.permute.xlu0 %3053
    %3055 = vrot.lane.b32.xlu0 %v2936, 15
    %v3056 = vpop.permute.xlu0 %3055
    %3057 = vrot.lane.b32.xlu0 %v2937, 15
    %v3058 = vpop.permute.xlu0 %3057
    %3059 = vrot.lane.b32.xlu0 %v2938, 15
    %v3060 = vpop.permute.xlu0 %3059
    %3061 = vrot.lane.b32.xlu0 %v2939, 15
    %v3062 = vpop.permute.xlu0 %3061
    %3063 = vrot.lane.b32.xlu0 %v2940, 15
    %v3064 = vpop.permute.xlu0 %3063
    %3065 = vrot.lane.b32.xlu0 %v2941, 15
    %v3066 = vpop.permute.xlu0 %3065
    %3067 = vrot.lane.b32.xlu0 %v2942, 15
    %v3068 = vpop.permute.xlu0 %3067
    %3069 = vrot.lane.b32.xlu0 %v2943, 15
    %v3070 = vpop.permute.xlu0 %3069
    %3071 = vrot.lane.b32.xlu0 %v2944, 15
    %v3072 = vpop.permute.xlu0 %3071
    %vm3137 = vcmask 142456
    %3138 = vst.msk [vmem:[#allocation3] sm:$0xf] %vm3137, %v2946
    %3139 = vst.msk [vmem:[#allocation3 + $0x4] sm:$0xf] %vm3137, %v2948
    %3140 = vst.msk [vmem:[#allocation3 + $0x8] sm:$0xf] %vm3137, %v2950
    %3141 = vst.msk [vmem:[#allocation3 + $0xc] sm:$0xf] %vm3137, %v2952
    %3142 = vst.msk [vmem:[#allocation3 + $0x10] sm:$0xf] %vm3137, %v2954
    %3143 = vst.msk [vmem:[#allocation3 + $0x14] sm:$0xf] %vm3137, %v2956
    %3144 = vst.msk [vmem:[#allocation3 + $0x18] sm:$0xf] %vm3137, %v2958
    %3145 = vst.msk [vmem:[#allocation3 + $0x1c] sm:$0xf] %vm3137, %v2960
    %3146 = vst.msk [vmem:[#allocation3 + $0x20] sm:$0xf] %vm3137, %v2962
    %3147 = vst.msk [vmem:[#allocation3 + $0x24] sm:$0xf] %vm3137, %v2964
    %3148 = vst.msk [vmem:[#allocation3 + $0x28] sm:$0xf] %vm3137, %v2966
    %3149 = vst.msk [vmem:[#allocation3 + $0x2c] sm:$0xf] %vm3137, %v2968
    %3150 = vst.msk [vmem:[#allocation3 + $0x30] sm:$0xf] %vm3137, %v2970
    %3151 = vst.msk [vmem:[#allocation3 + $0x34] sm:$0xf] %vm3137, %v2972
    %3152 = vst.msk [vmem:[#allocation3 + $0x38] sm:$0xf] %vm3137, %v2974
    %3153 = vst.msk [vmem:[#allocation3 + $0x3c] sm:$0xf] %vm3137, %v2976
    %3154 = vst.msk [vmem:[#allocation3 + $0x40] sm:$0xf] %vm3137, %v2978
    %3155 = vst.msk [vmem:[#allocation3 + $0x44] sm:$0xf] %vm3137, %v2980
    %3156 = vst.msk [vmem:[#allocation3 + $0x48] sm:$0xf] %vm3137, %v2982
    %3157 = vst.msk [vmem:[#allocation3 + $0x4c] sm:$0xf] %vm3137, %v2984
    %3158 = vst.msk [vmem:[#allocation3 + $0x50] sm:$0xf] %vm3137, %v2986
    %3159 = vst.msk [vmem:[#allocation3 + $0x54] sm:$0xf] %vm3137, %v2988
    %3160 = vst.msk [vmem:[#allocation3 + $0x58] sm:$0xf] %vm3137, %v2990
    %3161 = vst.msk [vmem:[#allocation3 + $0x5c] sm:$0xf] %vm3137, %v2992
    %3162 = vst.msk [vmem:[#allocation3 + $0x60] sm:$0xf] %vm3137, %v2994
    %3163 = vst.msk [vmem:[#allocation3 + $0x64] sm:$0xf] %vm3137, %v2996
    %3164 = vst.msk [vmem:[#allocation3 + $0x68] sm:$0xf] %vm3137, %v2998
    %3165 = vst.msk [vmem:[#allocation3 + $0x6c] sm:$0xf] %vm3137, %v3000
    %3166 = vst.msk [vmem:[#allocation3 + $0x70] sm:$0xf] %vm3137, %v3002
    %3167 = vst.msk [vmem:[#allocation3 + $0x74] sm:$0xf] %vm3137, %v3004
    %3168 = vst.msk [vmem:[#allocation3 + $0x78] sm:$0xf] %vm3137, %v3006
    %3169 = vst.msk [vmem:[#allocation3 + $0x7c] sm:$0xf] %vm3137, %v3008
    %3170 = vst.msk [vmem:[#allocation3 + $0x80] sm:$0xf] %vm3137, %v3010
    %3171 = vst.msk [vmem:[#allocation3 + $0x84] sm:$0xf] %vm3137, %v3012
    %3172 = vst.msk [vmem:[#allocation3 + $0x88] sm:$0xf] %vm3137, %v3014
    %3173 = vst.msk [vmem:[#allocation3 + $0x8c] sm:$0xf] %vm3137, %v3016
    %3174 = vst.msk [vmem:[#allocation3 + $0x90] sm:$0xf] %vm3137, %v3018
    %3175 = vst.msk [vmem:[#allocation3 + $0x94] sm:$0xf] %vm3137, %v3020
    %3176 = vst.msk [vmem:[#allocation3 + $0x98] sm:$0xf] %vm3137, %v3022
    %3177 = vst.msk [vmem:[#allocation3 + $0x9c] sm:$0xf] %vm3137, %v3024
    %3178 = vst.msk [vmem:[#allocation3 + $0xa0] sm:$0xf] %vm3137, %v3026
    %3179 = vst.msk [vmem:[#allocation3 + $0xa4] sm:$0xf] %vm3137, %v3028
    %3180 = vst.msk [vmem:[#allocation3 + $0xa8] sm:$0xf] %vm3137, %v3030
    %3181 = vst.msk [vmem:[#allocation3 + $0xac] sm:$0xf] %vm3137, %v3032
    %3182 = vst.msk [vmem:[#allocation3 + $0xb0] sm:$0xf] %vm3137, %v3034
    %3183 = vst.msk [vmem:[#allocation3 + $0xb4] sm:$0xf] %vm3137, %v3036
    %3184 = vst.msk [vmem:[#allocation3 + $0xb8] sm:$0xf] %vm3137, %v3038
    %3185 = vst.msk [vmem:[#allocation3 + $0xbc] sm:$0xf] %vm3137, %v3040
    %3186 = vst.msk [vmem:[#allocation3 + $0xc0] sm:$0xf] %vm3137, %v3042
    %3187 = vst.msk [vmem:[#allocation3 + $0xc4] sm:$0xf] %vm3137, %v3044
    %3188 = vst.msk [vmem:[#allocation3 + $0xc8] sm:$0xf] %vm3137, %v3046
    %3189 = vst.msk [vmem:[#allocation3 + $0xcc] sm:$0xf] %vm3137, %v3048
    %3190 = vst.msk [vmem:[#allocation3 + $0xd0] sm:$0xf] %vm3137, %v3050
    %3191 = vst.msk [vmem:[#allocation3 + $0xd4] sm:$0xf] %vm3137, %v3052
    %3192 = vst.msk [vmem:[#allocation3 + $0xd8] sm:$0xf] %vm3137, %v3054
    %3193 = vst.msk [vmem:[#allocation3 + $0xdc] sm:$0xf] %vm3137, %v3056
    %3194 = vst.msk [vmem:[#allocation3 + $0xe0] sm:$0xf] %vm3137, %v3058
    %3195 = vst.msk [vmem:[#allocation3 + $0xe4] sm:$0xf] %vm3137, %v3060
    %3196 = vst.msk [vmem:[#allocation3 + $0xe8] sm:$0xf] %vm3137, %v3062
    %3197 = vst.msk [vmem:[#allocation3 + $0xec] sm:$0xf] %vm3137, %v3064
    %3198 = vst.msk [vmem:[#allocation3 + $0xf0] sm:$0xf] %vm3137, %v3066
    %3199 = vst.msk [vmem:[#allocation3 + $0xf4] sm:$0xf] %vm3137, %v3068
    %3200 = vst.msk [vmem:[#allocation3 + $0xf8] sm:$0xf] %vm3137, %v3070
    %3201 = vst.msk [vmem:[#allocation3 + $0xfc] sm:$0xf] %vm3137, %v3072
    %s3202 = scalar_lea.vmem [#allocation2], 48
    %v3203 = vld [vmem:[%s3202] sm:$0xff]
    %v3204 = vld [vmem:[%s3202 + $0x8] sm:$0xff]
    %v3205 = vld [vmem:[%s3202 + $0x18] sm:$0xff]
    %v3206 = vld [vmem:[%s3202 + $0x20] sm:$0xff]
    %v3207 = vld [vmem:[%s3202 + $0x30] sm:$0xff]
    %v3208 = vld [vmem:[%s3202 + $0x38] sm:$0xff]
    %v3209 = vld [vmem:[%s3202 + $0x48] sm:$0xff]
    %v3210 = vld [vmem:[%s3202 + $0x50] sm:$0xff]
    %v3211 = vld [vmem:[%s3202 + $0x60] sm:$0xff]
    %v3212 = vld [vmem:[%s3202 + $0x68] sm:$0xff]
    %v3213 = vld [vmem:[%s3202 + $0x78] sm:$0xff]
    %v3214 = vld [vmem:[%s3202 + $0x80] sm:$0xff]
    %v3215 = vld [vmem:[%s3202 + $0x90] sm:$0xff]
    %v3216 = vld [vmem:[%s3202 + $0x98] sm:$0xff]
    %v3217 = vld [vmem:[%s3202 + $0xa8] sm:$0xff]
    %v3218 = vld [vmem:[%s3202 + $0xb0] sm:$0xff]
    %v3219 = vld [vmem:[%s3202 + $0xc0] sm:$0xff]
    %v3220 = vld [vmem:[%s3202 + $0xc8] sm:$0xff]
    %v3221 = vld [vmem:[%s3202 + $0xd8] sm:$0xff]
    %v3222 = vld [vmem:[%s3202 + $0xe0] sm:$0xff]
    %v3223 = vld [vmem:[%s3202 + $0xf0] sm:$0xff]
    %v3224 = vld [vmem:[%s3202 + $0xf8] sm:$0xff]
    %v3225 = vld [vmem:[%s3202 + $0x108] sm:$0xff]
    %v3226 = vld [vmem:[%s3202 + $0x110] sm:$0xff]
    %v3227 = vld [vmem:[%s3202 + $0x120] sm:$0xff]
    %v3228 = vld [vmem:[%s3202 + $0x128] sm:$0xff]
    %v3229 = vld [vmem:[%s3202 + $0x138] sm:$0xff]
    %v3230 = vld [vmem:[%s3202 + $0x140] sm:$0xff]
    %v3231 = vld [vmem:[%s3202 + $0x150] sm:$0xff]
    %v3232 = vld [vmem:[%s3202 + $0x158] sm:$0xff]
    %v3233 = vld [vmem:[%s3202 + $0x168] sm:$0xff]
    %v3234 = vld [vmem:[%s3202 + $0x170] sm:$0xff]
    %v3235 = vld [vmem:[%s3202 + $0x1b0] sm:$0xff]
    %v3236 = vld [vmem:[%s3202 + $0x1b8] sm:$0xff]
    %v3237 = vld [vmem:[%s3202 + $0x1c8] sm:$0xff]
    %v3238 = vld [vmem:[%s3202 + $0x1d0] sm:$0xff]
    %v3239 = vld [vmem:[%s3202 + $0x1e0] sm:$0xff]
    %v3240 = vld [vmem:[%s3202 + $0x1e8] sm:$0xff]
    %v3241 = vld [vmem:[%s3202 + $0x1f8] sm:$0xff]
    %v3242 = vld [vmem:[%s3202 + $0x200] sm:$0xff]
    %v3243 = vld [vmem:[%s3202 + $0x210] sm:$0xff]
    %v3244 = vld [vmem:[%s3202 + $0x218] sm:$0xff]
    %v3245 = vld [vmem:[%s3202 + $0x228] sm:$0xff]
    %v3246 = vld [vmem:[%s3202 + $0x230] sm:$0xff]
    %v3247 = vld [vmem:[%s3202 + $0x240] sm:$0xff]
    %v3248 = vld [vmem:[%s3202 + $0x248] sm:$0xff]
    %v3249 = vld [vmem:[%s3202 + $0x258] sm:$0xff]
    %v3250 = vld [vmem:[%s3202 + $0x260] sm:$0xff]
    %v3251 = vld [vmem:[%s3202 + $0x270] sm:$0xff]
    %v3252 = vld [vmem:[%s3202 + $0x278] sm:$0xff]
    %v3253 = vld [vmem:[%s3202 + $0x288] sm:$0xff]
    %v3254 = vld [vmem:[%s3202 + $0x290] sm:$0xff]
    %v3255 = vld [vmem:[%s3202 + $0x2a0] sm:$0xff]
    %v3256 = vld [vmem:[%s3202 + $0x2a8] sm:$0xff]
    %v3257 = vld [vmem:[%s3202 + $0x2b8] sm:$0xff]
    %v3258 = vld [vmem:[%s3202 + $0x2c0] sm:$0xff]
    %v3259 = vld [vmem:[%s3202 + $0x2d0] sm:$0xff]
    %v3260 = vld [vmem:[%s3202 + $0x2d8] sm:$0xff]
    %v3261 = vld [vmem:[%s3202 + $0x2e8] sm:$0xff]
    %v3262 = vld [vmem:[%s3202 + $0x2f0] sm:$0xff]
    %v3263 = vld [vmem:[%s3202 + $0x300] sm:$0xff]
    %v3264 = vld [vmem:[%s3202 + $0x308] sm:$0xff]
    %v3265 = vld [vmem:[%s3202 + $0x318] sm:$0xff]
    %v3266 = vld [vmem:[%s3202 + $0x320] sm:$0xff]
    %v3267 = vpack.c.bf16 %v3204, %v3203
    %v3268 = vpack.c.bf16 %v3206, %v3205
    %v3269 = vpack.c.bf16 %v3208, %v3207
    %v3270 = vpack.c.bf16 %v3210, %v3209
    %v3271 = vpack.c.bf16 %v3212, %v3211
    %v3272 = vpack.c.bf16 %v3214, %v3213
    %v3273 = vpack.c.bf16 %v3216, %v3215
    %v3274 = vpack.c.bf16 %v3218, %v3217
    %v3275 = vpack.c.bf16 %v3220, %v3219
    %v3276 = vpack.c.bf16 %v3222, %v3221
    %v3277 = vpack.c.bf16 %v3224, %v3223
    %v3278 = vpack.c.bf16 %v3226, %v3225
    %v3279 = vpack.c.bf16 %v3228, %v3227
    %v3280 = vpack.c.bf16 %v3230, %v3229
    %v3281 = vpack.c.bf16 %v3232, %v3231
    %v3282 = vpack.c.bf16 %v3234, %v3233
    %v3283 = vpack.c.bf16 %v3236, %v3235
    %v3284 = vpack.c.bf16 %v3238, %v3237
    %v3285 = vpack.c.bf16 %v3240, %v3239
    %v3286 = vpack.c.bf16 %v3242, %v3241
    %v3287 = vpack.c.bf16 %v3244, %v3243
    %v3288 = vpack.c.bf16 %v3246, %v3245
    %v3289 = vpack.c.bf16 %v3248, %v3247
    %v3290 = vpack.c.bf16 %v3250, %v3249
    %v3291 = vpack.c.bf16 %v3252, %v3251
    %v3292 = vpack.c.bf16 %v3254, %v3253
    %v3293 = vpack.c.bf16 %v3256, %v3255
    %v3294 = vpack.c.bf16 %v3258, %v3257
    %v3295 = vpack.c.bf16 %v3260, %v3259
    %v3296 = vpack.c.bf16 %v3262, %v3261
    %v3297 = vpack.c.bf16 %v3264, %v3263
    %v3298 = vpack.c.bf16 %v3266, %v3265
    %v3331 = vunpack.c.l.b16 %v3267
    %v3332 = vunpack.c.h.b16 %v3267
    %v3333 = vunpack.c.l.b16 %v3268
    %v3334 = vunpack.c.h.b16 %v3268
    %v3335 = vunpack.c.l.b16 %v3269
    %v3336 = vunpack.c.h.b16 %v3269
    %v3337 = vunpack.c.l.b16 %v3270
    %v3338 = vunpack.c.h.b16 %v3270
    %v3339 = vunpack.c.l.b16 %v3271
    %v3340 = vunpack.c.h.b16 %v3271
    %v3341 = vunpack.c.l.b16 %v3272
    %v3342 = vunpack.c.h.b16 %v3272
    %v3343 = vunpack.c.l.b16 %v3273
    %v3344 = vunpack.c.h.b16 %v3273
    %v3345 = vunpack.c.l.b16 %v3274
    %v3346 = vunpack.c.h.b16 %v3274
    %v3347 = vunpack.c.l.b16 %v3275
    %v3348 = vunpack.c.h.b16 %v3275
    %v3349 = vunpack.c.l.b16 %v3276
    %v3350 = vunpack.c.h.b16 %v3276
    %v3351 = vunpack.c.l.b16 %v3277
    %v3352 = vunpack.c.h.b16 %v3277
    %v3353 = vunpack.c.l.b16 %v3278
    %v3354 = vunpack.c.h.b16 %v3278
    %v3355 = vunpack.c.l.b16 %v3279
    %v3356 = vunpack.c.h.b16 %v3279
    %v3357 = vunpack.c.l.b16 %v3280
    %v3358 = vunpack.c.h.b16 %v3280
    %v3359 = vunpack.c.l.b16 %v3281
    %v3360 = vunpack.c.h.b16 %v3281
    %v3361 = vunpack.c.l.b16 %v3282
    %v3362 = vunpack.c.h.b16 %v3282
    %v3363 = vunpack.c.l.b16 %v3283
    %v3364 = vunpack.c.h.b16 %v3283
    %v3365 = vunpack.c.l.b16 %v3284
    %v3366 = vunpack.c.h.b16 %v3284
    %v3367 = vunpack.c.l.b16 %v3285
    %v3368 = vunpack.c.h.b16 %v3285
    %v3369 = vunpack.c.l.b16 %v3286
    %v3370 = vunpack.c.h.b16 %v3286
    %v3371 = vunpack.c.l.b16 %v3287
    %v3372 = vunpack.c.h.b16 %v3287
    %v3373 = vunpack.c.l.b16 %v3288
    %v3374 = vunpack.c.h.b16 %v3288
    %v3375 = vunpack.c.l.b16 %v3289
    %v3376 = vunpack.c.h.b16 %v3289
    %v3377 = vunpack.c.l.b16 %v3290
    %v3378 = vunpack.c.h.b16 %v3290
    %v3379 = vunpack.c.l.b16 %v3291
    %v3380 = vunpack.c.h.b16 %v3291
    %v3381 = vunpack.c.l.b16 %v3292
    %v3382 = vunpack.c.h.b16 %v3292
    %v3383 = vunpack.c.l.b16 %v3293
    %v3384 = vunpack.c.h.b16 %v3293
    %v3385 = vunpack.c.l.b16 %v3294
    %v3386 = vunpack.c.h.b16 %v3294
    %v3387 = vunpack.c.l.b16 %v3295
    %v3388 = vunpack.c.h.b16 %v3295
    %v3389 = vunpack.c.l.b16 %v3296
    %v3390 = vunpack.c.h.b16 %v3296
    %v3391 = vunpack.c.l.b16 %v3297
    %v3392 = vunpack.c.h.b16 %v3297
    %v3393 = vunpack.c.l.b16 %v3298
    %v3394 = vunpack.c.h.b16 %v3298
    %v3395 = vpack.c.b16 %v3331, %v3331
    %v3396 = vpack.c.b16 %v3332, %v3332
    %v3397 = vpack.c.b16 %v3333, %v3333
    %v3398 = vpack.c.b16 %v3334, %v3334
    %v3399 = vpack.c.b16 %v3335, %v3335
    %v3400 = vpack.c.b16 %v3336, %v3336
    %v3401 = vpack.c.b16 %v3337, %v3337
    %v3402 = vpack.c.b16 %v3338, %v3338
    %v3403 = vpack.c.b16 %v3339, %v3339
    %v3404 = vpack.c.b16 %v3340, %v3340
    %v3405 = vpack.c.b16 %v3341, %v3341
    %v3406 = vpack.c.b16 %v3342, %v3342
    %v3407 = vpack.c.b16 %v3343, %v3343
    %v3408 = vpack.c.b16 %v3344, %v3344
    %v3409 = vpack.c.b16 %v3345, %v3345
    %v3410 = vpack.c.b16 %v3346, %v3346
    %v3411 = vpack.c.b16 %v3347, %v3347
    %v3412 = vpack.c.b16 %v3348, %v3348
    %v3413 = vpack.c.b16 %v3349, %v3349
    %v3414 = vpack.c.b16 %v3350, %v3350
    %v3415 = vpack.c.b16 %v3351, %v3351
    %v3416 = vpack.c.b16 %v3352, %v3352
    %v3417 = vpack.c.b16 %v3353, %v3353
    %v3418 = vpack.c.b16 %v3354, %v3354
    %v3419 = vpack.c.b16 %v3355, %v3355
    %v3420 = vpack.c.b16 %v3356, %v3356
    %v3421 = vpack.c.b16 %v3357, %v3357
    %v3422 = vpack.c.b16 %v3358, %v3358
    %v3423 = vpack.c.b16 %v3359, %v3359
    %v3424 = vpack.c.b16 %v3360, %v3360
    %v3425 = vpack.c.b16 %v3361, %v3361
    %v3426 = vpack.c.b16 %v3362, %v3362
    %v3427 = vpack.c.b16 %v3363, %v3363
    %v3428 = vpack.c.b16 %v3364, %v3364
    %v3429 = vpack.c.b16 %v3365, %v3365
    %v3430 = vpack.c.b16 %v3366, %v3366
    %v3431 = vpack.c.b16 %v3367, %v3367
    %v3432 = vpack.c.b16 %v3368, %v3368
    %v3433 = vpack.c.b16 %v3369, %v3369
    %v3434 = vpack.c.b16 %v3370, %v3370
    %v3435 = vpack.c.b16 %v3371, %v3371
    %v3436 = vpack.c.b16 %v3372, %v3372
    %v3437 = vpack.c.b16 %v3373, %v3373
    %v3438 = vpack.c.b16 %v3374, %v3374
    %v3439 = vpack.c.b16 %v3375, %v3375
    %v3440 = vpack.c.b16 %v3376, %v3376
    %v3441 = vpack.c.b16 %v3377, %v3377
    %v3442 = vpack.c.b16 %v3378, %v3378
    %v3443 = vpack.c.b16 %v3379, %v3379
    %v3444 = vpack.c.b16 %v3380, %v3380
    %v3445 = vpack.c.b16 %v3381, %v3381
    %v3446 = vpack.c.b16 %v3382, %v3382
    %v3447 = vpack.c.b16 %v3383, %v3383
    %v3448 = vpack.c.b16 %v3384, %v3384
    %v3449 = vpack.c.b16 %v3385, %v3385
    %v3450 = vpack.c.b16 %v3386, %v3386
    %v3451 = vpack.c.b16 %v3387, %v3387
    %v3452 = vpack.c.b16 %v3388, %v3388
    %v3453 = vpack.c.b16 %v3389, %v3389
    %v3454 = vpack.c.b16 %v3390, %v3390
    %v3455 = vpack.c.b16 %v3391, %v3391
    %v3456 = vpack.c.b16 %v3392, %v3392
    %v3457 = vpack.c.b16 %v3393, %v3393
    %v3458 = vpack.c.b16 %v3394, %v3394
    %3459 = vrot.lane.b32.xlu0 %v3395, 18
    %v3460 = vpop.permute.xlu0 %3459
    %3461 = vrot.lane.b32.xlu0 %v3396, 18
    %v3462 = vpop.permute.xlu0 %3461
    %3463 = vrot.lane.b32.xlu0 %v3397, 18
    %v3464 = vpop.permute.xlu0 %3463
    %3465 = vrot.lane.b32.xlu0 %v3398, 18
    %v3466 = vpop.permute.xlu0 %3465
    %3467 = vrot.lane.b32.xlu0 %v3399, 18
    %v3468 = vpop.permute.xlu0 %3467
    %3469 = vrot.lane.b32.xlu0 %v3400, 18
    %v3470 = vpop.permute.xlu0 %3469
    %3471 = vrot.lane.b32.xlu0 %v3401, 18
    %v3472 = vpop.permute.xlu0 %3471
    %3473 = vrot.lane.b32.xlu0 %v3402, 18
    %v3474 = vpop.permute.xlu0 %3473
    %3475 = vrot.lane.b32.xlu0 %v3403, 18
    %v3476 = vpop.permute.xlu0 %3475
    %3477 = vrot.lane.b32.xlu0 %v3404, 18
    %v3478 = vpop.permute.xlu0 %3477
    %3479 = vrot.lane.b32.xlu0 %v3405, 18
    %v3480 = vpop.permute.xlu0 %3479
    %3481 = vrot.lane.b32.xlu0 %v3406, 18
    %v3482 = vpop.permute.xlu0 %3481
    %3483 = vrot.lane.b32.xlu0 %v3407, 18
    %v3484 = vpop.permute.xlu0 %3483
    %3485 = vrot.lane.b32.xlu0 %v3408, 18
    %v3486 = vpop.permute.xlu0 %3485
    %3487 = vrot.lane.b32.xlu0 %v3409, 18
    %v3488 = vpop.permute.xlu0 %3487
    %3489 = vrot.lane.b32.xlu0 %v3410, 18
    %v3490 = vpop.permute.xlu0 %3489
    %3491 = vrot.lane.b32.xlu0 %v3411, 18
    %v3492 = vpop.permute.xlu0 %3491
    %3493 = vrot.lane.b32.xlu0 %v3412, 18
    %v3494 = vpop.permute.xlu0 %3493
    %3495 = vrot.lane.b32.xlu0 %v3413, 18
    %v3496 = vpop.permute.xlu0 %3495
    %3497 = vrot.lane.b32.xlu0 %v3414, 18
    %v3498 = vpop.permute.xlu0 %3497
    %3499 = vrot.lane.b32.xlu0 %v3415, 18
    %v3500 = vpop.permute.xlu0 %3499
    %3501 = vrot.lane.b32.xlu0 %v3416, 18
    %v3502 = vpop.permute.xlu0 %3501
    %3503 = vrot.lane.b32.xlu0 %v3417, 18
    %v3504 = vpop.permute.xlu0 %3503
    %3505 = vrot.lane.b32.xlu0 %v3418, 18
    %v3506 = vpop.permute.xlu0 %3505
    %3507 = vrot.lane.b32.xlu0 %v3419, 18
    %v3508 = vpop.permute.xlu0 %3507
    %3509 = vrot.lane.b32.xlu0 %v3420, 18
    %v3510 = vpop.permute.xlu0 %3509
    %3511 = vrot.lane.b32.xlu0 %v3421, 18
    %v3512 = vpop.permute.xlu0 %3511
    %3513 = vrot.lane.b32.xlu0 %v3422, 18
    %v3514 = vpop.permute.xlu0 %3513
    %3515 = vrot.lane.b32.xlu0 %v3423, 18
    %v3516 = vpop.permute.xlu0 %3515
    %3517 = vrot.lane.b32.xlu0 %v3424, 18
    %v3518 = vpop.permute.xlu0 %3517
    %3519 = vrot.lane.b32.xlu0 %v3425, 18
    %v3520 = vpop.permute.xlu0 %3519
    %3521 = vrot.lane.b32.xlu0 %v3426, 18
    %v3522 = vpop.permute.xlu0 %3521
    %3523 = vrot.lane.b32.xlu0 %v3427, 18
    %v3524 = vpop.permute.xlu0 %3523
    %3525 = vrot.lane.b32.xlu0 %v3428, 18
    %v3526 = vpop.permute.xlu0 %3525
    %3527 = vrot.lane.b32.xlu0 %v3429, 18
    %v3528 = vpop.permute.xlu0 %3527
    %3529 = vrot.lane.b32.xlu0 %v3430, 18
    %v3530 = vpop.permute.xlu0 %3529
    %3531 = vrot.lane.b32.xlu0 %v3431, 18
    %v3532 = vpop.permute.xlu0 %3531
    %3533 = vrot.lane.b32.xlu0 %v3432, 18
    %v3534 = vpop.permute.xlu0 %3533
    %3535 = vrot.lane.b32.xlu0 %v3433, 18
    %v3536 = vpop.permute.xlu0 %3535
    %3537 = vrot.lane.b32.xlu0 %v3434, 18
    %v3538 = vpop.permute.xlu0 %3537
    %3539 = vrot.lane.b32.xlu0 %v3435, 18
    %v3540 = vpop.permute.xlu0 %3539
    %3541 = vrot.lane.b32.xlu0 %v3436, 18
    %v3542 = vpop.permute.xlu0 %3541
    %3543 = vrot.lane.b32.xlu0 %v3437, 18
    %v3544 = vpop.permute.xlu0 %3543
    %3545 = vrot.lane.b32.xlu0 %v3438, 18
    %v3546 = vpop.permute.xlu0 %3545
    %3547 = vrot.lane.b32.xlu0 %v3439, 18
    %v3548 = vpop.permute.xlu0 %3547
    %3549 = vrot.lane.b32.xlu0 %v3440, 18
    %v3550 = vpop.permute.xlu0 %3549
    %3551 = vrot.lane.b32.xlu0 %v3441, 18
    %v3552 = vpop.permute.xlu0 %3551
    %3553 = vrot.lane.b32.xlu0 %v3442, 18
    %v3554 = vpop.permute.xlu0 %3553
    %3555 = vrot.lane.b32.xlu0 %v3443, 18
    %v3556 = vpop.permute.xlu0 %3555
    %3557 = vrot.lane.b32.xlu0 %v3444, 18
    %v3558 = vpop.permute.xlu0 %3557
    %3559 = vrot.lane.b32.xlu0 %v3445, 18
    %v3560 = vpop.permute.xlu0 %3559
    %3561 = vrot.lane.b32.xlu0 %v3446, 18
    %v3562 = vpop.permute.xlu0 %3561
    %3563 = vrot.lane.b32.xlu0 %v3447, 18
    %v3564 = vpop.permute.xlu0 %3563
    %3565 = vrot.lane.b32.xlu0 %v3448, 18
    %v3566 = vpop.permute.xlu0 %3565
    %3567 = vrot.lane.b32.xlu0 %v3449, 18
    %v3568 = vpop.permute.xlu0 %3567
    %3569 = vrot.lane.b32.xlu0 %v3450, 18
    %v3570 = vpop.permute.xlu0 %3569
    %3571 = vrot.lane.b32.xlu0 %v3451, 18
    %v3572 = vpop.permute.xlu0 %3571
    %3573 = vrot.lane.b32.xlu0 %v3452, 18
    %v3574 = vpop.permute.xlu0 %3573
    %3575 = vrot.lane.b32.xlu0 %v3453, 18
    %v3576 = vpop.permute.xlu0 %3575
    %3577 = vrot.lane.b32.xlu0 %v3454, 18
    %v3578 = vpop.permute.xlu0 %3577
    %3579 = vrot.lane.b32.xlu0 %v3455, 18
    %v3580 = vpop.permute.xlu0 %3579
    %3581 = vrot.lane.b32.xlu0 %v3456, 18
    %v3582 = vpop.permute.xlu0 %3581
    %3583 = vrot.lane.b32.xlu0 %v3457, 18
    %v3584 = vpop.permute.xlu0 %3583
    %3585 = vrot.lane.b32.xlu0 %v3458, 18
    %v3586 = vpop.permute.xlu0 %3585
    %vm3651 = vcmask 167056
    %3652 = vst.msk [vmem:[#allocation3] sm:$0xf] %vm3651, %v3460
    %3653 = vst.msk [vmem:[#allocation3 + $0x4] sm:$0xf] %vm3651, %v3462
    %3654 = vst.msk [vmem:[#allocation3 + $0x8] sm:$0xf] %vm3651, %v3464
    %3655 = vst.msk [vmem:[#allocation3 + $0xc] sm:$0xf] %vm3651, %v3466
    %3656 = vst.msk [vmem:[#allocation3 + $0x10] sm:$0xf] %vm3651, %v3468
    %3657 = vst.msk [vmem:[#allocation3 + $0x14] sm:$0xf] %vm3651, %v3470
    %3658 = vst.msk [vmem:[#allocation3 + $0x18] sm:$0xf] %vm3651, %v3472
    %3659 = vst.msk [vmem:[#allocation3 + $0x1c] sm:$0xf] %vm3651, %v3474
    %3660 = vst.msk [vmem:[#allocation3 + $0x20] sm:$0xf] %vm3651, %v3476
    %3661 = vst.msk [vmem:[#allocation3 + $0x24] sm:$0xf] %vm3651, %v3478
    %3662 = vst.msk [vmem:[#allocation3 + $0x28] sm:$0xf] %vm3651, %v3480
    %3663 = vst.msk [vmem:[#allocation3 + $0x2c] sm:$0xf] %vm3651, %v3482
    %3664 = vst.msk [vmem:[#allocation3 + $0x30] sm:$0xf] %vm3651, %v3484
    %3665 = vst.msk [vmem:[#allocation3 + $0x34] sm:$0xf] %vm3651, %v3486
    %3666 = vst.msk [vmem:[#allocation3 + $0x38] sm:$0xf] %vm3651, %v3488
    %3667 = vst.msk [vmem:[#allocation3 + $0x3c] sm:$0xf] %vm3651, %v3490
    %3668 = vst.msk [vmem:[#allocation3 + $0x40] sm:$0xf] %vm3651, %v3492
    %3669 = vst.msk [vmem:[#allocation3 + $0x44] sm:$0xf] %vm3651, %v3494
    %3670 = vst.msk [vmem:[#allocation3 + $0x48] sm:$0xf] %vm3651, %v3496
    %3671 = vst.msk [vmem:[#allocation3 + $0x4c] sm:$0xf] %vm3651, %v3498
    %3672 = vst.msk [vmem:[#allocation3 + $0x50] sm:$0xf] %vm3651, %v3500
    %3673 = vst.msk [vmem:[#allocation3 + $0x54] sm:$0xf] %vm3651, %v3502
    %3674 = vst.msk [vmem:[#allocation3 + $0x58] sm:$0xf] %vm3651, %v3504
    %3675 = vst.msk [vmem:[#allocation3 + $0x5c] sm:$0xf] %vm3651, %v3506
    %3676 = vst.msk [vmem:[#allocation3 + $0x60] sm:$0xf] %vm3651, %v3508
    %3677 = vst.msk [vmem:[#allocation3 + $0x64] sm:$0xf] %vm3651, %v3510
    %3678 = vst.msk [vmem:[#allocation3 + $0x68] sm:$0xf] %vm3651, %v3512
    %3679 = vst.msk [vmem:[#allocation3 + $0x6c] sm:$0xf] %vm3651, %v3514
    %3680 = vst.msk [vmem:[#allocation3 + $0x70] sm:$0xf] %vm3651, %v3516
    %3681 = vst.msk [vmem:[#allocation3 + $0x74] sm:$0xf] %vm3651, %v3518
    %3682 = vst.msk [vmem:[#allocation3 + $0x78] sm:$0xf] %vm3651, %v3520
    %3683 = vst.msk [vmem:[#allocation3 + $0x7c] sm:$0xf] %vm3651, %v3522
    %3684 = vst.msk [vmem:[#allocation3 + $0x80] sm:$0xf] %vm3651, %v3524
    %3685 = vst.msk [vmem:[#allocation3 + $0x84] sm:$0xf] %vm3651, %v3526
    %3686 = vst.msk [vmem:[#allocation3 + $0x88] sm:$0xf] %vm3651, %v3528
    %3687 = vst.msk [vmem:[#allocation3 + $0x8c] sm:$0xf] %vm3651, %v3530
    %3688 = vst.msk [vmem:[#allocation3 + $0x90] sm:$0xf] %vm3651, %v3532
    %3689 = vst.msk [vmem:[#allocation3 + $0x94] sm:$0xf] %vm3651, %v3534
    %3690 = vst.msk [vmem:[#allocation3 + $0x98] sm:$0xf] %vm3651, %v3536
    %3691 = vst.msk [vmem:[#allocation3 + $0x9c] sm:$0xf] %vm3651, %v3538
    %3692 = vst.msk [vmem:[#allocation3 + $0xa0] sm:$0xf] %vm3651, %v3540
    %3693 = vst.msk [vmem:[#allocation3 + $0xa4] sm:$0xf] %vm3651, %v3542
    %3694 = vst.msk [vmem:[#allocation3 + $0xa8] sm:$0xf] %vm3651, %v3544
    %3695 = vst.msk [vmem:[#allocation3 + $0xac] sm:$0xf] %vm3651, %v3546
    %3696 = vst.msk [vmem:[#allocation3 + $0xb0] sm:$0xf] %vm3651, %v3548
    %3697 = vst.msk [vmem:[#allocation3 + $0xb4] sm:$0xf] %vm3651, %v3550
    %3698 = vst.msk [vmem:[#allocation3 + $0xb8] sm:$0xf] %vm3651, %v3552
    %3699 = vst.msk [vmem:[#allocation3 + $0xbc] sm:$0xf] %vm3651, %v3554
    %3700 = vst.msk [vmem:[#allocation3 + $0xc0] sm:$0xf] %vm3651, %v3556
    %3701 = vst.msk [vmem:[#allocation3 + $0xc4] sm:$0xf] %vm3651, %v3558
    %3702 = vst.msk [vmem:[#allocation3 + $0xc8] sm:$0xf] %vm3651, %v3560
    %3703 = vst.msk [vmem:[#allocation3 + $0xcc] sm:$0xf] %vm3651, %v3562
    %3704 = vst.msk [vmem:[#allocation3 + $0xd0] sm:$0xf] %vm3651, %v3564
    %3705 = vst.msk [vmem:[#allocation3 + $0xd4] sm:$0xf] %vm3651, %v3566
    %3706 = vst.msk [vmem:[#allocation3 + $0xd8] sm:$0xf] %vm3651, %v3568
    %3707 = vst.msk [vmem:[#allocation3 + $0xdc] sm:$0xf] %vm3651, %v3570
    %3708 = vst.msk [vmem:[#allocation3 + $0xe0] sm:$0xf] %vm3651, %v3572
    %3709 = vst.msk [vmem:[#allocation3 + $0xe4] sm:$0xf] %vm3651, %v3574
    %3710 = vst.msk [vmem:[#allocation3 + $0xe8] sm:$0xf] %vm3651, %v3576
    %3711 = vst.msk [vmem:[#allocation3 + $0xec] sm:$0xf] %vm3651, %v3578
    %3712 = vst.msk [vmem:[#allocation3 + $0xf0] sm:$0xf] %vm3651, %v3580
    %3713 = vst.msk [vmem:[#allocation3 + $0xf4] sm:$0xf] %vm3651, %v3582
    %3714 = vst.msk [vmem:[#allocation3 + $0xf8] sm:$0xf] %vm3651, %v3584
    %3715 = vst.msk [vmem:[#allocation3 + $0xfc] sm:$0xf] %vm3651, %v3586
    %v3716 = vld [vmem:[%s3202 + $0x1] sm:$0xff]
    %v3717 = vld [vmem:[%s3202 + $0x9] sm:$0xff]
    %v3718 = vld [vmem:[%s3202 + $0x19] sm:$0xff]
    %v3719 = vld [vmem:[%s3202 + $0x21] sm:$0xff]
    %v3720 = vld [vmem:[%s3202 + $0x31] sm:$0xff]
    %v3721 = vld [vmem:[%s3202 + $0x39] sm:$0xff]
    %v3722 = vld [vmem:[%s3202 + $0x49] sm:$0xff]
    %v3723 = vld [vmem:[%s3202 + $0x51] sm:$0xff]
    %v3724 = vld [vmem:[%s3202 + $0x61] sm:$0xff]
    %v3725 = vld [vmem:[%s3202 + $0x69] sm:$0xff]
    %v3726 = vld [vmem:[%s3202 + $0x79] sm:$0xff]
    %v3727 = vld [vmem:[%s3202 + $0x81] sm:$0xff]
    %v3728 = vld [vmem:[%s3202 + $0x91] sm:$0xff]
    %v3729 = vld [vmem:[%s3202 + $0x99] sm:$0xff]
    %v3730 = vld [vmem:[%s3202 + $0xa9] sm:$0xff]
    %v3731 = vld [vmem:[%s3202 + $0xb1] sm:$0xff]
    %v3732 = vld [vmem:[%s3202 + $0xc1] sm:$0xff]
    %v3733 = vld [vmem:[%s3202 + $0xc9] sm:$0xff]
    %v3734 = vld [vmem:[%s3202 + $0xd9] sm:$0xff]
    %v3735 = vld [vmem:[%s3202 + $0xe1] sm:$0xff]
    %v3736 = vld [vmem:[%s3202 + $0xf1] sm:$0xff]
    %v3737 = vld [vmem:[%s3202 + $0xf9] sm:$0xff]
    %v3738 = vld [vmem:[%s3202 + $0x109] sm:$0xff]
    %v3739 = vld [vmem:[%s3202 + $0x111] sm:$0xff]
    %v3740 = vld [vmem:[%s3202 + $0x121] sm:$0xff]
    %v3741 = vld [vmem:[%s3202 + $0x129] sm:$0xff]
    %v3742 = vld [vmem:[%s3202 + $0x139] sm:$0xff]
    %v3743 = vld [vmem:[%s3202 + $0x141] sm:$0xff]
    %v3744 = vld [vmem:[%s3202 + $0x151] sm:$0xff]
    %v3745 = vld [vmem:[%s3202 + $0x159] sm:$0xff]
    %v3746 = vld [vmem:[%s3202 + $0x169] sm:$0xff]
    %v3747 = vld [vmem:[%s3202 + $0x171] sm:$0xff]
    %v3748 = vld [vmem:[%s3202 + $0x1b1] sm:$0xff]
    %v3749 = vld [vmem:[%s3202 + $0x1b9] sm:$0xff]
    %v3750 = vld [vmem:[%s3202 + $0x1c9] sm:$0xff]
    %v3751 = vld [vmem:[%s3202 + $0x1d1] sm:$0xff]
    %v3752 = vld [vmem:[%s3202 + $0x1e1] sm:$0xff]
    %v3753 = vld [vmem:[%s3202 + $0x1e9] sm:$0xff]
    %v3754 = vld [vmem:[%s3202 + $0x1f9] sm:$0xff]
    %v3755 = vld [vmem:[%s3202 + $0x201] sm:$0xff]
    %v3756 = vld [vmem:[%s3202 + $0x211] sm:$0xff]
    %v3757 = vld [vmem:[%s3202 + $0x219] sm:$0xff]
    %v3758 = vld [vmem:[%s3202 + $0x229] sm:$0xff]
    %v3759 = vld [vmem:[%s3202 + $0x231] sm:$0xff]
    %v3760 = vld [vmem:[%s3202 + $0x241] sm:$0xff]
    %v3761 = vld [vmem:[%s3202 + $0x249] sm:$0xff]
    %v3762 = vld [vmem:[%s3202 + $0x259] sm:$0xff]
    %v3763 = vld [vmem:[%s3202 + $0x261] sm:$0xff]
    %v3764 = vld [vmem:[%s3202 + $0x271] sm:$0xff]
    %v3765 = vld [vmem:[%s3202 + $0x279] sm:$0xff]
    %v3766 = vld [vmem:[%s3202 + $0x289] sm:$0xff]
    %v3767 = vld [vmem:[%s3202 + $0x291] sm:$0xff]
    %v3768 = vld [vmem:[%s3202 + $0x2a1] sm:$0xff]
    %v3769 = vld [vmem:[%s3202 + $0x2a9] sm:$0xff]
    %v3770 = vld [vmem:[%s3202 + $0x2b9] sm:$0xff]
    %v3771 = vld [vmem:[%s3202 + $0x2c1] sm:$0xff]
    %v3772 = vld [vmem:[%s3202 + $0x2d1] sm:$0xff]
    %v3773 = vld [vmem:[%s3202 + $0x2d9] sm:$0xff]
    %v3774 = vld [vmem:[%s3202 + $0x2e9] sm:$0xff]
    %v3775 = vld [vmem:[%s3202 + $0x2f1] sm:$0xff]
    %v3776 = vld [vmem:[%s3202 + $0x301] sm:$0xff]
    %v3777 = vld [vmem:[%s3202 + $0x309] sm:$0xff]
    %v3778 = vld [vmem:[%s3202 + $0x319] sm:$0xff]
    %v3779 = vld [vmem:[%s3202 + $0x321] sm:$0xff]
    %v3780 = vpack.c.bf16 %v3717, %v3716
    %v3781 = vpack.c.bf16 %v3719, %v3718
    %v3782 = vpack.c.bf16 %v3721, %v3720
    %v3783 = vpack.c.bf16 %v3723, %v3722
    %v3784 = vpack.c.bf16 %v3725, %v3724
    %v3785 = vpack.c.bf16 %v3727, %v3726
    %v3786 = vpack.c.bf16 %v3729, %v3728
    %v3787 = vpack.c.bf16 %v3731, %v3730
    %v3788 = vpack.c.bf16 %v3733, %v3732
    %v3789 = vpack.c.bf16 %v3735, %v3734
    %v3790 = vpack.c.bf16 %v3737, %v3736
    %v3791 = vpack.c.bf16 %v3739, %v3738
    %v3792 = vpack.c.bf16 %v3741, %v3740
    %v3793 = vpack.c.bf16 %v3743, %v3742
    %v3794 = vpack.c.bf16 %v3745, %v3744
    %v3795 = vpack.c.bf16 %v3747, %v3746
    %v3796 = vpack.c.bf16 %v3749, %v3748
    %v3797 = vpack.c.bf16 %v3751, %v3750
    %v3798 = vpack.c.bf16 %v3753, %v3752
    %v3799 = vpack.c.bf16 %v3755, %v3754
    %v3800 = vpack.c.bf16 %v3757, %v3756
    %v3801 = vpack.c.bf16 %v3759, %v3758
    %v3802 = vpack.c.bf16 %v3761, %v3760
    %v3803 = vpack.c.bf16 %v3763, %v3762
    %v3804 = vpack.c.bf16 %v3765, %v3764
    %v3805 = vpack.c.bf16 %v3767, %v3766
    %v3806 = vpack.c.bf16 %v3769, %v3768
    %v3807 = vpack.c.bf16 %v3771, %v3770
    %v3808 = vpack.c.bf16 %v3773, %v3772
    %v3809 = vpack.c.bf16 %v3775, %v3774
    %v3810 = vpack.c.bf16 %v3777, %v3776
    %v3811 = vpack.c.bf16 %v3779, %v3778
    %v3844 = vunpack.c.l.b16 %v3780
    %v3845 = vunpack.c.h.b16 %v3780
    %v3846 = vunpack.c.l.b16 %v3781
    %v3847 = vunpack.c.h.b16 %v3781
    %v3848 = vunpack.c.l.b16 %v3782
    %v3849 = vunpack.c.h.b16 %v3782
    %v3850 = vunpack.c.l.b16 %v3783
    %v3851 = vunpack.c.h.b16 %v3783
    %v3852 = vunpack.c.l.b16 %v3784
    %v3853 = vunpack.c.h.b16 %v3784
    %v3854 = vunpack.c.l.b16 %v3785
    %v3855 = vunpack.c.h.b16 %v3785
    %v3856 = vunpack.c.l.b16 %v3786
    %v3857 = vunpack.c.h.b16 %v3786
    %v3858 = vunpack.c.l.b16 %v3787
    %v3859 = vunpack.c.h.b16 %v3787
    %v3860 = vunpack.c.l.b16 %v3788
    %v3861 = vunpack.c.h.b16 %v3788
    %v3862 = vunpack.c.l.b16 %v3789
    %v3863 = vunpack.c.h.b16 %v3789
    %v3864 = vunpack.c.l.b16 %v3790
    %v3865 = vunpack.c.h.b16 %v3790
    %v3866 = vunpack.c.l.b16 %v3791
    %v3867 = vunpack.c.h.b16 %v3791
    %v3868 = vunpack.c.l.b16 %v3792
    %v3869 = vunpack.c.h.b16 %v3792
    %v3870 = vunpack.c.l.b16 %v3793
    %v3871 = vunpack.c.h.b16 %v3793
    %v3872 = vunpack.c.l.b16 %v3794
    %v3873 = vunpack.c.h.b16 %v3794
    %v3874 = vunpack.c.l.b16 %v3795
    %v3875 = vunpack.c.h.b16 %v3795
    %v3876 = vunpack.c.l.b16 %v3796
    %v3877 = vunpack.c.h.b16 %v3796
    %v3878 = vunpack.c.l.b16 %v3797
    %v3879 = vunpack.c.h.b16 %v3797
    %v3880 = vunpack.c.l.b16 %v3798
    %v3881 = vunpack.c.h.b16 %v3798
    %v3882 = vunpack.c.l.b16 %v3799
    %v3883 = vunpack.c.h.b16 %v3799
    %v3884 = vunpack.c.l.b16 %v3800
    %v3885 = vunpack.c.h.b16 %v3800
    %v3886 = vunpack.c.l.b16 %v3801
    %v3887 = vunpack.c.h.b16 %v3801
    %v3888 = vunpack.c.l.b16 %v3802
    %v3889 = vunpack.c.h.b16 %v3802
    %v3890 = vunpack.c.l.b16 %v3803
    %v3891 = vunpack.c.h.b16 %v3803
    %v3892 = vunpack.c.l.b16 %v3804
    %v3893 = vunpack.c.h.b16 %v3804
    %v3894 = vunpack.c.l.b16 %v3805
    %v3895 = vunpack.c.h.b16 %v3805
    %v3896 = vunpack.c.l.b16 %v3806
    %v3897 = vunpack.c.h.b16 %v3806
    %v3898 = vunpack.c.l.b16 %v3807
    %v3899 = vunpack.c.h.b16 %v3807
    %v3900 = vunpack.c.l.b16 %v3808
    %v3901 = vunpack.c.h.b16 %v3808
    %v3902 = vunpack.c.l.b16 %v3809
    %v3903 = vunpack.c.h.b16 %v3809
    %v3904 = vunpack.c.l.b16 %v3810
    %v3905 = vunpack.c.h.b16 %v3810
    %v3906 = vunpack.c.l.b16 %v3811
    %v3907 = vunpack.c.h.b16 %v3811
    %v3908 = vpack.c.b16 %v3844, %v3844
    %v3909 = vpack.c.b16 %v3845, %v3845
    %v3910 = vpack.c.b16 %v3846, %v3846
    %v3911 = vpack.c.b16 %v3847, %v3847
    %v3912 = vpack.c.b16 %v3848, %v3848
    %v3913 = vpack.c.b16 %v3849, %v3849
    %v3914 = vpack.c.b16 %v3850, %v3850
    %v3915 = vpack.c.b16 %v3851, %v3851
    %v3916 = vpack.c.b16 %v3852, %v3852
    %v3917 = vpack.c.b16 %v3853, %v3853
    %v3918 = vpack.c.b16 %v3854, %v3854
    %v3919 = vpack.c.b16 %v3855, %v3855
    %v3920 = vpack.c.b16 %v3856, %v3856
    %v3921 = vpack.c.b16 %v3857, %v3857
    %v3922 = vpack.c.b16 %v3858, %v3858
    %v3923 = vpack.c.b16 %v3859, %v3859
    %v3924 = vpack.c.b16 %v3860, %v3860
    %v3925 = vpack.c.b16 %v3861, %v3861
    %v3926 = vpack.c.b16 %v3862, %v3862
    %v3927 = vpack.c.b16 %v3863, %v3863
    %v3928 = vpack.c.b16 %v3864, %v3864
    %v3929 = vpack.c.b16 %v3865, %v3865
    %v3930 = vpack.c.b16 %v3866, %v3866
    %v3931 = vpack.c.b16 %v3867, %v3867
    %v3932 = vpack.c.b16 %v3868, %v3868
    %v3933 = vpack.c.b16 %v3869, %v3869
    %v3934 = vpack.c.b16 %v3870, %v3870
    %v3935 = vpack.c.b16 %v3871, %v3871
    %v3936 = vpack.c.b16 %v3872, %v3872
    %v3937 = vpack.c.b16 %v3873, %v3873
    %v3938 = vpack.c.b16 %v3874, %v3874
    %v3939 = vpack.c.b16 %v3875, %v3875
    %v3940 = vpack.c.b16 %v3876, %v3876
    %v3941 = vpack.c.b16 %v3877, %v3877
    %v3942 = vpack.c.b16 %v3878, %v3878
    %v3943 = vpack.c.b16 %v3879, %v3879
    %v3944 = vpack.c.b16 %v3880, %v3880
    %v3945 = vpack.c.b16 %v3881, %v3881
    %v3946 = vpack.c.b16 %v3882, %v3882
    %v3947 = vpack.c.b16 %v3883, %v3883
    %v3948 = vpack.c.b16 %v3884, %v3884
    %v3949 = vpack.c.b16 %v3885, %v3885
    %v3950 = vpack.c.b16 %v3886, %v3886
    %v3951 = vpack.c.b16 %v3887, %v3887
    %v3952 = vpack.c.b16 %v3888, %v3888
    %v3953 = vpack.c.b16 %v3889, %v3889
    %v3954 = vpack.c.b16 %v3890, %v3890
    %v3955 = vpack.c.b16 %v3891, %v3891
    %v3956 = vpack.c.b16 %v3892, %v3892
    %v3957 = vpack.c.b16 %v3893, %v3893
    %v3958 = vpack.c.b16 %v3894, %v3894
    %v3959 = vpack.c.b16 %v3895, %v3895
    %v3960 = vpack.c.b16 %v3896, %v3896
    %v3961 = vpack.c.b16 %v3897, %v3897
    %v3962 = vpack.c.b16 %v3898, %v3898
    %v3963 = vpack.c.b16 %v3899, %v3899
    %v3964 = vpack.c.b16 %v3900, %v3900
    %v3965 = vpack.c.b16 %v3901, %v3901
    %v3966 = vpack.c.b16 %v3902, %v3902
    %v3967 = vpack.c.b16 %v3903, %v3903
    %v3968 = vpack.c.b16 %v3904, %v3904
    %v3969 = vpack.c.b16 %v3905, %v3905
    %v3970 = vpack.c.b16 %v3906, %v3906
    %v3971 = vpack.c.b16 %v3907, %v3907
    %3972 = vrot.lane.b32.xlu0 %v3908, 21
    %v3973 = vpop.permute.xlu0 %3972
    %3974 = vrot.lane.b32.xlu0 %v3909, 21
    %v3975 = vpop.permute.xlu0 %3974
    %3976 = vrot.lane.b32.xlu0 %v3910, 21
    %v3977 = vpop.permute.xlu0 %3976
    %3978 = vrot.lane.b32.xlu0 %v3911, 21
    %v3979 = vpop.permute.xlu0 %3978
    %3980 = vrot.lane.b32.xlu0 %v3912, 21
    %v3981 = vpop.permute.xlu0 %3980
    %3982 = vrot.lane.b32.xlu0 %v3913, 21
    %v3983 = vpop.permute.xlu0 %3982
    %3984 = vrot.lane.b32.xlu0 %v3914, 21
    %v3985 = vpop.permute.xlu0 %3984
    %3986 = vrot.lane.b32.xlu0 %v3915, 21
    %v3987 = vpop.permute.xlu0 %3986
    %3988 = vrot.lane.b32.xlu0 %v3916, 21
    %v3989 = vpop.permute.xlu0 %3988
    %3990 = vrot.lane.b32.xlu0 %v3917, 21
    %v3991 = vpop.permute.xlu0 %3990
    %3992 = vrot.lane.b32.xlu0 %v3918, 21
    %v3993 = vpop.permute.xlu0 %3992
    %3994 = vrot.lane.b32.xlu0 %v3919, 21
    %v3995 = vpop.permute.xlu0 %3994
    %3996 = vrot.lane.b32.xlu0 %v3920, 21
    %v3997 = vpop.permute.xlu0 %3996
    %3998 = vrot.lane.b32.xlu0 %v3921, 21
    %v3999 = vpop.permute.xlu0 %3998
    %4000 = vrot.lane.b32.xlu0 %v3922, 21
    %v4001 = vpop.permute.xlu0 %4000
    %4002 = vrot.lane.b32.xlu0 %v3923, 21
    %v4003 = vpop.permute.xlu0 %4002
    %4004 = vrot.lane.b32.xlu0 %v3924, 21
    %v4005 = vpop.permute.xlu0 %4004
    %4006 = vrot.lane.b32.xlu0 %v3925, 21
    %v4007 = vpop.permute.xlu0 %4006
    %4008 = vrot.lane.b32.xlu0 %v3926, 21
    %v4009 = vpop.permute.xlu0 %4008
    %4010 = vrot.lane.b32.xlu0 %v3927, 21
    %v4011 = vpop.permute.xlu0 %4010
    %4012 = vrot.lane.b32.xlu0 %v3928, 21
    %v4013 = vpop.permute.xlu0 %4012
    %4014 = vrot.lane.b32.xlu0 %v3929, 21
    %v4015 = vpop.permute.xlu0 %4014
    %4016 = vrot.lane.b32.xlu0 %v3930, 21
    %v4017 = vpop.permute.xlu0 %4016
    %4018 = vrot.lane.b32.xlu0 %v3931, 21
    %v4019 = vpop.permute.xlu0 %4018
    %4020 = vrot.lane.b32.xlu0 %v3932, 21
    %v4021 = vpop.permute.xlu0 %4020
    %4022 = vrot.lane.b32.xlu0 %v3933, 21
    %v4023 = vpop.permute.xlu0 %4022
    %4024 = vrot.lane.b32.xlu0 %v3934, 21
    %v4025 = vpop.permute.xlu0 %4024
    %4026 = vrot.lane.b32.xlu0 %v3935, 21
    %v4027 = vpop.permute.xlu0 %4026
    %4028 = vrot.lane.b32.xlu0 %v3936, 21
    %v4029 = vpop.permute.xlu0 %4028
    %4030 = vrot.lane.b32.xlu0 %v3937, 21
    %v4031 = vpop.permute.xlu0 %4030
    %4032 = vrot.lane.b32.xlu0 %v3938, 21
    %v4033 = vpop.permute.xlu0 %4032
    %4034 = vrot.lane.b32.xlu0 %v3939, 21
    %v4035 = vpop.permute.xlu0 %4034
    %4036 = vrot.lane.b32.xlu0 %v3940, 21
    %v4037 = vpop.permute.xlu0 %4036
    %4038 = vrot.lane.b32.xlu0 %v3941, 21
    %v4039 = vpop.permute.xlu0 %4038
    %4040 = vrot.lane.b32.xlu0 %v3942, 21
    %v4041 = vpop.permute.xlu0 %4040
    %4042 = vrot.lane.b32.xlu0 %v3943, 21
    %v4043 = vpop.permute.xlu0 %4042
    %4044 = vrot.lane.b32.xlu0 %v3944, 21
    %v4045 = vpop.permute.xlu0 %4044
    %4046 = vrot.lane.b32.xlu0 %v3945, 21
    %v4047 = vpop.permute.xlu0 %4046
    %4048 = vrot.lane.b32.xlu0 %v3946, 21
    %v4049 = vpop.permute.xlu0 %4048
    %4050 = vrot.lane.b32.xlu0 %v3947, 21
    %v4051 = vpop.permute.xlu0 %4050
    %4052 = vrot.lane.b32.xlu0 %v3948, 21
    %v4053 = vpop.permute.xlu0 %4052
    %4054 = vrot.lane.b32.xlu0 %v3949, 21
    %v4055 = vpop.permute.xlu0 %4054
    %4056 = vrot.lane.b32.xlu0 %v3950, 21
    %v4057 = vpop.permute.xlu0 %4056
    %4058 = vrot.lane.b32.xlu0 %v3951, 21
    %v4059 = vpop.permute.xlu0 %4058
    %4060 = vrot.lane.b32.xlu0 %v3952, 21
    %v4061 = vpop.permute.xlu0 %4060
    %4062 = vrot.lane.b32.xlu0 %v3953, 21
    %v4063 = vpop.permute.xlu0 %4062
    %4064 = vrot.lane.b32.xlu0 %v3954, 21
    %v4065 = vpop.permute.xlu0 %4064
    %4066 = vrot.lane.b32.xlu0 %v3955, 21
    %v4067 = vpop.permute.xlu0 %4066
    %4068 = vrot.lane.b32.xlu0 %v3956, 21
    %v4069 = vpop.permute.xlu0 %4068
    %4070 = vrot.lane.b32.xlu0 %v3957, 21
    %v4071 = vpop.permute.xlu0 %4070
    %4072 = vrot.lane.b32.xlu0 %v3958, 21
    %v4073 = vpop.permute.xlu0 %4072
    %4074 = vrot.lane.b32.xlu0 %v3959, 21
    %v4075 = vpop.permute.xlu0 %4074
    %4076 = vrot.lane.b32.xlu0 %v3960, 21
    %v4077 = vpop.permute.xlu0 %4076
    %4078 = vrot.lane.b32.xlu0 %v3961, 21
    %v4079 = vpop.permute.xlu0 %4078
    %4080 = vrot.lane.b32.xlu0 %v3962, 21
    %v4081 = vpop.permute.xlu0 %4080
    %4082 = vrot.lane.b32.xlu0 %v3963, 21
    %v4083 = vpop.permute.xlu0 %4082
    %4084 = vrot.lane.b32.xlu0 %v3964, 21
    %v4085 = vpop.permute.xlu0 %4084
    %4086 = vrot.lane.b32.xlu0 %v3965, 21
    %v4087 = vpop.permute.xlu0 %4086
    %4088 = vrot.lane.b32.xlu0 %v3966, 21
    %v4089 = vpop.permute.xlu0 %4088
    %4090 = vrot.lane.b32.xlu0 %v3967, 21
    %v4091 = vpop.permute.xlu0 %4090
    %4092 = vrot.lane.b32.xlu0 %v3968, 21
    %v4093 = vpop.permute.xlu0 %4092
    %4094 = vrot.lane.b32.xlu0 %v3969, 21
    %v4095 = vpop.permute.xlu0 %4094
    %4096 = vrot.lane.b32.xlu0 %v3970, 21
    %v4097 = vpop.permute.xlu0 %4096
    %4098 = vrot.lane.b32.xlu0 %v3971, 21
    %v4099 = vpop.permute.xlu0 %4098
    %vm4164 = vcmask 191656
    %4165 = vst.msk [vmem:[#allocation3] sm:$0xf] %vm4164, %v3973
    %4166 = vst.msk [vmem:[#allocation3 + $0x4] sm:$0xf] %vm4164, %v3975
    %4167 = vst.msk [vmem:[#allocation3 + $0x8] sm:$0xf] %vm4164, %v3977
    %4168 = vst.msk [vmem:[#allocation3 + $0xc] sm:$0xf] %vm4164, %v3979
    %4169 = vst.msk [vmem:[#allocation3 + $0x10] sm:$0xf] %vm4164, %v3981
    %4170 = vst.msk [vmem:[#allocation3 + $0x14] sm:$0xf] %vm4164, %v3983
    %4171 = vst.msk [vmem:[#allocation3 + $0x18] sm:$0xf] %vm4164, %v3985
    %4172 = vst.msk [vmem:[#allocation3 + $0x1c] sm:$0xf] %vm4164, %v3987
    %4173 = vst.msk [vmem:[#allocation3 + $0x20] sm:$0xf] %vm4164, %v3989
    %4174 = vst.msk [vmem:[#allocation3 + $0x24] sm:$0xf] %vm4164, %v3991
    %4175 = vst.msk [vmem:[#allocation3 + $0x28] sm:$0xf] %vm4164, %v3993
    %4176 = vst.msk [vmem:[#allocation3 + $0x2c] sm:$0xf] %vm4164, %v3995
    %4177 = vst.msk [vmem:[#allocation3 + $0x30] sm:$0xf] %vm4164, %v3997
    %4178 = vst.msk [vmem:[#allocation3 + $0x34] sm:$0xf] %vm4164, %v3999
    %4179 = vst.msk [vmem:[#allocation3 + $0x38] sm:$0xf] %vm4164, %v4001
    %4180 = vst.msk [vmem:[#allocation3 + $0x3c] sm:$0xf] %vm4164, %v4003
    %4181 = vst.msk [vmem:[#allocation3 + $0x40] sm:$0xf] %vm4164, %v4005
    %4182 = vst.msk [vmem:[#allocation3 + $0x44] sm:$0xf] %vm4164, %v4007
    %4183 = vst.msk [vmem:[#allocation3 + $0x48] sm:$0xf] %vm4164, %v4009
    %4184 = vst.msk [vmem:[#allocation3 + $0x4c] sm:$0xf] %vm4164, %v4011
    %4185 = vst.msk [vmem:[#allocation3 + $0x50] sm:$0xf] %vm4164, %v4013
    %4186 = vst.msk [vmem:[#allocation3 + $0x54] sm:$0xf] %vm4164, %v4015
    %4187 = vst.msk [vmem:[#allocation3 + $0x58] sm:$0xf] %vm4164, %v4017
    %4188 = vst.msk [vmem:[#allocation3 + $0x5c] sm:$0xf] %vm4164, %v4019
    %4189 = vst.msk [vmem:[#allocation3 + $0x60] sm:$0xf] %vm4164, %v4021
    %4190 = vst.msk [vmem:[#allocation3 + $0x64] sm:$0xf] %vm4164, %v4023
    %4191 = vst.msk [vmem:[#allocation3 + $0x68] sm:$0xf] %vm4164, %v4025
    %4192 = vst.msk [vmem:[#allocation3 + $0x6c] sm:$0xf] %vm4164, %v4027
    %4193 = vst.msk [vmem:[#allocation3 + $0x70] sm:$0xf] %vm4164, %v4029
    %4194 = vst.msk [vmem:[#allocation3 + $0x74] sm:$0xf] %vm4164, %v4031
    %4195 = vst.msk [vmem:[#allocation3 + $0x78] sm:$0xf] %vm4164, %v4033
    %4196 = vst.msk [vmem:[#allocation3 + $0x7c] sm:$0xf] %vm4164, %v4035
    %4197 = vst.msk [vmem:[#allocation3 + $0x80] sm:$0xf] %vm4164, %v4037
    %4198 = vst.msk [vmem:[#allocation3 + $0x84] sm:$0xf] %vm4164, %v4039
    %4199 = vst.msk [vmem:[#allocation3 + $0x88] sm:$0xf] %vm4164, %v4041
    %4200 = vst.msk [vmem:[#allocation3 + $0x8c] sm:$0xf] %vm4164, %v4043
    %4201 = vst.msk [vmem:[#allocation3 + $0x90] sm:$0xf] %vm4164, %v4045
    %4202 = vst.msk [vmem:[#allocation3 + $0x94] sm:$0xf] %vm4164, %v4047
    %4203 = vst.msk [vmem:[#allocation3 + $0x98] sm:$0xf] %vm4164, %v4049
    %4204 = vst.msk [vmem:[#allocation3 + $0x9c] sm:$0xf] %vm4164, %v4051
    %4205 = vst.msk [vmem:[#allocation3 + $0xa0] sm:$0xf] %vm4164, %v4053
    %4206 = vst.msk [vmem:[#allocation3 + $0xa4] sm:$0xf] %vm4164, %v4055
    %4207 = vst.msk [vmem:[#allocation3 + $0xa8] sm:$0xf] %vm4164, %v4057
    %4208 = vst.msk [vmem:[#allocation3 + $0xac] sm:$0xf] %vm4164, %v4059
    %4209 = vst.msk [vmem:[#allocation3 + $0xb0] sm:$0xf] %vm4164, %v4061
    %4210 = vst.msk [vmem:[#allocation3 + $0xb4] sm:$0xf] %vm4164, %v4063
    %4211 = vst.msk [vmem:[#allocation3 + $0xb8] sm:$0xf] %vm4164, %v4065
    %4212 = vst.msk [vmem:[#allocation3 + $0xbc] sm:$0xf] %vm4164, %v4067
    %4213 = vst.msk [vmem:[#allocation3 + $0xc0] sm:$0xf] %vm4164, %v4069
    %4214 = vst.msk [vmem:[#allocation3 + $0xc4] sm:$0xf] %vm4164, %v4071
    %4215 = vst.msk [vmem:[#allocation3 + $0xc8] sm:$0xf] %vm4164, %v4073
    %4216 = vst.msk [vmem:[#allocation3 + $0xcc] sm:$0xf] %vm4164, %v4075
    %4217 = vst.msk [vmem:[#allocation3 + $0xd0] sm:$0xf] %vm4164, %v4077
    %4218 = vst.msk [vmem:[#allocation3 + $0xd4] sm:$0xf] %vm4164, %v4079
    %4219 = vst.msk [vmem:[#allocation3 + $0xd8] sm:$0xf] %vm4164, %v4081
    %4220 = vst.msk [vmem:[#allocation3 + $0xdc] sm:$0xf] %vm4164, %v4083
    %4221 = vst.msk [vmem:[#allocation3 + $0xe0] sm:$0xf] %vm4164, %v4085
    %4222 = vst.msk [vmem:[#allocation3 + $0xe4] sm:$0xf] %vm4164, %v4087
    %4223 = vst.msk [vmem:[#allocation3 + $0xe8] sm:$0xf] %vm4164, %v4089
    %4224 = vst.msk [vmem:[#allocation3 + $0xec] sm:$0xf] %vm4164, %v4091
    %4225 = vst.msk [vmem:[#allocation3 + $0xf0] sm:$0xf] %vm4164, %v4093
    %4226 = vst.msk [vmem:[#allocation3 + $0xf4] sm:$0xf] %vm4164, %v4095
    %4227 = vst.msk [vmem:[#allocation3 + $0xf8] sm:$0xf] %vm4164, %v4097
    %4228 = vst.msk [vmem:[#allocation3 + $0xfc] sm:$0xf] %vm4164, %v4099
    %v4229 = vld [vmem:[%s3202 + $0x2] sm:$0xff]
    %v4230 = vld [vmem:[%s3202 + $0xa] sm:$0xff]
    %v4231 = vld [vmem:[%s3202 + $0x1a] sm:$0xff]
    %v4232 = vld [vmem:[%s3202 + $0x22] sm:$0xff]
    %v4233 = vld [vmem:[%s3202 + $0x32] sm:$0xff]
    %v4234 = vld [vmem:[%s3202 + $0x3a] sm:$0xff]
    %v4235 = vld [vmem:[%s3202 + $0x4a] sm:$0xff]
    %v4236 = vld [vmem:[%s3202 + $0x52] sm:$0xff]
    %v4237 = vld [vmem:[%s3202 + $0x62] sm:$0xff]
    %v4238 = vld [vmem:[%s3202 + $0x6a] sm:$0xff]
    %v4239 = vld [vmem:[%s3202 + $0x7a] sm:$0xff]
    %v4240 = vld [vmem:[%s3202 + $0x82] sm:$0xff]
    %v4241 = vld [vmem:[%s3202 + $0x92] sm:$0xff]
    %v4242 = vld [vmem:[%s3202 + $0x9a] sm:$0xff]
    %v4243 = vld [vmem:[%s3202 + $0xaa] sm:$0xff]
    %v4244 = vld [vmem:[%s3202 + $0xb2] sm:$0xff]
    %v4245 = vld [vmem:[%s3202 + $0xc2] sm:$0xff]
    %v4246 = vld [vmem:[%s3202 + $0xca] sm:$0xff]
    %v4247 = vld [vmem:[%s3202 + $0xda] sm:$0xff]
    %v4248 = vld [vmem:[%s3202 + $0xe2] sm:$0xff]
    %v4249 = vld [vmem:[%s3202 + $0xf2] sm:$0xff]
    %v4250 = vld [vmem:[%s3202 + $0xfa] sm:$0xff]
    %v4251 = vld [vmem:[%s3202 + $0x10a] sm:$0xff]
    %v4252 = vld [vmem:[%s3202 + $0x112] sm:$0xff]
    %v4253 = vld [vmem:[%s3202 + $0x122] sm:$0xff]
    %v4254 = vld [vmem:[%s3202 + $0x12a] sm:$0xff]
    %v4255 = vld [vmem:[%s3202 + $0x13a] sm:$0xff]
    %v4256 = vld [vmem:[%s3202 + $0x142] sm:$0xff]
    %v4257 = vld [vmem:[%s3202 + $0x152] sm:$0xff]
    %v4258 = vld [vmem:[%s3202 + $0x15a] sm:$0xff]
    %v4259 = vld [vmem:[%s3202 + $0x16a] sm:$0xff]
    %v4260 = vld [vmem:[%s3202 + $0x172] sm:$0xff]
    %v4261 = vld [vmem:[%s3202 + $0x1b2] sm:$0xff]
    %v4262 = vld [vmem:[%s3202 + $0x1ba] sm:$0xff]
    %v4263 = vld [vmem:[%s3202 + $0x1ca] sm:$0xff]
    %v4264 = vld [vmem:[%s3202 + $0x1d2] sm:$0xff]
    %v4265 = vld [vmem:[%s3202 + $0x1e2] sm:$0xff]
    %v4266 = vld [vmem:[%s3202 + $0x1ea] sm:$0xff]
    %v4267 = vld [vmem:[%s3202 + $0x1fa] sm:$0xff]
    %v4268 = vld [vmem:[%s3202 + $0x202] sm:$0xff]
    %v4269 = vld [vmem:[%s3202 + $0x212] sm:$0xff]
    %v4270 = vld [vmem:[%s3202 + $0x21a] sm:$0xff]
    %v4271 = vld [vmem:[%s3202 + $0x22a] sm:$0xff]
    %v4272 = vld [vmem:[%s3202 + $0x232] sm:$0xff]
    %v4273 = vld [vmem:[%s3202 + $0x242] sm:$0xff]
    %v4274 = vld [vmem:[%s3202 + $0x24a] sm:$0xff]
    %v4275 = vld [vmem:[%s3202 + $0x25a] sm:$0xff]
    %v4276 = vld [vmem:[%s3202 + $0x262] sm:$0xff]
    %v4277 = vld [vmem:[%s3202 + $0x272] sm:$0xff]
    %v4278 = vld [vmem:[%s3202 + $0x27a] sm:$0xff]
    %v4279 = vld [vmem:[%s3202 + $0x28a] sm:$0xff]
    %v4280 = vld [vmem:[%s3202 + $0x292] sm:$0xff]
    %v4281 = vld [vmem:[%s3202 + $0x2a2] sm:$0xff]
    %v4282 = vld [vmem:[%s3202 + $0x2aa] sm:$0xff]
    %v4283 = vld [vmem:[%s3202 + $0x2ba] sm:$0xff]
    %v4284 = vld [vmem:[%s3202 + $0x2c2] sm:$0xff]
    %v4285 = vld [vmem:[%s3202 + $0x2d2] sm:$0xff]
    %v4286 = vld [vmem:[%s3202 + $0x2da] sm:$0xff]
    %v4287 = vld [vmem:[%s3202 + $0x2ea] sm:$0xff]
    %v4288 = vld [vmem:[%s3202 + $0x2f2] sm:$0xff]
    %v4289 = vld [vmem:[%s3202 + $0x302] sm:$0xff]
    %v4290 = vld [vmem:[%s3202 + $0x30a] sm:$0xff]
    %v4291 = vld [vmem:[%s3202 + $0x31a] sm:$0xff]
    %v4292 = vld [vmem:[%s3202 + $0x322] sm:$0xff]
    %v4293 = vpack.c.bf16 %v4230, %v4229
    %v4294 = vpack.c.bf16 %v4232, %v4231
    %v4295 = vpack.c.bf16 %v4234, %v4233
    %v4296 = vpack.c.bf16 %v4236, %v4235
    %v4297 = vpack.c.bf16 %v4238, %v4237
    %v4298 = vpack.c.bf16 %v4240, %v4239
    %v4299 = vpack.c.bf16 %v4242, %v4241
    %v4300 = vpack.c.bf16 %v4244, %v4243
    %v4301 = vpack.c.bf16 %v4246, %v4245
    %v4302 = vpack.c.bf16 %v4248, %v4247
    %v4303 = vpack.c.bf16 %v4250, %v4249
    %v4304 = vpack.c.bf16 %v4252, %v4251
    %v4305 = vpack.c.bf16 %v4254, %v4253
    %v4306 = vpack.c.bf16 %v4256, %v4255
    %v4307 = vpack.c.bf16 %v4258, %v4257
    %v4308 = vpack.c.bf16 %v4260, %v4259
    %v4309 = vpack.c.bf16 %v4262, %v4261
    %v4310 = vpack.c.bf16 %v4264, %v4263
    %v4311 = vpack.c.bf16 %v4266, %v4265
    %v4312 = vpack.c.bf16 %v4268, %v4267
    %v4313 = vpack.c.bf16 %v4270, %v4269
    %v4314 = vpack.c.bf16 %v4272, %v4271
    %v4315 = vpack.c.bf16 %v4274, %v4273
    %v4316 = vpack.c.bf16 %v4276, %v4275
    %v4317 = vpack.c.bf16 %v4278, %v4277
    %v4318 = vpack.c.bf16 %v4280, %v4279
    %v4319 = vpack.c.bf16 %v4282, %v4281
    %v4320 = vpack.c.bf16 %v4284, %v4283
    %v4321 = vpack.c.bf16 %v4286, %v4285
    %v4322 = vpack.c.bf16 %v4288, %v4287
    %v4323 = vpack.c.bf16 %v4290, %v4289
    %v4324 = vpack.c.bf16 %v4292, %v4291
    %v4357 = vunpack.c.l.b16 %v4293
    %v4358 = vunpack.c.h.b16 %v4293
    %v4359 = vunpack.c.l.b16 %v4294
    %v4360 = vunpack.c.h.b16 %v4294
    %v4361 = vunpack.c.l.b16 %v4295
    %v4362 = vunpack.c.h.b16 %v4295
    %v4363 = vunpack.c.l.b16 %v4296
    %v4364 = vunpack.c.h.b16 %v4296
    %v4365 = vunpack.c.l.b16 %v4297
    %v4366 = vunpack.c.h.b16 %v4297
    %v4367 = vunpack.c.l.b16 %v4298
    %v4368 = vunpack.c.h.b16 %v4298
    %v4369 = vunpack.c.l.b16 %v4299
    %v4370 = vunpack.c.h.b16 %v4299
    %v4371 = vunpack.c.l.b16 %v4300
    %v4372 = vunpack.c.h.b16 %v4300
    %v4373 = vunpack.c.l.b16 %v4301
    %v4374 = vunpack.c.h.b16 %v4301
    %v4375 = vunpack.c.l.b16 %v4302
    %v4376 = vunpack.c.h.b16 %v4302
    %v4377 = vunpack.c.l.b16 %v4303
    %v4378 = vunpack.c.h.b16 %v4303
    %v4379 = vunpack.c.l.b16 %v4304
    %v4380 = vunpack.c.h.b16 %v4304
    %v4381 = vunpack.c.l.b16 %v4305
    %v4382 = vunpack.c.h.b16 %v4305
    %v4383 = vunpack.c.l.b16 %v4306
    %v4384 = vunpack.c.h.b16 %v4306
    %v4385 = vunpack.c.l.b16 %v4307
    %v4386 = vunpack.c.h.b16 %v4307
    %v4387 = vunpack.c.l.b16 %v4308
    %v4388 = vunpack.c.h.b16 %v4308
    %v4389 = vunpack.c.l.b16 %v4309
    %v4390 = vunpack.c.h.b16 %v4309
    %v4391 = vunpack.c.l.b16 %v4310
    %v4392 = vunpack.c.h.b16 %v4310
    %v4393 = vunpack.c.l.b16 %v4311
    %v4394 = vunpack.c.h.b16 %v4311
    %v4395 = vunpack.c.l.b16 %v4312
    %v4396 = vunpack.c.h.b16 %v4312
    %v4397 = vunpack.c.l.b16 %v4313
    %v4398 = vunpack.c.h.b16 %v4313
    %v4399 = vunpack.c.l.b16 %v4314
    %v4400 = vunpack.c.h.b16 %v4314
    %v4401 = vunpack.c.l.b16 %v4315
    %v4402 = vunpack.c.h.b16 %v4315
    %v4403 = vunpack.c.l.b16 %v4316
    %v4404 = vunpack.c.h.b16 %v4316
    %v4405 = vunpack.c.l.b16 %v4317
    %v4406 = vunpack.c.h.b16 %v4317
    %v4407 = vunpack.c.l.b16 %v4318
    %v4408 = vunpack.c.h.b16 %v4318
    %v4409 = vunpack.c.l.b16 %v4319
    %v4410 = vunpack.c.h.b16 %v4319
    %v4411 = vunpack.c.l.b16 %v4320
    %v4412 = vunpack.c.h.b16 %v4320
    %v4413 = vunpack.c.l.b16 %v4321
    %v4414 = vunpack.c.h.b16 %v4321
    %v4415 = vunpack.c.l.b16 %v4322
    %v4416 = vunpack.c.h.b16 %v4322
    %v4417 = vunpack.c.l.b16 %v4323
    %v4418 = vunpack.c.h.b16 %v4323
    %v4419 = vunpack.c.l.b16 %v4324
    %v4420 = vunpack.c.h.b16 %v4324
    %v4421 = vpack.c.b16 %v4357, %v4357
    %v4422 = vpack.c.b16 %v4358, %v4358
    %v4423 = vpack.c.b16 %v4359, %v4359
    %v4424 = vpack.c.b16 %v4360, %v4360
    %v4425 = vpack.c.b16 %v4361, %v4361
    %v4426 = vpack.c.b16 %v4362, %v4362
    %v4427 = vpack.c.b16 %v4363, %v4363
    %v4428 = vpack.c.b16 %v4364, %v4364
    %v4429 = vpack.c.b16 %v4365, %v4365
    %v4430 = vpack.c.b16 %v4366, %v4366
    %v4431 = vpack.c.b16 %v4367, %v4367
    %v4432 = vpack.c.b16 %v4368, %v4368
    %v4433 = vpack.c.b16 %v4369, %v4369
    %v4434 = vpack.c.b16 %v4370, %v4370
    %v4435 = vpack.c.b16 %v4371, %v4371
    %v4436 = vpack.c.b16 %v4372, %v4372
    %v4437 = vpack.c.b16 %v4373, %v4373
    %v4438 = vpack.c.b16 %v4374, %v4374
    %v4439 = vpack.c.b16 %v4375, %v4375
    %v4440 = vpack.c.b16 %v4376, %v4376
    %v4441 = vpack.c.b16 %v4377, %v4377
    %v4442 = vpack.c.b16 %v4378, %v4378
    %v4443 = vpack.c.b16 %v4379, %v4379
    %v4444 = vpack.c.b16 %v4380, %v4380
    %v4445 = vpack.c.b16 %v4381, %v4381
    %v4446 = vpack.c.b16 %v4382, %v4382
    %v4447 = vpack.c.b16 %v4383, %v4383
    %v4448 = vpack.c.b16 %v4384, %v4384
    %v4449 = vpack.c.b16 %v4385, %v4385
    %v4450 = vpack.c.b16 %v4386, %v4386
    %v4451 = vpack.c.b16 %v4387, %v4387
    %v4452 = vpack.c.b16 %v4388, %v4388
    %v4453 = vpack.c.b16 %v4389, %v4389
    %v4454 = vpack.c.b16 %v4390, %v4390
    %v4455 = vpack.c.b16 %v4391, %v4391
    %v4456 = vpack.c.b16 %v4392, %v4392
    %v4457 = vpack.c.b16 %v4393, %v4393
    %v4458 = vpack.c.b16 %v4394, %v4394
    %v4459 = vpack.c.b16 %v4395, %v4395
    %v4460 = vpack.c.b16 %v4396, %v4396
    %v4461 = vpack.c.b16 %v4397, %v4397
    %v4462 = vpack.c.b16 %v4398, %v4398
    %v4463 = vpack.c.b16 %v4399, %v4399
    %v4464 = vpack.c.b16 %v4400, %v4400
    %v4465 = vpack.c.b16 %v4401, %v4401
    %v4466 = vpack.c.b16 %v4402, %v4402
    %v4467 = vpack.c.b16 %v4403, %v4403
    %v4468 = vpack.c.b16 %v4404, %v4404
    %v4469 = vpack.c.b16 %v4405, %v4405
    %v4470 = vpack.c.b16 %v4406, %v4406
    %v4471 = vpack.c.b16 %v4407, %v4407
    %v4472 = vpack.c.b16 %v4408, %v4408
    %v4473 = vpack.c.b16 %v4409, %v4409
    %v4474 = vpack.c.b16 %v4410, %v4410
    %v4475 = vpack.c.b16 %v4411, %v4411
    %v4476 = vpack.c.b16 %v4412, %v4412
    %v4477 = vpack.c.b16 %v4413, %v4413
    %v4478 = vpack.c.b16 %v4414, %v4414
    %v4479 = vpack.c.b16 %v4415, %v4415
    %v4480 = vpack.c.b16 %v4416, %v4416
    %v4481 = vpack.c.b16 %v4417, %v4417
    %v4482 = vpack.c.b16 %v4418, %v4418
    %v4483 = vpack.c.b16 %v4419, %v4419
    %v4484 = vpack.c.b16 %v4420, %v4420
    %4485 = vrot.lane.b32.xlu0 %v4421, 24
    %v4486 = vpop.permute.xlu0 %4485
    %4487 = vrot.lane.b32.xlu0 %v4422, 24
    %v4488 = vpop.permute.xlu0 %4487
    %4489 = vrot.lane.b32.xlu0 %v4423, 24
    %v4490 = vpop.permute.xlu0 %4489
    %4491 = vrot.lane.b32.xlu0 %v4424, 24
    %v4492 = vpop.permute.xlu0 %4491
    %4493 = vrot.lane.b32.xlu0 %v4425, 24
    %v4494 = vpop.permute.xlu0 %4493
    %4495 = vrot.lane.b32.xlu0 %v4426, 24
    %v4496 = vpop.permute.xlu0 %4495
    %4497 = vrot.lane.b32.xlu0 %v4427, 24
    %v4498 = vpop.permute.xlu0 %4497
    %4499 = vrot.lane.b32.xlu0 %v4428, 24
    %v4500 = vpop.permute.xlu0 %4499
    %4501 = vrot.lane.b32.xlu0 %v4429, 24
    %v4502 = vpop.permute.xlu0 %4501
    %4503 = vrot.lane.b32.xlu0 %v4430, 24
    %v4504 = vpop.permute.xlu0 %4503
    %4505 = vrot.lane.b32.xlu0 %v4431, 24
    %v4506 = vpop.permute.xlu0 %4505
    %4507 = vrot.lane.b32.xlu0 %v4432, 24
    %v4508 = vpop.permute.xlu0 %4507
    %4509 = vrot.lane.b32.xlu0 %v4433, 24
    %v4510 = vpop.permute.xlu0 %4509
    %4511 = vrot.lane.b32.xlu0 %v4434, 24
    %v4512 = vpop.permute.xlu0 %4511
    %4513 = vrot.lane.b32.xlu0 %v4435, 24
    %v4514 = vpop.permute.xlu0 %4513
    %4515 = vrot.lane.b32.xlu0 %v4436, 24
    %v4516 = vpop.permute.xlu0 %4515
    %4517 = vrot.lane.b32.xlu0 %v4437, 24
    %v4518 = vpop.permute.xlu0 %4517
    %4519 = vrot.lane.b32.xlu0 %v4438, 24
    %v4520 = vpop.permute.xlu0 %4519
    %4521 = vrot.lane.b32.xlu0 %v4439, 24
    %v4522 = vpop.permute.xlu0 %4521
    %4523 = vrot.lane.b32.xlu0 %v4440, 24
    %v4524 = vpop.permute.xlu0 %4523
    %4525 = vrot.lane.b32.xlu0 %v4441, 24
    %v4526 = vpop.permute.xlu0 %4525
    %4527 = vrot.lane.b32.xlu0 %v4442, 24
    %v4528 = vpop.permute.xlu0 %4527
    %4529 = vrot.lane.b32.xlu0 %v4443, 24
    %v4530 = vpop.permute.xlu0 %4529
    %4531 = vrot.lane.b32.xlu0 %v4444, 24
    %v4532 = vpop.permute.xlu0 %4531
    %4533 = vrot.lane.b32.xlu0 %v4445, 24
    %v4534 = vpop.permute.xlu0 %4533
    %4535 = vrot.lane.b32.xlu0 %v4446, 24
    %v4536 = vpop.permute.xlu0 %4535
    %4537 = vrot.lane.b32.xlu0 %v4447, 24
    %v4538 = vpop.permute.xlu0 %4537
    %4539 = vrot.lane.b32.xlu0 %v4448, 24
    %v4540 = vpop.permute.xlu0 %4539
    %4541 = vrot.lane.b32.xlu0 %v4449, 24
    %v4542 = vpop.permute.xlu0 %4541
    %4543 = vrot.lane.b32.xlu0 %v4450, 24
    %v4544 = vpop.permute.xlu0 %4543
    %4545 = vrot.lane.b32.xlu0 %v4451, 24
    %v4546 = vpop.permute.xlu0 %4545
    %4547 = vrot.lane.b32.xlu0 %v4452, 24
    %v4548 = vpop.permute.xlu0 %4547
    %4549 = vrot.lane.b32.xlu0 %v4453, 24
    %v4550 = vpop.permute.xlu0 %4549
    %4551 = vrot.lane.b32.xlu0 %v4454, 24
    %v4552 = vpop.permute.xlu0 %4551
    %4553 = vrot.lane.b32.xlu0 %v4455, 24
    %v4554 = vpop.permute.xlu0 %4553
    %4555 = vrot.lane.b32.xlu0 %v4456, 24
    %v4556 = vpop.permute.xlu0 %4555
    %4557 = vrot.lane.b32.xlu0 %v4457, 24
    %v4558 = vpop.permute.xlu0 %4557
    %4559 = vrot.lane.b32.xlu0 %v4458, 24
    %v4560 = vpop.permute.xlu0 %4559
    %4561 = vrot.lane.b32.xlu0 %v4459, 24
    %v4562 = vpop.permute.xlu0 %4561
    %4563 = vrot.lane.b32.xlu0 %v4460, 24
    %v4564 = vpop.permute.xlu0 %4563
    %4565 = vrot.lane.b32.xlu0 %v4461, 24
    %v4566 = vpop.permute.xlu0 %4565
    %4567 = vrot.lane.b32.xlu0 %v4462, 24
    %v4568 = vpop.permute.xlu0 %4567
    %4569 = vrot.lane.b32.xlu0 %v4463, 24
    %v4570 = vpop.permute.xlu0 %4569
    %4571 = vrot.lane.b32.xlu0 %v4464, 24
    %v4572 = vpop.permute.xlu0 %4571
    %4573 = vrot.lane.b32.xlu0 %v4465, 24
    %v4574 = vpop.permute.xlu0 %4573
    %4575 = vrot.lane.b32.xlu0 %v4466, 24
    %v4576 = vpop.permute.xlu0 %4575
    %4577 = vrot.lane.b32.xlu0 %v4467, 24
    %v4578 = vpop.permute.xlu0 %4577
    %4579 = vrot.lane.b32.xlu0 %v4468, 24
    %v4580 = vpop.permute.xlu0 %4579
    %4581 = vrot.lane.b32.xlu0 %v4469, 24
    %v4582 = vpop.permute.xlu0 %4581
    %4583 = vrot.lane.b32.xlu0 %v4470, 24
    %v4584 = vpop.permute.xlu0 %4583
    %4585 = vrot.lane.b32.xlu0 %v4471, 24
    %v4586 = vpop.permute.xlu0 %4585
    %4587 = vrot.lane.b32.xlu0 %v4472, 24
    %v4588 = vpop.permute.xlu0 %4587
    %4589 = vrot.lane.b32.xlu0 %v4473, 24
    %v4590 = vpop.permute.xlu0 %4589
    %4591 = vrot.lane.b32.xlu0 %v4474, 24
    %v4592 = vpop.permute.xlu0 %4591
    %4593 = vrot.lane.b32.xlu0 %v4475, 24
    %v4594 = vpop.permute.xlu0 %4593
    %4595 = vrot.lane.b32.xlu0 %v4476, 24
    %v4596 = vpop.permute.xlu0 %4595
    %4597 = vrot.lane.b32.xlu0 %v4477, 24
    %v4598 = vpop.permute.xlu0 %4597
    %4599 = vrot.lane.b32.xlu0 %v4478, 24
    %v4600 = vpop.permute.xlu0 %4599
    %4601 = vrot.lane.b32.xlu0 %v4479, 24
    %v4602 = vpop.permute.xlu0 %4601
    %4603 = vrot.lane.b32.xlu0 %v4480, 24
    %v4604 = vpop.permute.xlu0 %4603
    %4605 = vrot.lane.b32.xlu0 %v4481, 24
    %v4606 = vpop.permute.xlu0 %4605
    %4607 = vrot.lane.b32.xlu0 %v4482, 24
    %v4608 = vpop.permute.xlu0 %4607
    %4609 = vrot.lane.b32.xlu0 %v4483, 24
    %v4610 = vpop.permute.xlu0 %4609
    %4611 = vrot.lane.b32.xlu0 %v4484, 24
    %v4612 = vpop.permute.xlu0 %4611
    %vm4677 = vcmask 216256
    %4678 = vst.msk [vmem:[#allocation3] sm:$0xf] %vm4677, %v4486
    %4679 = vst.msk [vmem:[#allocation3 + $0x4] sm:$0xf] %vm4677, %v4488
    %4680 = vst.msk [vmem:[#allocation3 + $0x8] sm:$0xf] %vm4677, %v4490
    %4681 = vst.msk [vmem:[#allocation3 + $0xc] sm:$0xf] %vm4677, %v4492
    %4682 = vst.msk [vmem:[#allocation3 + $0x10] sm:$0xf] %vm4677, %v4494
    %4683 = vst.msk [vmem:[#allocation3 + $0x14] sm:$0xf] %vm4677, %v4496
    %4684 = vst.msk [vmem:[#allocation3 + $0x18] sm:$0xf] %vm4677, %v4498
    %4685 = vst.msk [vmem:[#allocation3 + $0x1c] sm:$0xf] %vm4677, %v4500
    %4686 = vst.msk [vmem:[#allocation3 + $0x20] sm:$0xf] %vm4677, %v4502
    %4687 = vst.msk [vmem:[#allocation3 + $0x24] sm:$0xf] %vm4677, %v4504
    %4688 = vst.msk [vmem:[#allocation3 + $0x28] sm:$0xf] %vm4677, %v4506
    %4689 = vst.msk [vmem:[#allocation3 + $0x2c] sm:$0xf] %vm4677, %v4508
    %4690 = vst.msk [vmem:[#allocation3 + $0x30] sm:$0xf] %vm4677, %v4510
    %4691 = vst.msk [vmem:[#allocation3 + $0x34] sm:$0xf] %vm4677, %v4512
    %4692 = vst.msk [vmem:[#allocation3 + $0x38] sm:$0xf] %vm4677, %v4514
    %4693 = vst.msk [vmem:[#allocation3 + $0x3c] sm:$0xf] %vm4677, %v4516
    %4694 = vst.msk [vmem:[#allocation3 + $0x40] sm:$0xf] %vm4677, %v4518
    %4695 = vst.msk [vmem:[#allocation3 + $0x44] sm:$0xf] %vm4677, %v4520
    %4696 = vst.msk [vmem:[#allocation3 + $0x48] sm:$0xf] %vm4677, %v4522
    %4697 = vst.msk [vmem:[#allocation3 + $0x4c] sm:$0xf] %vm4677, %v4524
    %4698 = vst.msk [vmem:[#allocation3 + $0x50] sm:$0xf] %vm4677, %v4526
    %4699 = vst.msk [vmem:[#allocation3 + $0x54] sm:$0xf] %vm4677, %v4528
    %4700 = vst.msk [vmem:[#allocation3 + $0x58] sm:$0xf] %vm4677, %v4530
    %4701 = vst.msk [vmem:[#allocation3 + $0x5c] sm:$0xf] %vm4677, %v4532
    %4702 = vst.msk [vmem:[#allocation3 + $0x60] sm:$0xf] %vm4677, %v4534
    %4703 = vst.msk [vmem:[#allocation3 + $0x64] sm:$0xf] %vm4677, %v4536
    %4704 = vst.msk [vmem:[#allocation3 + $0x68] sm:$0xf] %vm4677, %v4538
    %4705 = vst.msk [vmem:[#allocation3 + $0x6c] sm:$0xf] %vm4677, %v4540
    %4706 = vst.msk [vmem:[#allocation3 + $0x70] sm:$0xf] %vm4677, %v4542
    %4707 = vst.msk [vmem:[#allocation3 + $0x74] sm:$0xf] %vm4677, %v4544
    %4708 = vst.msk [vmem:[#allocation3 + $0x78] sm:$0xf] %vm4677, %v4546
    %4709 = vst.msk [vmem:[#allocation3 + $0x7c] sm:$0xf] %vm4677, %v4548
    %4710 = vst.msk [vmem:[#allocation3 + $0x80] sm:$0xf] %vm4677, %v4550
    %4711 = vst.msk [vmem:[#allocation3 + $0x84] sm:$0xf] %vm4677, %v4552
    %4712 = vst.msk [vmem:[#allocation3 + $0x88] sm:$0xf] %vm4677, %v4554
    %4713 = vst.msk [vmem:[#allocation3 + $0x8c] sm:$0xf] %vm4677, %v4556
    %4714 = vst.msk [vmem:[#allocation3 + $0x90] sm:$0xf] %vm4677, %v4558
    %4715 = vst.msk [vmem:[#allocation3 + $0x94] sm:$0xf] %vm4677, %v4560
    %4716 = vst.msk [vmem:[#allocation3 + $0x98] sm:$0xf] %vm4677, %v4562
    %4717 = vst.msk [vmem:[#allocation3 + $0x9c] sm:$0xf] %vm4677, %v4564
    %4718 = vst.msk [vmem:[#allocation3 + $0xa0] sm:$0xf] %vm4677, %v4566
    %4719 = vst.msk [vmem:[#allocation3 + $0xa4] sm:$0xf] %vm4677, %v4568
    %4720 = vst.msk [vmem:[#allocation3 + $0xa8] sm:$0xf] %vm4677, %v4570
    %4721 = vst.msk [vmem:[#allocation3 + $0xac] sm:$0xf] %vm4677, %v4572
    %4722 = vst.msk [vmem:[#allocation3 + $0xb0] sm:$0xf] %vm4677, %v4574
    %4723 = vst.msk [vmem:[#allocation3 + $0xb4] sm:$0xf] %vm4677, %v4576
    %4724 = vst.msk [vmem:[#allocation3 + $0xb8] sm:$0xf] %vm4677, %v4578
    %4725 = vst.msk [vmem:[#allocation3 + $0xbc] sm:$0xf] %vm4677, %v4580
    %4726 = vst.msk [vmem:[#allocation3 + $0xc0] sm:$0xf] %vm4677, %v4582
    %4727 = vst.msk [vmem:[#allocation3 + $0xc4] sm:$0xf] %vm4677, %v4584
    %4728 = vst.msk [vmem:[#allocation3 + $0xc8] sm:$0xf] %vm4677, %v4586
    %4729 = vst.msk [vmem:[#allocation3 + $0xcc] sm:$0xf] %vm4677, %v4588
    %4730 = vst.msk [vmem:[#allocation3 + $0xd0] sm:$0xf] %vm4677, %v4590
    %4731 = vst.msk [vmem:[#allocation3 + $0xd4] sm:$0xf] %vm4677, %v4592
    %4732 = vst.msk [vmem:[#allocation3 + $0xd8] sm:$0xf] %vm4677, %v4594
    %4733 = vst.msk [vmem:[#allocation3 + $0xdc] sm:$0xf] %vm4677, %v4596
    %4734 = vst.msk [vmem:[#allocation3 + $0xe0] sm:$0xf] %vm4677, %v4598
    %4735 = vst.msk [vmem:[#allocation3 + $0xe4] sm:$0xf] %vm4677, %v4600
    %4736 = vst.msk [vmem:[#allocation3 + $0xe8] sm:$0xf] %vm4677, %v4602
    %4737 = vst.msk [vmem:[#allocation3 + $0xec] sm:$0xf] %vm4677, %v4604
    %4738 = vst.msk [vmem:[#allocation3 + $0xf0] sm:$0xf] %vm4677, %v4606
    %4739 = vst.msk [vmem:[#allocation3 + $0xf4] sm:$0xf] %vm4677, %v4608
    %4740 = vst.msk [vmem:[#allocation3 + $0xf8] sm:$0xf] %vm4677, %v4610
    %4741 = vst.msk [vmem:[#allocation3 + $0xfc] sm:$0xf] %vm4677, %v4612
    %v4742 = vld [vmem:[#allocation3] sm:$0xf]
    %v4743 = vld [vmem:[#allocation3 + $0x4] sm:$0xf]
    %v4744 = vld [vmem:[#allocation3 + $0x8] sm:$0xf]
    %v4745 = vld [vmem:[#allocation3 + $0xc] sm:$0xf]
    %v4746 = vld [vmem:[#allocation3 + $0x10] sm:$0xf]
    %v4747 = vld [vmem:[#allocation3 + $0x14] sm:$0xf]
    %v4748 = vld [vmem:[#allocation3 + $0x18] sm:$0xf]
    %v4749 = vld [vmem:[#allocation3 + $0x1c] sm:$0xf]
    %v4750 = vld [vmem:[#allocation3 + $0x20] sm:$0xf]
    %v4751 = vld [vmem:[#allocation3 + $0x24] sm:$0xf]
    %v4752 = vld [vmem:[#allocation3 + $0x28] sm:$0xf]
    %v4753 = vld [vmem:[#allocation3 + $0x2c] sm:$0xf]
    %v4754 = vld [vmem:[#allocation3 + $0x30] sm:$0xf]
    %v4755 = vld [vmem:[#allocation3 + $0x34] sm:$0xf]
    %v4756 = vld [vmem:[#allocation3 + $0x38] sm:$0xf]
    %v4757 = vld [vmem:[#allocation3 + $0x3c] sm:$0xf]
    %v4758 = vld [vmem:[#allocation3 + $0x40] sm:$0xf]
    %v4759 = vld [vmem:[#allocation3 + $0x44] sm:$0xf]
    %v4760 = vld [vmem:[#allocation3 + $0x48] sm:$0xf]
    %v4761 = vld [vmem:[#allocation3 + $0x4c] sm:$0xf]
    %v4762 = vld [vmem:[#allocation3 + $0x50] sm:$0xf]
    %v4763 = vld [vmem:[#allocation3 + $0x54] sm:$0xf]
    %v4764 = vld [vmem:[#allocation3 + $0x58] sm:$0xf]
    %v4765 = vld [vmem:[#allocation3 + $0x5c] sm:$0xf]
    %v4766 = vld [vmem:[#allocation3 + $0x60] sm:$0xf]
    %v4767 = vld [vmem:[#allocation3 + $0x64] sm:$0xf]
    %v4768 = vld [vmem:[#allocation3 + $0x68] sm:$0xf]
    %v4769 = vld [vmem:[#allocation3 + $0x6c] sm:$0xf]
    %v4770 = vld [vmem:[#allocation3 + $0x70] sm:$0xf]
    %v4771 = vld [vmem:[#allocation3 + $0x74] sm:$0xf]
    %v4772 = vld [vmem:[#allocation3 + $0x78] sm:$0xf]
    %v4773 = vld [vmem:[#allocation3 + $0x7c] sm:$0xf]
    %v4774 = vld [vmem:[#allocation3 + $0x80] sm:$0xf]
    %v4775 = vld [vmem:[#allocation3 + $0x84] sm:$0xf]
    %v4776 = vld [vmem:[#allocation3 + $0x88] sm:$0xf]
    %v4777 = vld [vmem:[#allocation3 + $0x8c] sm:$0xf]
    %v4778 = vld [vmem:[#allocation3 + $0x90] sm:$0xf]
    %v4779 = vld [vmem:[#allocation3 + $0x94] sm:$0xf]
    %v4780 = vld [vmem:[#allocation3 + $0x98] sm:$0xf]
    %v4781 = vld [vmem:[#allocation3 + $0x9c] sm:$0xf]
    %v4782 = vld [vmem:[#allocation3 + $0xa0] sm:$0xf]
    %v4783 = vld [vmem:[#allocation3 + $0xa4] sm:$0xf]
    %v4784 = vld [vmem:[#allocation3 + $0xa8] sm:$0xf]
    %v4785 = vld [vmem:[#allocation3 + $0xac] sm:$0xf]
    %v4786 = vld [vmem:[#allocation3 + $0xb0] sm:$0xf]
    %v4787 = vld [vmem:[#allocation3 + $0xb4] sm:$0xf]
    %v4788 = vld [vmem:[#allocation3 + $0xb8] sm:$0xf]
    %v4789 = vld [vmem:[#allocation3 + $0xbc] sm:$0xf]
    %v4790 = vld [vmem:[#allocation3 + $0xc0] sm:$0xf]
    %v4791 = vld [vmem:[#allocation3 + $0xc4] sm:$0xf]
    %v4792 = vld [vmem:[#allocation3 + $0xc8] sm:$0xf]
    %v4793 = vld [vmem:[#allocation3 + $0xcc] sm:$0xf]
    %v4794 = vld [vmem:[#allocation3 + $0xd0] sm:$0xf]
    %v4795 = vld [vmem:[#allocation3 + $0xd4] sm:$0xf]
    %v4796 = vld [vmem:[#allocation3 + $0xd8] sm:$0xf]
    %v4797 = vld [vmem:[#allocation3 + $0xdc] sm:$0xf]
    %v4798 = vld [vmem:[#allocation3 + $0xe0] sm:$0xf]
    %v4799 = vld [vmem:[#allocation3 + $0xe4] sm:$0xf]
    %v4800 = vld [vmem:[#allocation3 + $0xe8] sm:$0xf]
    %v4801 = vld [vmem:[#allocation3 + $0xec] sm:$0xf]
    %v4802 = vld [vmem:[#allocation3 + $0xf0] sm:$0xf]
    %v4803 = vld [vmem:[#allocation3 + $0xf4] sm:$0xf]
    %v4804 = vld [vmem:[#allocation3 + $0xf8] sm:$0xf]
    %v4805 = vld [vmem:[#allocation3 + $0xfc] sm:$0xf]
    %v4806 = vld [vmem:[%s1] sm:$0xf]
    %v4807 = vld [vmem:[%s1 + $0x4] sm:$0xf]
    %v4808 = vld [vmem:[%s1 + $0x8] sm:$0xf]
    %v4809 = vld [vmem:[%s1 + $0xc] sm:$0x3]
    %v4874 = vunpack.c.l.b16 %v4742
    %v4875 = vunpack.c.l.b16 %v4743
    %v4876 = vunpack.c.l.b16 %v4744
    %v4877 = vunpack.c.l.b16 %v4745
    %v4878 = vunpack.c.l.b16 %v4746
    %v4879 = vunpack.c.l.b16 %v4747
    %v4880 = vunpack.c.l.b16 %v4748
    %v4881 = vunpack.c.l.b16 %v4749
    %v4882 = vunpack.c.l.b16 %v4750
    %v4883 = vunpack.c.l.b16 %v4751
    %v4884 = vunpack.c.l.b16 %v4752
    %v4885 = vunpack.c.l.b16 %v4753
    %v4886 = vunpack.c.l.b16 %v4754
    %v4887 = vunpack.c.l.b16 %v4755
    %v4888 = vunpack.c.l.b16 %v4756
    %v4889 = vunpack.c.l.b16 %v4757
    %v4890 = vunpack.c.l.b16 %v4758
    %v4891 = vunpack.c.l.b16 %v4759
    %v4892 = vunpack.c.l.b16 %v4760
    %v4893 = vunpack.c.l.b16 %v4761
    %v4894 = vunpack.c.l.b16 %v4762
    %v4895 = vunpack.c.l.b16 %v4763
    %v4896 = vunpack.c.l.b16 %v4764
    %v4897 = vunpack.c.l.b16 %v4765
    %v4898 = vunpack.c.l.b16 %v4766
    %v4899 = vunpack.c.l.b16 %v4767
    %v4900 = vunpack.c.l.b16 %v4768
    %v4901 = vunpack.c.l.b16 %v4769
    %v4902 = vunpack.c.l.b16 %v4770
    %v4903 = vunpack.c.l.b16 %v4771
    %v4904 = vunpack.c.l.b16 %v4772
    %v4905 = vunpack.c.l.b16 %v4773
    %v4906 = vunpack.c.l.b16 %v4774
    %v4907 = vunpack.c.l.b16 %v4775
    %v4908 = vunpack.c.l.b16 %v4776
    %v4909 = vunpack.c.l.b16 %v4777
    %v4910 = vunpack.c.l.b16 %v4778
    %v4911 = vunpack.c.l.b16 %v4779
    %v4912 = vunpack.c.l.b16 %v4780
    %v4913 = vunpack.c.l.b16 %v4781
    %v4914 = vunpack.c.l.b16 %v4782
    %v4915 = vunpack.c.l.b16 %v4783
    %v4916 = vunpack.c.l.b16 %v4784
    %v4917 = vunpack.c.l.b16 %v4785
    %v4918 = vunpack.c.l.b16 %v4786
    %v4919 = vunpack.c.l.b16 %v4787
    %v4920 = vunpack.c.l.b16 %v4788
    %v4921 = vunpack.c.l.b16 %v4789
    %v4922 = vunpack.c.l.b16 %v4790
    %v4923 = vunpack.c.l.b16 %v4791
    %v4924 = vunpack.c.l.b16 %v4792
    %v4925 = vunpack.c.l.b16 %v4793
    %v4926 = vunpack.c.l.b16 %v4794
    %v4927 = vunpack.c.l.b16 %v4795
    %v4928 = vunpack.c.l.b16 %v4796
    %v4929 = vunpack.c.l.b16 %v4797
    %v4930 = vunpack.c.l.b16 %v4798
    %v4931 = vunpack.c.l.b16 %v4799
    %v4932 = vunpack.c.l.b16 %v4800
    %v4933 = vunpack.c.l.b16 %v4801
    %v4934 = vunpack.c.l.b16 %v4802
    %v4935 = vunpack.c.l.b16 %v4803
    %v4936 = vunpack.c.l.b16 %v4804
    %v4937 = vunpack.c.l.b16 %v4805
    %v4938 = vpack.c.b16 %v4875, %v4874
    %v4939 = vpack.c.b16 %v4877, %v4876
    %v4940 = vpack.c.b16 %v4879, %v4878
    %v4941 = vpack.c.b16 %v4881, %v4880
    %v4942 = vpack.c.b16 %v4883, %v4882
    %v4943 = vpack.c.b16 %v4885, %v4884
    %v4944 = vpack.c.b16 %v4887, %v4886
    %v4945 = vpack.c.b16 %v4889, %v4888
    %v4946 = vpack.c.b16 %v4891, %v4890
    %v4947 = vpack.c.b16 %v4893, %v4892
    %v4948 = vpack.c.b16 %v4895, %v4894
    %v4949 = vpack.c.b16 %v4897, %v4896
    %v4950 = vpack.c.b16 %v4899, %v4898
    %v4951 = vpack.c.b16 %v4901, %v4900
    %v4952 = vpack.c.b16 %v4903, %v4902
    %v4953 = vpack.c.b16 %v4905, %v4904
    %v4954 = vpack.c.b16 %v4907, %v4906
    %v4955 = vpack.c.b16 %v4909, %v4908
    %v4956 = vpack.c.b16 %v4911, %v4910
    %v4957 = vpack.c.b16 %v4913, %v4912
    %v4958 = vpack.c.b16 %v4915, %v4914
    %v4959 = vpack.c.b16 %v4917, %v4916
    %v4960 = vpack.c.b16 %v4919, %v4918
    %v4961 = vpack.c.b16 %v4921, %v4920
    %v4962 = vpack.c.b16 %v4923, %v4922
    %v4963 = vpack.c.b16 %v4925, %v4924
    %v4964 = vpack.c.b16 %v4927, %v4926
    %v4965 = vpack.c.b16 %v4929, %v4928
    %v4966 = vpack.c.b16 %v4931, %v4930
    %v4967 = vpack.c.b16 %v4933, %v4932
    %v4968 = vpack.c.b16 %v4935, %v4934
    %v4969 = vpack.c.b16 %v4937, %v4936
    %v4974 = vunpack.c.l.b16 %v4806
    %v4975 = vunpack.c.l.b16 %v4807
    %v4976 = vunpack.c.l.b16 %v4808
    %v4977 = vunpack.c.l.b16 %v4809
    %v4978 = vpack.c.b16 %v4975, %v4974
    %v4979 = vpack.c.b16 %v4977, %v4976
    %vm4981 = vcmask 220160
    %v4983 = vsel %vm4981, %v4938, 0
    %v4986 = vsel %vm4981, %v4939, 0
    %v4989 = vsel %vm4981, %v4940, 0
    %v4992 = vsel %vm4981, %v4941, 0
    %v4995 = vsel %vm4981, %v4942, 0
    %v4998 = vsel %vm4981, %v4943, 0
    %v5001 = vsel %vm4981, %v4944, 0
    %v5004 = vsel %vm4981, %v4945, 0
    %v5007 = vsel %vm4981, %v4946, 0
    %v5010 = vsel %vm4981, %v4947, 0
    %v5013 = vsel %vm4981, %v4948, 0
    %v5016 = vsel %vm4981, %v4949, 0
    %v5019 = vsel %vm4981, %v4950, 0
    %v5022 = vsel %vm4981, %v4951, 0
    %v5025 = vsel %vm4981, %v4952, 0
    %v5028 = vsel %vm4981, %v4953, 0
    %v5031 = vsel %vm4981, %v4954, 0
    %v5034 = vsel %vm4981, %v4955, 0
    %v5037 = vsel %vm4981, %v4956, 0
    %v5040 = vsel %vm4981, %v4957, 0
    %v5043 = vsel %vm4981, %v4958, 0
    %v5046 = vsel %vm4981, %v4959, 0
    %v5049 = vsel %vm4981, %v4960, 0
    %v5052 = vsel %vm4981, %v4961, 0
    %v5055 = vsel %vm4981, %v4962, 0
    %v5058 = vsel %vm4981, %v4963, 0
    %v5061 = vsel %vm4981, %v4964, 0
    %v5064 = vsel %vm4981, %v4965, 0
    %v5067 = vsel %vm4981, %v4966, 0
    %v5070 = vsel %vm4981, %v4967, 0
    %v5073 = vsel %vm4981, %v4968, 0
    %v5076 = vsel %vm4981, %v4969, 0
    %vm5078 = vcmask 1044480
    %vm5079 = vcmask 1045504
    %v5080 = vsel %vm5078, 4294967295, 65535
    %v5081 = vsel %vm5079, %v5080, 0
    %v5083 = vand.u32 %v4979, %v5081
    %5085 = vmatprep.subr.bf16.mxu0 0
    %5086 = vmatpush1.bf16.msra.mxu0 0
    %5087 = vmatprep.subr.bf16.mxu0 0
    %5088 = vmatpush1.bf16.msra.mxu0 0
    %5089 = vmatprep.subr.bf16.mxu0 0
    %5090 = vmatpush1.bf16.msra.mxu0 0
    %5091 = vmatprep.subr.bf16.mxu0 0
    %5092 = vmatpush1.bf16.msra.mxu0 0
    %5093 = vmatprep.subr.bf16.mxu0 0
    %5094 = vmatpush1.bf16.msra.mxu0 0
    %5095 = vmatprep.subr.bf16.mxu0 0
    %5096 = vmatpush1.bf16.msra.mxu0 0
    %5097 = vmatprep.subr.bf16.mxu0 0
    %5098 = vmatpush1.bf16.msra.mxu0 %v5083
    %5099 = vmatprep.subr.bf16.mxu0 0
    %5100 = vmatpush1.bf16.msra.mxu0 %v4978
    %5101 = vmatprep.subr.bf16.mxu0 0
    %5102 = vmatpush2.bf16.msra.mxu0 0
    %5103 = vmatprep.subr.bf16.mxu0 0
    %5104 = vmatpush2.bf16.msra.mxu0 0
    %5105 = vmatprep.subr.bf16.mxu0 0
    %5106 = vmatpush2.bf16.msra.mxu0 0
    %5107 = vmatprep.subr.bf16.mxu0 0
    %5108 = vmatpush2.bf16.msra.mxu0 0
    %5109 = vmatprep.subr.bf16.mxu0 0
    %5110 = vmatpush2.bf16.msra.mxu0 0
    %5111 = vmatprep.subr.bf16.mxu0 0
    %5112 = vmatpush2.bf16.msra.mxu0 0
    %5113 = vmatprep.subr.bf16.mxu0 0
    %5114 = vmatpush2.bf16.msra.mxu0 0
    %5115 = vmatprep.subr.bf16.mxu0 0
    %5116 = vmatpush2.bf16.msra.mxu0 0
    %5117 = vmatprep.mubr.bf16.mxu0 0
    %5118 = vmatmul.mubr.bf16.gmra.mxu0 %v4983
    %v5119 = vpop.f32.mrf.mxu0
    %v5120 = vadd.f32 0.0, %v5119
    %v5121 = vpop.f32.mrf.mxu0
    %v5122 = vpop.f32.mrf.mxu0
    %v5123 = vadd.f32 0.0, %v5122
    %v5124 = vpop.f32.mrf.mxu0
    %5125 = vmatprep.mubr.bf16.mxu0 0
    %5126 = vmatmul.mubr.bf16.gmra.mxu0 %v4986
    %v5127 = vpop.f32.mrf.mxu0
    %v5128 = vadd.f32 0.0, %v5127
    %v5129 = vpop.f32.mrf.mxu0
    %v5130 = vpop.f32.mrf.mxu0
    %v5131 = vadd.f32 0.0, %v5130
    %v5132 = vpop.f32.mrf.mxu0
    %5133 = vmatprep.mubr.bf16.mxu0 0
    %5134 = vmatmul.mubr.bf16.gmra.mxu0 %v4989
    %v5135 = vpop.f32.mrf.mxu0
    %v5136 = vadd.f32 0.0, %v5135
    %v5137 = vpop.f32.mrf.mxu0
    %v5138 = vpop.f32.mrf.mxu0
    %v5139 = vadd.f32 0.0, %v5138
    %v5140 = vpop.f32.mrf.mxu0
    %5141 = vmatprep.mubr.bf16.mxu0 0
    %5142 = vmatmul.mubr.bf16.gmra.mxu0 %v4992
    %v5143 = vpop.f32.mrf.mxu0
    %v5144 = vadd.f32 0.0, %v5143
    %v5145 = vpop.f32.mrf.mxu0
    %v5146 = vpop.f32.mrf.mxu0
    %v5147 = vadd.f32 0.0, %v5146
    %v5148 = vpop.f32.mrf.mxu0
    %5149 = vmatprep.mubr.bf16.mxu0 0
    %5150 = vmatmul.mubr.bf16.gmra.mxu0 %v4995
    %v5151 = vpop.f32.mrf.mxu0
    %v5152 = vadd.f32 0.0, %v5151
    %v5153 = vpop.f32.mrf.mxu0
    %v5154 = vpop.f32.mrf.mxu0
    %v5155 = vadd.f32 0.0, %v5154
    %v5156 = vpop.f32.mrf.mxu0
    %5157 = vmatprep.mubr.bf16.mxu0 0
    %5158 = vmatmul.mubr.bf16.gmra.mxu0 %v4998
    %v5159 = vpop.f32.mrf.mxu0
    %v5160 = vadd.f32 0.0, %v5159
    %v5161 = vpop.f32.mrf.mxu0
    %v5162 = vpop.f32.mrf.mxu0
    %v5163 = vadd.f32 0.0, %v5162
    %v5164 = vpop.f32.mrf.mxu0
    %5165 = vmatprep.mubr.bf16.mxu0 0
    %5166 = vmatmul.mubr.bf16.gmra.mxu0 %v5001
    %v5167 = vpop.f32.mrf.mxu0
    %v5168 = vadd.f32 0.0, %v5167
    %v5169 = vpop.f32.mrf.mxu0
    %v5170 = vpop.f32.mrf.mxu0
    %v5171 = vadd.f32 0.0, %v5170
    %v5172 = vpop.f32.mrf.mxu0
    %5173 = vmatprep.mubr.bf16.mxu0 0
    %5174 = vmatmul.mubr.bf16.gmra.mxu0 %v5004
    %v5175 = vpop.f32.mrf.mxu0
    %v5176 = vadd.f32 0.0, %v5175
    %v5177 = vpop.f32.mrf.mxu0
    %v5178 = vpop.f32.mrf.mxu0
    %v5179 = vadd.f32 0.0, %v5178
    %v5180 = vpop.f32.mrf.mxu0
    %5181 = vmatprep.mubr.bf16.mxu0 0
    %5182 = vmatmul.mubr.bf16.gmra.mxu0 %v5007
    %v5183 = vpop.f32.mrf.mxu0
    %v5184 = vadd.f32 0.0, %v5183
    %v5185 = vpop.f32.mrf.mxu0
    %v5186 = vpop.f32.mrf.mxu0
    %v5187 = vadd.f32 0.0, %v5186
    %v5188 = vpop.f32.mrf.mxu0
    %5189 = vmatprep.mubr.bf16.mxu0 0
    %5190 = vmatmul.mubr.bf16.gmra.mxu0 %v5010
    %v5191 = vpop.f32.mrf.mxu0
    %v5192 = vadd.f32 0.0, %v5191
    %v5193 = vpop.f32.mrf.mxu0
    %v5194 = vpop.f32.mrf.mxu0
    %v5195 = vadd.f32 0.0, %v5194
    %v5196 = vpop.f32.mrf.mxu0
    %5197 = vmatprep.mubr.bf16.mxu0 0
    %5198 = vmatmul.mubr.bf16.gmra.mxu0 %v5013
    %v5199 = vpop.f32.mrf.mxu0
    %v5200 = vadd.f32 0.0, %v5199
    %v5201 = vpop.f32.mrf.mxu0
    %v5202 = vpop.f32.mrf.mxu0
    %v5203 = vadd.f32 0.0, %v5202
    %v5204 = vpop.f32.mrf.mxu0
    %5205 = vmatprep.mubr.bf16.mxu0 0
    %5206 = vmatmul.mubr.bf16.gmra.mxu0 %v5016
    %v5207 = vpop.f32.mrf.mxu0
    %v5208 = vadd.f32 0.0, %v5207
    %v5209 = vpop.f32.mrf.mxu0
    %v5210 = vpop.f32.mrf.mxu0
    %v5211 = vadd.f32 0.0, %v5210
    %v5212 = vpop.f32.mrf.mxu0
    %5213 = vmatprep.mubr.bf16.mxu0 0
    %5214 = vmatmul.mubr.bf16.gmra.mxu0 %v5019
    %v5215 = vpop.f32.mrf.mxu0
    %v5216 = vadd.f32 0.0, %v5215
    %v5217 = vpop.f32.mrf.mxu0
    %v5218 = vpop.f32.mrf.mxu0
    %v5219 = vadd.f32 0.0, %v5218
    %v5220 = vpop.f32.mrf.mxu0
    %5221 = vmatprep.mubr.bf16.mxu0 0
    %5222 = vmatmul.mubr.bf16.gmra.mxu0 %v5022
    %v5223 = vpop.f32.mrf.mxu0
    %v5224 = vadd.f32 0.0, %v5223
    %v5225 = vpop.f32.mrf.mxu0
    %v5226 = vpop.f32.mrf.mxu0
    %v5227 = vadd.f32 0.0, %v5226
    %v5228 = vpop.f32.mrf.mxu0
    %5229 = vmatprep.mubr.bf16.mxu0 0
    %5230 = vmatmul.mubr.bf16.gmra.mxu0 %v5025
    %v5231 = vpop.f32.mrf.mxu0
    %v5232 = vadd.f32 0.0, %v5231
    %v5233 = vpop.f32.mrf.mxu0
    %v5234 = vpop.f32.mrf.mxu0
    %v5235 = vadd.f32 0.0, %v5234
    %v5236 = vpop.f32.mrf.mxu0
    %5237 = vmatprep.mubr.bf16.mxu0 0
    %5238 = vmatmul.mubr.bf16.gmra.mxu0 %v5028
    %v5239 = vpop.f32.mrf.mxu0
    %v5240 = vadd.f32 0.0, %v5239
    %v5241 = vpop.f32.mrf.mxu0
    %v5242 = vpop.f32.mrf.mxu0
    %v5243 = vadd.f32 0.0, %v5242
    %v5244 = vpop.f32.mrf.mxu0
    %5245 = vmatprep.mubr.bf16.mxu0 0
    %5246 = vmatmul.mubr.bf16.gmra.mxu0 %v5031
    %v5247 = vpop.f32.mrf.mxu0
    %v5248 = vadd.f32 0.0, %v5247
    %v5249 = vpop.f32.mrf.mxu0
    %v5250 = vpop.f32.mrf.mxu0
    %v5251 = vadd.f32 0.0, %v5250
    %v5252 = vpop.f32.mrf.mxu0
    %5253 = vmatprep.mubr.bf16.mxu0 0
    %5254 = vmatmul.mubr.bf16.gmra.mxu0 %v5034
    %v5255 = vpop.f32.mrf.mxu0
    %v5256 = vadd.f32 0.0, %v5255
    %v5257 = vpop.f32.mrf.mxu0
    %v5258 = vpop.f32.mrf.mxu0
    %v5259 = vadd.f32 0.0, %v5258
    %v5260 = vpop.f32.mrf.mxu0
    %5261 = vmatprep.mubr.bf16.mxu0 0
    %5262 = vmatmul.mubr.bf16.gmra.mxu0 %v5037
    %v5263 = vpop.f32.mrf.mxu0
    %v5264 = vadd.f32 0.0, %v5263
    %v5265 = vpop.f32.mrf.mxu0
    %v5266 = vpop.f32.mrf.mxu0
    %v5267 = vadd.f32 0.0, %v5266
    %v5268 = vpop.f32.mrf.mxu0
    %5269 = vmatprep.mubr.bf16.mxu0 0
    %5270 = vmatmul.mubr.bf16.gmra.mxu0 %v5040
    %v5271 = vpop.f32.mrf.mxu0
    %v5272 = vadd.f32 0.0, %v5271
    %v5273 = vpop.f32.mrf.mxu0
    %v5274 = vpop.f32.mrf.mxu0
    %v5275 = vadd.f32 0.0, %v5274
    %v5276 = vpop.f32.mrf.mxu0
    %5277 = vmatprep.mubr.bf16.mxu0 0
    %5278 = vmatmul.mubr.bf16.gmra.mxu0 %v5043
    %v5279 = vpop.f32.mrf.mxu0
    %v5280 = vadd.f32 0.0, %v5279
    %v5281 = vpop.f32.mrf.mxu0
    %v5282 = vpop.f32.mrf.mxu0
    %v5283 = vadd.f32 0.0, %v5282
    %v5284 = vpop.f32.mrf.mxu0
    %5285 = vmatprep.mubr.bf16.mxu0 0
    %5286 = vmatmul.mubr.bf16.gmra.mxu0 %v5046
    %v5287 = vpop.f32.mrf.mxu0
    %v5288 = vadd.f32 0.0, %v5287
    %v5289 = vpop.f32.mrf.mxu0
    %v5290 = vpop.f32.mrf.mxu0
    %v5291 = vadd.f32 0.0, %v5290
    %v5292 = vpop.f32.mrf.mxu0
    %5293 = vmatprep.mubr.bf16.mxu0 0
    %5294 = vmatmul.mubr.bf16.gmra.mxu0 %v5049
    %v5295 = vpop.f32.mrf.mxu0
    %v5296 = vadd.f32 0.0, %v5295
    %v5297 = vpop.f32.mrf.mxu0
    %v5298 = vpop.f32.mrf.mxu0
    %v5299 = vadd.f32 0.0, %v5298
    %v5300 = vpop.f32.mrf.mxu0
    %5301 = vmatprep.mubr.bf16.mxu0 0
    %5302 = vmatmul.mubr.bf16.gmra.mxu0 %v5052
    %v5303 = vpop.f32.mrf.mxu0
    %v5304 = vadd.f32 0.0, %v5303
    %v5305 = vpop.f32.mrf.mxu0
    %v5306 = vpop.f32.mrf.mxu0
    %v5307 = vadd.f32 0.0, %v5306
    %v5308 = vpop.f32.mrf.mxu0
    %5309 = vmatprep.mubr.bf16.mxu0 0
    %5310 = vmatmul.mubr.bf16.gmra.mxu0 %v5055
    %v5311 = vpop.f32.mrf.mxu0
    %v5312 = vadd.f32 0.0, %v5311
    %v5313 = vpop.f32.mrf.mxu0
    %v5314 = vpop.f32.mrf.mxu0
    %v5315 = vadd.f32 0.0, %v5314
    %v5316 = vpop.f32.mrf.mxu0
    %5317 = vmatprep.mubr.bf16.mxu0 0
    %5318 = vmatmul.mubr.bf16.gmra.mxu0 %v5058
    %v5319 = vpop.f32.mrf.mxu0
    %v5320 = vadd.f32 0.0, %v5319
    %v5321 = vpop.f32.mrf.mxu0
    %v5322 = vpop.f32.mrf.mxu0
    %v5323 = vadd.f32 0.0, %v5322
    %v5324 = vpop.f32.mrf.mxu0
    %5325 = vmatprep.mubr.bf16.mxu0 0
    %5326 = vmatmul.mubr.bf16.gmra.mxu0 %v5061
    %v5327 = vpop.f32.mrf.mxu0
    %v5328 = vadd.f32 0.0, %v5327
    %v5329 = vpop.f32.mrf.mxu0
    %v5330 = vpop.f32.mrf.mxu0
    %v5331 = vadd.f32 0.0, %v5330
    %v5332 = vpop.f32.mrf.mxu0
    %5333 = vmatprep.mubr.bf16.mxu0 0
    %5334 = vmatmul.mubr.bf16.gmra.mxu0 %v5064
    %v5335 = vpop.f32.mrf.mxu0
    %v5336 = vadd.f32 0.0, %v5335
    %v5337 = vpop.f32.mrf.mxu0
    %v5338 = vpop.f32.mrf.mxu0
    %v5339 = vadd.f32 0.0, %v5338
    %v5340 = vpop.f32.mrf.mxu0
    %5341 = vmatprep.mubr.bf16.mxu0 0
    %5342 = vmatmul.mubr.bf16.gmra.mxu0 %v5067
    %v5343 = vpop.f32.mrf.mxu0
    %v5344 = vadd.f32 0.0, %v5343
    %v5345 = vpop.f32.mrf.mxu0
    %v5346 = vpop.f32.mrf.mxu0
    %v5347 = vadd.f32 0.0, %v5346
    %v5348 = vpop.f32.mrf.mxu0
    %5349 = vmatprep.mubr.bf16.mxu0 0
    %5350 = vmatmul.mubr.bf16.gmra.mxu0 %v5070
    %v5351 = vpop.f32.mrf.mxu0
    %v5352 = vadd.f32 0.0, %v5351
    %v5353 = vpop.f32.mrf.mxu0
    %v5354 = vpop.f32.mrf.mxu0
    %v5355 = vadd.f32 0.0, %v5354
    %v5356 = vpop.f32.mrf.mxu0
    %5357 = vmatprep.mubr.bf16.mxu0 0
    %5358 = vmatmul.mubr.bf16.gmra.mxu0 %v5073
    %v5359 = vpop.f32.mrf.mxu0
    %v5360 = vadd.f32 0.0, %v5359
    %v5361 = vpop.f32.mrf.mxu0
    %v5362 = vpop.f32.mrf.mxu0
    %v5363 = vadd.f32 0.0, %v5362
    %v5364 = vpop.f32.mrf.mxu0
    %5365 = vmatprep.mubr.bf16.mxu0 0
    %5366 = vmatmul.mubr.bf16.gmra.mxu0 %v5076
    %v5367 = vpop.f32.mrf.mxu0
    %v5368 = vadd.f32 0.0, %v5367
    %v5369 = vpop.f32.mrf.mxu0
    %v5370 = vpop.f32.mrf.mxu0
    %v5371 = vadd.f32 0.0, %v5370
    %v5372 = vpop.f32.mrf.mxu0
    %5373 = vdwg.mxu0
    %vm5374 = vcmask 130048
    %v5375 = vsel %vm5374, %v5120, 0.0
    %v5376 = vsel %vm5374, %v5123, 0.0
    %v5377 = vadd.f32 %v5375, %v5376
    %v5378 = vsel %vm5374, %v5128, 0.0
    %v5379 = vadd.f32 %v5377, %v5378
    %v5380 = vsel %vm5374, %v5131, 0.0
    %v5381 = vadd.f32 %v5379, %v5380
    %v5382 = vsel %vm5374, %v5136, 0.0
    %v5383 = vadd.f32 %v5381, %v5382
    %v5384 = vsel %vm5374, %v5139, 0.0
    %v5385 = vadd.f32 %v5383, %v5384
    %v5386 = vsel %vm5374, %v5144, 0.0
    %v5387 = vadd.f32 %v5385, %v5386
    %v5388 = vsel %vm5374, %v5147, 0.0
    %v5389 = vadd.f32 %v5387, %v5388
    %v5390 = vsel %vm5374, %v5152, 0.0
    %v5391 = vadd.f32 %v5389, %v5390
    %v5392 = vsel %vm5374, %v5155, 0.0
    %v5393 = vadd.f32 %v5391, %v5392
    %v5394 = vsel %vm5374, %v5160, 0.0
    %v5395 = vadd.f32 %v5393, %v5394
    %v5396 = vsel %vm5374, %v5163, 0.0
    %v5397 = vadd.f32 %v5395, %v5396
    %v5398 = vsel %vm5374, %v5168, 0.0
    %v5399 = vadd.f32 %v5397, %v5398
    %v5400 = vsel %vm5374, %v5171, 0.0
    %v5401 = vadd.f32 %v5399, %v5400
    %v5402 = vsel %vm5374, %v5176, 0.0
    %v5403 = vadd.f32 %v5401, %v5402
    %v5404 = vsel %vm5374, %v5179, 0.0
    %v5405 = vadd.f32 %v5403, %v5404
    %v5406 = vsel %vm5374, %v5184, 0.0
    %v5407 = vadd.f32 %v5405, %v5406
    %v5408 = vsel %vm5374, %v5187, 0.0
    %v5409 = vadd.f32 %v5407, %v5408
    %v5410 = vsel %vm5374, %v5192, 0.0
    %v5411 = vadd.f32 %v5409, %v5410
    %v5412 = vsel %vm5374, %v5195, 0.0
    %v5413 = vadd.f32 %v5411, %v5412
    %v5414 = vsel %vm5374, %v5200, 0.0
    %v5415 = vadd.f32 %v5413, %v5414
    %v5416 = vsel %vm5374, %v5203, 0.0
    %v5417 = vadd.f32 %v5415, %v5416
    %v5418 = vsel %vm5374, %v5208, 0.0
    %v5419 = vadd.f32 %v5417, %v5418
    %v5420 = vsel %vm5374, %v5211, 0.0
    %v5421 = vadd.f32 %v5419, %v5420
    %v5422 = vsel %vm5374, %v5216, 0.0
    %v5423 = vadd.f32 %v5421, %v5422
    %v5424 = vsel %vm5374, %v5219, 0.0
    %v5425 = vadd.f32 %v5423, %v5424
    %v5426 = vsel %vm5374, %v5224, 0.0
    %v5427 = vadd.f32 %v5425, %v5426
    %v5428 = vsel %vm5374, %v5227, 0.0
    %v5429 = vadd.f32 %v5427, %v5428
    %v5430 = vsel %vm5374, %v5232, 0.0
    %v5431 = vadd.f32 %v5429, %v5430
    %v5432 = vsel %vm5374, %v5235, 0.0
    %v5433 = vadd.f32 %v5431, %v5432
    %v5434 = vsel %vm5374, %v5240, 0.0
    %v5435 = vadd.f32 %v5433, %v5434
    %v5436 = vsel %vm5374, %v5243, 0.0
    %v5437 = vadd.f32 %v5435, %v5436
    %v5438 = vsel %vm5374, %v5248, 0.0
    %v5439 = vadd.f32 %v5437, %v5438
    %v5440 = vsel %vm5374, %v5251, 0.0
    %v5441 = vadd.f32 %v5439, %v5440
    %v5442 = vsel %vm5374, %v5256, 0.0
    %v5443 = vadd.f32 %v5441, %v5442
    %v5444 = vsel %vm5374, %v5259, 0.0
    %v5445 = vadd.f32 %v5443, %v5444
    %v5446 = vsel %vm5374, %v5264, 0.0
    %v5447 = vadd.f32 %v5445, %v5446
    %v5448 = vsel %vm5374, %v5267, 0.0
    %v5449 = vadd.f32 %v5447, %v5448
    %v5450 = vsel %vm5374, %v5272, 0.0
    %v5451 = vadd.f32 %v5449, %v5450
    %v5452 = vsel %vm5374, %v5275, 0.0
    %v5453 = vadd.f32 %v5451, %v5452
    %v5454 = vsel %vm5374, %v5280, 0.0
    %v5455 = vadd.f32 %v5453, %v5454
    %v5456 = vsel %vm5374, %v5283, 0.0
    %v5457 = vadd.f32 %v5455, %v5456
    %v5458 = vsel %vm5374, %v5288, 0.0
    %v5459 = vadd.f32 %v5457, %v5458
    %v5460 = vsel %vm5374, %v5291, 0.0
    %v5461 = vadd.f32 %v5459, %v5460
    %v5462 = vsel %vm5374, %v5296, 0.0
    %v5463 = vadd.f32 %v5461, %v5462
    %v5464 = vsel %vm5374, %v5299, 0.0
    %v5465 = vadd.f32 %v5463, %v5464
    %v5466 = vsel %vm5374, %v5304, 0.0
    %v5467 = vadd.f32 %v5465, %v5466
    %v5468 = vsel %vm5374, %v5307, 0.0
    %v5469 = vadd.f32 %v5467, %v5468
    %v5470 = vsel %vm5374, %v5312, 0.0
    %v5471 = vadd.f32 %v5469, %v5470
    %v5472 = vsel %vm5374, %v5315, 0.0
    %v5473 = vadd.f32 %v5471, %v5472
    %v5474 = vsel %vm5374, %v5320, 0.0
    %v5475 = vadd.f32 %v5473, %v5474
    %v5476 = vsel %vm5374, %v5323, 0.0
    %v5477 = vadd.f32 %v5475, %v5476
    %v5478 = vsel %vm5374, %v5328, 0.0
    %v5479 = vadd.f32 %v5477, %v5478
    %v5480 = vsel %vm5374, %v5331, 0.0
    %v5481 = vadd.f32 %v5479, %v5480
    %v5482 = vsel %vm5374, %v5336, 0.0
    %v5483 = vadd.f32 %v5481, %v5482
    %v5484 = vsel %vm5374, %v5339, 0.0
    %v5485 = vadd.f32 %v5483, %v5484
    %v5486 = vsel %vm5374, %v5344, 0.0
    %v5487 = vadd.f32 %v5485, %v5486
    %v5488 = vsel %vm5374, %v5347, 0.0
    %v5489 = vadd.f32 %v5487, %v5488
    %v5490 = vsel %vm5374, %v5352, 0.0
    %v5491 = vadd.f32 %v5489, %v5490
    %v5492 = vsel %vm5374, %v5355, 0.0
    %v5493 = vadd.f32 %v5491, %v5492
    %v5494 = vsel %vm5374, %v5360, 0.0
    %v5495 = vadd.f32 %v5493, %v5494
    %v5496 = vsel %vm5374, %v5363, 0.0
    %v5497 = vadd.f32 %v5495, %v5496
    %v5498 = vsel %vm5374, %v5368, 0.0
    %v5499 = vadd.f32 %v5497, %v5498
    %v5500 = vsel %vm5374, %v5371, 0.0
    %v5501 = vadd.f32 %v5499, %v5500
    %v5502 = vrot.slane %v5501, 4
    %v5503 = vadd.f32 %v5501, %v5502
    %v5504 = vrot.slane %v5503, 2
    %v5505 = vadd.f32 %v5503, %v5504
    %v5506 = vrot.slane %v5505, 1
    %v5507 = vadd.f32 %v5505, %v5506
    %v5508 = vrcp.pop 512.0
    %v5509 = vmul.f32 %v5507, %v5508
    %v5510 = vmul.f32 %v5120, %v5120
    %v5511 = vmul.f32 %v5123, %v5123
    %v5512 = vmul.f32 %v5128, %v5128
    %v5513 = vmul.f32 %v5131, %v5131
    %v5514 = vmul.f32 %v5136, %v5136
    %v5515 = vmul.f32 %v5139, %v5139
    %v5516 = vmul.f32 %v5144, %v5144
    %v5517 = vmul.f32 %v5147, %v5147
    %v5518 = vmul.f32 %v5152, %v5152
    %v5519 = vmul.f32 %v5155, %v5155
    %v5520 = vmul.f32 %v5160, %v5160
    %v5521 = vmul.f32 %v5163, %v5163
    %v5522 = vmul.f32 %v5168, %v5168
    %v5523 = vmul.f32 %v5171, %v5171
    %v5524 = vmul.f32 %v5176, %v5176
    %v5525 = vmul.f32 %v5179, %v5179
    %v5526 = vmul.f32 %v5184, %v5184
    %v5527 = vmul.f32 %v5187, %v5187
    %v5528 = vmul.f32 %v5192, %v5192
    %v5529 = vmul.f32 %v5195, %v5195
    %v5530 = vmul.f32 %v5200, %v5200
    %v5531 = vmul.f32 %v5203, %v5203
    %v5532 = vmul.f32 %v5208, %v5208
    %v5533 = vmul.f32 %v5211, %v5211
    %v5534 = vmul.f32 %v5216, %v5216
    %v5535 = vmul.f32 %v5219, %v5219
    %v5536 = vmul.f32 %v5224, %v5224
    %v5537 = vmul.f32 %v5227, %v5227
    %v5538 = vmul.f32 %v5232, %v5232
    %v5539 = vmul.f32 %v5235, %v5235
    %v5540 = vmul.f32 %v5240, %v5240
    %v5541 = vmul.f32 %v5243, %v5243
    %v5542 = vmul.f32 %v5248, %v5248
    %v5543 = vmul.f32 %v5251, %v5251
    %v5544 = vmul.f32 %v5256, %v5256
    %v5545 = vmul.f32 %v5259, %v5259
    %v5546 = vmul.f32 %v5264, %v5264
    %v5547 = vmul.f32 %v5267, %v5267
    %v5548 = vmul.f32 %v5272, %v5272
    %v5549 = vmul.f32 %v5275, %v5275
    %v5550 = vmul.f32 %v5280, %v5280
    %v5551 = vmul.f32 %v5283, %v5283
    %v5552 = vmul.f32 %v5288, %v5288
    %v5553 = vmul.f32 %v5291, %v5291
    %v5554 = vmul.f32 %v5296, %v5296
    %v5555 = vmul.f32 %v5299, %v5299
    %v5556 = vmul.f32 %v5304, %v5304
    %v5557 = vmul.f32 %v5307, %v5307
    %v5558 = vmul.f32 %v5312, %v5312
    %v5559 = vmul.f32 %v5315, %v5315
    %v5560 = vmul.f32 %v5320, %v5320
    %v5561 = vmul.f32 %v5323, %v5323
    %v5562 = vmul.f32 %v5328, %v5328
    %v5563 = vmul.f32 %v5331, %v5331
    %v5564 = vmul.f32 %v5336, %v5336
    %v5565 = vmul.f32 %v5339, %v5339
    %v5566 = vmul.f32 %v5344, %v5344
    %v5567 = vmul.f32 %v5347, %v5347
    %v5568 = vmul.f32 %v5352, %v5352
    %v5569 = vmul.f32 %v5355, %v5355
    %v5570 = vmul.f32 %v5360, %v5360
    %v5571 = vmul.f32 %v5363, %v5363
    %v5572 = vmul.f32 %v5368, %v5368
    %v5573 = vmul.f32 %v5371, %v5371
    %v5574 = vsel %vm5374, %v5510, 0.0
    %v5575 = vsel %vm5374, %v5511, 0.0
    %v5576 = vadd.f32 %v5574, %v5575
    %v5577 = vsel %vm5374, %v5512, 0.0
    %v5578 = vadd.f32 %v5576, %v5577
    %v5579 = vsel %vm5374, %v5513, 0.0
    %v5580 = vadd.f32 %v5578, %v5579
    %v5581 = vsel %vm5374, %v5514, 0.0
    %v5582 = vadd.f32 %v5580, %v5581
    %v5583 = vsel %vm5374, %v5515, 0.0
    %v5584 = vadd.f32 %v5582, %v5583
    %v5585 = vsel %vm5374, %v5516, 0.0
    %v5586 = vadd.f32 %v5584, %v5585
    %v5587 = vsel %vm5374, %v5517, 0.0
    %v5588 = vadd.f32 %v5586, %v5587
    %v5589 = vsel %vm5374, %v5518, 0.0
    %v5590 = vadd.f32 %v5588, %v5589
    %v5591 = vsel %vm5374, %v5519, 0.0
    %v5592 = vadd.f32 %v5590, %v5591
    %v5593 = vsel %vm5374, %v5520, 0.0
    %v5594 = vadd.f32 %v5592, %v5593
    %v5595 = vsel %vm5374, %v5521, 0.0
    %v5596 = vadd.f32 %v5594, %v5595
    %v5597 = vsel %vm5374, %v5522, 0.0
    %v5598 = vadd.f32 %v5596, %v5597
    %v5599 = vsel %vm5374, %v5523, 0.0
    %v5600 = vadd.f32 %v5598, %v5599
    %v5601 = vsel %vm5374, %v5524, 0.0
    %v5602 = vadd.f32 %v5600, %v5601
    %v5603 = vsel %vm5374, %v5525, 0.0
    %v5604 = vadd.f32 %v5602, %v5603
    %v5605 = vsel %vm5374, %v5526, 0.0
    %v5606 = vadd.f32 %v5604, %v5605
    %v5607 = vsel %vm5374, %v5527, 0.0
    %v5608 = vadd.f32 %v5606, %v5607
    %v5609 = vsel %vm5374, %v5528, 0.0
    %v5610 = vadd.f32 %v5608, %v5609
    %v5611 = vsel %vm5374, %v5529, 0.0
    %v5612 = vadd.f32 %v5610, %v5611
    %v5613 = vsel %vm5374, %v5530, 0.0
    %v5614 = vadd.f32 %v5612, %v5613
    %v5615 = vsel %vm5374, %v5531, 0.0
    %v5616 = vadd.f32 %v5614, %v5615
    %v5617 = vsel %vm5374, %v5532, 0.0
    %v5618 = vadd.f32 %v5616, %v5617
    %v5619 = vsel %vm5374, %v5533, 0.0
    %v5620 = vadd.f32 %v5618, %v5619
    %v5621 = vsel %vm5374, %v5534, 0.0
    %v5622 = vadd.f32 %v5620, %v5621
    %v5623 = vsel %vm5374, %v5535, 0.0
    %v5624 = vadd.f32 %v5622, %v5623
    %v5625 = vsel %vm5374, %v5536, 0.0
    %v5626 = vadd.f32 %v5624, %v5625
    %v5627 = vsel %vm5374, %v5537, 0.0
    %v5628 = vadd.f32 %v5626, %v5627
    %v5629 = vsel %vm5374, %v5538, 0.0
    %v5630 = vadd.f32 %v5628, %v5629
    %v5631 = vsel %vm5374, %v5539, 0.0
    %v5632 = vadd.f32 %v5630, %v5631
    %v5633 = vsel %vm5374, %v5540, 0.0
    %v5634 = vadd.f32 %v5632, %v5633
    %v5635 = vsel %vm5374, %v5541, 0.0
    %v5636 = vadd.f32 %v5634, %v5635
    %v5637 = vsel %vm5374, %v5542, 0.0
    %v5638 = vadd.f32 %v5636, %v5637
    %v5639 = vsel %vm5374, %v5543, 0.0
    %v5640 = vadd.f32 %v5638, %v5639
    %v5641 = vsel %vm5374, %v5544, 0.0
    %v5642 = vadd.f32 %v5640, %v5641
    %v5643 = vsel %vm5374, %v5545, 0.0
    %v5644 = vadd.f32 %v5642, %v5643
    %v5645 = vsel %vm5374, %v5546, 0.0
    %v5646 = vadd.f32 %v5644, %v5645
    %v5647 = vsel %vm5374, %v5547, 0.0
    %v5648 = vadd.f32 %v5646, %v5647
    %v5649 = vsel %vm5374, %v5548, 0.0
    %v5650 = vadd.f32 %v5648, %v5649
    %v5651 = vsel %vm5374, %v5549, 0.0
    %v5652 = vadd.f32 %v5650, %v5651
    %v5653 = vsel %vm5374, %v5550, 0.0
    %v5654 = vadd.f32 %v5652, %v5653
    %v5655 = vsel %vm5374, %v5551, 0.0
    %v5656 = vadd.f32 %v5654, %v5655
    %v5657 = vsel %vm5374, %v5552, 0.0
    %v5658 = vadd.f32 %v5656, %v5657
    %v5659 = vsel %vm5374, %v5553, 0.0
    %v5660 = vadd.f32 %v5658, %v5659
    %v5661 = vsel %vm5374, %v5554, 0.0
    %v5662 = vadd.f32 %v5660, %v5661
    %v5663 = vsel %vm5374, %v5555, 0.0
    %v5664 = vadd.f32 %v5662, %v5663
    %v5665 = vsel %vm5374, %v5556, 0.0
    %v5666 = vadd.f32 %v5664, %v5665
    %v5667 = vsel %vm5374, %v5557, 0.0
    %v5668 = vadd.f32 %v5666, %v5667
    %v5669 = vsel %vm5374, %v5558, 0.0
    %v5670 = vadd.f32 %v5668, %v5669
    %v5671 = vsel %vm5374, %v5559, 0.0
    %v5672 = vadd.f32 %v5670, %v5671
    %v5673 = vsel %vm5374, %v5560, 0.0
    %v5674 = vadd.f32 %v5672, %v5673
    %v5675 = vsel %vm5374, %v5561, 0.0
    %v5676 = vadd.f32 %v5674, %v5675
    %v5677 = vsel %vm5374, %v5562, 0.0
    %v5678 = vadd.f32 %v5676, %v5677
    %v5679 = vsel %vm5374, %v5563, 0.0
    %v5680 = vadd.f32 %v5678, %v5679
    %v5681 = vsel %vm5374, %v5564, 0.0
    %v5682 = vadd.f32 %v5680, %v5681
    %v5683 = vsel %vm5374, %v5565, 0.0
    %v5684 = vadd.f32 %v5682, %v5683
    %v5685 = vsel %vm5374, %v5566, 0.0
    %v5686 = vadd.f32 %v5684, %v5685
    %v5687 = vsel %vm5374, %v5567, 0.0
    %v5688 = vadd.f32 %v5686, %v5687
    %v5689 = vsel %vm5374, %v5568, 0.0
    %v5690 = vadd.f32 %v5688, %v5689
    %v5691 = vsel %vm5374, %v5569, 0.0
    %v5692 = vadd.f32 %v5690, %v5691
    %v5693 = vsel %vm5374, %v5570, 0.0
    %v5694 = vadd.f32 %v5692, %v5693
    %v5695 = vsel %vm5374, %v5571, 0.0
    %v5696 = vadd.f32 %v5694, %v5695
    %v5697 = vsel %vm5374, %v5572, 0.0
    %v5698 = vadd.f32 %v5696, %v5697
    %v5699 = vsel %vm5374, %v5573, 0.0
    %v5700 = vadd.f32 %v5698, %v5699
    %v5701 = vrot.slane %v5700, 4
    %v5702 = vadd.f32 %v5700, %v5701
    %v5703 = vrot.slane %v5702, 2
    %v5704 = vadd.f32 %v5702, %v5703
    %v5705 = vrot.slane %v5704, 1
    %v5706 = vadd.f32 %v5704, %v5705
    %v5707 = vmul.f32 %v5706, %v5508
    %v5708 = vmul.f32 %v5509, %v5509
    %v5709 = vsub.f32 %v5707, %v5708
    %v5710 = vmax.f32 %v5709, 0.0
    %v5711 = vsub.f32 %v5120, %v5509
    %v5712 = vsub.f32 %v5123, %v5509
    %v5713 = vsub.f32 %v5128, %v5509
    %v5714 = vsub.f32 %v5131, %v5509
    %v5715 = vsub.f32 %v5136, %v5509
    %v5716 = vsub.f32 %v5139, %v5509
    %v5717 = vsub.f32 %v5144, %v5509
    %v5718 = vsub.f32 %v5147, %v5509
    %v5719 = vsub.f32 %v5152, %v5509
    %v5720 = vsub.f32 %v5155, %v5509
    %v5721 = vsub.f32 %v5160, %v5509
    %v5722 = vsub.f32 %v5163, %v5509
    %v5723 = vsub.f32 %v5168, %v5509
    %v5724 = vsub.f32 %v5171, %v5509
    %v5725 = vsub.f32 %v5176, %v5509
    %v5726 = vsub.f32 %v5179, %v5509
    %v5727 = vsub.f32 %v5184, %v5509
    %v5728 = vsub.f32 %v5187, %v5509
    %v5729 = vsub.f32 %v5192, %v5509
    %v5730 = vsub.f32 %v5195, %v5509
    %v5731 = vsub.f32 %v5200, %v5509
    %v5732 = vsub.f32 %v5203, %v5509
    %v5733 = vsub.f32 %v5208, %v5509
    %v5734 = vsub.f32 %v5211, %v5509
    %v5735 = vsub.f32 %v5216, %v5509
    %v5736 = vsub.f32 %v5219, %v5509
    %v5737 = vsub.f32 %v5224, %v5509
    %v5738 = vsub.f32 %v5227, %v5509
    %v5739 = vsub.f32 %v5232, %v5509
    %v5740 = vsub.f32 %v5235, %v5509
    %v5741 = vsub.f32 %v5240, %v5509
    %v5742 = vsub.f32 %v5243, %v5509
    %v5743 = vsub.f32 %v5248, %v5509
    %v5744 = vsub.f32 %v5251, %v5509
    %v5745 = vsub.f32 %v5256, %v5509
    %v5746 = vsub.f32 %v5259, %v5509
    %v5747 = vsub.f32 %v5264, %v5509
    %v5748 = vsub.f32 %v5267, %v5509
    %v5749 = vsub.f32 %v5272, %v5509
    %v5750 = vsub.f32 %v5275, %v5509
    %v5751 = vsub.f32 %v5280, %v5509
    %v5752 = vsub.f32 %v5283, %v5509
    %v5753 = vsub.f32 %v5288, %v5509
    %v5754 = vsub.f32 %v5291, %v5509
    %v5755 = vsub.f32 %v5296, %v5509
    %v5756 = vsub.f32 %v5299, %v5509
    %v5757 = vsub.f32 %v5304, %v5509
    %v5758 = vsub.f32 %v5307, %v5509
    %v5759 = vsub.f32 %v5312, %v5509
    %v5760 = vsub.f32 %v5315, %v5509
    %v5761 = vsub.f32 %v5320, %v5509
    %v5762 = vsub.f32 %v5323, %v5509
    %v5763 = vsub.f32 %v5328, %v5509
    %v5764 = vsub.f32 %v5331, %v5509
    %v5765 = vsub.f32 %v5336, %v5509
    %v5766 = vsub.f32 %v5339, %v5509
    %v5767 = vsub.f32 %v5344, %v5509
    %v5768 = vsub.f32 %v5347, %v5509
    %v5769 = vsub.f32 %v5352, %v5509
    %v5770 = vsub.f32 %v5355, %v5509
    %v5771 = vsub.f32 %v5360, %v5509
    %v5772 = vsub.f32 %v5363, %v5509
    %v5773 = vsub.f32 %v5368, %v5509
    %v5774 = vsub.f32 %v5371, %v5509
    %v5775 = vadd.f32 %v5710, 1e-05
    %v5776 = vrsqrt.pop %v5775
    %v5777 = vmul.f32 %v5711, %v5776
    %v5778 = vmul.f32 %v5712, %v5776
    %v5779 = vmul.f32 %v5713, %v5776
    %v5780 = vmul.f32 %v5714, %v5776
    %v5781 = vmul.f32 %v5715, %v5776
    %v5782 = vmul.f32 %v5716, %v5776
    %v5783 = vmul.f32 %v5717, %v5776
    %v5784 = vmul.f32 %v5718, %v5776
    %v5785 = vmul.f32 %v5719, %v5776
    %v5786 = vmul.f32 %v5720, %v5776
    %v5787 = vmul.f32 %v5721, %v5776
    %v5788 = vmul.f32 %v5722, %v5776
    %v5789 = vmul.f32 %v5723, %v5776
    %v5790 = vmul.f32 %v5724, %v5776
    %v5791 = vmul.f32 %v5725, %v5776
    %v5792 = vmul.f32 %v5726, %v5776
    %v5793 = vmul.f32 %v5727, %v5776
    %v5794 = vmul.f32 %v5728, %v5776
    %v5795 = vmul.f32 %v5729, %v5776
    %v5796 = vmul.f32 %v5730, %v5776
    %v5797 = vmul.f32 %v5731, %v5776
    %v5798 = vmul.f32 %v5732, %v5776
    %v5799 = vmul.f32 %v5733, %v5776
    %v5800 = vmul.f32 %v5734, %v5776
    %v5801 = vmul.f32 %v5735, %v5776
    %v5802 = vmul.f32 %v5736, %v5776
    %v5803 = vmul.f32 %v5737, %v5776
    %v5804 = vmul.f32 %v5738, %v5776
    %v5805 = vmul.f32 %v5739, %v5776
    %v5806 = vmul.f32 %v5740, %v5776
    %v5807 = vmul.f32 %v5741, %v5776
    %v5808 = vmul.f32 %v5742, %v5776
    %v5809 = vmul.f32 %v5743, %v5776
    %v5810 = vmul.f32 %v5744, %v5776
    %v5811 = vmul.f32 %v5745, %v5776
    %v5812 = vmul.f32 %v5746, %v5776
    %v5813 = vmul.f32 %v5747, %v5776
    %v5814 = vmul.f32 %v5748, %v5776
    %v5815 = vmul.f32 %v5749, %v5776
    %v5816 = vmul.f32 %v5750, %v5776
    %v5817 = vmul.f32 %v5751, %v5776
    %v5818 = vmul.f32 %v5752, %v5776
    %v5819 = vmul.f32 %v5753, %v5776
    %v5820 = vmul.f32 %v5754, %v5776
    %v5821 = vmul.f32 %v5755, %v5776
    %v5822 = vmul.f32 %v5756, %v5776
    %v5823 = vmul.f32 %v5757, %v5776
    %v5824 = vmul.f32 %v5758, %v5776
    %v5825 = vmul.f32 %v5759, %v5776
    %v5826 = vmul.f32 %v5760, %v5776
    %v5827 = vmul.f32 %v5761, %v5776
    %v5828 = vmul.f32 %v5762, %v5776
    %v5829 = vmul.f32 %v5763, %v5776
    %v5830 = vmul.f32 %v5764, %v5776
    %v5831 = vmul.f32 %v5765, %v5776
    %v5832 = vmul.f32 %v5766, %v5776
    %v5833 = vmul.f32 %v5767, %v5776
    %v5834 = vmul.f32 %v5768, %v5776
    %v5835 = vmul.f32 %v5769, %v5776
    %v5836 = vmul.f32 %v5770, %v5776
    %v5837 = vmul.f32 %v5771, %v5776
    %v5838 = vmul.f32 %v5772, %v5776
    %v5839 = vmul.f32 %v5773, %v5776
    %v5840 = vmul.f32 %v5774, %v5776
    %v5841 = vmax.f32 %v5777, 0.0
    %v5842 = vmax.f32 %v5778, 0.0
    %v5843 = vmax.f32 %v5779, 0.0
    %v5844 = vmax.f32 %v5780, 0.0
    %v5845 = vmax.f32 %v5781, 0.0
    %v5846 = vmax.f32 %v5782, 0.0
    %v5847 = vmax.f32 %v5783, 0.0
    %v5848 = vmax.f32 %v5784, 0.0
    %v5849 = vmax.f32 %v5785, 0.0
    %v5850 = vmax.f32 %v5786, 0.0
    %v5851 = vmax.f32 %v5787, 0.0
    %v5852 = vmax.f32 %v5788, 0.0
    %v5853 = vmax.f32 %v5789, 0.0
    %v5854 = vmax.f32 %v5790, 0.0
    %v5855 = vmax.f32 %v5791, 0.0
    %v5856 = vmax.f32 %v5792, 0.0
    %v5857 = vmax.f32 %v5793, 0.0
    %v5858 = vmax.f32 %v5794, 0.0
    %v5859 = vmax.f32 %v5795, 0.0
    %v5860 = vmax.f32 %v5796, 0.0
    %v5861 = vmax.f32 %v5797, 0.0
    %v5862 = vmax.f32 %v5798, 0.0
    %v5863 = vmax.f32 %v5799, 0.0
    %v5864 = vmax.f32 %v5800, 0.0
    %v5865 = vmax.f32 %v5801, 0.0
    %v5866 = vmax.f32 %v5802, 0.0
    %v5867 = vmax.f32 %v5803, 0.0
    %v5868 = vmax.f32 %v5804, 0.0
    %v5869 = vmax.f32 %v5805, 0.0
    %v5870 = vmax.f32 %v5806, 0.0
    %v5871 = vmax.f32 %v5807, 0.0
    %v5872 = vmax.f32 %v5808, 0.0
    %v5873 = vmax.f32 %v5809, 0.0
    %v5874 = vmax.f32 %v5810, 0.0
    %v5875 = vmax.f32 %v5811, 0.0
    %v5876 = vmax.f32 %v5812, 0.0
    %v5877 = vmax.f32 %v5813, 0.0
    %v5878 = vmax.f32 %v5814, 0.0
    %v5879 = vmax.f32 %v5815, 0.0
    %v5880 = vmax.f32 %v5816, 0.0
    %v5881 = vmax.f32 %v5817, 0.0
    %v5882 = vmax.f32 %v5818, 0.0
    %v5883 = vmax.f32 %v5819, 0.0
    %v5884 = vmax.f32 %v5820, 0.0
    %v5885 = vmax.f32 %v5821, 0.0
    %v5886 = vmax.f32 %v5822, 0.0
    %v5887 = vmax.f32 %v5823, 0.0
    %v5888 = vmax.f32 %v5824, 0.0
    %v5889 = vmax.f32 %v5825, 0.0
    %v5890 = vmax.f32 %v5826, 0.0
    %v5891 = vmax.f32 %v5827, 0.0
    %v5892 = vmax.f32 %v5828, 0.0
    %v5893 = vmax.f32 %v5829, 0.0
    %v5894 = vmax.f32 %v5830, 0.0
    %v5895 = vmax.f32 %v5831, 0.0
    %v5896 = vmax.f32 %v5832, 0.0
    %v5897 = vmax.f32 %v5833, 0.0
    %v5898 = vmax.f32 %v5834, 0.0
    %v5899 = vmax.f32 %v5835, 0.0
    %v5900 = vmax.f32 %v5836, 0.0
    %v5901 = vmax.f32 %v5837, 0.0
    %v5902 = vmax.f32 %v5838, 0.0
    %v5903 = vmax.f32 %v5839, 0.0
    %v5904 = vmax.f32 %v5840, 0.0
    %v5905 = vpack.c.bf16 %v5842, %v5841
    %v5906 = vpack.c.bf16 %v5844, %v5843
    %v5907 = vpack.c.bf16 %v5846, %v5845
    %v5908 = vpack.c.bf16 %v5848, %v5847
    %v5909 = vpack.c.bf16 %v5850, %v5849
    %v5910 = vpack.c.bf16 %v5852, %v5851
    %v5911 = vpack.c.bf16 %v5854, %v5853
    %v5912 = vpack.c.bf16 %v5856, %v5855
    %v5913 = vpack.c.bf16 %v5858, %v5857
    %v5914 = vpack.c.bf16 %v5860, %v5859
    %v5915 = vpack.c.bf16 %v5862, %v5861
    %v5916 = vpack.c.bf16 %v5864, %v5863
    %v5917 = vpack.c.bf16 %v5866, %v5865
    %v5918 = vpack.c.bf16 %v5868, %v5867
    %v5919 = vpack.c.bf16 %v5870, %v5869
    %v5920 = vpack.c.bf16 %v5872, %v5871
    %v5921 = vpack.c.bf16 %v5874, %v5873
    %v5922 = vpack.c.bf16 %v5876, %v5875
    %v5923 = vpack.c.bf16 %v5878, %v5877
    %v5924 = vpack.c.bf16 %v5880, %v5879
    %v5925 = vpack.c.bf16 %v5882, %v5881
    %v5926 = vpack.c.bf16 %v5884, %v5883
    %v5927 = vpack.c.bf16 %v5886, %v5885
    %v5928 = vpack.c.bf16 %v5888, %v5887
    %v5929 = vpack.c.bf16 %v5890, %v5889
    %v5930 = vpack.c.bf16 %v5892, %v5891
    %v5931 = vpack.c.bf16 %v5894, %v5893
    %v5932 = vpack.c.bf16 %v5896, %v5895
    %v5933 = vpack.c.bf16 %v5898, %v5897
    %v5934 = vpack.c.bf16 %v5900, %v5899
    %v5935 = vpack.c.bf16 %v5902, %v5901
    %v5936 = vpack.c.bf16 %v5904, %v5903
    %v5969 = vunpack.c.l.b16 %v5905
    %v5970 = vunpack.c.h.b16 %v5905
    %v5971 = vunpack.c.l.b16 %v5906
    %v5972 = vunpack.c.h.b16 %v5906
    %v5973 = vunpack.c.l.b16 %v5907
    %v5974 = vunpack.c.h.b16 %v5907
    %v5975 = vunpack.c.l.b16 %v5908
    %v5976 = vunpack.c.h.b16 %v5908
    %v5977 = vunpack.c.l.b16 %v5909
    %v5978 = vunpack.c.h.b16 %v5909
    %v5979 = vunpack.c.l.b16 %v5910
    %v5980 = vunpack.c.h.b16 %v5910
    %v5981 = vunpack.c.l.b16 %v5911
    %v5982 = vunpack.c.h.b16 %v5911
    %v5983 = vunpack.c.l.b16 %v5912
    %v5984 = vunpack.c.h.b16 %v5912
    %v5985 = vunpack.c.l.b16 %v5913
    %v5986 = vunpack.c.h.b16 %v5913
    %v5987 = vunpack.c.l.b16 %v5914
    %v5988 = vunpack.c.h.b16 %v5914
    %v5989 = vunpack.c.l.b16 %v5915
    %v5990 = vunpack.c.h.b16 %v5915
    %v5991 = vunpack.c.l.b16 %v5916
    %v5992 = vunpack.c.h.b16 %v5916
    %v5993 = vunpack.c.l.b16 %v5917
    %v5994 = vunpack.c.h.b16 %v5917
    %v5995 = vunpack.c.l.b16 %v5918
    %v5996 = vunpack.c.h.b16 %v5918
    %v5997 = vunpack.c.l.b16 %v5919
    %v5998 = vunpack.c.h.b16 %v5919
    %v5999 = vunpack.c.l.b16 %v5920
    %v6000 = vunpack.c.h.b16 %v5920
    %v6001 = vunpack.c.l.b16 %v5921
    %v6002 = vunpack.c.h.b16 %v5921
    %v6003 = vunpack.c.l.b16 %v5922
    %v6004 = vunpack.c.h.b16 %v5922
    %v6005 = vunpack.c.l.b16 %v5923
    %v6006 = vunpack.c.h.b16 %v5923
    %v6007 = vunpack.c.l.b16 %v5924
    %v6008 = vunpack.c.h.b16 %v5924
    %v6009 = vunpack.c.l.b16 %v5925
    %v6010 = vunpack.c.h.b16 %v5925
    %v6011 = vunpack.c.l.b16 %v5926
    %v6012 = vunpack.c.h.b16 %v5926
    %v6013 = vunpack.c.l.b16 %v5927
    %v6014 = vunpack.c.h.b16 %v5927
    %v6015 = vunpack.c.l.b16 %v5928
    %v6016 = vunpack.c.h.b16 %v5928
    %v6017 = vunpack.c.l.b16 %v5929
    %v6018 = vunpack.c.h.b16 %v5929
    %v6019 = vunpack.c.l.b16 %v5930
    %v6020 = vunpack.c.h.b16 %v5930
    %v6021 = vunpack.c.l.b16 %v5931
    %v6022 = vunpack.c.h.b16 %v5931
    %v6023 = vunpack.c.l.b16 %v5932
    %v6024 = vunpack.c.h.b16 %v5932
    %v6025 = vunpack.c.l.b16 %v5933
    %v6026 = vunpack.c.h.b16 %v5933
    %v6027 = vunpack.c.l.b16 %v5934
    %v6028 = vunpack.c.h.b16 %v5934
    %v6029 = vunpack.c.l.b16 %v5935
    %v6030 = vunpack.c.h.b16 %v5935
    %v6031 = vunpack.c.l.b16 %v5936
    %v6032 = vunpack.c.h.b16 %v5936
    %v6033 = vpack.c.b16 %v5969, %v5969
    %v6034 = vpack.c.b16 %v5970, %v5970
    %v6035 = vpack.c.b16 %v5971, %v5971
    %v6036 = vpack.c.b16 %v5972, %v5972
    %v6037 = vpack.c.b16 %v5973, %v5973
    %v6038 = vpack.c.b16 %v5974, %v5974
    %v6039 = vpack.c.b16 %v5975, %v5975
    %v6040 = vpack.c.b16 %v5976, %v5976
    %v6041 = vpack.c.b16 %v5977, %v5977
    %v6042 = vpack.c.b16 %v5978, %v5978
    %v6043 = vpack.c.b16 %v5979, %v5979
    %v6044 = vpack.c.b16 %v5980, %v5980
    %v6045 = vpack.c.b16 %v5981, %v5981
    %v6046 = vpack.c.b16 %v5982, %v5982
    %v6047 = vpack.c.b16 %v5983, %v5983
    %v6048 = vpack.c.b16 %v5984, %v5984
    %v6049 = vpack.c.b16 %v5985, %v5985
    %v6050 = vpack.c.b16 %v5986, %v5986
    %v6051 = vpack.c.b16 %v5987, %v5987
    %v6052 = vpack.c.b16 %v5988, %v5988
    %v6053 = vpack.c.b16 %v5989, %v5989
    %v6054 = vpack.c.b16 %v5990, %v5990
    %v6055 = vpack.c.b16 %v5991, %v5991
    %v6056 = vpack.c.b16 %v5992, %v5992
    %v6057 = vpack.c.b16 %v5993, %v5993
    %v6058 = vpack.c.b16 %v5994, %v5994
    %v6059 = vpack.c.b16 %v5995, %v5995
    %v6060 = vpack.c.b16 %v5996, %v5996
    %v6061 = vpack.c.b16 %v5997, %v5997
    %v6062 = vpack.c.b16 %v5998, %v5998
    %v6063 = vpack.c.b16 %v5999, %v5999
    %v6064 = vpack.c.b16 %v6000, %v6000
    %v6065 = vpack.c.b16 %v6001, %v6001
    %v6066 = vpack.c.b16 %v6002, %v6002
    %v6067 = vpack.c.b16 %v6003, %v6003
    %v6068 = vpack.c.b16 %v6004, %v6004
    %v6069 = vpack.c.b16 %v6005, %v6005
    %v6070 = vpack.c.b16 %v6006, %v6006
    %v6071 = vpack.c.b16 %v6007, %v6007
    %v6072 = vpack.c.b16 %v6008, %v6008
    %v6073 = vpack.c.b16 %v6009, %v6009
    %v6074 = vpack.c.b16 %v6010, %v6010
    %v6075 = vpack.c.b16 %v6011, %v6011
    %v6076 = vpack.c.b16 %v6012, %v6012
    %v6077 = vpack.c.b16 %v6013, %v6013
    %v6078 = vpack.c.b16 %v6014, %v6014
    %v6079 = vpack.c.b16 %v6015, %v6015
    %v6080 = vpack.c.b16 %v6016, %v6016
    %v6081 = vpack.c.b16 %v6017, %v6017
    %v6082 = vpack.c.b16 %v6018, %v6018
    %v6083 = vpack.c.b16 %v6019, %v6019
    %v6084 = vpack.c.b16 %v6020, %v6020
    %v6085 = vpack.c.b16 %v6021, %v6021
    %v6086 = vpack.c.b16 %v6022, %v6022
    %v6087 = vpack.c.b16 %v6023, %v6023
    %v6088 = vpack.c.b16 %v6024, %v6024
    %v6089 = vpack.c.b16 %v6025, %v6025
    %v6090 = vpack.c.b16 %v6026, %v6026
    %v6091 = vpack.c.b16 %v6027, %v6027
    %v6092 = vpack.c.b16 %v6028, %v6028
    %v6093 = vpack.c.b16 %v6029, %v6029
    %v6094 = vpack.c.b16 %v6030, %v6030
    %v6095 = vpack.c.b16 %v6031, %v6031
    %v6096 = vpack.c.b16 %v6032, %v6032
    %vm6161 = vcmask 125952
    %6162 = vst.msk [vmem:[#allocation4] sm:$0xf] %vm6161, %v6033
    %6163 = vst.msk [vmem:[#allocation4 + $0x4] sm:$0xf] %vm6161, %v6034
    %6164 = vst.msk [vmem:[#allocation4 + $0x8] sm:$0xf] %vm6161, %v6035
    %6165 = vst.msk [vmem:[#allocation4 + $0xc] sm:$0xf] %vm6161, %v6036
    %6166 = vst.msk [vmem:[#allocation4 + $0x10] sm:$0xf] %vm6161, %v6037
    %6167 = vst.msk [vmem:[#allocation4 + $0x14] sm:$0xf] %vm6161, %v6038
    %6168 = vst.msk [vmem:[#allocation4 + $0x18] sm:$0xf] %vm6161, %v6039
    %6169 = vst.msk [vmem:[#allocation4 + $0x1c] sm:$0xf] %vm6161, %v6040
    %6170 = vst.msk [vmem:[#allocation4 + $0x20] sm:$0xf] %vm6161, %v6041
    %6171 = vst.msk [vmem:[#allocation4 + $0x24] sm:$0xf] %vm6161, %v6042
    %6172 = vst.msk [vmem:[#allocation4 + $0x28] sm:$0xf] %vm6161, %v6043
    %6173 = vst.msk [vmem:[#allocation4 + $0x2c] sm:$0xf] %vm6161, %v6044
    %6174 = vst.msk [vmem:[#allocation4 + $0x30] sm:$0xf] %vm6161, %v6045
    %6175 = vst.msk [vmem:[#allocation4 + $0x34] sm:$0xf] %vm6161, %v6046
    %6176 = vst.msk [vmem:[#allocation4 + $0x38] sm:$0xf] %vm6161, %v6047
    %6177 = vst.msk [vmem:[#allocation4 + $0x3c] sm:$0xf] %vm6161, %v6048
    %6178 = vst.msk [vmem:[#allocation4 + $0x40] sm:$0xf] %vm6161, %v6049
    %6179 = vst.msk [vmem:[#allocation4 + $0x44] sm:$0xf] %vm6161, %v6050
    %6180 = vst.msk [vmem:[#allocation4 + $0x48] sm:$0xf] %vm6161, %v6051
    %6181 = vst.msk [vmem:[#allocation4 + $0x4c] sm:$0xf] %vm6161, %v6052
    %6182 = vst.msk [vmem:[#allocation4 + $0x50] sm:$0xf] %vm6161, %v6053
    %6183 = vst.msk [vmem:[#allocation4 + $0x54] sm:$0xf] %vm6161, %v6054
    %6184 = vst.msk [vmem:[#allocation4 + $0x58] sm:$0xf] %vm6161, %v6055
    %6185 = vst.msk [vmem:[#allocation4 + $0x5c] sm:$0xf] %vm6161, %v6056
    %6186 = vst.msk [vmem:[#allocation4 + $0x60] sm:$0xf] %vm6161, %v6057
    %6187 = vst.msk [vmem:[#allocation4 + $0x64] sm:$0xf] %vm6161, %v6058
    %6188 = vst.msk [vmem:[#allocation4 + $0x68] sm:$0xf] %vm6161, %v6059
    %6189 = vst.msk [vmem:[#allocation4 + $0x6c] sm:$0xf] %vm6161, %v6060
    %6190 = vst.msk [vmem:[#allocation4 + $0x70] sm:$0xf] %vm6161, %v6061
    %6191 = vst.msk [vmem:[#allocation4 + $0x74] sm:$0xf] %vm6161, %v6062
    %6192 = vst.msk [vmem:[#allocation4 + $0x78] sm:$0xf] %vm6161, %v6063
    %6193 = vst.msk [vmem:[#allocation4 + $0x7c] sm:$0xf] %vm6161, %v6064
    %6194 = vst.msk [vmem:[#allocation4 + $0x80] sm:$0xf] %vm6161, %v6065
    %6195 = vst.msk [vmem:[#allocation4 + $0x84] sm:$0xf] %vm6161, %v6066
    %6196 = vst.msk [vmem:[#allocation4 + $0x88] sm:$0xf] %vm6161, %v6067
    %6197 = vst.msk [vmem:[#allocation4 + $0x8c] sm:$0xf] %vm6161, %v6068
    %6198 = vst.msk [vmem:[#allocation4 + $0x90] sm:$0xf] %vm6161, %v6069
    %6199 = vst.msk [vmem:[#allocation4 + $0x94] sm:$0xf] %vm6161, %v6070
    %6200 = vst.msk [vmem:[#allocation4 + $0x98] sm:$0xf] %vm6161, %v6071
    %6201 = vst.msk [vmem:[#allocation4 + $0x9c] sm:$0xf] %vm6161, %v6072
    %6202 = vst.msk [vmem:[#allocation4 + $0xa0] sm:$0xf] %vm6161, %v6073
    %6203 = vst.msk [vmem:[#allocation4 + $0xa4] sm:$0xf] %vm6161, %v6074
    %6204 = vst.msk [vmem:[#allocation4 + $0xa8] sm:$0xf] %vm6161, %v6075
    %6205 = vst.msk [vmem:[#allocation4 + $0xac] sm:$0xf] %vm6161, %v6076
    %6206 = vst.msk [vmem:[#allocation4 + $0xb0] sm:$0xf] %vm6161, %v6077
    %6207 = vst.msk [vmem:[#allocation4 + $0xb4] sm:$0xf] %vm6161, %v6078
    %6208 = vst.msk [vmem:[#allocation4 + $0xb8] sm:$0xf] %vm6161, %v6079
    %6209 = vst.msk [vmem:[#allocation4 + $0xbc] sm:$0xf] %vm6161, %v6080
    %6210 = vst.msk [vmem:[#allocation4 + $0xc0] sm:$0xf] %vm6161, %v6081
    %6211 = vst.msk [vmem:[#allocation4 + $0xc4] sm:$0xf] %vm6161, %v6082
    %6212 = vst.msk [vmem:[#allocation4 + $0xc8] sm:$0xf] %vm6161, %v6083
    %6213 = vst.msk [vmem:[#allocation4 + $0xcc] sm:$0xf] %vm6161, %v6084
    %6214 = vst.msk [vmem:[#allocation4 + $0xd0] sm:$0xf] %vm6161, %v6085
    %6215 = vst.msk [vmem:[#allocation4 + $0xd4] sm:$0xf] %vm6161, %v6086
    %6216 = vst.msk [vmem:[#allocation4 + $0xd8] sm:$0xf] %vm6161, %v6087
    %6217 = vst.msk [vmem:[#allocation4 + $0xdc] sm:$0xf] %vm6161, %v6088
    %6218 = vst.msk [vmem:[#allocation4 + $0xe0] sm:$0xf] %vm6161, %v6089
    %6219 = vst.msk [vmem:[#allocation4 + $0xe4] sm:$0xf] %vm6161, %v6090
    %6220 = vst.msk [vmem:[#allocation4 + $0xe8] sm:$0xf] %vm6161, %v6091
    %6221 = vst.msk [vmem:[#allocation4 + $0xec] sm:$0xf] %vm6161, %v6092
    %6222 = vst.msk [vmem:[#allocation4 + $0xf0] sm:$0xf] %vm6161, %v6093
    %6223 = vst.msk [vmem:[#allocation4 + $0xf4] sm:$0xf] %vm6161, %v6094
    %6224 = vst.msk [vmem:[#allocation4 + $0xf8] sm:$0xf] %vm6161, %v6095
    %6225 = vst.msk [vmem:[#allocation4 + $0xfc] sm:$0xf] %vm6161, %v6096
    // Predicated region
    $region10: #{tpu_custom_call.1} parent=1 // pred_check
      _
    $region11: #{tpu_custom_call.1} parent=1 // pred_check_branch
      %6227 = sbr.rel (0) target = $region13
    $region12: #{tpu_custom_call.1} parent=1 // pred_region
      %s6229 = ssub.s32 4096, 4096
      %6230 = vsyncadd [#allocation5], %s6229
      %s6231 = sshll.u32 [#allocation4], 4
      %s6232 = int_to_ptr.vmem [resolvable:$true] %s6231
      %6237 = dma.vmem_to_hbm [thread:$0]  %s6232, 4096, %s2, [#allocation5], 64, 64, 4
    $region13: #{tpu_custom_call.1} parent=1 // pred_fallthru
      _
    // Predicated region
    $region14: #{tpu_custom_call.1} parent=1 // pred_check
      _
    $region15: #{tpu_custom_call.1} parent=1 // pred_check_branch
      %6239 = sbr.rel (0) target = $region17
    $region16: #{tpu_custom_call.1} parent=1 // pred_region
      %6240 = dma.done [#allocation5], 4096
    $region17: #{tpu_custom_call.1} parent=1 // pred_fallthru
      _
    %6241 = vsyncpa [#allocation5], 1

</llo_original>
